<compile_context>
chip_gen: v7x
topology: tpu7x:2x2x1
jax: 0.10.0
libtpu: 0.0.40
codegen_flags: <defaults>
</compile_context>

<pallas_src>
import functools

import jax
import jax.numpy as jnp
from jax.experimental import pallas as pl
from jax.experimental.pallas import tpu as pltpu


def _banded_w(w_dhwio, scale, w_in, w_out, pad, dtype):
    """Fold the W-axis taps + W zero-padding of a stride-1 conv into a band matrix.

    w_dhwio: (K, K, K, Ci, Co)  conv weight, (kd, kh, kw, Cin, Cout).
    Returns (K, K, w_in*Ci, w_out*Co) such that, for a fixed (kd, kh) tap,
      out[(d,h), wo*Co + co] =
        sum_{wi,ci} x[(d',h'), wi*Ci + ci] * B[kd,kh][wi*Ci + ci, wo*Co + co]
    equals the W-axis convolution (zero padding `pad`, stride 1) of that tap.
    The WSConv scale is folded in here as well (conv is linear).

    TODO(synk): for production W=256 volumes, tile W into lane groups
    (Wtile*C = 128) instead of banding the full W — full-W banding is
    O(W^2*Ci*Co) in VMEM and MXU FLOPs (~85x band-zero waste, >64 MiB weights
    on v7x).
    """
    K = w_dhwio.shape[0]
    Ci, Co = w_dhwio.shape[3], w_dhwio.shape[4]
    kw = jnp.arange(K)[:, None, None]
    wi = jnp.arange(w_in)[None, :, None]
    wo = jnp.arange(w_out)[None, None, :]
    # x[wi] contributes to out[wo] through tap kw iff wi == wo - pad + kw
    band = (wi == wo - pad + kw).astype(w_dhwio.dtype)            # (K, w_in, w_out)
    ws = w_dhwio * scale                                          # fold WS scale
    big = jnp.einsum("kio,dhkcf->dhicof", band, ws)               # (K,K,w_in,Ci,w_out,Co)
    return big.reshape(K, K, w_in * Ci, w_out * Co).astype(dtype)


def _folded_bias(bias, w_out):
    """(Co,) bias -> (1, w_out*Co) matching the folded (w, c) lane layout."""
    return jnp.tile(bias, (w_out,)).reshape(1, -1).astype(jnp.float32)


def _conv_block_kernel(x_ref, w1_ref, b1_ref, w2_ref, b2_ref, o_ref,
                       xpad_ref, mid_ref, *,
                       k1, pad1, d_in, h_in, d_mid, h_mid, d_chunk, neg_slope):
    """Fused WSConv3d+Leaky (x2) for one batch element, (W, C) folded on lanes.

    x_ref   : (1, D,  H,  W*Cin)          bf16  input block (unpadded)
    w1_ref  : (k1, k1, W*Cin,  Wm*Cm)     bf16  banded conv1 weight (scale folded)
    b1_ref  : (1, Wm*Cm)                  f32
    w2_ref  : (3, 3,  Wm*Cm,  Wm*Co)      bf16  banded conv2 weight (scale folded)
    b2_ref  : (1, Wm*Co)                  f32
    o_ref   : (1, Dm, Hm, Wm*Co)          out   output block
    xpad_ref: (D+2p, H+2p, W*Cin)         bf16  scratch: D/H zero-padded input
    mid_ref : (Dm+2, Hm+2, Wm*Cm)         bf16  scratch: D/H zero-padded conv1 out
    """
    wf_in = x_ref.shape[-1]
    wf_mid = mid_ref.shape[-1]
    wf_out = o_ref.shape[-1]
    hp_in = h_in + 2 * pad1
    hp_mid = h_mid + 2

    # Zero ONLY the halo slabs every grid step (interiors are fully overwritten
    # below).  Must NOT be gated on program_id==0: under "parallel" batch
    # semantics the second TensorCore never executes iteration 0.
    if pad1 > 0:
        xpad_ref[0:pad1, :, :] = jnp.zeros((pad1, hp_in, wf_in), xpad_ref.dtype)
        xpad_ref[pad1 + d_in:, :, :] = jnp.zeros((pad1, hp_in, wf_in), xpad_ref.dtype)
        xpad_ref[pad1:pad1 + d_in, 0:pad1, :] = (
            jnp.zeros((d_in, pad1, wf_in), xpad_ref.dtype))
        xpad_ref[pad1:pad1 + d_in, pad1 + h_in:, :] = (
            jnp.zeros((d_in, pad1, wf_in), xpad_ref.dtype))
    mid_ref[0:1, :, :] = jnp.zeros((1, hp_mid, wf_mid), mid_ref.dtype)
    mid_ref[1 + d_mid:, :, :] = jnp.zeros((1, hp_mid, wf_mid), mid_ref.dtype)
    mid_ref[1:1 + d_mid, 0:1, :] = jnp.zeros((d_mid, 1, wf_mid), mid_ref.dtype)
    mid_ref[1:1 + d_mid, 1 + h_mid:, :] = jnp.zeros((d_mid, 1, wf_mid), mid_ref.dtype)

    # Stage the input into its D/H zero-padding halo (the W padding is already
    # folded into the banded weights).  Already bf16 from the wrapper: no convert.
    # TODO(synk): over-allocate the leading H halo to a full 16-row sublane tile
    # so the interior stores here and below are tile-aligned (unmasked vst).
    xpad_ref[pad1:pad1 + d_in, pad1:pad1 + h_in, :] = x_ref[0]

    def conv_leaky(src_ref, w_ref, b_ref, nk, d0, dc, nh, wf_src, wf_dst):
        # Bias folded into the accumulator init (saves one VALU add/element).
        acc = jnp.broadcast_to(b_ref[...], (dc * nh, wf_dst))      # f32
        for kd in range(nk):
            for kh in range(nk):
                xs = src_ref[d0 + kd:d0 + kd + dc, kh:kh + nh, :]
                xs = xs.reshape(dc * nh, wf_src)
                acc = acc + jnp.dot(xs, w_ref[kd, kh],
                                    preferred_element_type=jnp.float32)
        return jnp.maximum(acc, neg_slope * acc)   # LeakyReLU(0.2), f32 epilogue

    # ---- conv1 + LeakyReLU -> interior of mid_ref ---------------------------
    for d0 in range(0, d_mid, d_chunk):
        dc = min(d_chunk, d_mid - d0)
        y1 = conv_leaky(xpad_ref, w1_ref, b1_ref, k1, d0, dc, h_mid, wf_in, wf_mid)
        mid_ref[1 + d0:1 + d0 + dc, 1:1 + h_mid, :] = (
            y1.reshape(dc, h_mid, wf_mid).astype(mid_ref.dtype))

    # ---- conv2 + LeakyReLU -> output (lane-dense: last dim = Wm*Cout) -------
    for d0 in range(0, d_mid, d_chunk):
        dc = min(d_chunk, d_mid - d0)
        y2 = conv_leaky(mid_ref, w2_ref, b2_ref, 3, d0, dc, h_mid, wf_mid, wf_out)
        o_ref[0, d0:d0 + dc, :, :] = (
            y2.reshape(dc, h_mid, wf_out).astype(o_ref.dtype))


def conv_block_forward(params, x_ncdhw, *, stride, padding,
                       d_chunk=16, neg_slope=0.2, mxu_dtype=jnp.bfloat16,
                       out_dtype=jnp.float32):
    """ConvBlock.forward: leaky(conv1(x)) -> leaky(conv2(.)).  NCDHW in/out."""
    # TODO(synk): only stride == 1 is implemented (ConvBlock is used with stride=1).
    assert stride == 1, "stride != 1 not implemented in the Pallas kernel"
    N, Cin, D, H, W = x_ncdhw.shape
    k1 = params["w1"].shape[0]
    Cmid = params["w1"].shape[-1]
    Cout = params["w2"].shape[-1]
    p1 = padding

    # conv1 (k1/stride 1/pad p1) output spatial sizes; conv2 is 3/1/1 (size-preserving).
    Dm = D + 2 * p1 - k1 + 1
    Hm = H + 2 * p1 - k1 + 1
    Wm = W + 2 * p1 - k1 + 1

    # NCDHW -> NDHWC, fold (W, C) onto the lane axis, cast to the MXU dtype in
    # the wrapper so the input DMA moves half the bytes.
    x_fold = (jnp.transpose(x_ncdhw, (0, 2, 3, 4, 1))
              .reshape(N, D, H, W * Cin).astype(mxu_dtype))

    # Banded (W-Toeplitz) weights with the WS scale folded in, bf16 for the MXU.
    w1b = _banded_w(params["w1"], params["s1"], W, Wm, p1, mxu_dtype)
    w2b = _banded_w(params["w2"], params["s2"], Wm, Wm, 1, mxu_dtype)
    b1f = _folded_bias(params["b1"], Wm)
    b2f = _folded_bias(params["b2"], Wm)

    # d_chunk=Dm fills the 256-row MXU on v6e/v7x; on v5e pass d_chunk=8 if the
    # bundle dump shows f32-accumulator spills.
    dch = max(1, min(d_chunk, Dm))
    kern = functools.partial(
        _conv_block_kernel, k1=k1, pad1=p1, d_in=D, h_in=H, d_mid=Dm, h_mid=Hm,
        d_chunk=dch, neg_slope=neg_slope)

    out_itemsize = jnp.dtype(out_dtype).itemsize
    flops = 2 * N * Dm * Hm * (k1 * k1 * (W * Cin) * (Wm * Cmid)
                               + 9 * (Wm * Cmid) * (Wm * Cout))
    bytes_accessed = (x_fold.size * 2 + w1b.size * 2 + w2b.size * 2
                      + b1f.size * 4 + b2f.size * 4
                      + N * Dm * Hm * Wm * Cout * out_itemsize)

    # TODO(synk): for real 256^3 U-Net volumes, add a halo-tiled D grid axis
    # (marked "parallel" so a batch-1 volume still uses both v7x TCs) with
    # Dtile ~4-8 on v7x (64 MiB VMEM) / ~16 on v5e/v6e, and tile W into lane
    # groups (Wtile*C = 128) instead of folding the full W*C width.
    out_folded = pl.pallas_call(
        kern,
        out_shape=jax.ShapeDtypeStruct((N, Dm, Hm, Wm * Cout), out_dtype),
        grid_spec=pltpu.PrefetchScalarGridSpec(
            num_scalar_prefetch=0,
            grid=(N,),
            in_specs=[
                pl.BlockSpec((1, D, H, W * Cin), lambda n: (n, 0, 0, 0)),
                # Constant-index weights/biases: single-buffer to halve their
                # VMEM residency (most valuable on v7x's smaller VMEM).
                pl.BlockSpec((k1, k1, W * Cin, Wm * Cmid), lambda n: (0, 0, 0, 0),
                             pipeline_mode=pl.Buffered(1)),
                pl.BlockSpec((1, Wm * Cmid), lambda n: (0, 0),
                             pipeline_mode=pl.Buffered(1)),
                pl.BlockSpec((3, 3, Wm * Cmid, Wm * Cout), lambda n: (0, 0, 0, 0),
                             pipeline_mode=pl.Buffered(1)),
                pl.BlockSpec((1, Wm * Cout), lambda n: (0, 0),
                             pipeline_mode=pl.Buffered(1)),
            ],
            out_specs=pl.BlockSpec((1, Dm, Hm, Wm * Cout), lambda n: (n, 0, 0, 0)),
            scratch_shapes=[
                pltpu.VMEM((D + 2 * p1, H + 2 * p1, W * Cin), mxu_dtype),
                pltpu.VMEM((Dm + 2, Hm + 2, Wm * Cmid), mxu_dtype),
            ]),
        compiler_params=pltpu.CompilerParams(
            dimension_semantics=("parallel",),        # shard batch across v7x TCs
            vmem_limit_bytes=32 * 1024 * 1024),       # fits v5e/v6e/v7x comfortably
        cost_estimate=pl.CostEstimate(flops=int(flops), transcendentals=0,
                                      bytes_accessed=int(bytes_accessed)),
    )(x_fold, w1b, b1f, w2b, b2f)

    out = out_folded.reshape(N, Dm, Hm, Wm, Cout)     # un-fold (W, C): free reshape
    return jnp.transpose(out, (0, 4, 1, 2, 3))        # NDHWC -> NCDHW


def init_conv_block(key, in_channels, out_channels, kernel_size):
    """Params mirroring WSConv3d.__init__ (normal(0,1) weights, zero bias).

    Weights are stored DHWIO (kd, kh, kw, Cin, Cout), i.e. the PyTorch
    (Cout, Cin, kd, kh, kw) Conv3d weight transposed.
    """
    k1, k2 = jax.random.split(key)
    w1 = jax.random.normal(
        k1, (out_channels, in_channels, kernel_size, kernel_size, kernel_size),
        jnp.float32)
    w2 = jax.random.normal(k2, (out_channels, out_channels, 3, 3, 3), jnp.float32)
    w1 = jnp.transpose(w1, (2, 3, 4, 1, 0))
    w2 = jnp.transpose(w2, (2, 3, 4, 1, 0))
    b1 = jnp.zeros((out_channels,), jnp.float32)
    b2 = jnp.zeros((out_channels,), jnp.float32)
    # NOTE: kernel_size ** 2 (not ** 3), exactly as in the PyTorch source.
    s1 = (2.0 / (in_channels * kernel_size ** 2)) ** 0.5
    s2 = (2.0 / (out_channels * 3 ** 2)) ** 0.5
    return dict(w1=w1, b1=b1, s1=s1, w2=w2, b2=b2, s2=s2)


if __name__ == "__main__":
    key = jax.random.PRNGKey(0)
    kx, kp = jax.random.split(key)

    N, Cin, Cout, S = 2, 4, 8, 16
    kernel_size, stride, padding = 3, 1, 1

    x = jax.random.normal(kx, (N, Cin, S, S, S), jnp.float32)     # NCDHW, like PyTorch
    params = init_conv_block(kp, Cin, Cout, kernel_size)

    fwd = jax.jit(functools.partial(conv_block_forward, stride=stride, padding=padding))
    y = jax.block_until_ready(fwd(params, x))

    # Pure-JAX f32 reference (lax conv) to validate the Pallas kernel.
    def ref_ws_conv(a_ndhwc, w, b, scale, pad):
        out = jax.lax.conv_general_dilated(
            a_ndhwc * scale, w, window_strides=(1, 1, 1),
            padding=[(pad, pad)] * 3,
            dimension_numbers=("NDHWC", "DHWIO", "NDHWC"))
        return out + b.reshape(1, 1, 1, 1, -1)

    def leaky(v):
        return jnp.where(v >= 0, v, 0.2 * v)

    xr = jnp.transpose(x, (0, 2, 3, 4, 1))
    r = leaky(ref_ws_conv(xr, params["w1"], params["b1"], params["s1"], padding))
    r = leaky(ref_ws_conv(r, params["w2"], params["b2"], params["s2"], 1))
    r = jnp.transpose(r, (0, 4, 1, 2, 3))

    assert y.shape == (N, Cout, S, S, S), y.shape
    max_err = float(jnp.max(jnp.abs(y - r)))
    rel_l2 = float(jnp.linalg.norm(y - r) / (jnp.linalg.norm(r) + 1e-6))
    # bf16 MXU operands with f32 accumulation vs. a pure-f32 reference.
    assert rel_l2 < 2e-2, f"relative L2 err={rel_l2}"
    assert jnp.allclose(y, r, atol=3e-1, rtol=5e-2), (
        f"max abs err={max_err}, rel L2={rel_l2}")
    print("KERNEL_OK")
</pallas_src>

<mosaic_0001>
module attributes {stable_mosaic.version = 11 : i64} {
  func.func @_conv_block_kernel(%arg0: i32, %arg1: memref<1x16x16x64xbf16, #tpu.memory_space<vmem>>, %arg2: memref<3x3x64x128xbf16, #tpu.memory_space<vmem>>, %arg3: memref<1x128xf32, #tpu.memory_space<vmem>>, %arg4: memref<3x3x128x128xbf16, #tpu.memory_space<vmem>>, %arg5: memref<1x128xf32, #tpu.memory_space<vmem>>, %arg6: memref<1x16x16x128xf32, #tpu.memory_space<vmem>>, %arg7: memref<18x18x64xbf16, #tpu.memory_space<vmem>>, %arg8: memref<18x18x128xbf16, #tpu.memory_space<vmem>>) attributes {dimension_semantics = [#tpu.dimension_semantics<parallel>], iteration_bounds = array<i64: 2>, scalar_prefetch = 0 : i64, scratch_operands = 2 : i64, tpu.core_type = #tpu.core_type<tc>, window_params = [{transform_indices = @transform_0, window_bounds = array<i64: 1, 16, 16, 64>}, {pipeline_mode = #tpu.pipeline_mode<synchronous>, transform_indices = @transform_1, window_bounds = array<i64: 3, 3, 64, 128>}, {pipeline_mode = #tpu.pipeline_mode<synchronous>, transform_indices = @transform_2, window_bounds = array<i64: 1, 128>}, {pipeline_mode = #tpu.pipeline_mode<synchronous>, transform_indices = @transform_3, window_bounds = array<i64: 3, 3, 128, 128>}, {pipeline_mode = #tpu.pipeline_mode<synchronous>, transform_indices = @transform_4, window_bounds = array<i64: 1, 128>}, {transform_indices = @transform_5, window_bounds = array<i64: 1, 16, 16, 128>}]} {
    %cst = arith.constant 0.000000e+00 : bf16
    %0 = vector.broadcast %cst : bf16 to vector<1x18x64xbf16>
    %c0 = arith.constant 0 : index
    %c0_0 = arith.constant 0 : index
    %c0_1 = arith.constant 0 : index
    %1 = vector.load %arg7[%c0, %c0_0, %c0_1] : memref<18x18x64xbf16, #tpu.memory_space<vmem>>, vector<1x18x64xbf16>
    tpu.vector_store %arg7[%c0, %c0_0, %c0_1], %0 {strides = array<i32>} : memref<18x18x64xbf16, #tpu.memory_space<vmem>>, vector<1x18x64xbf16>,
    %cst_2 = arith.constant 0.000000e+00 : bf16
    %2 = vector.broadcast %cst_2 : bf16 to vector<1x18x64xbf16>
    %c17 = arith.constant 17 : index
    %c0_3 = arith.constant 0 : index
    %c0_4 = arith.constant 0 : index
    %3 = vector.load %arg7[%c17, %c0_3, %c0_4] : memref<18x18x64xbf16, #tpu.memory_space<vmem>>, vector<1x18x64xbf16>
    tpu.vector_store %arg7[%c17, %c0_3, %c0_4], %2 {strides = array<i32>} : memref<18x18x64xbf16, #tpu.memory_space<vmem>>, vector<1x18x64xbf16>,
    %cst_5 = arith.constant 0.000000e+00 : bf16
    %4 = vector.broadcast %cst_5 : bf16 to vector<16x1x64xbf16>
    %c1 = arith.constant 1 : index
    %c0_6 = arith.constant 0 : index
    %c0_7 = arith.constant 0 : index
    %5 = vector.load %arg7[%c1, %c0_6, %c0_7] : memref<18x18x64xbf16, #tpu.memory_space<vmem>>, vector<16x1x64xbf16>
    tpu.vector_store %arg7[%c1, %c0_6, %c0_7], %4 {strides = array<i32>} : memref<18x18x64xbf16, #tpu.memory_space<vmem>>, vector<16x1x64xbf16>,
    %cst_8 = arith.constant 0.000000e+00 : bf16
    %6 = vector.broadcast %cst_8 : bf16 to vector<16x1x64xbf16>
    %c1_9 = arith.constant 1 : index
    %c17_10 = arith.constant 17 : index
    %c0_11 = arith.constant 0 : index
    %7 = vector.load %arg7[%c1_9, %c17_10, %c0_11] : memref<18x18x64xbf16, #tpu.memory_space<vmem>>, vector<16x1x64xbf16>
    tpu.vector_store %arg7[%c1_9, %c17_10, %c0_11], %6 {strides = array<i32>} : memref<18x18x64xbf16, #tpu.memory_space<vmem>>, vector<16x1x64xbf16>,
    %cst_12 = arith.constant 0.000000e+00 : bf16
    %8 = vector.broadcast %cst_12 : bf16 to vector<1x18x128xbf16>
    %c0_13 = arith.constant 0 : index
    %c0_14 = arith.constant 0 : index
    %c0_15 = arith.constant 0 : index
    %9 = vector.load %arg8[%c0_13, %c0_14, %c0_15] : memref<18x18x128xbf16, #tpu.memory_space<vmem>>, vector<1x18x128xbf16>
    tpu.vector_store %arg8[%c0_13, %c0_14, %c0_15], %8 {strides = array<i32>} : memref<18x18x128xbf16, #tpu.memory_space<vmem>>, vector<1x18x128xbf16>,
    %cst_16 = arith.constant 0.000000e+00 : bf16
    %10 = vector.broadcast %cst_16 : bf16 to vector<1x18x128xbf16>
    %c17_17 = arith.constant 17 : index
    %c0_18 = arith.constant 0 : index
    %c0_19 = arith.constant 0 : index
    %11 = vector.load %arg8[%c17_17, %c0_18, %c0_19] : memref<18x18x128xbf16, #tpu.memory_space<vmem>>, vector<1x18x128xbf16>
    tpu.vector_store %arg8[%c17_17, %c0_18, %c0_19], %10 {strides = array<i32>} : memref<18x18x128xbf16, #tpu.memory_space<vmem>>, vector<1x18x128xbf16>,
    %cst_20 = arith.constant 0.000000e+00 : bf16
    %12 = vector.broadcast %cst_20 : bf16 to vector<16x1x128xbf16>
    %c1_21 = arith.constant 1 : index
    %c0_22 = arith.constant 0 : index
    %c0_23 = arith.constant 0 : index
    %13 = vector.load %arg8[%c1_21, %c0_22, %c0_23] : memref<18x18x128xbf16, #tpu.memory_space<vmem>>, vector<16x1x128xbf16>
    tpu.vector_store %arg8[%c1_21, %c0_22, %c0_23], %12 {strides = array<i32>} : memref<18x18x128xbf16, #tpu.memory_space<vmem>>, vector<16x1x128xbf16>,
    %cst_24 = arith.constant 0.000000e+00 : bf16
    %14 = vector.broadcast %cst_24 : bf16 to vector<16x1x128xbf16>
    %c1_25 = arith.constant 1 : index
    %c17_26 = arith.constant 17 : index
    %c0_27 = arith.constant 0 : index
    %15 = vector.load %arg8[%c1_25, %c17_26, %c0_27] : memref<18x18x128xbf16, #tpu.memory_space<vmem>>, vector<16x1x128xbf16>
    tpu.vector_store %arg8[%c1_25, %c17_26, %c0_27], %14 {strides = array<i32>} : memref<18x18x128xbf16, #tpu.memory_space<vmem>>, vector<16x1x128xbf16>,
    %c0_28 = arith.constant 0 : index
    %c0_29 = arith.constant 0 : index
    %c0_30 = arith.constant 0 : index
    %c0_31 = arith.constant 0 : index
    %16 = vector.load %arg1[%c0_28, %c0_29, %c0_30, %c0_31] : memref<1x16x16x64xbf16, #tpu.memory_space<vmem>>, vector<1x16x16x64xbf16>
    %17 = vector.shape_cast %16 : vector<1x16x16x64xbf16> to vector<16x16x64xbf16>
    %c1_32 = arith.constant 1 : index
    %c1_33 = arith.constant 1 : index
    %c0_34 = arith.constant 0 : index
    %18 = vector.load %arg7[%c1_32, %c1_33, %c0_34] : memref<18x18x64xbf16, #tpu.memory_space<vmem>>, vector<16x16x64xbf16>
    tpu.vector_store %arg7[%c1_32, %c1_33, %c0_34], %17 {strides = array<i32>} : memref<18x18x64xbf16, #tpu.memory_space<vmem>>, vector<16x16x64xbf16>,
    %c0_35 = arith.constant 0 : index
    %c0_36 = arith.constant 0 : index
    %19 = vector.load %arg3[%c0_35, %c0_36] : memref<1x128xf32, #tpu.memory_space<vmem>>, vector<1x128xf32>
    %20 = vector.shape_cast %19 : vector<1x128xf32> to vector<1x128xf32>
    %21 = vector.broadcast %20 : vector<1x128xf32> to vector<256x128xf32>
    %c0_37 = arith.constant 0 : index
    %c0_38 = arith.constant 0 : index
    %c0_39 = arith.constant 0 : index
    %22 = vector.load %arg7[%c0_37, %c0_38, %c0_39] : memref<18x18x64xbf16, #tpu.memory_space<vmem>>, vector<16x16x64xbf16>
    %23 = vector.shape_cast %22 : vector<16x16x64xbf16> to vector<256x64xbf16>
    %c0_40 = arith.constant 0 : index
    %c0_41 = arith.constant 0 : index
    %c0_42 = arith.constant 0 : index
    %c0_43 = arith.constant 0 : index
    %24 = vector.load %arg2[%c0_40, %c0_41, %c0_42, %c0_43] : memref<3x3x64x128xbf16, #tpu.memory_space<vmem>>, vector<1x1x64x128xbf16>
    %25 = vector.shape_cast %24 : vector<1x1x64x128xbf16> to vector<64x128xbf16>
    %cst_44 = arith.constant dense<0.000000e+00> : vector<256x128xf32>
    %26 = tpu.matmul %23, %25, %cst_44 {dimension_numbers = #tpu.dot_dimension_numbers<[1], [0], [0], [1], [0, 0, 1, 1], [], []>} : vector<256x64xbf16>, vector<64x128xbf16>, vector<256x128xf32> -> vector<256x128xf32>
    %27 = arith.addf %21, %26 : vector<256x128xf32>
    %c0_45 = arith.constant 0 : index
    %c1_46 = arith.constant 1 : index
    %c0_47 = arith.constant 0 : index
    %28 = vector.load %arg7[%c0_45, %c1_46, %c0_47] : memref<18x18x64xbf16, #tpu.memory_space<vmem>>, vector<16x16x64xbf16>
    %29 = vector.shape_cast %28 : vector<16x16x64xbf16> to vector<256x64xbf16>
    %c0_48 = arith.constant 0 : index
    %c1_49 = arith.constant 1 : index
    %c0_50 = arith.constant 0 : index
    %c0_51 = arith.constant 0 : index
    %30 = vector.load %arg2[%c0_48, %c1_49, %c0_50, %c0_51] : memref<3x3x64x128xbf16, #tpu.memory_space<vmem>>, vector<1x1x64x128xbf16>
    %31 = vector.shape_cast %30 : vector<1x1x64x128xbf16> to vector<64x128xbf16>
    %cst_52 = arith.constant dense<0.000000e+00> : vector<256x128xf32>
    %32 = tpu.matmul %29, %31, %cst_52 {dimension_numbers = #tpu.dot_dimension_numbers<[1], [0], [0], [1], [0, 0, 1, 1], [], []>} : vector<256x64xbf16>, vector<64x128xbf16>, vector<256x128xf32> -> vector<256x128xf32>
    %33 = arith.addf %27, %32 : vector<256x128xf32>
    %c0_53 = arith.constant 0 : index
    %c2 = arith.constant 2 : index
    %c0_54 = arith.constant 0 : index
    %34 = vector.load %arg7[%c0_53, %c2, %c0_54] : memref<18x18x64xbf16, #tpu.memory_space<vmem>>, vector<16x16x64xbf16>
    %35 = vector.shape_cast %34 : vector<16x16x64xbf16> to vector<256x64xbf16>
    %c0_55 = arith.constant 0 : index
    %c2_56 = arith.constant 2 : index
    %c0_57 = arith.constant 0 : index
    %c0_58 = arith.constant 0 : index
    %36 = vector.load %arg2[%c0_55, %c2_56, %c0_57, %c0_58] : memref<3x3x64x128xbf16, #tpu.memory_space<vmem>>, vector<1x1x64x128xbf16>
    %37 = vector.shape_cast %36 : vector<1x1x64x128xbf16> to vector<64x128xbf16>
    %cst_59 = arith.constant dense<0.000000e+00> : vector<256x128xf32>
    %38 = tpu.matmul %35, %37, %cst_59 {dimension_numbers = #tpu.dot_dimension_numbers<[1], [0], [0], [1], [0, 0, 1, 1], [], []>} : vector<256x64xbf16>, vector<64x128xbf16>, vector<256x128xf32> -> vector<256x128xf32>
    %39 = arith.addf %33, %38 : vector<256x128xf32>
    %c1_60 = arith.constant 1 : index
    %c0_61 = arith.constant 0 : index
    %c0_62 = arith.constant 0 : index
    %40 = vector.load %arg7[%c1_60, %c0_61, %c0_62] : memref<18x18x64xbf16, #tpu.memory_space<vmem>>, vector<16x16x64xbf16>
    %41 = vector.shape_cast %40 : vector<16x16x64xbf16> to vector<256x64xbf16>
    %c1_63 = arith.constant 1 : index
    %c0_64 = arith.constant 0 : index
    %c0_65 = arith.constant 0 : index
    %c0_66 = arith.constant 0 : index
    %42 = vector.load %arg2[%c1_63, %c0_64, %c0_65, %c0_66] : memref<3x3x64x128xbf16, #tpu.memory_space<vmem>>, vector<1x1x64x128xbf16>
    %43 = vector.shape_cast %42 : vector<1x1x64x128xbf16> to vector<64x128xbf16>
    %cst_67 = arith.constant dense<0.000000e+00> : vector<256x128xf32>
    %44 = tpu.matmul %41, %43, %cst_67 {dimension_numbers = #tpu.dot_dimension_numbers<[1], [0], [0], [1], [0, 0, 1, 1], [], []>} : vector<256x64xbf16>, vector<64x128xbf16>, vector<256x128xf32> -> vector<256x128xf32>
    %45 = arith.addf %39, %44 : vector<256x128xf32>
    %c1_68 = arith.constant 1 : index
    %c1_69 = arith.constant 1 : index
    %c0_70 = arith.constant 0 : index
    %46 = vector.load %arg7[%c1_68, %c1_69, %c0_70] : memref<18x18x64xbf16, #tpu.memory_space<vmem>>, vector<16x16x64xbf16>
    %47 = vector.shape_cast %46 : vector<16x16x64xbf16> to vector<256x64xbf16>
    %c1_71 = arith.constant 1 : index
    %c1_72 = arith.constant 1 : index
    %c0_73 = arith.constant 0 : index
    %c0_74 = arith.constant 0 : index
    %48 = vector.load %arg2[%c1_71, %c1_72, %c0_73, %c0_74] : memref<3x3x64x128xbf16, #tpu.memory_space<vmem>>, vector<1x1x64x128xbf16>
    %49 = vector.shape_cast %48 : vector<1x1x64x128xbf16> to vector<64x128xbf16>
    %cst_75 = arith.constant dense<0.000000e+00> : vector<256x128xf32>
    %50 = tpu.matmul %47, %49, %cst_75 {dimension_numbers = #tpu.dot_dimension_numbers<[1], [0], [0], [1], [0, 0, 1, 1], [], []>} : vector<256x64xbf16>, vector<64x128xbf16>, vector<256x128xf32> -> vector<256x128xf32>
    %51 = arith.addf %45, %50 : vector<256x128xf32>
    %c1_76 = arith.constant 1 : index
    %c2_77 = arith.constant 2 : index
    %c0_78 = arith.constant 0 : index
    %52 = vector.load %arg7[%c1_76, %c2_77, %c0_78] : memref<18x18x64xbf16, #tpu.memory_space<vmem>>, vector<16x16x64xbf16>
    %53 = vector.shape_cast %52 : vector<16x16x64xbf16> to vector<256x64xbf16>
    %c1_79 = arith.constant 1 : index
    %c2_80 = arith.constant 2 : index
    %c0_81 = arith.constant 0 : index
    %c0_82 = arith.constant 0 : index
    %54 = vector.load %arg2[%c1_79, %c2_80, %c0_81, %c0_82] : memref<3x3x64x128xbf16, #tpu.memory_space<vmem>>, vector<1x1x64x128xbf16>
    %55 = vector.shape_cast %54 : vector<1x1x64x128xbf16> to vector<64x128xbf16>
    %cst_83 = arith.constant dense<0.000000e+00> : vector<256x128xf32>
    %56 = tpu.matmul %53, %55, %cst_83 {dimension_numbers = #tpu.dot_dimension_numbers<[1], [0], [0], [1], [0, 0, 1, 1], [], []>} : vector<256x64xbf16>, vector<64x128xbf16>, vector<256x128xf32> -> vector<256x128xf32>
    %57 = arith.addf %51, %56 : vector<256x128xf32>
    %c2_84 = arith.constant 2 : index
    %c0_85 = arith.constant 0 : index
    %c0_86 = arith.constant 0 : index
    %58 = vector.load %arg7[%c2_84, %c0_85, %c0_86] : memref<18x18x64xbf16, #tpu.memory_space<vmem>>, vector<16x16x64xbf16>
    %59 = vector.shape_cast %58 : vector<16x16x64xbf16> to vector<256x64xbf16>
    %c2_87 = arith.constant 2 : index
    %c0_88 = arith.constant 0 : index
    %c0_89 = arith.constant 0 : index
    %c0_90 = arith.constant 0 : index
    %60 = vector.load %arg2[%c2_87, %c0_88, %c0_89, %c0_90] : memref<3x3x64x128xbf16, #tpu.memory_space<vmem>>, vector<1x1x64x128xbf16>
    %61 = vector.shape_cast %60 : vector<1x1x64x128xbf16> to vector<64x128xbf16>
    %cst_91 = arith.constant dense<0.000000e+00> : vector<256x128xf32>
    %62 = tpu.matmul %59, %61, %cst_91 {dimension_numbers = #tpu.dot_dimension_numbers<[1], [0], [0], [1], [0, 0, 1, 1], [], []>} : vector<256x64xbf16>, vector<64x128xbf16>, vector<256x128xf32> -> vector<256x128xf32>
    %63 = arith.addf %57, %62 : vector<256x128xf32>
    %c2_92 = arith.constant 2 : index
    %c1_93 = arith.constant 1 : index
    %c0_94 = arith.constant 0 : index
    %64 = vector.load %arg7[%c2_92, %c1_93, %c0_94] : memref<18x18x64xbf16, #tpu.memory_space<vmem>>, vector<16x16x64xbf16>
    %65 = vector.shape_cast %64 : vector<16x16x64xbf16> to vector<256x64xbf16>
    %c2_95 = arith.constant 2 : index
    %c1_96 = arith.constant 1 : index
    %c0_97 = arith.constant 0 : index
    %c0_98 = arith.constant 0 : index
    %66 = vector.load %arg2[%c2_95, %c1_96, %c0_97, %c0_98] : memref<3x3x64x128xbf16, #tpu.memory_space<vmem>>, vector<1x1x64x128xbf16>
    %67 = vector.shape_cast %66 : vector<1x1x64x128xbf16> to vector<64x128xbf16>
    %cst_99 = arith.constant dense<0.000000e+00> : vector<256x128xf32>
    %68 = tpu.matmul %65, %67, %cst_99 {dimension_numbers = #tpu.dot_dimension_numbers<[1], [0], [0], [1], [0, 0, 1, 1], [], []>} : vector<256x64xbf16>, vector<64x128xbf16>, vector<256x128xf32> -> vector<256x128xf32>
    %69 = arith.addf %63, %68 : vector<256x128xf32>
    %c2_100 = arith.constant 2 : index
    %c2_101 = arith.constant 2 : index
    %c0_102 = arith.constant 0 : index
    %70 = vector.load %arg7[%c2_100, %c2_101, %c0_102] : memref<18x18x64xbf16, #tpu.memory_space<vmem>>, vector<16x16x64xbf16>
    %71 = vector.shape_cast %70 : vector<16x16x64xbf16> to vector<256x64xbf16>
    %c2_103 = arith.constant 2 : index
    %c2_104 = arith.constant 2 : index
    %c0_105 = arith.constant 0 : index
    %c0_106 = arith.constant 0 : index
    %72 = vector.load %arg2[%c2_103, %c2_104, %c0_105, %c0_106] : memref<3x3x64x128xbf16, #tpu.memory_space<vmem>>, vector<1x1x64x128xbf16>
    %73 = vector.shape_cast %72 : vector<1x1x64x128xbf16> to vector<64x128xbf16>
    %cst_107 = arith.constant dense<0.000000e+00> : vector<256x128xf32>
    %74 = tpu.matmul %71, %73, %cst_107 {dimension_numbers = #tpu.dot_dimension_numbers<[1], [0], [0], [1], [0, 0, 1, 1], [], []>} : vector<256x64xbf16>, vector<64x128xbf16>, vector<256x128xf32> -> vector<256x128xf32>
    %75 = arith.addf %69, %74 : vector<256x128xf32>
    %cst_108 = arith.constant 2.000000e-01 : f32
    %76 = vector.broadcast %cst_108 : f32 to vector<256x128xf32>
    %77 = arith.mulf %76, %75 : vector<256x128xf32>
    %78 = arith.maximumf %75, %77 : vector<256x128xf32>
    %79 = vector.shape_cast %78 : vector<256x128xf32> to vector<16x16x128xf32>
    %80 = arith.truncf %79 : vector<16x16x128xf32> to vector<16x16x128xbf16>
    %c1_109 = arith.constant 1 : index
    %c1_110 = arith.constant 1 : index
    %c0_111 = arith.constant 0 : index
    %81 = vector.load %arg8[%c1_109, %c1_110, %c0_111] : memref<18x18x128xbf16, #tpu.memory_space<vmem>>, vector<16x16x128xbf16>
    tpu.vector_store %arg8[%c1_109, %c1_110, %c0_111], %80 {strides = array<i32>} : memref<18x18x128xbf16, #tpu.memory_space<vmem>>, vector<16x16x128xbf16>,
    %c0_112 = arith.constant 0 : index
    %c0_113 = arith.constant 0 : index
    %82 = vector.load %arg5[%c0_112, %c0_113] : memref<1x128xf32, #tpu.memory_space<vmem>>, vector<1x128xf32>
    %83 = vector.shape_cast %82 : vector<1x128xf32> to vector<1x128xf32>
    %84 = vector.broadcast %83 : vector<1x128xf32> to vector<256x128xf32>
    %c0_114 = arith.constant 0 : index
    %c0_115 = arith.constant 0 : index
    %c0_116 = arith.constant 0 : index
    %85 = vector.load %arg8[%c0_114, %c0_115, %c0_116] : memref<18x18x128xbf16, #tpu.memory_space<vmem>>, vector<16x16x128xbf16>
    %86 = vector.shape_cast %85 : vector<16x16x128xbf16> to vector<256x128xbf16>
    %c0_117 = arith.constant 0 : index
    %c0_118 = arith.constant 0 : index
    %c0_119 = arith.constant 0 : index
    %c0_120 = arith.constant 0 : index
    %87 = vector.load %arg4[%c0_117, %c0_118, %c0_119, %c0_120] : memref<3x3x128x128xbf16, #tpu.memory_space<vmem>>, vector<1x1x128x128xbf16>
    %88 = vector.shape_cast %87 : vector<1x1x128x128xbf16> to vector<128x128xbf16>
    %cst_121 = arith.constant dense<0.000000e+00> : vector<256x128xf32>
    %89 = tpu.matmul %86, %88, %cst_121 {dimension_numbers = #tpu.dot_dimension_numbers<[1], [0], [0], [1], [0, 0, 1, 1], [], []>} : vector<256x128xbf16>, vector<128x128xbf16>, vector<256x128xf32> -> vector<256x128xf32>
    %90 = arith.addf %84, %89 : vector<256x128xf32>
    %c0_122 = arith.constant 0 : index
    %c1_123 = arith.constant 1 : index
    %c0_124 = arith.constant 0 : index
    %91 = vector.load %arg8[%c0_122, %c1_123, %c0_124] : memref<18x18x128xbf16, #tpu.memory_space<vmem>>, vector<16x16x128xbf16>
    %92 = vector.shape_cast %91 : vector<16x16x128xbf16> to vector<256x128xbf16>
    %c0_125 = arith.constant 0 : index
    %c1_126 = arith.constant 1 : index
    %c0_127 = arith.constant 0 : index
    %c0_128 = arith.constant 0 : index
    %93 = vector.load %arg4[%c0_125, %c1_126, %c0_127, %c0_128] : memref<3x3x128x128xbf16, #tpu.memory_space<vmem>>, vector<1x1x128x128xbf16>
    %94 = vector.shape_cast %93 : vector<1x1x128x128xbf16> to vector<128x128xbf16>
    %cst_129 = arith.constant dense<0.000000e+00> : vector<256x128xf32>
    %95 = tpu.matmul %92, %94, %cst_129 {dimension_numbers = #tpu.dot_dimension_numbers<[1], [0], [0], [1], [0, 0, 1, 1], [], []>} : vector<256x128xbf16>, vector<128x128xbf16>, vector<256x128xf32> -> vector<256x128xf32>
    %96 = arith.addf %90, %95 : vector<256x128xf32>
    %c0_130 = arith.constant 0 : index
    %c2_131 = arith.constant 2 : index
    %c0_132 = arith.constant 0 : index
    %97 = vector.load %arg8[%c0_130, %c2_131, %c0_132] : memref<18x18x128xbf16, #tpu.memory_space<vmem>>, vector<16x16x128xbf16>
    %98 = vector.shape_cast %97 : vector<16x16x128xbf16> to vector<256x128xbf16>
    %c0_133 = arith.constant 0 : index
    %c2_134 = arith.constant 2 : index
    %c0_135 = arith.constant 0 : index
    %c0_136 = arith.constant 0 : index
    %99 = vector.load %arg4[%c0_133, %c2_134, %c0_135, %c0_136] : memref<3x3x128x128xbf16, #tpu.memory_space<vmem>>, vector<1x1x128x128xbf16>
    %100 = vector.shape_cast %99 : vector<1x1x128x128xbf16> to vector<128x128xbf16>
    %cst_137 = arith.constant dense<0.000000e+00> : vector<256x128xf32>
    %101 = tpu.matmul %98, %100, %cst_137 {dimension_numbers = #tpu.dot_dimension_numbers<[1], [0], [0], [1], [0, 0, 1, 1], [], []>} : vector<256x128xbf16>, vector<128x128xbf16>, vector<256x128xf32> -> vector<256x128xf32>
    %102 = arith.addf %96, %101 : vector<256x128xf32>
    %c1_138 = arith.constant 1 : index
    %c0_139 = arith.constant 0 : index
    %c0_140 = arith.constant 0 : index
    %103 = vector.load %arg8[%c1_138, %c0_139, %c0_140] : memref<18x18x128xbf16, #tpu.memory_space<vmem>>, vector<16x16x128xbf16>
    %104 = vector.shape_cast %103 : vector<16x16x128xbf16> to vector<256x128xbf16>
    %c1_141 = arith.constant 1 : index
    %c0_142 = arith.constant 0 : index
    %c0_143 = arith.constant 0 : index
    %c0_144 = arith.constant 0 : index
    %105 = vector.load %arg4[%c1_141, %c0_142, %c0_143, %c0_144] : memref<3x3x128x128xbf16, #tpu.memory_space<vmem>>, vector<1x1x128x128xbf16>
    %106 = vector.shape_cast %105 : vector<1x1x128x128xbf16> to vector<128x128xbf16>
    %cst_145 = arith.constant dense<0.000000e+00> : vector<256x128xf32>
    %107 = tpu.matmul %104, %106, %cst_145 {dimension_numbers = #tpu.dot_dimension_numbers<[1], [0], [0], [1], [0, 0, 1, 1], [], []>} : vector<256x128xbf16>, vector<128x128xbf16>, vector<256x128xf32> -> vector<256x128xf32>
    %108 = arith.addf %102, %107 : vector<256x128xf32>
    %c1_146 = arith.constant 1 : index
    %c1_147 = arith.constant 1 : index
    %c0_148 = arith.constant 0 : index
    %109 = vector.load %arg8[%c1_146, %c1_147, %c0_148] : memref<18x18x128xbf16, #tpu.memory_space<vmem>>, vector<16x16x128xbf16>
    %110 = vector.shape_cast %109 : vector<16x16x128xbf16> to vector<256x128xbf16>
    %c1_149 = arith.constant 1 : index
    %c1_150 = arith.constant 1 : index
    %c0_151 = arith.constant 0 : index
    %c0_152 = arith.constant 0 : index
    %111 = vector.load %arg4[%c1_149, %c1_150, %c0_151, %c0_152] : memref<3x3x128x128xbf16, #tpu.memory_space<vmem>>, vector<1x1x128x128xbf16>
    %112 = vector.shape_cast %111 : vector<1x1x128x128xbf16> to vector<128x128xbf16>
    %cst_153 = arith.constant dense<0.000000e+00> : vector<256x128xf32>
    %113 = tpu.matmul %110, %112, %cst_153 {dimension_numbers = #tpu.dot_dimension_numbers<[1], [0], [0], [1], [0, 0, 1, 1], [], []>} : vector<256x128xbf16>, vector<128x128xbf16>, vector<256x128xf32> -> vector<256x128xf32>
    %114 = arith.addf %108, %113 : vector<256x128xf32>
    %c1_154 = arith.constant 1 : index
    %c2_155 = arith.constant 2 : index
    %c0_156 = arith.constant 0 : index
    %115 = vector.load %arg8[%c1_154, %c2_155, %c0_156] : memref<18x18x128xbf16, #tpu.memory_space<vmem>>, vector<16x16x128xbf16>
    %116 = vector.shape_cast %115 : vector<16x16x128xbf16> to vector<256x128xbf16>
    %c1_157 = arith.constant 1 : index
    %c2_158 = arith.constant 2 : index
    %c0_159 = arith.constant 0 : index
    %c0_160 = arith.constant 0 : index
    %117 = vector.load %arg4[%c1_157, %c2_158, %c0_159, %c0_160] : memref<3x3x128x128xbf16, #tpu.memory_space<vmem>>, vector<1x1x128x128xbf16>
    %118 = vector.shape_cast %117 : vector<1x1x128x128xbf16> to vector<128x128xbf16>
    %cst_161 = arith.constant dense<0.000000e+00> : vector<256x128xf32>
    %119 = tpu.matmul %116, %118, %cst_161 {dimension_numbers = #tpu.dot_dimension_numbers<[1], [0], [0], [1], [0, 0, 1, 1], [], []>} : vector<256x128xbf16>, vector<128x128xbf16>, vector<256x128xf32> -> vector<256x128xf32>
    %120 = arith.addf %114, %119 : vector<256x128xf32>
    %c2_162 = arith.constant 2 : index
    %c0_163 = arith.constant 0 : index
    %c0_164 = arith.constant 0 : index
    %121 = vector.load %arg8[%c2_162, %c0_163, %c0_164] : memref<18x18x128xbf16, #tpu.memory_space<vmem>>, vector<16x16x128xbf16>
    %122 = vector.shape_cast %121 : vector<16x16x128xbf16> to vector<256x128xbf16>
    %c2_165 = arith.constant 2 : index
    %c0_166 = arith.constant 0 : index
    %c0_167 = arith.constant 0 : index
    %c0_168 = arith.constant 0 : index
    %123 = vector.load %arg4[%c2_165, %c0_166, %c0_167, %c0_168] : memref<3x3x128x128xbf16, #tpu.memory_space<vmem>>, vector<1x1x128x128xbf16>
    %124 = vector.shape_cast %123 : vector<1x1x128x128xbf16> to vector<128x128xbf16>
    %cst_169 = arith.constant dense<0.000000e+00> : vector<256x128xf32>
    %125 = tpu.matmul %122, %124, %cst_169 {dimension_numbers = #tpu.dot_dimension_numbers<[1], [0], [0], [1], [0, 0, 1, 1], [], []>} : vector<256x128xbf16>, vector<128x128xbf16>, vector<256x128xf32> -> vector<256x128xf32>
    %126 = arith.addf %120, %125 : vector<256x128xf32>
    %c2_170 = arith.constant 2 : index
    %c1_171 = arith.constant 1 : index
    %c0_172 = arith.constant 0 : index
    %127 = vector.load %arg8[%c2_170, %c1_171, %c0_172] : memref<18x18x128xbf16, #tpu.memory_space<vmem>>, vector<16x16x128xbf16>
    %128 = vector.shape_cast %127 : vector<16x16x128xbf16> to vector<256x128xbf16>
    %c2_173 = arith.constant 2 : index
    %c1_174 = arith.constant 1 : index
    %c0_175 = arith.constant 0 : index
    %c0_176 = arith.constant 0 : index
    %129 = vector.load %arg4[%c2_173, %c1_174, %c0_175, %c0_176] : memref<3x3x128x128xbf16, #tpu.memory_space<vmem>>, vector<1x1x128x128xbf16>
    %130 = vector.shape_cast %129 : vector<1x1x128x128xbf16> to vector<128x128xbf16>
    %cst_177 = arith.constant dense<0.000000e+00> : vector<256x128xf32>
    %131 = tpu.matmul %128, %130, %cst_177 {dimension_numbers = #tpu.dot_dimension_numbers<[1], [0], [0], [1], [0, 0, 1, 1], [], []>} : vector<256x128xbf16>, vector<128x128xbf16>, vector<256x128xf32> -> vector<256x128xf32>
    %132 = arith.addf %126, %131 : vector<256x128xf32>
    %c2_178 = arith.constant 2 : index
    %c2_179 = arith.constant 2 : index
    %c0_180 = arith.constant 0 : index
    %133 = vector.load %arg8[%c2_178, %c2_179, %c0_180] : memref<18x18x128xbf16, #tpu.memory_space<vmem>>, vector<16x16x128xbf16>
    %134 = vector.shape_cast %133 : vector<16x16x128xbf16> to vector<256x128xbf16>
    %c2_181 = arith.constant 2 : index
    %c2_182 = arith.constant 2 : index
    %c0_183 = arith.constant 0 : index
    %c0_184 = arith.constant 0 : index
    %135 = vector.load %arg4[%c2_181, %c2_182, %c0_183, %c0_184] : memref<3x3x128x128xbf16, #tpu.memory_space<vmem>>, vector<1x1x128x128xbf16>
    %136 = vector.shape_cast %135 : vector<1x1x128x128xbf16> to vector<128x128xbf16>
    %cst_185 = arith.constant dense<0.000000e+00> : vector<256x128xf32>
    %137 = tpu.matmul %134, %136, %cst_185 {dimension_numbers = #tpu.dot_dimension_numbers<[1], [0], [0], [1], [0, 0, 1, 1], [], []>} : vector<256x128xbf16>, vector<128x128xbf16>, vector<256x128xf32> -> vector<256x128xf32>
    %138 = arith.addf %132, %137 : vector<256x128xf32>
    %cst_186 = arith.constant 2.000000e-01 : f32
    %139 = vector.broadcast %cst_186 : f32 to vector<256x128xf32>
    %140 = arith.mulf %139, %138 : vector<256x128xf32>
    %141 = arith.maximumf %138, %140 : vector<256x128xf32>
    %142 = vector.shape_cast %141 : vector<256x128xf32> to vector<16x16x128xf32>
    %c0_187 = arith.constant 0 : index
    %c0_188 = arith.constant 0 : index
    %c0_189 = arith.constant 0 : index
    %c0_190 = arith.constant 0 : index
    %143 = vector.load %arg6[%c0_187, %c0_188, %c0_189, %c0_190] : memref<1x16x16x128xf32, #tpu.memory_space<vmem>>, vector<1x16x16x128xf32>
    %144 = vector.shape_cast %143 : vector<1x16x16x128xf32> to vector<16x16x128xf32>
    %145 = vector.shape_cast %142 : vector<16x16x128xf32> to vector<1x16x16x128xf32>
    tpu.vector_store %arg6[%c0_187, %c0_188, %c0_189, %c0_190], %145 {strides = array<i32>} : memref<1x16x16x128xf32, #tpu.memory_space<vmem>>, vector<1x16x16x128xf32>,
    return
  }
  func.func @transform_0(%arg0: i32) -> (i32, i32, i32, i32) {
    %c0_i32 = arith.constant 0 : i32
    %c0_i32_0 = arith.constant 0 : i32
    %c0_i32_1 = arith.constant 0 : i32
    %c0_i32_2 = arith.constant 0 : i32
    return %arg0, %c0_i32, %c0_i32_0, %c0_i32_1 : i32, i32, i32, i32
  }
  func.func @transform_1(%arg0: i32) -> (i32, i32, i32, i32) {
    %c0_i32 = arith.constant 0 : i32
    %c0_i32_0 = arith.constant 0 : i32
    %c0_i32_1 = arith.constant 0 : i32
    %c0_i32_2 = arith.constant 0 : i32
    %c0_i32_3 = arith.constant 0 : i32
    return %c0_i32, %c0_i32_0, %c0_i32_1, %c0_i32_2 : i32, i32, i32, i32
  }
  func.func @transform_2(%arg0: i32) -> (i32, i32) {
    %c0_i32 = arith.constant 0 : i32
    %c0_i32_0 = arith.constant 0 : i32
    %c0_i32_1 = arith.constant 0 : i32
    return %c0_i32, %c0_i32_0 : i32, i32
  }
  func.func @transform_3(%arg0: i32) -> (i32, i32, i32, i32) {
    %c0_i32 = arith.constant 0 : i32
    %c0_i32_0 = arith.constant 0 : i32
    %c0_i32_1 = arith.constant 0 : i32
    %c0_i32_2 = arith.constant 0 : i32
    %c0_i32_3 = arith.constant 0 : i32
    return %c0_i32, %c0_i32_0, %c0_i32_1, %c0_i32_2 : i32, i32, i32, i32
  }
  func.func @transform_4(%arg0: i32) -> (i32, i32) {
    %c0_i32 = arith.constant 0 : i32
    %c0_i32_0 = arith.constant 0 : i32
    %c0_i32_1 = arith.constant 0 : i32
    return %c0_i32, %c0_i32_0 : i32, i32
  }
  func.func @transform_5(%arg0: i32) -> (i32, i32, i32, i32) {
    %c0_i32 = arith.constant 0 : i32
    %c0_i32_0 = arith.constant 0 : i32
    %c0_i32_1 = arith.constant 0 : i32
    %c0_i32_2 = arith.constant 0 : i32
    return %arg0, %c0_i32, %c0_i32_0, %c0_i32_1 : i32, i32, i32, i32
  }
}

</mosaic_0001>

<llo_original>
// kernel: tile.13
$region0: #{tile.13}
  #allocation0 [shape = 's32[1]{0}', space=sflag, size = 0x4, scoped, tag = 'scoped memory for tile.13']
  %s0 = inlined_call_operand.vmem [shape: f32[8], index: 0, kind: input, shape index: {}]
  %s1 = inlined_call_operand.vmem [shape: f32[16,8], index: 1, kind: output, shape index: {}]
  // Predicated region
  $region2: #{tile.13} parent=0 // pred_check
    _
  $region3: #{tile.13} parent=0 // pred_check_branch
    %3 = sbr.rel (0) target = $region5
  $region4: #{tile.13} parent=0 // pred_region
    _
  $region5: #{tile.13} parent=0 // pred_fallthru
    _
  %v4 = vld [vmem:[%s0] ss:$0 sm:$0xff]
  %5 = vst [vmem:[%s1] sm:$0xff] %v4
  %s6 = scalar_lea.vmem %s1, 8
  %7 = vst [vmem:[%s6] sm:$0xff] %v4

// kernel: tile.14
$region0: #{tile.14}
  %s0 = inlined_call_operand.vmem [shape: f32[16,8], index: 0, kind: input, shape index: {}]
  %s1 = inlined_call_operand.vmem [shape: f32[1,128], index: 1, kind: output, shape index: {}]
  $region1: #{tile.14} parent=0
    #allocation0 [shape = 'u8[4096]{0}', space=vmem, size = 0x1000, scoped, tag = 'scoped mem for output reshape']
    %v2 = vld [vmem:[%s0] sm:$0x1]
    %vm3 = vcmask 64512
    %4 = vst.msk [vmem:[#allocation0] sm:$0x1] %vm3, %v2
    %s5 = scalar_lea.vmem %s0, 15
    %v6 = vld [vmem:[%s5] sm:$0x1]
    %7 = vrot.lane.b32.xlu0 %v6, 120
    %v8 = vpop.permute.xlu0 %7
    %vm9 = vcmask 1048512
    %10 = vst.msk [vmem:[#allocation0] sm:$0x1] %vm9, %v8
    %s11 = scalar_lea.vmem %s0, 14
    %v12 = vld [vmem:[%s11] sm:$0x1]
    %13 = vrot.lane.b32.xlu0 %v12, 112
    %v14 = vpop.permute.xlu0 %13
    %vm15 = vcmask 982912
    %16 = vst.msk [vmem:[#allocation0] sm:$0x1] %vm15, %v14
    %s17 = scalar_lea.vmem %s0, 13
    %v18 = vld [vmem:[%s17] sm:$0x1]
    %19 = vrot.lane.b32.xlu0 %v18, 104
    %v20 = vpop.permute.xlu0 %19
    %vm21 = vcmask 917312
    %22 = vst.msk [vmem:[#allocation0] sm:$0x1] %vm21, %v20
    %s23 = scalar_lea.vmem %s0, 12
    %v24 = vld [vmem:[%s23] sm:$0x1]
    %25 = vrot.lane.b32.xlu0 %v24, 96
    %v26 = vpop.permute.xlu0 %25
    %vm27 = vcmask 851712
    %28 = vst.msk [vmem:[#allocation0] sm:$0x1] %vm27, %v26
    %s29 = scalar_lea.vmem %s0, 11
    %v30 = vld [vmem:[%s29] sm:$0x1]
    %31 = vrot.lane.b32.xlu0 %v30, 88
    %v32 = vpop.permute.xlu0 %31
    %vm33 = vcmask 786112
    %34 = vst.msk [vmem:[#allocation0] sm:$0x1] %vm33, %v32
    %s35 = scalar_lea.vmem %s0, 10
    %v36 = vld [vmem:[%s35] sm:$0x1]
    %37 = vrot.lane.b32.xlu0 %v36, 80
    %v38 = vpop.permute.xlu0 %37
    %vm39 = vcmask 720512
    %40 = vst.msk [vmem:[#allocation0] sm:$0x1] %vm39, %v38
    %s41 = scalar_lea.vmem %s0, 9
    %v42 = vld [vmem:[%s41] sm:$0x1]
    %43 = vrot.lane.b32.xlu0 %v42, 72
    %v44 = vpop.permute.xlu0 %43
    %vm45 = vcmask 654912
    %46 = vst.msk [vmem:[#allocation0] sm:$0x1] %vm45, %v44
    %s47 = scalar_lea.vmem %s0, 8
    %v48 = vld [vmem:[%s47] sm:$0x1]
    %49 = vrot.lane.b32.xlu0 %v48, 64
    %v50 = vpop.permute.xlu0 %49
    %vm51 = vcmask 589312
    %52 = vst.msk [vmem:[#allocation0] sm:$0x1] %vm51, %v50
    %s53 = scalar_lea.vmem %s0, 7
    %v54 = vld [vmem:[%s53] sm:$0x1]
    %55 = vrot.lane.b32.xlu0 %v54, 56
    %v56 = vpop.permute.xlu0 %55
    %vm57 = vcmask 523712
    %58 = vst.msk [vmem:[#allocation0] sm:$0x1] %vm57, %v56
    %s59 = scalar_lea.vmem %s0, 6
    %v60 = vld [vmem:[%s59] sm:$0x1]
    %61 = vrot.lane.b32.xlu0 %v60, 48
    %v62 = vpop.permute.xlu0 %61
    %vm63 = vcmask 458112
    %64 = vst.msk [vmem:[#allocation0] sm:$0x1] %vm63, %v62
    %s65 = scalar_lea.vmem %s0, 5
    %v66 = vld [vmem:[%s65] sm:$0x1]
    %67 = vrot.lane.b32.xlu0 %v66, 40
    %v68 = vpop.permute.xlu0 %67
    %vm69 = vcmask 392512
    %70 = vst.msk [vmem:[#allocation0] sm:$0x1] %vm69, %v68
    %s71 = scalar_lea.vmem %s0, 4
    %v72 = vld [vmem:[%s71] sm:$0x1]
    %73 = vrot.lane.b32.xlu0 %v72, 32
    %v74 = vpop.permute.xlu0 %73
    %vm75 = vcmask 326912
    %76 = vst.msk [vmem:[#allocation0] sm:$0x1] %vm75, %v74
    %s77 = scalar_lea.vmem %s0, 3
    %v78 = vld [vmem:[%s77] sm:$0x1]
    %79 = vrot.lane.b32.xlu0 %v78, 24
    %v80 = vpop.permute.xlu0 %79
    %vm81 = vcmask 261312
    %82 = vst.msk [vmem:[#allocation0] sm:$0x1] %vm81, %v80
    %s83 = scalar_lea.vmem %s0, 2
    %v84 = vld [vmem:[%s83] sm:$0x1]
    %85 = vrot.lane.b32.xlu0 %v84, 16
    %v86 = vpop.permute.xlu0 %85
    %vm87 = vcmask 195712
    %88 = vst.msk [vmem:[#allocation0] sm:$0x1] %vm87, %v86
    %s89 = scalar_lea.vmem %s0, 1
    %v90 = vld [vmem:[%s89] sm:$0x1]
    %91 = vrot.lane.b32.xlu0 %v90, 8
    %v92 = vpop.permute.xlu0 %91
    %vm93 = vcmask 130112
    %94 = vst.msk [vmem:[#allocation0] sm:$0x1] %vm93, %v92
    %s96 = sshllo.u32 0, 1
    %v98 = vld [vmem:[#allocation0] sm:%s96]
    %s99 = sshllo.u32 0, 1
    %100 = vst [vmem:[%s1] sm:%s99] %v98

// kernel: conv_block_forward.1
$region0: #{conv_block_forward.1}
  #allocation0 [shape = 'u32[]', space=smem, size = 0x4, offset = 0x4, fixed_abs, tag = 'smem constant byte address 0x4 - core index']
  #allocation1 [shape = 'u32[144,128]{1,0:T(1,128)}', space=vmem, size = 0x12000, scoped, tag = 'internal scratch']
  #allocation2 [shape = 'bf16[18,18,64]{2,1,0:T(8,128)(2,1)}', space=vmem, size = 0x1b000, scoped, tag = 'scratch operand']
  #allocation3 [shape = 'bf16[18,18,128]{2,1,0:T(8,128)(2,1)}', space=vmem, size = 0x1b000, scoped, tag = 'scratch operand']
  %s0 = inlined_call_operand.vmem [shape: bf16[2,16,16,64], index: 0, kind: input, shape index: {}]
  %s1 = inlined_call_operand.vmem [shape: bf16[3,3,64,128], index: 1, kind: input, shape index: {}]
  %s2 = inlined_call_operand.vmem [shape: f32[1,128], index: 2, kind: input, shape index: {}]
  %s3 = inlined_call_operand.vmem [shape: bf16[3,3,128,128], index: 3, kind: input, shape index: {}]
  %s4 = inlined_call_operand.vmem [shape: f32[1,128], index: 4, kind: input, shape index: {}]
  %s5 = inlined_call_operand.vmem [shape: f32[2,16,16,128], index: 5, kind: output, shape index: {}]
  %s6 = sld [smem:[#allocation0]]
  $region53: #{conv_block_forward.1} parent=0
    _
  %s8 = ssub.s32 1, %s6
  %s9 = scalar_select 0, %s8, %s6
  loop: start=0, step=1, limit=4
  $region2: #{conv_block_forward.1} parent=0 // loop_pre_header
    _
  $region3: #{conv_block_forward.1} parent=0 // loop_header
    %s11 = sphi 0, %s15
    %p12 = scmp.ge.s32.totalorder %s11, 4
    %s21 = sphi 0, %s23
    %s24 = sphi 0, %s21
    %s25 = sphi 0, %s24
    %s41 = sphi 0, %s25
    %s45 = sphi 0, %s45
    %s47 = sphi 0, %s45
    %s48 = sphi 0, %s47
    %s62 = sphi 0, %s48
    %s66 = sphi 0, %s66
    %s68 = sphi 0, %s66
    %s69 = sphi 0, %s68
    %s83 = sphi 0, %s69
    %s87 = sphi 0, %s87
    %s89 = sphi 0, %s87
    %s90 = sphi 0, %s89
    %s104 = sphi 0, %s90
    %s108 = sphi 0, %s108
    %s110 = sphi 0, %s108
    %s111 = sphi 0, %s110
    %s125 = sphi 0, %s111
    %s131 = sphi 0, %s133
    %s134 = sphi 0, %s131
    %s135 = sphi 0, %s134
    %s151 = sphi 0, %s135
  $region4: #{conv_block_forward.1} parent=0 // loop_header_branch
    %14 = sbr.rel (%p12) target = $region8
  $region5: #{conv_block_forward.1} parent=0 // loop_body
    %s16 = ssub.s32 %s11, 1
    %s17 = ssub.s32 %s11, 2
    %s18 = sadd.s32 %s11, 1
    %s19 = ssub.s32 %s11, %s18
    %p20 = scmp.eq.s32.totalorder %s19, 0
    %s22 = sadd.s32 %s21, 1
    %s23 = scalar_select %p20, %s21, %s22
    %p26 = pneg %p20
    %p27 = scmp.eq.s32.totalorder %s11, 1
    %p28 = por %p26, %p27
    %p29 = scmp.ne.s32.totalorder %s21, %s24
    %p30 = scmp.eq.s32.totalorder %s11, 0
    %p31 = por %p29, %p30
    %p32 = scmp.ne.s32.totalorder %s21, %s24
    %p33 = scmp.eq.s32.totalorder %s16, 1
    %p34 = por %p32, %p33
    %p35 = scmp.ne.s32.totalorder %s24, %s25
    %p36 = scmp.eq.s32.totalorder %s16, 0
    %p37 = por %p35, %p36
    %p38 = scmp.ne.s32.totalorder %s24, %s25
    %p39 = scmp.eq.s32.totalorder %s17, 1
    %p40 = por %p38, %p39
    %p42 = scmp.ne.s32.totalorder %s25, %s41
    %p43 = scmp.eq.s32.totalorder %s17, 0
    %p44 = por %p42, %p43
    %s46 = sadd.s32 %s45, 1
    %p49 = scmp.eq.s32.totalorder %s11, 1
    %p50 = scmp.ne.s32.totalorder %s45, %s47
    %p51 = scmp.eq.s32.totalorder %s11, 0
    %p52 = por %p50, %p51
    %p53 = scmp.ne.s32.totalorder %s45, %s47
    %p54 = scmp.eq.s32.totalorder %s16, 1
    %p55 = por %p53, %p54
    %p56 = scmp.ne.s32.totalorder %s47, %s48
    %p57 = scmp.eq.s32.totalorder %s16, 0
    %p58 = por %p56, %p57
    %p59 = scmp.ne.s32.totalorder %s47, %s48
    %p60 = scmp.eq.s32.totalorder %s17, 1
    %p61 = por %p59, %p60
    %p63 = scmp.ne.s32.totalorder %s48, %s62
    %p64 = scmp.eq.s32.totalorder %s17, 0
    %p65 = por %p63, %p64
    %s67 = sadd.s32 %s66, 1
    %p70 = scmp.eq.s32.totalorder %s11, 1
    %p71 = scmp.ne.s32.totalorder %s66, %s68
    %p72 = scmp.eq.s32.totalorder %s11, 0
    %p73 = por %p71, %p72
    %p74 = scmp.ne.s32.totalorder %s66, %s68
    %p75 = scmp.eq.s32.totalorder %s16, 1
    %p76 = por %p74, %p75
    %p77 = scmp.ne.s32.totalorder %s68, %s69
    %p78 = scmp.eq.s32.totalorder %s16, 0
    %p79 = por %p77, %p78
    %p80 = scmp.ne.s32.totalorder %s68, %s69
    %p81 = scmp.eq.s32.totalorder %s17, 1
    %p82 = por %p80, %p81
    %p84 = scmp.ne.s32.totalorder %s69, %s83
    %p85 = scmp.eq.s32.totalorder %s17, 0
    %p86 = por %p84, %p85
    %s88 = sadd.s32 %s87, 1
    %p91 = scmp.eq.s32.totalorder %s11, 1
    %p92 = scmp.ne.s32.totalorder %s87, %s89
    %p93 = scmp.eq.s32.totalorder %s11, 0
    %p94 = por %p92, %p93
    %p95 = scmp.ne.s32.totalorder %s87, %s89
    %p96 = scmp.eq.s32.totalorder %s16, 1
    %p97 = por %p95, %p96
    %p98 = scmp.ne.s32.totalorder %s89, %s90
    %p99 = scmp.eq.s32.totalorder %s16, 0
    %p100 = por %p98, %p99
    %p101 = scmp.ne.s32.totalorder %s89, %s90
    %p102 = scmp.eq.s32.totalorder %s17, 1
    %p103 = por %p101, %p102
    %p105 = scmp.ne.s32.totalorder %s90, %s104
    %p106 = scmp.eq.s32.totalorder %s17, 0
    %p107 = por %p105, %p106
    %s109 = sadd.s32 %s108, 1
    %p112 = scmp.eq.s32.totalorder %s11, 1
    %p113 = scmp.ne.s32.totalorder %s108, %s110
    %p114 = scmp.eq.s32.totalorder %s11, 0
    %p115 = por %p113, %p114
    %p116 = scmp.ne.s32.totalorder %s108, %s110
    %p117 = scmp.eq.s32.totalorder %s16, 1
    %p118 = por %p116, %p117
    %p119 = scmp.ne.s32.totalorder %s110, %s111
    %p120 = scmp.eq.s32.totalorder %s16, 0
    %p121 = por %p119, %p120
    %p122 = scmp.ne.s32.totalorder %s110, %s111
    %p123 = scmp.eq.s32.totalorder %s17, 1
    %p124 = por %p122, %p123
    %p126 = scmp.ne.s32.totalorder %s111, %s125
    %p127 = scmp.eq.s32.totalorder %s17, 0
    %p128 = por %p126, %p127
    %s129 = ssub.s32 %s11, %s18
    %p130 = scmp.eq.s32.totalorder %s129, 0
    %s132 = sadd.s32 %s131, 1
    %s133 = scalar_select %p130, %s131, %s132
    %p136 = pneg %p130
    %p137 = scmp.eq.s32.totalorder %s11, 1
    %p138 = por %p136, %p137
    %p139 = scmp.ne.s32.totalorder %s131, %s134
    %p140 = scmp.eq.s32.totalorder %s11, 0
    %p141 = por %p139, %p140
    %p142 = scmp.ne.s32.totalorder %s131, %s134
    %p143 = scmp.eq.s32.totalorder %s16, 1
    %p144 = por %p142, %p143
    %p145 = scmp.ne.s32.totalorder %s134, %s135
    %p146 = scmp.eq.s32.totalorder %s16, 0
    %p147 = por %p145, %p146
    %p148 = scmp.ne.s32.totalorder %s134, %s135
    %p149 = scmp.eq.s32.totalorder %s17, 1
    %p150 = por %p148, %p149
    %p152 = scmp.ne.s32.totalorder %s135, %s151
    %p153 = scmp.eq.s32.totalorder %s17, 0
    %p154 = por %p152, %p153
    %p155 = scmp.le.s32.totalorder 1, %s11
    %p156 = scmp.lt.s32.totalorder %s11, 3
    %p157 = pnand %p155, %p156
    %p158 = pneg %p157
    // Predicated region
    $region9: #{conv_block_forward.1} parent=5 // pred_check
      _
    $region10: #{conv_block_forward.1} parent=5 // pred_check_branch
      %160 = sbr.rel (%p157) target = $region12
    $region11: #{conv_block_forward.1} parent=5 // pred_region
      %s161 = ssub.s32 %s11, 1
      // Predicated region
      $region13: #{conv_block_forward.1} parent=11 // pred_check
        %p162 = pneg %p58
      $region14: #{conv_block_forward.1} parent=11 // pred_check_branch
        %164 = sbr.rel (%p162) target = $region16
      $region15: #{conv_block_forward.1} parent=11 // pred_region
        _
      $region16: #{conv_block_forward.1} parent=11 // pred_fallthru
        _
      // Predicated region
      $region17: #{conv_block_forward.1} parent=11 // pred_check
        %p165 = pneg %p79
      $region18: #{conv_block_forward.1} parent=11 // pred_check_branch
        %167 = sbr.rel (%p165) target = $region20
      $region19: #{conv_block_forward.1} parent=11 // pred_region
        _
      $region20: #{conv_block_forward.1} parent=11 // pred_fallthru
        _
      // Predicated region
      $region21: #{conv_block_forward.1} parent=11 // pred_check
        %p168 = pneg %p100
      $region22: #{conv_block_forward.1} parent=11 // pred_check_branch
        %170 = sbr.rel (%p168) target = $region24
      $region23: #{conv_block_forward.1} parent=11 // pred_region
        _
      $region24: #{conv_block_forward.1} parent=11 // pred_fallthru
        _
      // Predicated region
      $region25: #{conv_block_forward.1} parent=11 // pred_check
        %p171 = pneg %p121
      $region26: #{conv_block_forward.1} parent=11 // pred_check_branch
        %173 = sbr.rel (%p171) target = $region28
      $region27: #{conv_block_forward.1} parent=11 // pred_region
        _
      $region28: #{conv_block_forward.1} parent=11 // pred_fallthru
        _
    $region12: #{conv_block_forward.1} parent=5 // pred_fallthru
      _
    %p174 = scmp.lt.s32.totalorder %s11, 2
    // Predicated region
    $region29: #{conv_block_forward.1} parent=5 // pred_check
      %p175 = pneg %p174
    $region30: #{conv_block_forward.1} parent=5 // pred_check_branch
      %177 = sbr.rel (%p175) target = $region32
    $region31: #{conv_block_forward.1} parent=5 // pred_region
      // Predicated region
      $region33: #{conv_block_forward.1} parent=31 // pred_check
        %p178 = pneg %p31
      $region34: #{conv_block_forward.1} parent=31 // pred_check_branch
        %180 = sbr.rel (%p178) target = $region36
      $region35: #{conv_block_forward.1} parent=31 // pred_region
        %p181 = scmp.lt.s32.totalorder %s11, 1
        %s182 = scalar_select %p181, %s11, 1
        %s183 = smul.addr %s182, 32
        %s184 = smul.addr %s183, 4
        %s185 = scalar_lea.vmem %s0, %s184
      $region36: #{conv_block_forward.1} parent=31 // pred_fallthru
        _
    $region32: #{conv_block_forward.1} parent=5 // pred_fallthru
      _
    %p186 = scmp.le.s32.totalorder 1, %s11
    %p187 = scmp.lt.s32.totalorder %s11, 3
    %p188 = pnand %p186, %p187
    %p189 = pneg %p188
    // Predicated region
    $region37: #{conv_block_forward.1} parent=5 // pred_check
      _
    $region38: #{conv_block_forward.1} parent=5 // pred_check_branch
      %191 = sbr.rel (%p188) target = $region40
    $region39: #{conv_block_forward.1} parent=5 // pred_region
      %s192 = ssub.s32 %s11, 1
      %p193 = scmp.lt.s32.totalorder %s16, 1
      %s194 = scalar_select %p193, %s16, 1
      %s195 = smul.addr %s194, 32
      %s196 = smul.addr %s195, 4
      %s197 = scalar_lea.vmem %s0, %s196
      %p198 = pneg %p37
      %p199 = pneg %p34
      %p200 = pneg %p58
      %p201 = pneg %p55
      %p202 = pneg %p79
      %p203 = pneg %p76
      %p204 = pneg %p100
      %p205 = pneg %p97
      %p206 = pneg %p121
      %p207 = pneg %p118
      %p208 = pneg %p147
      %p209 = pneg %p144
      %p210 = scmp.lt.s32.totalorder %s16, 1
      %s211 = scalar_select %p210, %s16, 1
      %s212 = smul.addr %s211, 32
      %s213 = smul.addr %s212, 8
      %s214 = scalar_lea.vmem %s5, %s213
      %p215 = scmp.lt.s32.totalorder %s16, 1
      %s216 = scalar_select %p215, %s16, 1
      %s217 = smul.addr %s216, 32
      %s218 = smul.addr %s217, 4
      %s219 = scalar_lea.vmem %s0, %s218
      %p220 = scmp.lt.s32.totalorder %s16, 1
      %s221 = scalar_select %p220, %s16, 1
      %s222 = smul.addr %s221, 32
      %s223 = smul.addr %s222, 8
      %s224 = scalar_lea.vmem %s5, %s223
      %vm226 = vcmask 519168
      %227 = vst.msk [vmem:[#allocation2] sm:$0xf] %vm226, 0
      %228 = vst.msk [vmem:[#allocation2 + $0x4] sm:$0xf] %vm226, 0
      %vm229 = vcmask 516096
      %230 = vst.msk [vmem:[#allocation2 + $0x8] sm:$0x1] %vm229, 0
      %s231 = scalar_lea.vmem [#allocation2], 204
      %232 = vst.msk [vmem:[%s231] sm:$0xf] %vm226, 0
      %233 = vst.msk [vmem:[%s231 + $0x4] sm:$0xf] %vm226, 0
      %234 = vst.msk [vmem:[%s231 + $0x8] sm:$0x1] %vm229, 0
      %s235 = scalar_lea.vmem [#allocation2], 12
      %vm236 = vcmask 516096
      %vm237 = vsmask.f32 256
      %vm238 = vmand %vm236, %vm237
      %v239 = vld [vmem:[%s235] sm:$0x1]
      %v240 = vsel %vm238, 0, %v239
      %241 = vst [vmem:[%s235] sm:$0x1] %v240
      %v242 = vld [vmem:[%s235 + $0xc] sm:$0x1]
      %v243 = vsel %vm238, 0, %v242
      %244 = vst [vmem:[%s235 + $0xc] sm:$0x1] %v243
      %v245 = vld [vmem:[%s235 + $0x18] sm:$0x1]
      %v246 = vsel %vm238, 0, %v245
      %247 = vst [vmem:[%s235 + $0x18] sm:$0x1] %v246
      %v248 = vld [vmem:[%s235 + $0x24] sm:$0x1]
      %v249 = vsel %vm238, 0, %v248
      %250 = vst [vmem:[%s235 + $0x24] sm:$0x1] %v249
      %v251 = vld [vmem:[%s235 + $0x30] sm:$0x1]
      %v252 = vsel %vm238, 0, %v251
      %253 = vst [vmem:[%s235 + $0x30] sm:$0x1] %v252
      %v254 = vld [vmem:[%s235 + $0x3c] sm:$0x1]
      %v255 = vsel %vm238, 0, %v254
      %256 = vst [vmem:[%s235 + $0x3c] sm:$0x1] %v255
      %v257 = vld [vmem:[%s235 + $0x48] sm:$0x1]
      %v258 = vsel %vm238, 0, %v257
      %259 = vst [vmem:[%s235 + $0x48] sm:$0x1] %v258
      %v260 = vld [vmem:[%s235 + $0x54] sm:$0x1]
      %v261 = vsel %vm238, 0, %v260
      %262 = vst [vmem:[%s235 + $0x54] sm:$0x1] %v261
      %v263 = vld [vmem:[%s235 + $0x60] sm:$0x1]
      %v264 = vsel %vm238, 0, %v263
      %265 = vst [vmem:[%s235 + $0x60] sm:$0x1] %v264
      %v266 = vld [vmem:[%s235 + $0x6c] sm:$0x1]
      %v267 = vsel %vm238, 0, %v266
      %268 = vst [vmem:[%s235 + $0x6c] sm:$0x1] %v267
      %v269 = vld [vmem:[%s235 + $0x78] sm:$0x1]
      %v270 = vsel %vm238, 0, %v269
      %271 = vst [vmem:[%s235 + $0x78] sm:$0x1] %v270
      %v272 = vld [vmem:[%s235 + $0x84] sm:$0x1]
      %v273 = vsel %vm238, 0, %v272
      %274 = vst [vmem:[%s235 + $0x84] sm:$0x1] %v273
      %v275 = vld [vmem:[%s235 + $0x90] sm:$0x1]
      %v276 = vsel %vm238, 0, %v275
      %277 = vst [vmem:[%s235 + $0x90] sm:$0x1] %v276
      %v278 = vld [vmem:[%s235 + $0x9c] sm:$0x1]
      %v279 = vsel %vm238, 0, %v278
      %280 = vst [vmem:[%s235 + $0x9c] sm:$0x1] %v279
      %v281 = vld [vmem:[%s235 + $0xa8] sm:$0x1]
      %v282 = vsel %vm238, 0, %v281
      %283 = vst [vmem:[%s235 + $0xa8] sm:$0x1] %v282
      %v284 = vld [vmem:[%s235 + $0xb4] sm:$0x1]
      %v285 = vsel %vm238, 0, %v284
      %286 = vst [vmem:[%s235 + $0xb4] sm:$0x1] %v285
      %vm287 = vsmask.f32 7938
      %vm288 = vmand %vm236, %vm287
      %v289 = vld [vmem:[%s235 + $0x8] sm:$0x1]
      %v290 = vsel %vm288, 0, %v289
      %291 = vst [vmem:[%s235 + $0x8] sm:$0x1] %v290
      %v292 = vld [vmem:[%s235 + $0x14] sm:$0x1]
      %v293 = vsel %vm288, 0, %v292
      %294 = vst [vmem:[%s235 + $0x14] sm:$0x1] %v293
      %v295 = vld [vmem:[%s235 + $0x20] sm:$0x1]
      %v296 = vsel %vm288, 0, %v295
      %297 = vst [vmem:[%s235 + $0x20] sm:$0x1] %v296
      %v298 = vld [vmem:[%s235 + $0x2c] sm:$0x1]
      %v299 = vsel %vm288, 0, %v298
      %300 = vst [vmem:[%s235 + $0x2c] sm:$0x1] %v299
      %v301 = vld [vmem:[%s235 + $0x38] sm:$0x1]
      %v302 = vsel %vm288, 0, %v301
      %303 = vst [vmem:[%s235 + $0x38] sm:$0x1] %v302
      %v304 = vld [vmem:[%s235 + $0x44] sm:$0x1]
      %v305 = vsel %vm288, 0, %v304
      %306 = vst [vmem:[%s235 + $0x44] sm:$0x1] %v305
      %v307 = vld [vmem:[%s235 + $0x50] sm:$0x1]
      %v308 = vsel %vm288, 0, %v307
      %309 = vst [vmem:[%s235 + $0x50] sm:$0x1] %v308
      %v310 = vld [vmem:[%s235 + $0x5c] sm:$0x1]
      %v311 = vsel %vm288, 0, %v310
      %312 = vst [vmem:[%s235 + $0x5c] sm:$0x1] %v311
      %v313 = vld [vmem:[%s235 + $0x68] sm:$0x1]
      %v314 = vsel %vm288, 0, %v313
      %315 = vst [vmem:[%s235 + $0x68] sm:$0x1] %v314
      %v316 = vld [vmem:[%s235 + $0x74] sm:$0x1]
      %v317 = vsel %vm288, 0, %v316
      %318 = vst [vmem:[%s235 + $0x74] sm:$0x1] %v317
      %v319 = vld [vmem:[%s235 + $0x80] sm:$0x1]
      %v320 = vsel %vm288, 0, %v319
      %321 = vst [vmem:[%s235 + $0x80] sm:$0x1] %v320
      %v322 = vld [vmem:[%s235 + $0x8c] sm:$0x1]
      %v323 = vsel %vm288, 0, %v322
      %324 = vst [vmem:[%s235 + $0x8c] sm:$0x1] %v323
      %v325 = vld [vmem:[%s235 + $0x98] sm:$0x1]
      %v326 = vsel %vm288, 0, %v325
      %327 = vst [vmem:[%s235 + $0x98] sm:$0x1] %v326
      %v328 = vld [vmem:[%s235 + $0xa4] sm:$0x1]
      %v329 = vsel %vm288, 0, %v328
      %330 = vst [vmem:[%s235 + $0xa4] sm:$0x1] %v329
      %v331 = vld [vmem:[%s235 + $0xb0] sm:$0x1]
      %v332 = vsel %vm288, 0, %v331
      %333 = vst [vmem:[%s235 + $0xb0] sm:$0x1] %v332
      %v334 = vld [vmem:[%s235 + $0xbc] sm:$0x1]
      %v335 = vsel %vm288, 0, %v334
      %336 = vst [vmem:[%s235 + $0xbc] sm:$0x1] %v335
      %337 = vst [vmem:[#allocation3] sm:$0xf] 0
      %338 = vst [vmem:[#allocation3 + $0x4] sm:$0xf] 0
      %339 = vst [vmem:[#allocation3 + $0x8] sm:$0x1] 0
      %s340 = scalar_lea.vmem [#allocation3], 204
      %341 = vst [vmem:[%s340] sm:$0xf] 0
      %342 = vst [vmem:[%s340 + $0x4] sm:$0xf] 0
      %343 = vst [vmem:[%s340 + $0x8] sm:$0x1] 0
      %s344 = scalar_lea.vmem [#allocation3], 12
      %vm345 = vcmask 1040384
      %vm346 = vmand %vm345, %vm237
      %v347 = vld [vmem:[%s344] sm:$0x1]
      %v348 = vsel %vm346, 0, %v347
      %349 = vst [vmem:[%s344] sm:$0x1] %v348
      %v350 = vld [vmem:[%s344 + $0xc] sm:$0x1]
      %v351 = vsel %vm346, 0, %v350
      %352 = vst [vmem:[%s344 + $0xc] sm:$0x1] %v351
      %v353 = vld [vmem:[%s344 + $0x18] sm:$0x1]
      %v354 = vsel %vm346, 0, %v353
      %355 = vst [vmem:[%s344 + $0x18] sm:$0x1] %v354
      %v356 = vld [vmem:[%s344 + $0x24] sm:$0x1]
      %v357 = vsel %vm346, 0, %v356
      %358 = vst [vmem:[%s344 + $0x24] sm:$0x1] %v357
      %v359 = vld [vmem:[%s344 + $0x30] sm:$0x1]
      %v360 = vsel %vm346, 0, %v359
      %361 = vst [vmem:[%s344 + $0x30] sm:$0x1] %v360
      %v362 = vld [vmem:[%s344 + $0x3c] sm:$0x1]
      %v363 = vsel %vm346, 0, %v362
      %364 = vst [vmem:[%s344 + $0x3c] sm:$0x1] %v363
      %v365 = vld [vmem:[%s344 + $0x48] sm:$0x1]
      %v366 = vsel %vm346, 0, %v365
      %367 = vst [vmem:[%s344 + $0x48] sm:$0x1] %v366
      %v368 = vld [vmem:[%s344 + $0x54] sm:$0x1]
      %v369 = vsel %vm346, 0, %v368
      %370 = vst [vmem:[%s344 + $0x54] sm:$0x1] %v369
      %v371 = vld [vmem:[%s344 + $0x60] sm:$0x1]
      %v372 = vsel %vm346, 0, %v371
      %373 = vst [vmem:[%s344 + $0x60] sm:$0x1] %v372
      %v374 = vld [vmem:[%s344 + $0x6c] sm:$0x1]
      %v375 = vsel %vm346, 0, %v374
      %376 = vst [vmem:[%s344 + $0x6c] sm:$0x1] %v375
      %v377 = vld [vmem:[%s344 + $0x78] sm:$0x1]
      %v378 = vsel %vm346, 0, %v377
      %379 = vst [vmem:[%s344 + $0x78] sm:$0x1] %v378
      %v380 = vld [vmem:[%s344 + $0x84] sm:$0x1]
      %v381 = vsel %vm346, 0, %v380
      %382 = vst [vmem:[%s344 + $0x84] sm:$0x1] %v381
      %v383 = vld [vmem:[%s344 + $0x90] sm:$0x1]
      %v384 = vsel %vm346, 0, %v383
      %385 = vst [vmem:[%s344 + $0x90] sm:$0x1] %v384
      %v386 = vld [vmem:[%s344 + $0x9c] sm:$0x1]
      %v387 = vsel %vm346, 0, %v386
      %388 = vst [vmem:[%s344 + $0x9c] sm:$0x1] %v387
      %v389 = vld [vmem:[%s344 + $0xa8] sm:$0x1]
      %v390 = vsel %vm346, 0, %v389
      %391 = vst [vmem:[%s344 + $0xa8] sm:$0x1] %v390
      %v392 = vld [vmem:[%s344 + $0xb4] sm:$0x1]
      %v393 = vsel %vm346, 0, %v392
      %394 = vst [vmem:[%s344 + $0xb4] sm:$0x1] %v393
      %vm395 = vmand %vm345, %vm287
      %v396 = vld [vmem:[%s344 + $0x8] sm:$0x1]
      %v397 = vsel %vm395, 0, %v396
      %398 = vst [vmem:[%s344 + $0x8] sm:$0x1] %v397
      %v399 = vld [vmem:[%s344 + $0x14] sm:$0x1]
      %v400 = vsel %vm395, 0, %v399
      %401 = vst [vmem:[%s344 + $0x14] sm:$0x1] %v400
      %v402 = vld [vmem:[%s344 + $0x20] sm:$0x1]
      %v403 = vsel %vm395, 0, %v402
      %404 = vst [vmem:[%s344 + $0x20] sm:$0x1] %v403
      %v405 = vld [vmem:[%s344 + $0x2c] sm:$0x1]
      %v406 = vsel %vm395, 0, %v405
      %407 = vst [vmem:[%s344 + $0x2c] sm:$0x1] %v406
      %v408 = vld [vmem:[%s344 + $0x38] sm:$0x1]
      %v409 = vsel %vm395, 0, %v408
      %410 = vst [vmem:[%s344 + $0x38] sm:$0x1] %v409
      %v411 = vld [vmem:[%s344 + $0x44] sm:$0x1]
      %v412 = vsel %vm395, 0, %v411
      %413 = vst [vmem:[%s344 + $0x44] sm:$0x1] %v412
      %v414 = vld [vmem:[%s344 + $0x50] sm:$0x1]
      %v415 = vsel %vm395, 0, %v414
      %416 = vst [vmem:[%s344 + $0x50] sm:$0x1] %v415
      %v417 = vld [vmem:[%s344 + $0x5c] sm:$0x1]
      %v418 = vsel %vm395, 0, %v417
      %419 = vst [vmem:[%s344 + $0x5c] sm:$0x1] %v418
      %v420 = vld [vmem:[%s344 + $0x68] sm:$0x1]
      %v421 = vsel %vm395, 0, %v420
      %422 = vst [vmem:[%s344 + $0x68] sm:$0x1] %v421
      %v423 = vld [vmem:[%s344 + $0x74] sm:$0x1]
      %v424 = vsel %vm395, 0, %v423
      %425 = vst [vmem:[%s344 + $0x74] sm:$0x1] %v424
      %v426 = vld [vmem:[%s344 + $0x80] sm:$0x1]
      %v427 = vsel %vm395, 0, %v426
      %428 = vst [vmem:[%s344 + $0x80] sm:$0x1] %v427
      %v429 = vld [vmem:[%s344 + $0x8c] sm:$0x1]
      %v430 = vsel %vm395, 0, %v429
      %431 = vst [vmem:[%s344 + $0x8c] sm:$0x1] %v430
      %v432 = vld [vmem:[%s344 + $0x98] sm:$0x1]
      %v433 = vsel %vm395, 0, %v432
      %434 = vst [vmem:[%s344 + $0x98] sm:$0x1] %v433
      %v435 = vld [vmem:[%s344 + $0xa4] sm:$0x1]
      %v436 = vsel %vm395, 0, %v435
      %437 = vst [vmem:[%s344 + $0xa4] sm:$0x1] %v436
      %v438 = vld [vmem:[%s344 + $0xb0] sm:$0x1]
      %v439 = vsel %vm395, 0, %v438
      %440 = vst [vmem:[%s344 + $0xb0] sm:$0x1] %v439
      %v441 = vld [vmem:[%s344 + $0xbc] sm:$0x1]
      %v442 = vsel %vm395, 0, %v441
      %443 = vst [vmem:[%s344 + $0xbc] sm:$0x1] %v442
      %v444 = vld [vmem:[%s219] sm:$0xf]
      %v445 = vld [vmem:[%s219 + $0x4] sm:$0xf]
      %v446 = vld [vmem:[%s219 + $0x8] sm:$0xf]
      %v447 = vld [vmem:[%s219 + $0xc] sm:$0xf]
      %v448 = vld [vmem:[%s219 + $0x10] sm:$0xf]
      %v449 = vld [vmem:[%s219 + $0x14] sm:$0xf]
      %v450 = vld [vmem:[%s219 + $0x18] sm:$0xf]
      %v451 = vld [vmem:[%s219 + $0x1c] sm:$0xf]
      %v452 = vld [vmem:[%s219 + $0x20] sm:$0xf]
      %v453 = vld [vmem:[%s219 + $0x24] sm:$0xf]
      %v454 = vld [vmem:[%s219 + $0x28] sm:$0xf]
      %v455 = vld [vmem:[%s219 + $0x2c] sm:$0xf]
      %v456 = vld [vmem:[%s219 + $0x30] sm:$0xf]
      %v457 = vld [vmem:[%s219 + $0x34] sm:$0xf]
      %v458 = vld [vmem:[%s219 + $0x38] sm:$0xf]
      %v459 = vld [vmem:[%s219 + $0x3c] sm:$0xf]
      %v460 = vld [vmem:[%s219 + $0x40] sm:$0xf]
      %v461 = vld [vmem:[%s219 + $0x44] sm:$0xf]
      %v462 = vld [vmem:[%s219 + $0x48] sm:$0xf]
      %v463 = vld [vmem:[%s219 + $0x4c] sm:$0xf]
      %v464 = vld [vmem:[%s219 + $0x50] sm:$0xf]
      %v465 = vld [vmem:[%s219 + $0x54] sm:$0xf]
      %v466 = vld [vmem:[%s219 + $0x58] sm:$0xf]
      %v467 = vld [vmem:[%s219 + $0x5c] sm:$0xf]
      %v468 = vld [vmem:[%s219 + $0x60] sm:$0xf]
      %v469 = vld [vmem:[%s219 + $0x64] sm:$0xf]
      %v470 = vld [vmem:[%s219 + $0x68] sm:$0xf]
      %v471 = vld [vmem:[%s219 + $0x6c] sm:$0xf]
      %v472 = vld [vmem:[%s219 + $0x70] sm:$0xf]
      %v473 = vld [vmem:[%s219 + $0x74] sm:$0xf]
      %v474 = vld [vmem:[%s219 + $0x78] sm:$0xf]
      %v475 = vld [vmem:[%s219 + $0x7c] sm:$0xf]
      %vm476 = vsmask.f32 4368
      %vm477 = vmor %vm237, %vm476
      %v479 = vshrl.u32 %v444, 16
      %v481 = vrot.slane %v479, 7
      %v482 = vshll.u32 %v444, 16
      %v484 = vor.u32 %v481, %v482
      %v485 = vrot.slane %v481, 4
      %v487 = vshrl.u32 %v445, 16
      %v489 = vrot.slane %v487, 7
      %v490 = vshll.u32 %v445, 16
      %v492 = vor.u32 %v489, %v490
      %v493 = vsel %vm477, %v485, %v492
      %v494 = vrot.slane %v489, 4
      %v496 = vshrl.u32 %v446, 16
      %v498 = vrot.slane %v496, 7
      %v499 = vshll.u32 %v446, 16
      %v501 = vor.u32 %v498, %v499
      %v502 = vrot.slane %v498, 4
      %v504 = vshrl.u32 %v447, 16
      %v506 = vrot.slane %v504, 7
      %v507 = vshll.u32 %v447, 16
      %v509 = vor.u32 %v506, %v507
      %v510 = vsel %vm477, %v502, %v509
      %v511 = vrot.slane %v506, 4
      %v513 = vshrl.u32 %v448, 16
      %v515 = vrot.slane %v513, 7
      %v516 = vshll.u32 %v448, 16
      %v518 = vor.u32 %v515, %v516
      %v519 = vrot.slane %v515, 4
      %v521 = vshrl.u32 %v449, 16
      %v523 = vrot.slane %v521, 7
      %v524 = vshll.u32 %v449, 16
      %v526 = vor.u32 %v523, %v524
      %v527 = vsel %vm477, %v519, %v526
      %v528 = vrot.slane %v523, 4
      %v530 = vshrl.u32 %v450, 16
      %v532 = vrot.slane %v530, 7
      %v533 = vshll.u32 %v450, 16
      %v535 = vor.u32 %v532, %v533
      %v536 = vrot.slane %v532, 4
      %v538 = vshrl.u32 %v451, 16
      %v540 = vrot.slane %v538, 7
      %v541 = vshll.u32 %v451, 16
      %v543 = vor.u32 %v540, %v541
      %v544 = vsel %vm477, %v536, %v543
      %v545 = vrot.slane %v540, 4
      %v547 = vshrl.u32 %v452, 16
      %v549 = vrot.slane %v547, 7
      %v550 = vshll.u32 %v452, 16
      %v552 = vor.u32 %v549, %v550
      %v553 = vrot.slane %v549, 4
      %v555 = vshrl.u32 %v453, 16
      %v557 = vrot.slane %v555, 7
      %v558 = vshll.u32 %v453, 16
      %v560 = vor.u32 %v557, %v558
      %v561 = vsel %vm477, %v553, %v560
      %v562 = vrot.slane %v557, 4
      %v564 = vshrl.u32 %v454, 16
      %v566 = vrot.slane %v564, 7
      %v567 = vshll.u32 %v454, 16
      %v569 = vor.u32 %v566, %v567
      %v570 = vrot.slane %v566, 4
      %v572 = vshrl.u32 %v455, 16
      %v574 = vrot.slane %v572, 7
      %v575 = vshll.u32 %v455, 16
      %v577 = vor.u32 %v574, %v575
      %v578 = vsel %vm477, %v570, %v577
      %v579 = vrot.slane %v574, 4
      %v581 = vshrl.u32 %v456, 16
      %v583 = vrot.slane %v581, 7
      %v584 = vshll.u32 %v456, 16
      %v586 = vor.u32 %v583, %v584
      %v587 = vrot.slane %v583, 4
      %v589 = vshrl.u32 %v457, 16
      %v591 = vrot.slane %v589, 7
      %v592 = vshll.u32 %v457, 16
      %v594 = vor.u32 %v591, %v592
      %v595 = vsel %vm477, %v587, %v594
      %v596 = vrot.slane %v591, 4
      %v598 = vshrl.u32 %v458, 16
      %v600 = vrot.slane %v598, 7
      %v601 = vshll.u32 %v458, 16
      %v603 = vor.u32 %v600, %v601
      %v604 = vrot.slane %v600, 4
      %v606 = vshrl.u32 %v459, 16
      %v608 = vrot.slane %v606, 7
      %v609 = vshll.u32 %v459, 16
      %v611 = vor.u32 %v608, %v609
      %v612 = vsel %vm477, %v604, %v611
      %v613 = vrot.slane %v608, 4
      %v615 = vshrl.u32 %v460, 16
      %v617 = vrot.slane %v615, 7
      %v618 = vshll.u32 %v460, 16
      %v620 = vor.u32 %v617, %v618
      %v621 = vrot.slane %v617, 4
      %v623 = vshrl.u32 %v461, 16
      %v625 = vrot.slane %v623, 7
      %v626 = vshll.u32 %v461, 16
      %v628 = vor.u32 %v625, %v626
      %v629 = vsel %vm477, %v621, %v628
      %v630 = vrot.slane %v625, 4
      %v632 = vshrl.u32 %v462, 16
      %v634 = vrot.slane %v632, 7
      %v635 = vshll.u32 %v462, 16
      %v637 = vor.u32 %v634, %v635
      %v638 = vrot.slane %v634, 4
      %v640 = vshrl.u32 %v463, 16
      %v642 = vrot.slane %v640, 7
      %v643 = vshll.u32 %v463, 16
      %v645 = vor.u32 %v642, %v643
      %v646 = vsel %vm477, %v638, %v645
      %v647 = vrot.slane %v642, 4
      %v649 = vshrl.u32 %v464, 16
      %v651 = vrot.slane %v649, 7
      %v652 = vshll.u32 %v464, 16
      %v654 = vor.u32 %v651, %v652
      %v655 = vrot.slane %v651, 4
      %v657 = vshrl.u32 %v465, 16
      %v659 = vrot.slane %v657, 7
      %v660 = vshll.u32 %v465, 16
      %v662 = vor.u32 %v659, %v660
      %v663 = vsel %vm477, %v655, %v662
      %v664 = vrot.slane %v659, 4
      %v666 = vshrl.u32 %v466, 16
      %v668 = vrot.slane %v666, 7
      %v669 = vshll.u32 %v466, 16
      %v671 = vor.u32 %v668, %v669
      %v672 = vrot.slane %v668, 4
      %v674 = vshrl.u32 %v467, 16
      %v676 = vrot.slane %v674, 7
      %v677 = vshll.u32 %v467, 16
      %v679 = vor.u32 %v676, %v677
      %v680 = vsel %vm477, %v672, %v679
      %v681 = vrot.slane %v676, 4
      %v683 = vshrl.u32 %v468, 16
      %v685 = vrot.slane %v683, 7
      %v686 = vshll.u32 %v468, 16
      %v688 = vor.u32 %v685, %v686
      %v689 = vrot.slane %v685, 4
      %v691 = vshrl.u32 %v469, 16
      %v693 = vrot.slane %v691, 7
      %v694 = vshll.u32 %v469, 16
      %v696 = vor.u32 %v693, %v694
      %v697 = vsel %vm477, %v689, %v696
      %v698 = vrot.slane %v693, 4
      %v700 = vshrl.u32 %v470, 16
      %v702 = vrot.slane %v700, 7
      %v703 = vshll.u32 %v470, 16
      %v705 = vor.u32 %v702, %v703
      %v706 = vrot.slane %v702, 4
      %v708 = vshrl.u32 %v471, 16
      %v710 = vrot.slane %v708, 7
      %v711 = vshll.u32 %v471, 16
      %v713 = vor.u32 %v710, %v711
      %v714 = vsel %vm477, %v706, %v713
      %v715 = vrot.slane %v710, 4
      %v717 = vshrl.u32 %v472, 16
      %v719 = vrot.slane %v717, 7
      %v720 = vshll.u32 %v472, 16
      %v722 = vor.u32 %v719, %v720
      %v723 = vrot.slane %v719, 4
      %v725 = vshrl.u32 %v473, 16
      %v727 = vrot.slane %v725, 7
      %v728 = vshll.u32 %v473, 16
      %v730 = vor.u32 %v727, %v728
      %v731 = vsel %vm477, %v723, %v730
      %v732 = vrot.slane %v727, 4
      %v734 = vshrl.u32 %v474, 16
      %v736 = vrot.slane %v734, 7
      %v737 = vshll.u32 %v474, 16
      %v739 = vor.u32 %v736, %v737
      %v740 = vrot.slane %v736, 4
      %v742 = vshrl.u32 %v475, 16
      %v744 = vrot.slane %v742, 7
      %v745 = vshll.u32 %v475, 16
      %v747 = vor.u32 %v744, %v745
      %v748 = vsel %vm477, %v740, %v747
      %v749 = vrot.slane %v744, 4
      %vm798 = vcmask 519168
      %vm799 = vmand %vm798, %vm287
      %v800 = vld [vmem:[%s235] sm:$0xf]
      %v801 = vsel %vm799, %v484, %v800
      %802 = vst [vmem:[%s235] sm:$0xf] %v801
      %803 = vst.msk [vmem:[%s235 + $0x4] sm:$0xf] %vm226, %v493
      %v804 = vld [vmem:[%s235 + $0x8] sm:$0x1]
      %v805 = vsel %vm238, %v494, %v804
      %806 = vst [vmem:[%s235 + $0x8] sm:$0x1] %v805
      %v807 = vld [vmem:[%s235 + $0xc] sm:$0xf]
      %v808 = vsel %vm799, %v501, %v807
      %809 = vst [vmem:[%s235 + $0xc] sm:$0xf] %v808
      %810 = vst.msk [vmem:[%s235 + $0x10] sm:$0xf] %vm226, %v510
      %v811 = vld [vmem:[%s235 + $0x14] sm:$0x1]
      %v812 = vsel %vm238, %v511, %v811
      %813 = vst [vmem:[%s235 + $0x14] sm:$0x1] %v812
      %v814 = vld [vmem:[%s235 + $0x18] sm:$0xf]
      %v815 = vsel %vm799, %v518, %v814
      %816 = vst [vmem:[%s235 + $0x18] sm:$0xf] %v815
      %817 = vst.msk [vmem:[%s235 + $0x1c] sm:$0xf] %vm226, %v527
      %v818 = vld [vmem:[%s235 + $0x20] sm:$0x1]
      %v819 = vsel %vm238, %v528, %v818
      %820 = vst [vmem:[%s235 + $0x20] sm:$0x1] %v819
      %v821 = vld [vmem:[%s235 + $0x24] sm:$0xf]
      %v822 = vsel %vm799, %v535, %v821
      %823 = vst [vmem:[%s235 + $0x24] sm:$0xf] %v822
      %824 = vst.msk [vmem:[%s235 + $0x28] sm:$0xf] %vm226, %v544
      %v825 = vld [vmem:[%s235 + $0x2c] sm:$0x1]
      %v826 = vsel %vm238, %v545, %v825
      %827 = vst [vmem:[%s235 + $0x2c] sm:$0x1] %v826
      %v828 = vld [vmem:[%s235 + $0x30] sm:$0xf]
      %v829 = vsel %vm799, %v552, %v828
      %830 = vst [vmem:[%s235 + $0x30] sm:$0xf] %v829
      %831 = vst.msk [vmem:[%s235 + $0x34] sm:$0xf] %vm226, %v561
      %v832 = vld [vmem:[%s235 + $0x38] sm:$0x1]
      %v833 = vsel %vm238, %v562, %v832
      %834 = vst [vmem:[%s235 + $0x38] sm:$0x1] %v833
      %v835 = vld [vmem:[%s235 + $0x3c] sm:$0xf]
      %v836 = vsel %vm799, %v569, %v835
      %837 = vst [vmem:[%s235 + $0x3c] sm:$0xf] %v836
      %838 = vst.msk [vmem:[%s235 + $0x40] sm:$0xf] %vm226, %v578
      %v839 = vld [vmem:[%s235 + $0x44] sm:$0x1]
      %v840 = vsel %vm238, %v579, %v839
      %841 = vst [vmem:[%s235 + $0x44] sm:$0x1] %v840
      %v842 = vld [vmem:[%s235 + $0x48] sm:$0xf]
      %v843 = vsel %vm799, %v586, %v842
      %844 = vst [vmem:[%s235 + $0x48] sm:$0xf] %v843
      %845 = vst.msk [vmem:[%s235 + $0x4c] sm:$0xf] %vm226, %v595
      %v846 = vld [vmem:[%s235 + $0x50] sm:$0x1]
      %v847 = vsel %vm238, %v596, %v846
      %848 = vst [vmem:[%s235 + $0x50] sm:$0x1] %v847
      %v849 = vld [vmem:[%s235 + $0x54] sm:$0xf]
      %v850 = vsel %vm799, %v603, %v849
      %851 = vst [vmem:[%s235 + $0x54] sm:$0xf] %v850
      %852 = vst.msk [vmem:[%s235 + $0x58] sm:$0xf] %vm226, %v612
      %v853 = vld [vmem:[%s235 + $0x5c] sm:$0x1]
      %v854 = vsel %vm238, %v613, %v853
      %855 = vst [vmem:[%s235 + $0x5c] sm:$0x1] %v854
      %v856 = vld [vmem:[%s235 + $0x60] sm:$0xf]
      %v857 = vsel %vm799, %v620, %v856
      %858 = vst [vmem:[%s235 + $0x60] sm:$0xf] %v857
      %859 = vst.msk [vmem:[%s235 + $0x64] sm:$0xf] %vm226, %v629
      %v860 = vld [vmem:[%s235 + $0x68] sm:$0x1]
      %v861 = vsel %vm238, %v630, %v860
      %862 = vst [vmem:[%s235 + $0x68] sm:$0x1] %v861
      %v863 = vld [vmem:[%s235 + $0x6c] sm:$0xf]
      %v864 = vsel %vm799, %v637, %v863
      %865 = vst [vmem:[%s235 + $0x6c] sm:$0xf] %v864
      %866 = vst.msk [vmem:[%s235 + $0x70] sm:$0xf] %vm226, %v646
      %v867 = vld [vmem:[%s235 + $0x74] sm:$0x1]
      %v868 = vsel %vm238, %v647, %v867
      %869 = vst [vmem:[%s235 + $0x74] sm:$0x1] %v868
      %v870 = vld [vmem:[%s235 + $0x78] sm:$0xf]
      %v871 = vsel %vm799, %v654, %v870
      %872 = vst [vmem:[%s235 + $0x78] sm:$0xf] %v871
      %873 = vst.msk [vmem:[%s235 + $0x7c] sm:$0xf] %vm226, %v663
      %v874 = vld [vmem:[%s235 + $0x80] sm:$0x1]
      %v875 = vsel %vm238, %v664, %v874
      %876 = vst [vmem:[%s235 + $0x80] sm:$0x1] %v875
      %v877 = vld [vmem:[%s235 + $0x84] sm:$0xf]
      %v878 = vsel %vm799, %v671, %v877
      %879 = vst [vmem:[%s235 + $0x84] sm:$0xf] %v878
      %880 = vst.msk [vmem:[%s235 + $0x88] sm:$0xf] %vm226, %v680
      %v881 = vld [vmem:[%s235 + $0x8c] sm:$0x1]
      %v882 = vsel %vm238, %v681, %v881
      %883 = vst [vmem:[%s235 + $0x8c] sm:$0x1] %v882
      %v884 = vld [vmem:[%s235 + $0x90] sm:$0xf]
      %v885 = vsel %vm799, %v688, %v884
      %886 = vst [vmem:[%s235 + $0x90] sm:$0xf] %v885
      %887 = vst.msk [vmem:[%s235 + $0x94] sm:$0xf] %vm226, %v697
      %v888 = vld [vmem:[%s235 + $0x98] sm:$0x1]
      %v889 = vsel %vm238, %v698, %v888
      %890 = vst [vmem:[%s235 + $0x98] sm:$0x1] %v889
      %v891 = vld [vmem:[%s235 + $0x9c] sm:$0xf]
      %v892 = vsel %vm799, %v705, %v891
      %893 = vst [vmem:[%s235 + $0x9c] sm:$0xf] %v892
      %894 = vst.msk [vmem:[%s235 + $0xa0] sm:$0xf] %vm226, %v714
      %v895 = vld [vmem:[%s235 + $0xa4] sm:$0x1]
      %v896 = vsel %vm238, %v715, %v895
      %897 = vst [vmem:[%s235 + $0xa4] sm:$0x1] %v896
      %v898 = vld [vmem:[%s235 + $0xa8] sm:$0xf]
      %v899 = vsel %vm799, %v722, %v898
      %900 = vst [vmem:[%s235 + $0xa8] sm:$0xf] %v899
      %901 = vst.msk [vmem:[%s235 + $0xac] sm:$0xf] %vm226, %v731
      %v902 = vld [vmem:[%s235 + $0xb0] sm:$0x1]
      %v903 = vsel %vm238, %v732, %v902
      %904 = vst [vmem:[%s235 + $0xb0] sm:$0x1] %v903
      %v905 = vld [vmem:[%s235 + $0xb4] sm:$0xf]
      %v906 = vsel %vm799, %v739, %v905
      %907 = vst [vmem:[%s235 + $0xb4] sm:$0xf] %v906
      %908 = vst.msk [vmem:[%s235 + $0xb8] sm:$0xf] %vm226, %v748
      %v909 = vld [vmem:[%s235 + $0xbc] sm:$0x1]
      %v910 = vsel %vm238, %v749, %v909
      %911 = vst [vmem:[%s235 + $0xbc] sm:$0x1] %v910
      %v912 = vld [vmem:[%s2] sm:$0x1]
      %v914 = vlaneseq
      %v915 = vshrl.u32 %v914, 7
      %v916 = vsub.s32 0, %v915
      %v917 = vrot.slane %v912, %v916
      %v919 = vld [vmem:[#allocation2] sm:$0xf]
      %v920 = vld [vmem:[#allocation2 + $0x4] sm:$0xf]
      %v921 = vld [vmem:[#allocation2 + $0xc] sm:$0xf]
      %v922 = vld [vmem:[#allocation2 + $0x10] sm:$0xf]
      %v923 = vld [vmem:[#allocation2 + $0x18] sm:$0xf]
      %v924 = vld [vmem:[#allocation2 + $0x1c] sm:$0xf]
      %v925 = vld [vmem:[#allocation2 + $0x24] sm:$0xf]
      %v926 = vld [vmem:[#allocation2 + $0x28] sm:$0xf]
      %v927 = vld [vmem:[#allocation2 + $0x30] sm:$0xf]
      %v928 = vld [vmem:[#allocation2 + $0x34] sm:$0xf]
      %v929 = vld [vmem:[#allocation2 + $0x3c] sm:$0xf]
      %v930 = vld [vmem:[#allocation2 + $0x40] sm:$0xf]
      %v931 = vld [vmem:[#allocation2 + $0x48] sm:$0xf]
      %v932 = vld [vmem:[#allocation2 + $0x4c] sm:$0xf]
      %v933 = vld [vmem:[#allocation2 + $0x54] sm:$0xf]
      %v934 = vld [vmem:[#allocation2 + $0x58] sm:$0xf]
      %v935 = vld [vmem:[#allocation2 + $0x60] sm:$0xf]
      %v936 = vld [vmem:[#allocation2 + $0x64] sm:$0xf]
      %v937 = vld [vmem:[#allocation2 + $0x6c] sm:$0xf]
      %v938 = vld [vmem:[#allocation2 + $0x70] sm:$0xf]
      %v939 = vld [vmem:[#allocation2 + $0x78] sm:$0xf]
      %v940 = vld [vmem:[#allocation2 + $0x7c] sm:$0xf]
      %v941 = vld [vmem:[#allocation2 + $0x84] sm:$0xf]
      %v942 = vld [vmem:[#allocation2 + $0x88] sm:$0xf]
      %v943 = vld [vmem:[#allocation2 + $0x90] sm:$0xf]
      %v944 = vld [vmem:[#allocation2 + $0x94] sm:$0xf]
      %v945 = vld [vmem:[#allocation2 + $0x9c] sm:$0xf]
      %v946 = vld [vmem:[#allocation2 + $0xa0] sm:$0xf]
      %v947 = vld [vmem:[#allocation2 + $0xa8] sm:$0xf]
      %v948 = vld [vmem:[#allocation2 + $0xac] sm:$0xf]
      %v949 = vld [vmem:[#allocation2 + $0xb4] sm:$0xf]
      %v950 = vld [vmem:[#allocation2 + $0xb8] sm:$0xf]
      %v951 = vld [vmem:[%s1] sm:$0xf]
      %v952 = vld [vmem:[%s1 + $0x4] sm:$0xf]
      %v953 = vld [vmem:[%s1 + $0x8] sm:$0xf]
      %v954 = vld [vmem:[%s1 + $0xc] sm:$0xf]
      %v955 = vld [vmem:[%s1 + $0x10] sm:$0xf]
      %v956 = vld [vmem:[%s1 + $0x14] sm:$0xf]
      %v957 = vld [vmem:[%s1 + $0x18] sm:$0xf]
      %v958 = vld [vmem:[%s1 + $0x1c] sm:$0xf]
      %v991 = vunpack.c.l.b16 %v919
      %v992 = vunpack.c.l.b16 %v920
      %v993 = vunpack.c.l.b16 %v921
      %v994 = vunpack.c.l.b16 %v922
      %v995 = vunpack.c.l.b16 %v923
      %v996 = vunpack.c.l.b16 %v924
      %v997 = vunpack.c.l.b16 %v925
      %v998 = vunpack.c.l.b16 %v926
      %v999 = vunpack.c.l.b16 %v927
      %v1000 = vunpack.c.l.b16 %v928
      %v1001 = vunpack.c.l.b16 %v929
      %v1002 = vunpack.c.l.b16 %v930
      %v1003 = vunpack.c.l.b16 %v931
      %v1004 = vunpack.c.l.b16 %v932
      %v1005 = vunpack.c.l.b16 %v933
      %v1006 = vunpack.c.l.b16 %v934
      %v1007 = vunpack.c.l.b16 %v935
      %v1008 = vunpack.c.l.b16 %v936
      %v1009 = vunpack.c.l.b16 %v937
      %v1010 = vunpack.c.l.b16 %v938
      %v1011 = vunpack.c.l.b16 %v939
      %v1012 = vunpack.c.l.b16 %v940
      %v1013 = vunpack.c.l.b16 %v941
      %v1014 = vunpack.c.l.b16 %v942
      %v1015 = vunpack.c.l.b16 %v943
      %v1016 = vunpack.c.l.b16 %v944
      %v1017 = vunpack.c.l.b16 %v945
      %v1018 = vunpack.c.l.b16 %v946
      %v1019 = vunpack.c.l.b16 %v947
      %v1020 = vunpack.c.l.b16 %v948
      %v1021 = vunpack.c.l.b16 %v949
      %v1022 = vunpack.c.l.b16 %v950
      %v1023 = vpack.c.b16 %v992, %v991
      %v1024 = vpack.c.b16 %v994, %v993
      %v1025 = vpack.c.b16 %v996, %v995
      %v1026 = vpack.c.b16 %v998, %v997
      %v1027 = vpack.c.b16 %v1000, %v999
      %v1028 = vpack.c.b16 %v1002, %v1001
      %v1029 = vpack.c.b16 %v1004, %v1003
      %v1030 = vpack.c.b16 %v1006, %v1005
      %v1031 = vpack.c.b16 %v1008, %v1007
      %v1032 = vpack.c.b16 %v1010, %v1009
      %v1033 = vpack.c.b16 %v1012, %v1011
      %v1034 = vpack.c.b16 %v1014, %v1013
      %v1035 = vpack.c.b16 %v1016, %v1015
      %v1036 = vpack.c.b16 %v1018, %v1017
      %v1037 = vpack.c.b16 %v1020, %v1019
      %v1038 = vpack.c.b16 %v1022, %v1021
      %v1047 = vunpack.c.l.b16 %v951
      %v1048 = vunpack.c.l.b16 %v952
      %v1049 = vunpack.c.l.b16 %v953
      %v1050 = vunpack.c.l.b16 %v954
      %v1051 = vunpack.c.l.b16 %v955
      %v1052 = vunpack.c.l.b16 %v956
      %v1053 = vunpack.c.l.b16 %v957
      %v1054 = vunpack.c.l.b16 %v958
      %v1055 = vpack.c.b16 %v1048, %v1047
      %v1056 = vpack.c.b16 %v1050, %v1049
      %v1057 = vpack.c.b16 %v1052, %v1051
      %v1058 = vpack.c.b16 %v1054, %v1053
      %vm1063 = vcmask 523264
      %v1065 = vsel %vm1063, %v1023, 0
      %v1068 = vsel %vm1063, %v1024, 0
      %v1071 = vsel %vm1063, %v1025, 0
      %v1074 = vsel %vm1063, %v1026, 0
      %v1077 = vsel %vm1063, %v1027, 0
      %v1080 = vsel %vm1063, %v1028, 0
      %v1083 = vsel %vm1063, %v1029, 0
      %v1086 = vsel %vm1063, %v1030, 0
      %v1089 = vsel %vm1063, %v1031, 0
      %v1092 = vsel %vm1063, %v1032, 0
      %v1095 = vsel %vm1063, %v1033, 0
      %v1098 = vsel %vm1063, %v1034, 0
      %v1101 = vsel %vm1063, %v1035, 0
      %v1104 = vsel %vm1063, %v1036, 0
      %v1107 = vsel %vm1063, %v1037, 0
      %v1110 = vsel %vm1063, %v1038, 0
      %1112 = vmatprep.subr.bf16.mxu0 0
      %1113 = vmatpush1.bf16.msra.mxu0 %v1055
      %1114 = vmatprep.subr.bf16.mxu0 0
      %1115 = vmatpush1.bf16.msra.mxu0 %v1056
      %1116 = vmatprep.subr.bf16.mxu0 0
      %1117 = vmatpush1.bf16.msra.mxu0 %v1057
      %1118 = vmatprep.subr.bf16.mxu0 0
      %1119 = vmatpush1.bf16.msra.mxu0 %v1058
      %1120 = vmatprep.subr.bf16.mxu0 0
      %1121 = vmatpush1.bf16.msra.mxu0 0
      %1122 = vmatprep.subr.bf16.mxu0 0
      %1123 = vmatpush1.bf16.msra.mxu0 0
      %1124 = vmatprep.subr.bf16.mxu0 0
      %1125 = vmatpush1.bf16.msra.mxu0 0
      %1126 = vmatprep.subr.bf16.mxu0 0
      %1127 = vmatpush1.bf16.msra.mxu0 0
      %1128 = vmatprep.subr.bf16.mxu0 0
      %1129 = vmatpush1.bf16.msra.mxu0 0
      %1130 = vmatprep.subr.bf16.mxu0 0
      %1131 = vmatpush1.bf16.msra.mxu0 0
      %1132 = vmatprep.subr.bf16.mxu0 0
      %1133 = vmatpush1.bf16.msra.mxu0 0
      %1134 = vmatprep.subr.bf16.mxu0 0
      %1135 = vmatpush1.bf16.msra.mxu0 0
      %1136 = vmatprep.subr.bf16.mxu0 0
      %1137 = vmatpush1.bf16.msra.mxu0 0
      %1138 = vmatprep.subr.bf16.mxu0 0
      %1139 = vmatpush1.bf16.msra.mxu0 0
      %1140 = vmatprep.subr.bf16.mxu0 0
      %1141 = vmatpush1.bf16.msra.mxu0 0
      %1142 = vmatprep.subr.bf16.mxu0 0
      %1143 = vmatpush1.bf16.msra.mxu0 0
      %1144 = vmatprep.mubr.bf16.mxu0 0
      %1145 = vmatmul.mubr.bf16.gmra.mrb[0].mxu0 %v1065
      %v1146 = vpop.f32.mrb[0].mxu0
      %v1147 = vadd.f32 0.0, %v1146
      %v1148 = vpop.f32.mrb[0].mxu0
      %v1149 = vpop.f32.mrb[0].mxu0
      %v1150 = vadd.f32 0.0, %v1149
      %v1151 = vpop.f32.mrb[0].mxu0
      %1152 = vmatprep.mubr.bf16.mxu0 0
      %1153 = vmatmul.mubr.bf16.gmra.mrb[0].mxu0 %v1068
      %v1154 = vpop.f32.mrb[0].mxu0
      %v1155 = vadd.f32 0.0, %v1154
      %v1156 = vpop.f32.mrb[0].mxu0
      %v1157 = vpop.f32.mrb[0].mxu0
      %v1158 = vadd.f32 0.0, %v1157
      %v1159 = vpop.f32.mrb[0].mxu0
      %1160 = vmatprep.mubr.bf16.mxu0 0
      %1161 = vmatmul.mubr.bf16.gmra.mrb[0].mxu0 %v1071
      %v1162 = vpop.f32.mrb[0].mxu0
      %v1163 = vadd.f32 0.0, %v1162
      %v1164 = vpop.f32.mrb[0].mxu0
      %v1165 = vpop.f32.mrb[0].mxu0
      %v1166 = vadd.f32 0.0, %v1165
      %v1167 = vpop.f32.mrb[0].mxu0
      %1168 = vmatprep.mubr.bf16.mxu0 0
      %1169 = vmatmul.mubr.bf16.gmra.mrb[0].mxu0 %v1074
      %v1170 = vpop.f32.mrb[0].mxu0
      %v1171 = vadd.f32 0.0, %v1170
      %v1172 = vpop.f32.mrb[0].mxu0
      %v1173 = vpop.f32.mrb[0].mxu0
      %v1174 = vadd.f32 0.0, %v1173
      %v1175 = vpop.f32.mrb[0].mxu0
      %1176 = vmatprep.mubr.bf16.mxu0 0
      %1177 = vmatmul.mubr.bf16.gmra.mrb[0].mxu0 %v1077
      %v1178 = vpop.f32.mrb[0].mxu0
      %v1179 = vadd.f32 0.0, %v1178
      %v1180 = vpop.f32.mrb[0].mxu0
      %v1181 = vpop.f32.mrb[0].mxu0
      %v1182 = vadd.f32 0.0, %v1181
      %v1183 = vpop.f32.mrb[0].mxu0
      %1184 = vmatprep.mubr.bf16.mxu0 0
      %1185 = vmatmul.mubr.bf16.gmra.mrb[0].mxu0 %v1080
      %v1186 = vpop.f32.mrb[0].mxu0
      %v1187 = vadd.f32 0.0, %v1186
      %v1188 = vpop.f32.mrb[0].mxu0
      %v1189 = vpop.f32.mrb[0].mxu0
      %v1190 = vadd.f32 0.0, %v1189
      %v1191 = vpop.f32.mrb[0].mxu0
      %1192 = vmatprep.mubr.bf16.mxu0 0
      %1193 = vmatmul.mubr.bf16.gmra.mrb[0].mxu0 %v1083
      %v1194 = vpop.f32.mrb[0].mxu0
      %v1195 = vadd.f32 0.0, %v1194
      %v1196 = vpop.f32.mrb[0].mxu0
      %v1197 = vpop.f32.mrb[0].mxu0
      %v1198 = vadd.f32 0.0, %v1197
      %v1199 = vpop.f32.mrb[0].mxu0
      %1200 = vmatprep.mubr.bf16.mxu0 0
      %1201 = vmatmul.mubr.bf16.gmra.mrb[0].mxu0 %v1086
      %v1202 = vpop.f32.mrb[0].mxu0
      %v1203 = vadd.f32 0.0, %v1202
      %v1204 = vpop.f32.mrb[0].mxu0
      %v1205 = vpop.f32.mrb[0].mxu0
      %v1206 = vadd.f32 0.0, %v1205
      %v1207 = vpop.f32.mrb[0].mxu0
      %1208 = vmatprep.mubr.bf16.mxu0 0
      %1209 = vmatmul.mubr.bf16.gmra.mrb[0].mxu0 %v1089
      %v1210 = vpop.f32.mrb[0].mxu0
      %v1211 = vadd.f32 0.0, %v1210
      %v1212 = vpop.f32.mrb[0].mxu0
      %v1213 = vpop.f32.mrb[0].mxu0
      %v1214 = vadd.f32 0.0, %v1213
      %v1215 = vpop.f32.mrb[0].mxu0
      %1216 = vmatprep.mubr.bf16.mxu0 0
      %1217 = vmatmul.mubr.bf16.gmra.mrb[0].mxu0 %v1092
      %v1218 = vpop.f32.mrb[0].mxu0
      %v1219 = vadd.f32 0.0, %v1218
      %v1220 = vpop.f32.mrb[0].mxu0
      %v1221 = vpop.f32.mrb[0].mxu0
      %v1222 = vadd.f32 0.0, %v1221
      %v1223 = vpop.f32.mrb[0].mxu0
      %1224 = vmatprep.mubr.bf16.mxu0 0
      %1225 = vmatmul.mubr.bf16.gmra.mrb[0].mxu0 %v1095
      %v1226 = vpop.f32.mrb[0].mxu0
      %v1227 = vadd.f32 0.0, %v1226
      %v1228 = vpop.f32.mrb[0].mxu0
      %v1229 = vpop.f32.mrb[0].mxu0
      %v1230 = vadd.f32 0.0, %v1229
      %v1231 = vpop.f32.mrb[0].mxu0
      %1232 = vmatprep.mubr.bf16.mxu0 0
      %1233 = vmatmul.mubr.bf16.gmra.mrb[0].mxu0 %v1098
      %v1234 = vpop.f32.mrb[0].mxu0
      %v1235 = vadd.f32 0.0, %v1234
      %v1236 = vpop.f32.mrb[0].mxu0
      %v1237 = vpop.f32.mrb[0].mxu0
      %v1238 = vadd.f32 0.0, %v1237
      %v1239 = vpop.f32.mrb[0].mxu0
      %1240 = vmatprep.mubr.bf16.mxu0 0
      %1241 = vmatmul.mubr.bf16.gmra.mrb[0].mxu0 %v1101
      %v1242 = vpop.f32.mrb[0].mxu0
      %v1243 = vadd.f32 0.0, %v1242
      %v1244 = vpop.f32.mrb[0].mxu0
      %v1245 = vpop.f32.mrb[0].mxu0
      %v1246 = vadd.f32 0.0, %v1245
      %v1247 = vpop.f32.mrb[0].mxu0
      %1248 = vmatprep.mubr.bf16.mxu0 0
      %1249 = vmatmul.mubr.bf16.gmra.mrb[0].mxu0 %v1104
      %v1250 = vpop.f32.mrb[0].mxu0
      %v1251 = vadd.f32 0.0, %v1250
      %v1252 = vpop.f32.mrb[0].mxu0
      %v1253 = vpop.f32.mrb[0].mxu0
      %v1254 = vadd.f32 0.0, %v1253
      %v1255 = vpop.f32.mrb[0].mxu0
      %1256 = vmatprep.mubr.bf16.mxu0 0
      %1257 = vmatmul.mubr.bf16.gmra.mrb[0].mxu0 %v1107
      %v1258 = vpop.f32.mrb[0].mxu0
      %v1259 = vadd.f32 0.0, %v1258
      %v1260 = vpop.f32.mrb[0].mxu0
      %v1261 = vpop.f32.mrb[0].mxu0
      %v1262 = vadd.f32 0.0, %v1261
      %v1263 = vpop.f32.mrb[0].mxu0
      %1264 = vmatprep.mubr.bf16.mxu0 0
      %1265 = vmatmul.mubr.bf16.gmra.mrb[0].mxu0 %v1110
      %v1266 = vpop.f32.mrb[0].mxu0
      %v1267 = vadd.f32 0.0, %v1266
      %v1268 = vpop.f32.mrb[0].mxu0
      %v1269 = vpop.f32.mrb[0].mxu0
      %v1270 = vadd.f32 0.0, %v1269
      %v1271 = vpop.f32.mrb[0].mxu0
      %1272 = vdwg.mxu0
      %v1273 = vadd.f32 %v917, %v1147
      %v1274 = vadd.f32 %v917, %v1150
      %v1275 = vadd.f32 %v917, %v1155
      %v1276 = vadd.f32 %v917, %v1158
      %v1277 = vadd.f32 %v917, %v1163
      %v1278 = vadd.f32 %v917, %v1166
      %v1279 = vadd.f32 %v917, %v1171
      %v1280 = vadd.f32 %v917, %v1174
      %v1281 = vadd.f32 %v917, %v1179
      %v1282 = vadd.f32 %v917, %v1182
      %v1283 = vadd.f32 %v917, %v1187
      %v1284 = vadd.f32 %v917, %v1190
      %v1285 = vadd.f32 %v917, %v1195
      %v1286 = vadd.f32 %v917, %v1198
      %v1287 = vadd.f32 %v917, %v1203
      %v1288 = vadd.f32 %v917, %v1206
      %v1289 = vadd.f32 %v917, %v1211
      %v1290 = vadd.f32 %v917, %v1214
      %v1291 = vadd.f32 %v917, %v1219
      %v1292 = vadd.f32 %v917, %v1222
      %v1293 = vadd.f32 %v917, %v1227
      %v1294 = vadd.f32 %v917, %v1230
      %v1295 = vadd.f32 %v917, %v1235
      %v1296 = vadd.f32 %v917, %v1238
      %v1297 = vadd.f32 %v917, %v1243
      %v1298 = vadd.f32 %v917, %v1246
      %v1299 = vadd.f32 %v917, %v1251
      %v1300 = vadd.f32 %v917, %v1254
      %v1301 = vadd.f32 %v917, %v1259
      %v1302 = vadd.f32 %v917, %v1262
      %v1303 = vadd.f32 %v917, %v1267
      %v1304 = vadd.f32 %v917, %v1270
      %v1305 = vld [vmem:[#allocation2] sm:$0xf]
      %v1306 = vld [vmem:[#allocation2 + $0x4] sm:$0xf]
      %v1307 = vld [vmem:[#allocation2 + $0x8] sm:$0x1]
      %v1308 = vld [vmem:[#allocation2 + $0xc] sm:$0xf]
      %v1309 = vld [vmem:[#allocation2 + $0x10] sm:$0xf]
      %v1310 = vld [vmem:[#allocation2 + $0x14] sm:$0x1]
      %v1311 = vld [vmem:[#allocation2 + $0x18] sm:$0xf]
      %v1312 = vld [vmem:[#allocation2 + $0x1c] sm:$0xf]
      %v1313 = vld [vmem:[#allocation2 + $0x20] sm:$0x1]
      %v1314 = vld [vmem:[#allocation2 + $0x24] sm:$0xf]
      %v1315 = vld [vmem:[#allocation2 + $0x28] sm:$0xf]
      %v1316 = vld [vmem:[#allocation2 + $0x2c] sm:$0x1]
      %v1317 = vld [vmem:[#allocation2 + $0x30] sm:$0xf]
      %v1318 = vld [vmem:[#allocation2 + $0x34] sm:$0xf]
      %v1319 = vld [vmem:[#allocation2 + $0x38] sm:$0x1]
      %v1320 = vld [vmem:[#allocation2 + $0x3c] sm:$0xf]
      %v1321 = vld [vmem:[#allocation2 + $0x40] sm:$0xf]
      %v1322 = vld [vmem:[#allocation2 + $0x44] sm:$0x1]
      %v1323 = vld [vmem:[#allocation2 + $0x48] sm:$0xf]
      %v1324 = vld [vmem:[#allocation2 + $0x4c] sm:$0xf]
      %v1325 = vld [vmem:[#allocation2 + $0x50] sm:$0x1]
      %v1326 = vld [vmem:[#allocation2 + $0x54] sm:$0xf]
      %v1327 = vld [vmem:[#allocation2 + $0x58] sm:$0xf]
      %v1328 = vld [vmem:[#allocation2 + $0x5c] sm:$0x1]
      %v1329 = vld [vmem:[#allocation2 + $0x60] sm:$0xf]
      %v1330 = vld [vmem:[#allocation2 + $0x64] sm:$0xf]
      %v1331 = vld [vmem:[#allocation2 + $0x68] sm:$0x1]
      %v1332 = vld [vmem:[#allocation2 + $0x6c] sm:$0xf]
      %v1333 = vld [vmem:[#allocation2 + $0x70] sm:$0xf]
      %v1334 = vld [vmem:[#allocation2 + $0x74] sm:$0x1]
      %v1335 = vld [vmem:[#allocation2 + $0x78] sm:$0xf]
      %v1336 = vld [vmem:[#allocation2 + $0x7c] sm:$0xf]
      %v1337 = vld [vmem:[#allocation2 + $0x80] sm:$0x1]
      %v1338 = vld [vmem:[#allocation2 + $0x84] sm:$0xf]
      %v1339 = vld [vmem:[#allocation2 + $0x88] sm:$0xf]
      %v1340 = vld [vmem:[#allocation2 + $0x8c] sm:$0x1]
      %v1341 = vld [vmem:[#allocation2 + $0x90] sm:$0xf]
      %v1342 = vld [vmem:[#allocation2 + $0x94] sm:$0xf]
      %v1343 = vld [vmem:[#allocation2 + $0x98] sm:$0x1]
      %v1344 = vld [vmem:[#allocation2 + $0x9c] sm:$0xf]
      %v1345 = vld [vmem:[#allocation2 + $0xa0] sm:$0xf]
      %v1346 = vld [vmem:[#allocation2 + $0xa4] sm:$0x1]
      %v1347 = vld [vmem:[#allocation2 + $0xa8] sm:$0xf]
      %v1348 = vld [vmem:[#allocation2 + $0xac] sm:$0xf]
      %v1349 = vld [vmem:[#allocation2 + $0xb0] sm:$0x1]
      %v1350 = vld [vmem:[#allocation2 + $0xb4] sm:$0xf]
      %v1351 = vld [vmem:[#allocation2 + $0xb8] sm:$0xf]
      %v1352 = vld [vmem:[#allocation2 + $0xbc] sm:$0x1]
      %vm1353 = vsmask.f32 3328
      %vm1354 = vsmask.f32 7440
      %vm1355 = vmor %vm1353, %vm1354
      %v1357 = vshrl.u32 %v1305, 16
      %v1359 = vrot.slane %v1357, 4
      %v1360 = vshll.u32 %v1305, 16
      %v1362 = vrot.slane %v1360, 5
      %v1363 = vor.u32 %v1359, %v1362
      %v1364 = vrot.slane %v1363, 4
      %v1366 = vshll.u32 %v1306, 16
      %v1368 = vrot.slane %v1366, 5
      %v1369 = vsel %vm1355, %v1364, %v1368
      %v1370 = vshrl.u32 %v1306, 16
      %v1372 = vrot.slane %v1370, 4
      %v1373 = vor.u32 %v1372, %v1368
      %v1374 = vrot.slane %v1373, 4
      %v1376 = vshll.u32 %v1307, 16
      %v1378 = vrot.slane %v1376, 5
      %v1379 = vsel %vm1355, %v1374, %v1378
      %v1381 = vshrl.u32 %v1308, 16
      %v1383 = vrot.slane %v1381, 4
      %v1384 = vshll.u32 %v1308, 16
      %v1386 = vrot.slane %v1384, 5
      %v1387 = vor.u32 %v1383, %v1386
      %v1388 = vrot.slane %v1387, 4
      %v1390 = vshll.u32 %v1309, 16
      %v1392 = vrot.slane %v1390, 5
      %v1393 = vsel %vm1355, %v1388, %v1392
      %v1394 = vshrl.u32 %v1309, 16
      %v1396 = vrot.slane %v1394, 4
      %v1397 = vor.u32 %v1396, %v1392
      %v1398 = vrot.slane %v1397, 4
      %v1400 = vshll.u32 %v1310, 16
      %v1402 = vrot.slane %v1400, 5
      %v1403 = vsel %vm1355, %v1398, %v1402
      %v1405 = vshrl.u32 %v1311, 16
      %v1407 = vrot.slane %v1405, 4
      %v1408 = vshll.u32 %v1311, 16
      %v1410 = vrot.slane %v1408, 5
      %v1411 = vor.u32 %v1407, %v1410
      %v1412 = vrot.slane %v1411, 4
      %v1414 = vshll.u32 %v1312, 16
      %v1416 = vrot.slane %v1414, 5
      %v1417 = vsel %vm1355, %v1412, %v1416
      %v1418 = vshrl.u32 %v1312, 16
      %v1420 = vrot.slane %v1418, 4
      %v1421 = vor.u32 %v1420, %v1416
      %v1422 = vrot.slane %v1421, 4
      %v1424 = vshll.u32 %v1313, 16
      %v1426 = vrot.slane %v1424, 5
      %v1427 = vsel %vm1355, %v1422, %v1426
      %v1429 = vshrl.u32 %v1314, 16
      %v1431 = vrot.slane %v1429, 4
      %v1432 = vshll.u32 %v1314, 16
      %v1434 = vrot.slane %v1432, 5
      %v1435 = vor.u32 %v1431, %v1434
      %v1436 = vrot.slane %v1435, 4
      %v1438 = vshll.u32 %v1315, 16
      %v1440 = vrot.slane %v1438, 5
      %v1441 = vsel %vm1355, %v1436, %v1440
      %v1442 = vshrl.u32 %v1315, 16
      %v1444 = vrot.slane %v1442, 4
      %v1445 = vor.u32 %v1444, %v1440
      %v1446 = vrot.slane %v1445, 4
      %v1448 = vshll.u32 %v1316, 16
      %v1450 = vrot.slane %v1448, 5
      %v1451 = vsel %vm1355, %v1446, %v1450
      %v1453 = vshrl.u32 %v1317, 16
      %v1455 = vrot.slane %v1453, 4
      %v1456 = vshll.u32 %v1317, 16
      %v1458 = vrot.slane %v1456, 5
      %v1459 = vor.u32 %v1455, %v1458
      %v1460 = vrot.slane %v1459, 4
      %v1462 = vshll.u32 %v1318, 16
      %v1464 = vrot.slane %v1462, 5
      %v1465 = vsel %vm1355, %v1460, %v1464
      %v1466 = vshrl.u32 %v1318, 16
      %v1468 = vrot.slane %v1466, 4
      %v1469 = vor.u32 %v1468, %v1464
      %v1470 = vrot.slane %v1469, 4
      %v1472 = vshll.u32 %v1319, 16
      %v1474 = vrot.slane %v1472, 5
      %v1475 = vsel %vm1355, %v1470, %v1474
      %v1477 = vshrl.u32 %v1320, 16
      %v1479 = vrot.slane %v1477, 4
      %v1480 = vshll.u32 %v1320, 16
      %v1482 = vrot.slane %v1480, 5
      %v1483 = vor.u32 %v1479, %v1482
      %v1484 = vrot.slane %v1483, 4
      %v1486 = vshll.u32 %v1321, 16
      %v1488 = vrot.slane %v1486, 5
      %v1489 = vsel %vm1355, %v1484, %v1488
      %v1490 = vshrl.u32 %v1321, 16
      %v1492 = vrot.slane %v1490, 4
      %v1493 = vor.u32 %v1492, %v1488
      %v1494 = vrot.slane %v1493, 4
      %v1496 = vshll.u32 %v1322, 16
      %v1498 = vrot.slane %v1496, 5
      %v1499 = vsel %vm1355, %v1494, %v1498
      %v1501 = vshrl.u32 %v1323, 16
      %v1503 = vrot.slane %v1501, 4
      %v1504 = vshll.u32 %v1323, 16
      %v1506 = vrot.slane %v1504, 5
      %v1507 = vor.u32 %v1503, %v1506
      %v1508 = vrot.slane %v1507, 4
      %v1510 = vshll.u32 %v1324, 16
      %v1512 = vrot.slane %v1510, 5
      %v1513 = vsel %vm1355, %v1508, %v1512
      %v1514 = vshrl.u32 %v1324, 16
      %v1516 = vrot.slane %v1514, 4
      %v1517 = vor.u32 %v1516, %v1512
      %v1518 = vrot.slane %v1517, 4
      %v1520 = vshll.u32 %v1325, 16
      %v1522 = vrot.slane %v1520, 5
      %v1523 = vsel %vm1355, %v1518, %v1522
      %v1525 = vshrl.u32 %v1326, 16
      %v1527 = vrot.slane %v1525, 4
      %v1528 = vshll.u32 %v1326, 16
      %v1530 = vrot.slane %v1528, 5
      %v1531 = vor.u32 %v1527, %v1530
      %v1532 = vrot.slane %v1531, 4
      %v1534 = vshll.u32 %v1327, 16
      %v1536 = vrot.slane %v1534, 5
      %v1537 = vsel %vm1355, %v1532, %v1536
      %v1538 = vshrl.u32 %v1327, 16
      %v1540 = vrot.slane %v1538, 4
      %v1541 = vor.u32 %v1540, %v1536
      %v1542 = vrot.slane %v1541, 4
      %v1544 = vshll.u32 %v1328, 16
      %v1546 = vrot.slane %v1544, 5
      %v1547 = vsel %vm1355, %v1542, %v1546
      %v1549 = vshrl.u32 %v1329, 16
      %v1551 = vrot.slane %v1549, 4
      %v1552 = vshll.u32 %v1329, 16
      %v1554 = vrot.slane %v1552, 5
      %v1555 = vor.u32 %v1551, %v1554
      %v1556 = vrot.slane %v1555, 4
      %v1558 = vshll.u32 %v1330, 16
      %v1560 = vrot.slane %v1558, 5
      %v1561 = vsel %vm1355, %v1556, %v1560
      %v1562 = vshrl.u32 %v1330, 16
      %v1564 = vrot.slane %v1562, 4
      %v1565 = vor.u32 %v1564, %v1560
      %v1566 = vrot.slane %v1565, 4
      %v1568 = vshll.u32 %v1331, 16
      %v1570 = vrot.slane %v1568, 5
      %v1571 = vsel %vm1355, %v1566, %v1570
      %v1573 = vshrl.u32 %v1332, 16
      %v1575 = vrot.slane %v1573, 4
      %v1576 = vshll.u32 %v1332, 16
      %v1578 = vrot.slane %v1576, 5
      %v1579 = vor.u32 %v1575, %v1578
      %v1580 = vrot.slane %v1579, 4
      %v1582 = vshll.u32 %v1333, 16
      %v1584 = vrot.slane %v1582, 5
      %v1585 = vsel %vm1355, %v1580, %v1584
      %v1586 = vshrl.u32 %v1333, 16
      %v1588 = vrot.slane %v1586, 4
      %v1589 = vor.u32 %v1588, %v1584
      %v1590 = vrot.slane %v1589, 4
      %v1592 = vshll.u32 %v1334, 16
      %v1594 = vrot.slane %v1592, 5
      %v1595 = vsel %vm1355, %v1590, %v1594
      %v1597 = vshrl.u32 %v1335, 16
      %v1599 = vrot.slane %v1597, 4
      %v1600 = vshll.u32 %v1335, 16
      %v1602 = vrot.slane %v1600, 5
      %v1603 = vor.u32 %v1599, %v1602
      %v1604 = vrot.slane %v1603, 4
      %v1606 = vshll.u32 %v1336, 16
      %v1608 = vrot.slane %v1606, 5
      %v1609 = vsel %vm1355, %v1604, %v1608
      %v1610 = vshrl.u32 %v1336, 16
      %v1612 = vrot.slane %v1610, 4
      %v1613 = vor.u32 %v1612, %v1608
      %v1614 = vrot.slane %v1613, 4
      %v1616 = vshll.u32 %v1337, 16
      %v1618 = vrot.slane %v1616, 5
      %v1619 = vsel %vm1355, %v1614, %v1618
      %v1621 = vshrl.u32 %v1338, 16
      %v1623 = vrot.slane %v1621, 4
      %v1624 = vshll.u32 %v1338, 16
      %v1626 = vrot.slane %v1624, 5
      %v1627 = vor.u32 %v1623, %v1626
      %v1628 = vrot.slane %v1627, 4
      %v1630 = vshll.u32 %v1339, 16
      %v1632 = vrot.slane %v1630, 5
      %v1633 = vsel %vm1355, %v1628, %v1632
      %v1634 = vshrl.u32 %v1339, 16
      %v1636 = vrot.slane %v1634, 4
      %v1637 = vor.u32 %v1636, %v1632
      %v1638 = vrot.slane %v1637, 4
      %v1640 = vshll.u32 %v1340, 16
      %v1642 = vrot.slane %v1640, 5
      %v1643 = vsel %vm1355, %v1638, %v1642
      %v1645 = vshrl.u32 %v1341, 16
      %v1647 = vrot.slane %v1645, 4
      %v1648 = vshll.u32 %v1341, 16
      %v1650 = vrot.slane %v1648, 5
      %v1651 = vor.u32 %v1647, %v1650
      %v1652 = vrot.slane %v1651, 4
      %v1654 = vshll.u32 %v1342, 16
      %v1656 = vrot.slane %v1654, 5
      %v1657 = vsel %vm1355, %v1652, %v1656
      %v1658 = vshrl.u32 %v1342, 16
      %v1660 = vrot.slane %v1658, 4
      %v1661 = vor.u32 %v1660, %v1656
      %v1662 = vrot.slane %v1661, 4
      %v1664 = vshll.u32 %v1343, 16
      %v1666 = vrot.slane %v1664, 5
      %v1667 = vsel %vm1355, %v1662, %v1666
      %v1669 = vshrl.u32 %v1344, 16
      %v1671 = vrot.slane %v1669, 4
      %v1672 = vshll.u32 %v1344, 16
      %v1674 = vrot.slane %v1672, 5
      %v1675 = vor.u32 %v1671, %v1674
      %v1676 = vrot.slane %v1675, 4
      %v1678 = vshll.u32 %v1345, 16
      %v1680 = vrot.slane %v1678, 5
      %v1681 = vsel %vm1355, %v1676, %v1680
      %v1682 = vshrl.u32 %v1345, 16
      %v1684 = vrot.slane %v1682, 4
      %v1685 = vor.u32 %v1684, %v1680
      %v1686 = vrot.slane %v1685, 4
      %v1688 = vshll.u32 %v1346, 16
      %v1690 = vrot.slane %v1688, 5
      %v1691 = vsel %vm1355, %v1686, %v1690
      %v1693 = vshrl.u32 %v1347, 16
      %v1695 = vrot.slane %v1693, 4
      %v1696 = vshll.u32 %v1347, 16
      %v1698 = vrot.slane %v1696, 5
      %v1699 = vor.u32 %v1695, %v1698
      %v1700 = vrot.slane %v1699, 4
      %v1702 = vshll.u32 %v1348, 16
      %v1704 = vrot.slane %v1702, 5
      %v1705 = vsel %vm1355, %v1700, %v1704
      %v1706 = vshrl.u32 %v1348, 16
      %v1708 = vrot.slane %v1706, 4
      %v1709 = vor.u32 %v1708, %v1704
      %v1710 = vrot.slane %v1709, 4
      %v1712 = vshll.u32 %v1349, 16
      %v1714 = vrot.slane %v1712, 5
      %v1715 = vsel %vm1355, %v1710, %v1714
      %v1717 = vshrl.u32 %v1350, 16
      %v1719 = vrot.slane %v1717, 4
      %v1720 = vshll.u32 %v1350, 16
      %v1722 = vrot.slane %v1720, 5
      %v1723 = vor.u32 %v1719, %v1722
      %v1724 = vrot.slane %v1723, 4
      %v1726 = vshll.u32 %v1351, 16
      %v1728 = vrot.slane %v1726, 5
      %v1729 = vsel %vm1355, %v1724, %v1728
      %v1730 = vshrl.u32 %v1351, 16
      %v1732 = vrot.slane %v1730, 4
      %v1733 = vor.u32 %v1732, %v1728
      %v1734 = vrot.slane %v1733, 4
      %v1736 = vshll.u32 %v1352, 16
      %v1738 = vrot.slane %v1736, 5
      %v1739 = vsel %vm1355, %v1734, %v1738
      %s1740 = scalar_lea.vmem %s1, 32
      %v1741 = vld [vmem:[%s1740] sm:$0xf]
      %v1742 = vld [vmem:[%s1740 + $0x4] sm:$0xf]
      %v1743 = vld [vmem:[%s1740 + $0x8] sm:$0xf]
      %v1744 = vld [vmem:[%s1740 + $0xc] sm:$0xf]
      %v1745 = vld [vmem:[%s1740 + $0x10] sm:$0xf]
      %v1746 = vld [vmem:[%s1740 + $0x14] sm:$0xf]
      %v1747 = vld [vmem:[%s1740 + $0x18] sm:$0xf]
      %v1748 = vld [vmem:[%s1740 + $0x1c] sm:$0xf]
      %v1749 = vunpack.c.l.b16 %v1369
      %v1750 = vunpack.c.l.b16 %v1379
      %v1751 = vunpack.c.l.b16 %v1393
      %v1752 = vunpack.c.l.b16 %v1403
      %v1753 = vunpack.c.l.b16 %v1417
      %v1754 = vunpack.c.l.b16 %v1427
      %v1755 = vunpack.c.l.b16 %v1441
      %v1756 = vunpack.c.l.b16 %v1451
      %v1757 = vunpack.c.l.b16 %v1465
      %v1758 = vunpack.c.l.b16 %v1475
      %v1759 = vunpack.c.l.b16 %v1489
      %v1760 = vunpack.c.l.b16 %v1499
      %v1761 = vunpack.c.l.b16 %v1513
      %v1762 = vunpack.c.l.b16 %v1523
      %v1763 = vunpack.c.l.b16 %v1537
      %v1764 = vunpack.c.l.b16 %v1547
      %v1765 = vunpack.c.l.b16 %v1561
      %v1766 = vunpack.c.l.b16 %v1571
      %v1767 = vunpack.c.l.b16 %v1585
      %v1768 = vunpack.c.l.b16 %v1595
      %v1769 = vunpack.c.l.b16 %v1609
      %v1770 = vunpack.c.l.b16 %v1619
      %v1771 = vunpack.c.l.b16 %v1633
      %v1772 = vunpack.c.l.b16 %v1643
      %v1773 = vunpack.c.l.b16 %v1657
      %v1774 = vunpack.c.l.b16 %v1667
      %v1775 = vunpack.c.l.b16 %v1681
      %v1776 = vunpack.c.l.b16 %v1691
      %v1777 = vunpack.c.l.b16 %v1705
      %v1778 = vunpack.c.l.b16 %v1715
      %v1779 = vunpack.c.l.b16 %v1729
      %v1780 = vunpack.c.l.b16 %v1739
      %v1781 = vpack.c.b16 %v1750, %v1749
      %v1782 = vpack.c.b16 %v1752, %v1751
      %v1783 = vpack.c.b16 %v1754, %v1753
      %v1784 = vpack.c.b16 %v1756, %v1755
      %v1785 = vpack.c.b16 %v1758, %v1757
      %v1786 = vpack.c.b16 %v1760, %v1759
      %v1787 = vpack.c.b16 %v1762, %v1761
      %v1788 = vpack.c.b16 %v1764, %v1763
      %v1789 = vpack.c.b16 %v1766, %v1765
      %v1790 = vpack.c.b16 %v1768, %v1767
      %v1791 = vpack.c.b16 %v1770, %v1769
      %v1792 = vpack.c.b16 %v1772, %v1771
      %v1793 = vpack.c.b16 %v1774, %v1773
      %v1794 = vpack.c.b16 %v1776, %v1775
      %v1795 = vpack.c.b16 %v1778, %v1777
      %v1796 = vpack.c.b16 %v1780, %v1779
      %v1805 = vunpack.c.l.b16 %v1741
      %v1806 = vunpack.c.l.b16 %v1742
      %v1807 = vunpack.c.l.b16 %v1743
      %v1808 = vunpack.c.l.b16 %v1744
      %v1809 = vunpack.c.l.b16 %v1745
      %v1810 = vunpack.c.l.b16 %v1746
      %v1811 = vunpack.c.l.b16 %v1747
      %v1812 = vunpack.c.l.b16 %v1748
      %v1813 = vpack.c.b16 %v1806, %v1805
      %v1814 = vpack.c.b16 %v1808, %v1807
      %v1815 = vpack.c.b16 %v1810, %v1809
      %v1816 = vpack.c.b16 %v1812, %v1811
      %v1822 = vsel %vm1063, %v1781, 0
      %v1825 = vsel %vm1063, %v1782, 0
      %v1828 = vsel %vm1063, %v1783, 0
      %v1831 = vsel %vm1063, %v1784, 0
      %v1834 = vsel %vm1063, %v1785, 0
      %v1837 = vsel %vm1063, %v1786, 0
      %v1840 = vsel %vm1063, %v1787, 0
      %v1843 = vsel %vm1063, %v1788, 0
      %v1846 = vsel %vm1063, %v1789, 0
      %v1849 = vsel %vm1063, %v1790, 0
      %v1852 = vsel %vm1063, %v1791, 0
      %v1855 = vsel %vm1063, %v1792, 0
      %v1858 = vsel %vm1063, %v1793, 0
      %v1861 = vsel %vm1063, %v1794, 0
      %v1864 = vsel %vm1063, %v1795, 0
      %v1867 = vsel %vm1063, %v1796, 0
      %1869 = vmatprep.subr.bf16.mxu0 0
      %1870 = vmatpush1.bf16.msra.mxu0 %v1813
      %1871 = vmatprep.subr.bf16.mxu0 0
      %1872 = vmatpush1.bf16.msra.mxu0 %v1814
      %1873 = vmatprep.subr.bf16.mxu0 0
      %1874 = vmatpush1.bf16.msra.mxu0 %v1815
      %1875 = vmatprep.subr.bf16.mxu0 0
      %1876 = vmatpush1.bf16.msra.mxu0 %v1816
      %1877 = vmatprep.subr.bf16.mxu0 0
      %1878 = vmatpush1.bf16.msra.mxu0 0
      %1879 = vmatprep.subr.bf16.mxu0 0
      %1880 = vmatpush1.bf16.msra.mxu0 0
      %1881 = vmatprep.subr.bf16.mxu0 0
      %1882 = vmatpush1.bf16.msra.mxu0 0
      %1883 = vmatprep.subr.bf16.mxu0 0
      %1884 = vmatpush1.bf16.msra.mxu0 0
      %1885 = vmatprep.subr.bf16.mxu0 0
      %1886 = vmatpush1.bf16.msra.mxu0 0
      %1887 = vmatprep.subr.bf16.mxu0 0
      %1888 = vmatpush1.bf16.msra.mxu0 0
      %1889 = vmatprep.subr.bf16.mxu0 0
      %1890 = vmatpush1.bf16.msra.mxu0 0
      %1891 = vmatprep.subr.bf16.mxu0 0
      %1892 = vmatpush1.bf16.msra.mxu0 0
      %1893 = vmatprep.subr.bf16.mxu0 0
      %1894 = vmatpush1.bf16.msra.mxu0 0
      %1895 = vmatprep.subr.bf16.mxu0 0
      %1896 = vmatpush1.bf16.msra.mxu0 0
      %1897 = vmatprep.subr.bf16.mxu0 0
      %1898 = vmatpush1.bf16.msra.mxu0 0
      %1899 = vmatprep.subr.bf16.mxu0 0
      %1900 = vmatpush1.bf16.msra.mxu0 0
      %1901 = vmatprep.mubr.bf16.mxu0 0
      %1902 = vmatmul.mubr.bf16.gmra.mrb[0].mxu0 %v1822
      %v1903 = vpop.f32.mrb[0].mxu0
      %v1904 = vadd.f32 0.0, %v1903
      %v1905 = vpop.f32.mrb[0].mxu0
      %v1906 = vpop.f32.mrb[0].mxu0
      %v1907 = vadd.f32 0.0, %v1906
      %v1908 = vpop.f32.mrb[0].mxu0
      %1909 = vmatprep.mubr.bf16.mxu0 0
      %1910 = vmatmul.mubr.bf16.gmra.mrb[0].mxu0 %v1825
      %v1911 = vpop.f32.mrb[0].mxu0
      %v1912 = vadd.f32 0.0, %v1911
      %v1913 = vpop.f32.mrb[0].mxu0
      %v1914 = vpop.f32.mrb[0].mxu0
      %v1915 = vadd.f32 0.0, %v1914
      %v1916 = vpop.f32.mrb[0].mxu0
      %1917 = vmatprep.mubr.bf16.mxu0 0
      %1918 = vmatmul.mubr.bf16.gmra.mrb[0].mxu0 %v1828
      %v1919 = vpop.f32.mrb[0].mxu0
      %v1920 = vadd.f32 0.0, %v1919
      %v1921 = vpop.f32.mrb[0].mxu0
      %v1922 = vpop.f32.mrb[0].mxu0
      %v1923 = vadd.f32 0.0, %v1922
      %v1924 = vpop.f32.mrb[0].mxu0
      %1925 = vmatprep.mubr.bf16.mxu0 0
      %1926 = vmatmul.mubr.bf16.gmra.mrb[0].mxu0 %v1831
      %v1927 = vpop.f32.mrb[0].mxu0
      %v1928 = vadd.f32 0.0, %v1927
      %v1929 = vpop.f32.mrb[0].mxu0
      %v1930 = vpop.f32.mrb[0].mxu0
      %v1931 = vadd.f32 0.0, %v1930
      %v1932 = vpop.f32.mrb[0].mxu0
      %1933 = vmatprep.mubr.bf16.mxu0 0
      %1934 = vmatmul.mubr.bf16.gmra.mrb[0].mxu0 %v1834
      %v1935 = vpop.f32.mrb[0].mxu0
      %v1936 = vadd.f32 0.0, %v1935
      %v1937 = vpop.f32.mrb[0].mxu0
      %v1938 = vpop.f32.mrb[0].mxu0
      %v1939 = vadd.f32 0.0, %v1938
      %v1940 = vpop.f32.mrb[0].mxu0
      %1941 = vmatprep.mubr.bf16.mxu0 0
      %1942 = vmatmul.mubr.bf16.gmra.mrb[0].mxu0 %v1837
      %v1943 = vpop.f32.mrb[0].mxu0
      %v1944 = vadd.f32 0.0, %v1943
      %v1945 = vpop.f32.mrb[0].mxu0
      %v1946 = vpop.f32.mrb[0].mxu0
      %v1947 = vadd.f32 0.0, %v1946
      %v1948 = vpop.f32.mrb[0].mxu0
      %1949 = vmatprep.mubr.bf16.mxu0 0
      %1950 = vmatmul.mubr.bf16.gmra.mrb[0].mxu0 %v1840
      %v1951 = vpop.f32.mrb[0].mxu0
      %v1952 = vadd.f32 0.0, %v1951
      %v1953 = vpop.f32.mrb[0].mxu0
      %v1954 = vpop.f32.mrb[0].mxu0
      %v1955 = vadd.f32 0.0, %v1954
      %v1956 = vpop.f32.mrb[0].mxu0
      %1957 = vmatprep.mubr.bf16.mxu0 0
      %1958 = vmatmul.mubr.bf16.gmra.mrb[0].mxu0 %v1843
      %v1959 = vpop.f32.mrb[0].mxu0
      %v1960 = vadd.f32 0.0, %v1959
      %v1961 = vpop.f32.mrb[0].mxu0
      %v1962 = vpop.f32.mrb[0].mxu0
      %v1963 = vadd.f32 0.0, %v1962
      %v1964 = vpop.f32.mrb[0].mxu0
      %1965 = vmatprep.mubr.bf16.mxu0 0
      %1966 = vmatmul.mubr.bf16.gmra.mrb[0].mxu0 %v1846
      %v1967 = vpop.f32.mrb[0].mxu0
      %v1968 = vadd.f32 0.0, %v1967
      %v1969 = vpop.f32.mrb[0].mxu0
      %v1970 = vpop.f32.mrb[0].mxu0
      %v1971 = vadd.f32 0.0, %v1970
      %v1972 = vpop.f32.mrb[0].mxu0
      %1973 = vmatprep.mubr.bf16.mxu0 0
      %1974 = vmatmul.mubr.bf16.gmra.mrb[0].mxu0 %v1849
      %v1975 = vpop.f32.mrb[0].mxu0
      %v1976 = vadd.f32 0.0, %v1975
      %v1977 = vpop.f32.mrb[0].mxu0
      %v1978 = vpop.f32.mrb[0].mxu0
      %v1979 = vadd.f32 0.0, %v1978
      %v1980 = vpop.f32.mrb[0].mxu0
      %1981 = vmatprep.mubr.bf16.mxu0 0
      %1982 = vmatmul.mubr.bf16.gmra.mrb[0].mxu0 %v1852
      %v1983 = vpop.f32.mrb[0].mxu0
      %v1984 = vadd.f32 0.0, %v1983
      %v1985 = vpop.f32.mrb[0].mxu0
      %v1986 = vpop.f32.mrb[0].mxu0
      %v1987 = vadd.f32 0.0, %v1986
      %v1988 = vpop.f32.mrb[0].mxu0
      %1989 = vmatprep.mubr.bf16.mxu0 0
      %1990 = vmatmul.mubr.bf16.gmra.mrb[0].mxu0 %v1855
      %v1991 = vpop.f32.mrb[0].mxu0
      %v1992 = vadd.f32 0.0, %v1991
      %v1993 = vpop.f32.mrb[0].mxu0
      %v1994 = vpop.f32.mrb[0].mxu0
      %v1995 = vadd.f32 0.0, %v1994
      %v1996 = vpop.f32.mrb[0].mxu0
      %1997 = vmatprep.mubr.bf16.mxu0 0
      %1998 = vmatmul.mubr.bf16.gmra.mrb[0].mxu0 %v1858
      %v1999 = vpop.f32.mrb[0].mxu0
      %v2000 = vadd.f32 0.0, %v1999
      %v2001 = vpop.f32.mrb[0].mxu0
      %v2002 = vpop.f32.mrb[0].mxu0
      %v2003 = vadd.f32 0.0, %v2002
      %v2004 = vpop.f32.mrb[0].mxu0
      %2005 = vmatprep.mubr.bf16.mxu0 0
      %2006 = vmatmul.mubr.bf16.gmra.mrb[0].mxu0 %v1861
      %v2007 = vpop.f32.mrb[0].mxu0
      %v2008 = vadd.f32 0.0, %v2007
      %v2009 = vpop.f32.mrb[0].mxu0
      %v2010 = vpop.f32.mrb[0].mxu0
      %v2011 = vadd.f32 0.0, %v2010
      %v2012 = vpop.f32.mrb[0].mxu0
      %2013 = vmatprep.mubr.bf16.mxu0 0
      %2014 = vmatmul.mubr.bf16.gmra.mrb[0].mxu0 %v1864
      %v2015 = vpop.f32.mrb[0].mxu0
      %v2016 = vadd.f32 0.0, %v2015
      %v2017 = vpop.f32.mrb[0].mxu0
      %v2018 = vpop.f32.mrb[0].mxu0
      %v2019 = vadd.f32 0.0, %v2018
      %v2020 = vpop.f32.mrb[0].mxu0
      %2021 = vmatprep.mubr.bf16.mxu0 0
      %2022 = vmatmul.mubr.bf16.gmra.mrb[0].mxu0 %v1867
      %v2023 = vpop.f32.mrb[0].mxu0
      %v2024 = vadd.f32 0.0, %v2023
      %v2025 = vpop.f32.mrb[0].mxu0
      %v2026 = vpop.f32.mrb[0].mxu0
      %v2027 = vadd.f32 0.0, %v2026
      %v2028 = vpop.f32.mrb[0].mxu0
      %2029 = vdwg.mxu0
      %v2030 = vadd.f32 %v1273, %v1904
      %v2031 = vadd.f32 %v1274, %v1907
      %v2032 = vadd.f32 %v1275, %v1912
      %v2033 = vadd.f32 %v1276, %v1915
      %v2034 = vadd.f32 %v1277, %v1920
      %v2035 = vadd.f32 %v1278, %v1923
      %v2036 = vadd.f32 %v1279, %v1928
      %v2037 = vadd.f32 %v1280, %v1931
      %v2038 = vadd.f32 %v1281, %v1936
      %v2039 = vadd.f32 %v1282, %v1939
      %v2040 = vadd.f32 %v1283, %v1944
      %v2041 = vadd.f32 %v1284, %v1947
      %v2042 = vadd.f32 %v1285, %v1952
      %v2043 = vadd.f32 %v1286, %v1955
      %v2044 = vadd.f32 %v1287, %v1960
      %v2045 = vadd.f32 %v1288, %v1963
      %v2046 = vadd.f32 %v1289, %v1968
      %v2047 = vadd.f32 %v1290, %v1971
      %v2048 = vadd.f32 %v1291, %v1976
      %v2049 = vadd.f32 %v1292, %v1979
      %v2050 = vadd.f32 %v1293, %v1984
      %v2051 = vadd.f32 %v1294, %v1987
      %v2052 = vadd.f32 %v1295, %v1992
      %v2053 = vadd.f32 %v1296, %v1995
      %v2054 = vadd.f32 %v1297, %v2000
      %v2055 = vadd.f32 %v1298, %v2003
      %v2056 = vadd.f32 %v1299, %v2008
      %v2057 = vadd.f32 %v1300, %v2011
      %v2058 = vadd.f32 %v1301, %v2016
      %v2059 = vadd.f32 %v1302, %v2019
      %v2060 = vadd.f32 %v1303, %v2024
      %v2061 = vadd.f32 %v1304, %v2027
      %v2062 = vld [vmem:[#allocation2] sm:$0xe]
      %v2063 = vld [vmem:[#allocation2 + $0xc] sm:$0xe]
      %v2064 = vld [vmem:[#allocation2 + $0x18] sm:$0xe]
      %v2065 = vld [vmem:[#allocation2 + $0x24] sm:$0xe]
      %v2066 = vld [vmem:[#allocation2 + $0x30] sm:$0xe]
      %v2067 = vld [vmem:[#allocation2 + $0x3c] sm:$0xe]
      %v2068 = vld [vmem:[#allocation2 + $0x48] sm:$0xe]
      %v2069 = vld [vmem:[#allocation2 + $0x54] sm:$0xe]
      %v2070 = vld [vmem:[#allocation2 + $0x60] sm:$0xe]
      %v2071 = vld [vmem:[#allocation2 + $0x6c] sm:$0xe]
      %v2072 = vld [vmem:[#allocation2 + $0x78] sm:$0xe]
      %v2073 = vld [vmem:[#allocation2 + $0x84] sm:$0xe]
      %v2074 = vld [vmem:[#allocation2 + $0x90] sm:$0xe]
      %v2075 = vld [vmem:[#allocation2 + $0x9c] sm:$0xe]
      %v2076 = vld [vmem:[#allocation2 + $0xa8] sm:$0xe]
      %v2077 = vld [vmem:[#allocation2 + $0xb4] sm:$0xe]
      %vm2126 = vcmask 1042432
      %vm2127 = vcmask 1046532
      %vm2128 = vmor %vm2126, %vm2127
      %v2129 = vrot.slane %v2062, 5
      %v2130 = vrot.slane %v2129, 4
      %v2131 = vrot.slane %v1306, 5
      %v2132 = vsel %vm2128, %v2130, %v2131
      %v2133 = vrot.slane %v2131, 4
      %v2134 = vrot.slane %v1307, 5
      %v2135 = vsel %vm2128, %v2133, %v2134
      %v2136 = vrot.slane %v2063, 5
      %v2137 = vrot.slane %v2136, 4
      %v2138 = vrot.slane %v1309, 5
      %v2139 = vsel %vm2128, %v2137, %v2138
      %v2140 = vrot.slane %v2138, 4
      %v2141 = vrot.slane %v1310, 5
      %v2142 = vsel %vm2128, %v2140, %v2141
      %v2143 = vrot.slane %v2064, 5
      %v2144 = vrot.slane %v2143, 4
      %v2145 = vrot.slane %v1312, 5
      %v2146 = vsel %vm2128, %v2144, %v2145
      %v2147 = vrot.slane %v2145, 4
      %v2148 = vrot.slane %v1313, 5
      %v2149 = vsel %vm2128, %v2147, %v2148
      %v2150 = vrot.slane %v2065, 5
      %v2151 = vrot.slane %v2150, 4
      %v2152 = vrot.slane %v1315, 5
      %v2153 = vsel %vm2128, %v2151, %v2152
      %v2154 = vrot.slane %v2152, 4
      %v2155 = vrot.slane %v1316, 5
      %v2156 = vsel %vm2128, %v2154, %v2155
      %v2157 = vrot.slane %v2066, 5
      %v2158 = vrot.slane %v2157, 4
      %v2159 = vrot.slane %v1318, 5
      %v2160 = vsel %vm2128, %v2158, %v2159
      %v2161 = vrot.slane %v2159, 4
      %v2162 = vrot.slane %v1319, 5
      %v2163 = vsel %vm2128, %v2161, %v2162
      %v2164 = vrot.slane %v2067, 5
      %v2165 = vrot.slane %v2164, 4
      %v2166 = vrot.slane %v1321, 5
      %v2167 = vsel %vm2128, %v2165, %v2166
      %v2168 = vrot.slane %v2166, 4
      %v2169 = vrot.slane %v1322, 5
      %v2170 = vsel %vm2128, %v2168, %v2169
      %v2171 = vrot.slane %v2068, 5
      %v2172 = vrot.slane %v2171, 4
      %v2173 = vrot.slane %v1324, 5
      %v2174 = vsel %vm2128, %v2172, %v2173
      %v2175 = vrot.slane %v2173, 4
      %v2176 = vrot.slane %v1325, 5
      %v2177 = vsel %vm2128, %v2175, %v2176
      %v2178 = vrot.slane %v2069, 5
      %v2179 = vrot.slane %v2178, 4
      %v2180 = vrot.slane %v1327, 5
      %v2181 = vsel %vm2128, %v2179, %v2180
      %v2182 = vrot.slane %v2180, 4
      %v2183 = vrot.slane %v1328, 5
      %v2184 = vsel %vm2128, %v2182, %v2183
      %v2185 = vrot.slane %v2070, 5
      %v2186 = vrot.slane %v2185, 4
      %v2187 = vrot.slane %v1330, 5
      %v2188 = vsel %vm2128, %v2186, %v2187
      %v2189 = vrot.slane %v2187, 4
      %v2190 = vrot.slane %v1331, 5
      %v2191 = vsel %vm2128, %v2189, %v2190
      %v2192 = vrot.slane %v2071, 5
      %v2193 = vrot.slane %v2192, 4
      %v2194 = vrot.slane %v1333, 5
      %v2195 = vsel %vm2128, %v2193, %v2194
      %v2196 = vrot.slane %v2194, 4
      %v2197 = vrot.slane %v1334, 5
      %v2198 = vsel %vm2128, %v2196, %v2197
      %v2199 = vrot.slane %v2072, 5
      %v2200 = vrot.slane %v2199, 4
      %v2201 = vrot.slane %v1336, 5
      %v2202 = vsel %vm2128, %v2200, %v2201
      %v2203 = vrot.slane %v2201, 4
      %v2204 = vrot.slane %v1337, 5
      %v2205 = vsel %vm2128, %v2203, %v2204
      %v2206 = vrot.slane %v2073, 5
      %v2207 = vrot.slane %v2206, 4
      %v2208 = vrot.slane %v1339, 5
      %v2209 = vsel %vm2128, %v2207, %v2208
      %v2210 = vrot.slane %v2208, 4
      %v2211 = vrot.slane %v1340, 5
      %v2212 = vsel %vm2128, %v2210, %v2211
      %v2213 = vrot.slane %v2074, 5
      %v2214 = vrot.slane %v2213, 4
      %v2215 = vrot.slane %v1342, 5
      %v2216 = vsel %vm2128, %v2214, %v2215
      %v2217 = vrot.slane %v2215, 4
      %v2218 = vrot.slane %v1343, 5
      %v2219 = vsel %vm2128, %v2217, %v2218
      %v2220 = vrot.slane %v2075, 5
      %v2221 = vrot.slane %v2220, 4
      %v2222 = vrot.slane %v1345, 5
      %v2223 = vsel %vm2128, %v2221, %v2222
      %v2224 = vrot.slane %v2222, 4
      %v2225 = vrot.slane %v1346, 5
      %v2226 = vsel %vm2128, %v2224, %v2225
      %v2227 = vrot.slane %v2076, 5
      %v2228 = vrot.slane %v2227, 4
      %v2229 = vrot.slane %v1348, 5
      %v2230 = vsel %vm2128, %v2228, %v2229
      %v2231 = vrot.slane %v2229, 4
      %v2232 = vrot.slane %v1349, 5
      %v2233 = vsel %vm2128, %v2231, %v2232
      %v2234 = vrot.slane %v2077, 5
      %v2235 = vrot.slane %v2234, 4
      %v2236 = vrot.slane %v1351, 5
      %v2237 = vsel %vm2128, %v2235, %v2236
      %v2238 = vrot.slane %v2236, 4
      %v2239 = vrot.slane %v1352, 5
      %v2240 = vsel %vm2128, %v2238, %v2239
      %s2241 = scalar_lea.vmem %s1, 64
      %v2242 = vld [vmem:[%s2241] sm:$0xf]
      %v2243 = vld [vmem:[%s2241 + $0x4] sm:$0xf]
      %v2244 = vld [vmem:[%s2241 + $0x8] sm:$0xf]
      %v2245 = vld [vmem:[%s2241 + $0xc] sm:$0xf]
      %v2246 = vld [vmem:[%s2241 + $0x10] sm:$0xf]
      %v2247 = vld [vmem:[%s2241 + $0x14] sm:$0xf]
      %v2248 = vld [vmem:[%s2241 + $0x18] sm:$0xf]
      %v2249 = vld [vmem:[%s2241 + $0x1c] sm:$0xf]
      %v2250 = vunpack.c.l.b16 %v2132
      %v2251 = vunpack.c.l.b16 %v2135
      %v2252 = vunpack.c.l.b16 %v2139
      %v2253 = vunpack.c.l.b16 %v2142
      %v2254 = vunpack.c.l.b16 %v2146
      %v2255 = vunpack.c.l.b16 %v2149
      %v2256 = vunpack.c.l.b16 %v2153
      %v2257 = vunpack.c.l.b16 %v2156
      %v2258 = vunpack.c.l.b16 %v2160
      %v2259 = vunpack.c.l.b16 %v2163
      %v2260 = vunpack.c.l.b16 %v2167
      %v2261 = vunpack.c.l.b16 %v2170
      %v2262 = vunpack.c.l.b16 %v2174
      %v2263 = vunpack.c.l.b16 %v2177
      %v2264 = vunpack.c.l.b16 %v2181
      %v2265 = vunpack.c.l.b16 %v2184
      %v2266 = vunpack.c.l.b16 %v2188
      %v2267 = vunpack.c.l.b16 %v2191
      %v2268 = vunpack.c.l.b16 %v2195
      %v2269 = vunpack.c.l.b16 %v2198
      %v2270 = vunpack.c.l.b16 %v2202
      %v2271 = vunpack.c.l.b16 %v2205
      %v2272 = vunpack.c.l.b16 %v2209
      %v2273 = vunpack.c.l.b16 %v2212
      %v2274 = vunpack.c.l.b16 %v2216
      %v2275 = vunpack.c.l.b16 %v2219
      %v2276 = vunpack.c.l.b16 %v2223
      %v2277 = vunpack.c.l.b16 %v2226
      %v2278 = vunpack.c.l.b16 %v2230
      %v2279 = vunpack.c.l.b16 %v2233
      %v2280 = vunpack.c.l.b16 %v2237
      %v2281 = vunpack.c.l.b16 %v2240
      %v2282 = vpack.c.b16 %v2251, %v2250
      %v2283 = vpack.c.b16 %v2253, %v2252
      %v2284 = vpack.c.b16 %v2255, %v2254
      %v2285 = vpack.c.b16 %v2257, %v2256
      %v2286 = vpack.c.b16 %v2259, %v2258
      %v2287 = vpack.c.b16 %v2261, %v2260
      %v2288 = vpack.c.b16 %v2263, %v2262
      %v2289 = vpack.c.b16 %v2265, %v2264
      %v2290 = vpack.c.b16 %v2267, %v2266
      %v2291 = vpack.c.b16 %v2269, %v2268
      %v2292 = vpack.c.b16 %v2271, %v2270
      %v2293 = vpack.c.b16 %v2273, %v2272
      %v2294 = vpack.c.b16 %v2275, %v2274
      %v2295 = vpack.c.b16 %v2277, %v2276
      %v2296 = vpack.c.b16 %v2279, %v2278
      %v2297 = vpack.c.b16 %v2281, %v2280
      %v2306 = vunpack.c.l.b16 %v2242
      %v2307 = vunpack.c.l.b16 %v2243
      %v2308 = vunpack.c.l.b16 %v2244
      %v2309 = vunpack.c.l.b16 %v2245
      %v2310 = vunpack.c.l.b16 %v2246
      %v2311 = vunpack.c.l.b16 %v2247
      %v2312 = vunpack.c.l.b16 %v2248
      %v2313 = vunpack.c.l.b16 %v2249
      %v2314 = vpack.c.b16 %v2307, %v2306
      %v2315 = vpack.c.b16 %v2309, %v2308
      %v2316 = vpack.c.b16 %v2311, %v2310
      %v2317 = vpack.c.b16 %v2313, %v2312
      %v2323 = vsel %vm1063, %v2282, 0
      %v2326 = vsel %vm1063, %v2283, 0
      %v2329 = vsel %vm1063, %v2284, 0
      %v2332 = vsel %vm1063, %v2285, 0
      %v2335 = vsel %vm1063, %v2286, 0
      %v2338 = vsel %vm1063, %v2287, 0
      %v2341 = vsel %vm1063, %v2288, 0
      %v2344 = vsel %vm1063, %v2289, 0
      %v2347 = vsel %vm1063, %v2290, 0
      %v2350 = vsel %vm1063, %v2291, 0
      %v2353 = vsel %vm1063, %v2292, 0
      %v2356 = vsel %vm1063, %v2293, 0
      %v2359 = vsel %vm1063, %v2294, 0
      %v2362 = vsel %vm1063, %v2295, 0
      %v2365 = vsel %vm1063, %v2296, 0
      %v2368 = vsel %vm1063, %v2297, 0
      %2370 = vmatprep.subr.bf16.mxu0 0
      %2371 = vmatpush1.bf16.msra.mxu0 %v2314
      %2372 = vmatprep.subr.bf16.mxu0 0
      %2373 = vmatpush1.bf16.msra.mxu0 %v2315
      %2374 = vmatprep.subr.bf16.mxu0 0
      %2375 = vmatpush1.bf16.msra.mxu0 %v2316
      %2376 = vmatprep.subr.bf16.mxu0 0
      %2377 = vmatpush1.bf16.msra.mxu0 %v2317
      %2378 = vmatprep.subr.bf16.mxu0 0
      %2379 = vmatpush1.bf16.msra.mxu0 0
      %2380 = vmatprep.subr.bf16.mxu0 0
      %2381 = vmatpush1.bf16.msra.mxu0 0
      %2382 = vmatprep.subr.bf16.mxu0 0
      %2383 = vmatpush1.bf16.msra.mxu0 0
      %2384 = vmatprep.subr.bf16.mxu0 0
      %2385 = vmatpush1.bf16.msra.mxu0 0
      %2386 = vmatprep.subr.bf16.mxu0 0
      %2387 = vmatpush1.bf16.msra.mxu0 0
      %2388 = vmatprep.subr.bf16.mxu0 0
      %2389 = vmatpush1.bf16.msra.mxu0 0
      %2390 = vmatprep.subr.bf16.mxu0 0
      %2391 = vmatpush1.bf16.msra.mxu0 0
      %2392 = vmatprep.subr.bf16.mxu0 0
      %2393 = vmatpush1.bf16.msra.mxu0 0
      %2394 = vmatprep.subr.bf16.mxu0 0
      %2395 = vmatpush1.bf16.msra.mxu0 0
      %2396 = vmatprep.subr.bf16.mxu0 0
      %2397 = vmatpush1.bf16.msra.mxu0 0
      %2398 = vmatprep.subr.bf16.mxu0 0
      %2399 = vmatpush1.bf16.msra.mxu0 0
      %2400 = vmatprep.subr.bf16.mxu0 0
      %2401 = vmatpush1.bf16.msra.mxu0 0
      %2402 = vmatprep.mubr.bf16.mxu0 0
      %2403 = vmatmul.mubr.bf16.gmra.mrb[0].mxu0 %v2323
      %v2404 = vpop.f32.mrb[0].mxu0
      %v2405 = vadd.f32 0.0, %v2404
      %v2406 = vpop.f32.mrb[0].mxu0
      %v2407 = vpop.f32.mrb[0].mxu0
      %v2408 = vadd.f32 0.0, %v2407
      %v2409 = vpop.f32.mrb[0].mxu0
      %2410 = vmatprep.mubr.bf16.mxu0 0
      %2411 = vmatmul.mubr.bf16.gmra.mrb[0].mxu0 %v2326
      %v2412 = vpop.f32.mrb[0].mxu0
      %v2413 = vadd.f32 0.0, %v2412
      %v2414 = vpop.f32.mrb[0].mxu0
      %v2415 = vpop.f32.mrb[0].mxu0
      %v2416 = vadd.f32 0.0, %v2415
      %v2417 = vpop.f32.mrb[0].mxu0
      %2418 = vmatprep.mubr.bf16.mxu0 0
      %2419 = vmatmul.mubr.bf16.gmra.mrb[0].mxu0 %v2329
      %v2420 = vpop.f32.mrb[0].mxu0
      %v2421 = vadd.f32 0.0, %v2420
      %v2422 = vpop.f32.mrb[0].mxu0
      %v2423 = vpop.f32.mrb[0].mxu0
      %v2424 = vadd.f32 0.0, %v2423
      %v2425 = vpop.f32.mrb[0].mxu0
      %2426 = vmatprep.mubr.bf16.mxu0 0
      %2427 = vmatmul.mubr.bf16.gmra.mrb[0].mxu0 %v2332
      %v2428 = vpop.f32.mrb[0].mxu0
      %v2429 = vadd.f32 0.0, %v2428
      %v2430 = vpop.f32.mrb[0].mxu0
      %v2431 = vpop.f32.mrb[0].mxu0
      %v2432 = vadd.f32 0.0, %v2431
      %v2433 = vpop.f32.mrb[0].mxu0
      %2434 = vmatprep.mubr.bf16.mxu0 0
      %2435 = vmatmul.mubr.bf16.gmra.mrb[0].mxu0 %v2335
      %v2436 = vpop.f32.mrb[0].mxu0
      %v2437 = vadd.f32 0.0, %v2436
      %v2438 = vpop.f32.mrb[0].mxu0
      %v2439 = vpop.f32.mrb[0].mxu0
      %v2440 = vadd.f32 0.0, %v2439
      %v2441 = vpop.f32.mrb[0].mxu0
      %2442 = vmatprep.mubr.bf16.mxu0 0
      %2443 = vmatmul.mubr.bf16.gmra.mrb[0].mxu0 %v2338
      %v2444 = vpop.f32.mrb[0].mxu0
      %v2445 = vadd.f32 0.0, %v2444
      %v2446 = vpop.f32.mrb[0].mxu0
      %v2447 = vpop.f32.mrb[0].mxu0
      %v2448 = vadd.f32 0.0, %v2447
      %v2449 = vpop.f32.mrb[0].mxu0
      %2450 = vmatprep.mubr.bf16.mxu0 0
      %2451 = vmatmul.mubr.bf16.gmra.mrb[0].mxu0 %v2341
      %v2452 = vpop.f32.mrb[0].mxu0
      %v2453 = vadd.f32 0.0, %v2452
      %v2454 = vpop.f32.mrb[0].mxu0
      %v2455 = vpop.f32.mrb[0].mxu0
      %v2456 = vadd.f32 0.0, %v2455
      %v2457 = vpop.f32.mrb[0].mxu0
      %2458 = vmatprep.mubr.bf16.mxu0 0
      %2459 = vmatmul.mubr.bf16.gmra.mrb[0].mxu0 %v2344
      %v2460 = vpop.f32.mrb[0].mxu0
      %v2461 = vadd.f32 0.0, %v2460
      %v2462 = vpop.f32.mrb[0].mxu0
      %v2463 = vpop.f32.mrb[0].mxu0
      %v2464 = vadd.f32 0.0, %v2463
      %v2465 = vpop.f32.mrb[0].mxu0
      %2466 = vmatprep.mubr.bf16.mxu0 0
      %2467 = vmatmul.mubr.bf16.gmra.mrb[0].mxu0 %v2347
      %v2468 = vpop.f32.mrb[0].mxu0
      %v2469 = vadd.f32 0.0, %v2468
      %v2470 = vpop.f32.mrb[0].mxu0
      %v2471 = vpop.f32.mrb[0].mxu0
      %v2472 = vadd.f32 0.0, %v2471
      %v2473 = vpop.f32.mrb[0].mxu0
      %2474 = vmatprep.mubr.bf16.mxu0 0
      %2475 = vmatmul.mubr.bf16.gmra.mrb[0].mxu0 %v2350
      %v2476 = vpop.f32.mrb[0].mxu0
      %v2477 = vadd.f32 0.0, %v2476
      %v2478 = vpop.f32.mrb[0].mxu0
      %v2479 = vpop.f32.mrb[0].mxu0
      %v2480 = vadd.f32 0.0, %v2479
      %v2481 = vpop.f32.mrb[0].mxu0
      %2482 = vmatprep.mubr.bf16.mxu0 0
      %2483 = vmatmul.mubr.bf16.gmra.mrb[0].mxu0 %v2353
      %v2484 = vpop.f32.mrb[0].mxu0
      %v2485 = vadd.f32 0.0, %v2484
      %v2486 = vpop.f32.mrb[0].mxu0
      %v2487 = vpop.f32.mrb[0].mxu0
      %v2488 = vadd.f32 0.0, %v2487
      %v2489 = vpop.f32.mrb[0].mxu0
      %2490 = vmatprep.mubr.bf16.mxu0 0
      %2491 = vmatmul.mubr.bf16.gmra.mrb[0].mxu0 %v2356
      %v2492 = vpop.f32.mrb[0].mxu0
      %v2493 = vadd.f32 0.0, %v2492
      %v2494 = vpop.f32.mrb[0].mxu0
      %v2495 = vpop.f32.mrb[0].mxu0
      %v2496 = vadd.f32 0.0, %v2495
      %v2497 = vpop.f32.mrb[0].mxu0
      %2498 = vmatprep.mubr.bf16.mxu0 0
      %2499 = vmatmul.mubr.bf16.gmra.mrb[0].mxu0 %v2359
      %v2500 = vpop.f32.mrb[0].mxu0
      %v2501 = vadd.f32 0.0, %v2500
      %v2502 = vpop.f32.mrb[0].mxu0
      %v2503 = vpop.f32.mrb[0].mxu0
      %v2504 = vadd.f32 0.0, %v2503
      %v2505 = vpop.f32.mrb[0].mxu0
      %2506 = vmatprep.mubr.bf16.mxu0 0
      %2507 = vmatmul.mubr.bf16.gmra.mrb[0].mxu0 %v2362
      %v2508 = vpop.f32.mrb[0].mxu0
      %v2509 = vadd.f32 0.0, %v2508
      %v2510 = vpop.f32.mrb[0].mxu0
      %v2511 = vpop.f32.mrb[0].mxu0
      %v2512 = vadd.f32 0.0, %v2511
      %v2513 = vpop.f32.mrb[0].mxu0
      %2514 = vmatprep.mubr.bf16.mxu0 0
      %2515 = vmatmul.mubr.bf16.gmra.mrb[0].mxu0 %v2365
      %v2516 = vpop.f32.mrb[0].mxu0
      %v2517 = vadd.f32 0.0, %v2516
      %v2518 = vpop.f32.mrb[0].mxu0
      %v2519 = vpop.f32.mrb[0].mxu0
      %v2520 = vadd.f32 0.0, %v2519
      %v2521 = vpop.f32.mrb[0].mxu0
      %2522 = vmatprep.mubr.bf16.mxu0 0
      %2523 = vmatmul.mubr.bf16.gmra.mrb[0].mxu0 %v2368
      %v2524 = vpop.f32.mrb[0].mxu0
      %v2525 = vadd.f32 0.0, %v2524
      %v2526 = vpop.f32.mrb[0].mxu0
      %v2527 = vpop.f32.mrb[0].mxu0
      %v2528 = vadd.f32 0.0, %v2527
      %v2529 = vpop.f32.mrb[0].mxu0
      %2530 = vdwg.mxu0
      %v2531 = vadd.f32 %v2030, %v2405
      %v2532 = vadd.f32 %v2031, %v2408
      %v2533 = vadd.f32 %v2032, %v2413
      %v2534 = vadd.f32 %v2033, %v2416
      %v2535 = vadd.f32 %v2034, %v2421
      %v2536 = vadd.f32 %v2035, %v2424
      %v2537 = vadd.f32 %v2036, %v2429
      %v2538 = vadd.f32 %v2037, %v2432
      %v2539 = vadd.f32 %v2038, %v2437
      %v2540 = vadd.f32 %v2039, %v2440
      %v2541 = vadd.f32 %v2040, %v2445
      %v2542 = vadd.f32 %v2041, %v2448
      %v2543 = vadd.f32 %v2042, %v2453
      %v2544 = vadd.f32 %v2043, %v2456
      %v2545 = vadd.f32 %v2044, %v2461
      %v2546 = vadd.f32 %v2045, %v2464
      %v2547 = vadd.f32 %v2046, %v2469
      %v2548 = vadd.f32 %v2047, %v2472
      %v2549 = vadd.f32 %v2048, %v2477
      %v2550 = vadd.f32 %v2049, %v2480
      %v2551 = vadd.f32 %v2050, %v2485
      %v2552 = vadd.f32 %v2051, %v2488
      %v2553 = vadd.f32 %v2052, %v2493
      %v2554 = vadd.f32 %v2053, %v2496
      %v2555 = vadd.f32 %v2054, %v2501
      %v2556 = vadd.f32 %v2055, %v2504
      %v2557 = vadd.f32 %v2056, %v2509
      %v2558 = vadd.f32 %v2057, %v2512
      %v2559 = vadd.f32 %v2058, %v2517
      %v2560 = vadd.f32 %v2059, %v2520
      %v2561 = vadd.f32 %v2060, %v2525
      %v2562 = vadd.f32 %v2061, %v2528
      %v2563 = vld [vmem:[%s235] sm:$0xf]
      %v2564 = vld [vmem:[%s235 + $0x4] sm:$0xf]
      %v2565 = vld [vmem:[%s235 + $0xc] sm:$0xf]
      %v2566 = vld [vmem:[%s235 + $0x10] sm:$0xf]
      %v2567 = vld [vmem:[%s235 + $0x18] sm:$0xf]
      %v2568 = vld [vmem:[%s235 + $0x1c] sm:$0xf]
      %v2569 = vld [vmem:[%s235 + $0x24] sm:$0xf]
      %v2570 = vld [vmem:[%s235 + $0x28] sm:$0xf]
      %v2571 = vld [vmem:[%s235 + $0x30] sm:$0xf]
      %v2572 = vld [vmem:[%s235 + $0x34] sm:$0xf]
      %v2573 = vld [vmem:[%s235 + $0x3c] sm:$0xf]
      %v2574 = vld [vmem:[%s235 + $0x40] sm:$0xf]
      %v2575 = vld [vmem:[%s235 + $0x48] sm:$0xf]
      %v2576 = vld [vmem:[%s235 + $0x4c] sm:$0xf]
      %v2577 = vld [vmem:[%s235 + $0x54] sm:$0xf]
      %v2578 = vld [vmem:[%s235 + $0x58] sm:$0xf]
      %v2579 = vld [vmem:[%s235 + $0x60] sm:$0xf]
      %v2580 = vld [vmem:[%s235 + $0x64] sm:$0xf]
      %v2581 = vld [vmem:[%s235 + $0x6c] sm:$0xf]
      %v2582 = vld [vmem:[%s235 + $0x70] sm:$0xf]
      %v2583 = vld [vmem:[%s235 + $0x78] sm:$0xf]
      %v2584 = vld [vmem:[%s235 + $0x7c] sm:$0xf]
      %v2585 = vld [vmem:[%s235 + $0x84] sm:$0xf]
      %v2586 = vld [vmem:[%s235 + $0x88] sm:$0xf]
      %v2587 = vld [vmem:[%s235 + $0x90] sm:$0xf]
      %v2588 = vld [vmem:[%s235 + $0x94] sm:$0xf]
      %v2589 = vld [vmem:[%s235 + $0x9c] sm:$0xf]
      %v2590 = vld [vmem:[%s235 + $0xa0] sm:$0xf]
      %v2591 = vld [vmem:[%s235 + $0xa8] sm:$0xf]
      %v2592 = vld [vmem:[%s235 + $0xac] sm:$0xf]
      %v2593 = vld [vmem:[%s235 + $0xb4] sm:$0xf]
      %v2594 = vld [vmem:[%s235 + $0xb8] sm:$0xf]
      %s2595 = scalar_lea.vmem %s1, 96
      %v2596 = vld [vmem:[%s2595] sm:$0xf]
      %v2597 = vld [vmem:[%s2595 + $0x4] sm:$0xf]
      %v2598 = vld [vmem:[%s2595 + $0x8] sm:$0xf]
      %v2599 = vld [vmem:[%s2595 + $0xc] sm:$0xf]
      %v2600 = vld [vmem:[%s2595 + $0x10] sm:$0xf]
      %v2601 = vld [vmem:[%s2595 + $0x14] sm:$0xf]
      %v2602 = vld [vmem:[%s2595 + $0x18] sm:$0xf]
      %v2603 = vld [vmem:[%s2595 + $0x1c] sm:$0xf]
      %v2636 = vunpack.c.l.b16 %v2563
      %v2637 = vunpack.c.l.b16 %v2564
      %v2638 = vunpack.c.l.b16 %v2565
      %v2639 = vunpack.c.l.b16 %v2566
      %v2640 = vunpack.c.l.b16 %v2567
      %v2641 = vunpack.c.l.b16 %v2568
      %v2642 = vunpack.c.l.b16 %v2569
      %v2643 = vunpack.c.l.b16 %v2570
      %v2644 = vunpack.c.l.b16 %v2571
      %v2645 = vunpack.c.l.b16 %v2572
      %v2646 = vunpack.c.l.b16 %v2573
      %v2647 = vunpack.c.l.b16 %v2574
      %v2648 = vunpack.c.l.b16 %v2575
      %v2649 = vunpack.c.l.b16 %v2576
      %v2650 = vunpack.c.l.b16 %v2577
      %v2651 = vunpack.c.l.b16 %v2578
      %v2652 = vunpack.c.l.b16 %v2579
      %v2653 = vunpack.c.l.b16 %v2580
      %v2654 = vunpack.c.l.b16 %v2581
      %v2655 = vunpack.c.l.b16 %v2582
      %v2656 = vunpack.c.l.b16 %v2583
      %v2657 = vunpack.c.l.b16 %v2584
      %v2658 = vunpack.c.l.b16 %v2585
      %v2659 = vunpack.c.l.b16 %v2586
      %v2660 = vunpack.c.l.b16 %v2587
      %v2661 = vunpack.c.l.b16 %v2588
      %v2662 = vunpack.c.l.b16 %v2589
      %v2663 = vunpack.c.l.b16 %v2590
      %v2664 = vunpack.c.l.b16 %v2591
      %v2665 = vunpack.c.l.b16 %v2592
      %v2666 = vunpack.c.l.b16 %v2593
      %v2667 = vunpack.c.l.b16 %v2594
      %v2668 = vpack.c.b16 %v2637, %v2636
      %v2669 = vpack.c.b16 %v2639, %v2638
      %v2670 = vpack.c.b16 %v2641, %v2640
      %v2671 = vpack.c.b16 %v2643, %v2642
      %v2672 = vpack.c.b16 %v2645, %v2644
      %v2673 = vpack.c.b16 %v2647, %v2646
      %v2674 = vpack.c.b16 %v2649, %v2648
      %v2675 = vpack.c.b16 %v2651, %v2650
      %v2676 = vpack.c.b16 %v2653, %v2652
      %v2677 = vpack.c.b16 %v2655, %v2654
      %v2678 = vpack.c.b16 %v2657, %v2656
      %v2679 = vpack.c.b16 %v2659, %v2658
      %v2680 = vpack.c.b16 %v2661, %v2660
      %v2681 = vpack.c.b16 %v2663, %v2662
      %v2682 = vpack.c.b16 %v2665, %v2664
      %v2683 = vpack.c.b16 %v2667, %v2666
      %v2692 = vunpack.c.l.b16 %v2596
      %v2693 = vunpack.c.l.b16 %v2597
      %v2694 = vunpack.c.l.b16 %v2598
      %v2695 = vunpack.c.l.b16 %v2599
      %v2696 = vunpack.c.l.b16 %v2600
      %v2697 = vunpack.c.l.b16 %v2601
      %v2698 = vunpack.c.l.b16 %v2602
      %v2699 = vunpack.c.l.b16 %v2603
      %v2700 = vpack.c.b16 %v2693, %v2692
      %v2701 = vpack.c.b16 %v2695, %v2694
      %v2702 = vpack.c.b16 %v2697, %v2696
      %v2703 = vpack.c.b16 %v2699, %v2698
      %v2709 = vsel %vm1063, %v2668, 0
      %v2712 = vsel %vm1063, %v2669, 0
      %v2715 = vsel %vm1063, %v2670, 0
      %v2718 = vsel %vm1063, %v2671, 0
      %v2721 = vsel %vm1063, %v2672, 0
      %v2724 = vsel %vm1063, %v2673, 0
      %v2727 = vsel %vm1063, %v2674, 0
      %v2730 = vsel %vm1063, %v2675, 0
      %v2733 = vsel %vm1063, %v2676, 0
      %v2736 = vsel %vm1063, %v2677, 0
      %v2739 = vsel %vm1063, %v2678, 0
      %v2742 = vsel %vm1063, %v2679, 0
      %v2745 = vsel %vm1063, %v2680, 0
      %v2748 = vsel %vm1063, %v2681, 0
      %v2751 = vsel %vm1063, %v2682, 0
      %v2754 = vsel %vm1063, %v2683, 0
      %2756 = vmatprep.subr.bf16.mxu0 0
      %2757 = vmatpush1.bf16.msra.mxu0 %v2700
      %2758 = vmatprep.subr.bf16.mxu0 0
      %2759 = vmatpush1.bf16.msra.mxu0 %v2701
      %2760 = vmatprep.subr.bf16.mxu0 0
      %2761 = vmatpush1.bf16.msra.mxu0 %v2702
      %2762 = vmatprep.subr.bf16.mxu0 0
      %2763 = vmatpush1.bf16.msra.mxu0 %v2703
      %2764 = vmatprep.subr.bf16.mxu0 0
      %2765 = vmatpush1.bf16.msra.mxu0 0
      %2766 = vmatprep.subr.bf16.mxu0 0
      %2767 = vmatpush1.bf16.msra.mxu0 0
      %2768 = vmatprep.subr.bf16.mxu0 0
      %2769 = vmatpush1.bf16.msra.mxu0 0
      %2770 = vmatprep.subr.bf16.mxu0 0
      %2771 = vmatpush1.bf16.msra.mxu0 0
      %2772 = vmatprep.subr.bf16.mxu0 0
      %2773 = vmatpush1.bf16.msra.mxu0 0
      %2774 = vmatprep.subr.bf16.mxu0 0
      %2775 = vmatpush1.bf16.msra.mxu0 0
      %2776 = vmatprep.subr.bf16.mxu0 0
      %2777 = vmatpush1.bf16.msra.mxu0 0
      %2778 = vmatprep.subr.bf16.mxu0 0
      %2779 = vmatpush1.bf16.msra.mxu0 0
      %2780 = vmatprep.subr.bf16.mxu0 0
      %2781 = vmatpush1.bf16.msra.mxu0 0
      %2782 = vmatprep.subr.bf16.mxu0 0
      %2783 = vmatpush1.bf16.msra.mxu0 0
      %2784 = vmatprep.subr.bf16.mxu0 0
      %2785 = vmatpush1.bf16.msra.mxu0 0
      %2786 = vmatprep.subr.bf16.mxu0 0
      %2787 = vmatpush1.bf16.msra.mxu0 0
      %2788 = vmatprep.mubr.bf16.mxu0 0
      %2789 = vmatmul.mubr.bf16.gmra.mrb[0].mxu0 %v2709
      %v2790 = vpop.f32.mrb[0].mxu0
      %v2791 = vadd.f32 0.0, %v2790
      %v2792 = vpop.f32.mrb[0].mxu0
      %v2793 = vpop.f32.mrb[0].mxu0
      %v2794 = vadd.f32 0.0, %v2793
      %v2795 = vpop.f32.mrb[0].mxu0
      %2796 = vmatprep.mubr.bf16.mxu0 0
      %2797 = vmatmul.mubr.bf16.gmra.mrb[0].mxu0 %v2712
      %v2798 = vpop.f32.mrb[0].mxu0
      %v2799 = vadd.f32 0.0, %v2798
      %v2800 = vpop.f32.mrb[0].mxu0
      %v2801 = vpop.f32.mrb[0].mxu0
      %v2802 = vadd.f32 0.0, %v2801
      %v2803 = vpop.f32.mrb[0].mxu0
      %2804 = vmatprep.mubr.bf16.mxu0 0
      %2805 = vmatmul.mubr.bf16.gmra.mrb[0].mxu0 %v2715
      %v2806 = vpop.f32.mrb[0].mxu0
      %v2807 = vadd.f32 0.0, %v2806
      %v2808 = vpop.f32.mrb[0].mxu0
      %v2809 = vpop.f32.mrb[0].mxu0
      %v2810 = vadd.f32 0.0, %v2809
      %v2811 = vpop.f32.mrb[0].mxu0
      %2812 = vmatprep.mubr.bf16.mxu0 0
      %2813 = vmatmul.mubr.bf16.gmra.mrb[0].mxu0 %v2718
      %v2814 = vpop.f32.mrb[0].mxu0
      %v2815 = vadd.f32 0.0, %v2814
      %v2816 = vpop.f32.mrb[0].mxu0
      %v2817 = vpop.f32.mrb[0].mxu0
      %v2818 = vadd.f32 0.0, %v2817
      %v2819 = vpop.f32.mrb[0].mxu0
      %2820 = vmatprep.mubr.bf16.mxu0 0
      %2821 = vmatmul.mubr.bf16.gmra.mrb[0].mxu0 %v2721
      %v2822 = vpop.f32.mrb[0].mxu0
      %v2823 = vadd.f32 0.0, %v2822
      %v2824 = vpop.f32.mrb[0].mxu0
      %v2825 = vpop.f32.mrb[0].mxu0
      %v2826 = vadd.f32 0.0, %v2825
      %v2827 = vpop.f32.mrb[0].mxu0
      %2828 = vmatprep.mubr.bf16.mxu0 0
      %2829 = vmatmul.mubr.bf16.gmra.mrb[0].mxu0 %v2724
      %v2830 = vpop.f32.mrb[0].mxu0
      %v2831 = vadd.f32 0.0, %v2830
      %v2832 = vpop.f32.mrb[0].mxu0
      %v2833 = vpop.f32.mrb[0].mxu0
      %v2834 = vadd.f32 0.0, %v2833
      %v2835 = vpop.f32.mrb[0].mxu0
      %2836 = vmatprep.mubr.bf16.mxu0 0
      %2837 = vmatmul.mubr.bf16.gmra.mrb[0].mxu0 %v2727
      %v2838 = vpop.f32.mrb[0].mxu0
      %v2839 = vadd.f32 0.0, %v2838
      %v2840 = vpop.f32.mrb[0].mxu0
      %v2841 = vpop.f32.mrb[0].mxu0
      %v2842 = vadd.f32 0.0, %v2841
      %v2843 = vpop.f32.mrb[0].mxu0
      %2844 = vmatprep.mubr.bf16.mxu0 0
      %2845 = vmatmul.mubr.bf16.gmra.mrb[0].mxu0 %v2730
      %v2846 = vpop.f32.mrb[0].mxu0
      %v2847 = vadd.f32 0.0, %v2846
      %v2848 = vpop.f32.mrb[0].mxu0
      %v2849 = vpop.f32.mrb[0].mxu0
      %v2850 = vadd.f32 0.0, %v2849
      %v2851 = vpop.f32.mrb[0].mxu0
      %2852 = vmatprep.mubr.bf16.mxu0 0
      %2853 = vmatmul.mubr.bf16.gmra.mrb[0].mxu0 %v2733
      %v2854 = vpop.f32.mrb[0].mxu0
      %v2855 = vadd.f32 0.0, %v2854
      %v2856 = vpop.f32.mrb[0].mxu0
      %v2857 = vpop.f32.mrb[0].mxu0
      %v2858 = vadd.f32 0.0, %v2857
      %v2859 = vpop.f32.mrb[0].mxu0
      %2860 = vmatprep.mubr.bf16.mxu0 0
      %2861 = vmatmul.mubr.bf16.gmra.mrb[0].mxu0 %v2736
      %v2862 = vpop.f32.mrb[0].mxu0
      %v2863 = vadd.f32 0.0, %v2862
      %v2864 = vpop.f32.mrb[0].mxu0
      %v2865 = vpop.f32.mrb[0].mxu0
      %v2866 = vadd.f32 0.0, %v2865
      %v2867 = vpop.f32.mrb[0].mxu0
      %2868 = vmatprep.mubr.bf16.mxu0 0
      %2869 = vmatmul.mubr.bf16.gmra.mrb[0].mxu0 %v2739
      %v2870 = vpop.f32.mrb[0].mxu0
      %v2871 = vadd.f32 0.0, %v2870
      %v2872 = vpop.f32.mrb[0].mxu0
      %v2873 = vpop.f32.mrb[0].mxu0
      %v2874 = vadd.f32 0.0, %v2873
      %v2875 = vpop.f32.mrb[0].mxu0
      %2876 = vmatprep.mubr.bf16.mxu0 0
      %2877 = vmatmul.mubr.bf16.gmra.mrb[0].mxu0 %v2742
      %v2878 = vpop.f32.mrb[0].mxu0
      %v2879 = vadd.f32 0.0, %v2878
      %v2880 = vpop.f32.mrb[0].mxu0
      %v2881 = vpop.f32.mrb[0].mxu0
      %v2882 = vadd.f32 0.0, %v2881
      %v2883 = vpop.f32.mrb[0].mxu0
      %2884 = vmatprep.mubr.bf16.mxu0 0
      %2885 = vmatmul.mubr.bf16.gmra.mrb[0].mxu0 %v2745
      %v2886 = vpop.f32.mrb[0].mxu0
      %v2887 = vadd.f32 0.0, %v2886
      %v2888 = vpop.f32.mrb[0].mxu0
      %v2889 = vpop.f32.mrb[0].mxu0
      %v2890 = vadd.f32 0.0, %v2889
      %v2891 = vpop.f32.mrb[0].mxu0
      %2892 = vmatprep.mubr.bf16.mxu0 0
      %2893 = vmatmul.mubr.bf16.gmra.mrb[0].mxu0 %v2748
      %v2894 = vpop.f32.mrb[0].mxu0
      %v2895 = vadd.f32 0.0, %v2894
      %v2896 = vpop.f32.mrb[0].mxu0
      %v2897 = vpop.f32.mrb[0].mxu0
      %v2898 = vadd.f32 0.0, %v2897
      %v2899 = vpop.f32.mrb[0].mxu0
      %2900 = vmatprep.mubr.bf16.mxu0 0
      %2901 = vmatmul.mubr.bf16.gmra.mrb[0].mxu0 %v2751
      %v2902 = vpop.f32.mrb[0].mxu0
      %v2903 = vadd.f32 0.0, %v2902
      %v2904 = vpop.f32.mrb[0].mxu0
      %v2905 = vpop.f32.mrb[0].mxu0
      %v2906 = vadd.f32 0.0, %v2905
      %v2907 = vpop.f32.mrb[0].mxu0
      %2908 = vmatprep.mubr.bf16.mxu0 0
      %2909 = vmatmul.mubr.bf16.gmra.mrb[0].mxu0 %v2754
      %v2910 = vpop.f32.mrb[0].mxu0
      %v2911 = vadd.f32 0.0, %v2910
      %v2912 = vpop.f32.mrb[0].mxu0
      %v2913 = vpop.f32.mrb[0].mxu0
      %v2914 = vadd.f32 0.0, %v2913
      %v2915 = vpop.f32.mrb[0].mxu0
      %2916 = vdwg.mxu0
      %v2917 = vadd.f32 %v2531, %v2791
      %v2918 = vadd.f32 %v2532, %v2794
      %v2919 = vadd.f32 %v2533, %v2799
      %v2920 = vadd.f32 %v2534, %v2802
      %v2921 = vadd.f32 %v2535, %v2807
      %v2922 = vadd.f32 %v2536, %v2810
      %v2923 = vadd.f32 %v2537, %v2815
      %v2924 = vadd.f32 %v2538, %v2818
      %v2925 = vadd.f32 %v2539, %v2823
      %v2926 = vadd.f32 %v2540, %v2826
      %v2927 = vadd.f32 %v2541, %v2831
      %v2928 = vadd.f32 %v2542, %v2834
      %v2929 = vadd.f32 %v2543, %v2839
      %v2930 = vadd.f32 %v2544, %v2842
      %v2931 = vadd.f32 %v2545, %v2847
      %v2932 = vadd.f32 %v2546, %v2850
      %v2933 = vadd.f32 %v2547, %v2855
      %v2934 = vadd.f32 %v2548, %v2858
      %v2935 = vadd.f32 %v2549, %v2863
      %v2936 = vadd.f32 %v2550, %v2866
      %v2937 = vadd.f32 %v2551, %v2871
      %v2938 = vadd.f32 %v2552, %v2874
      %v2939 = vadd.f32 %v2553, %v2879
      %v2940 = vadd.f32 %v2554, %v2882
      %v2941 = vadd.f32 %v2555, %v2887
      %v2942 = vadd.f32 %v2556, %v2890
      %v2943 = vadd.f32 %v2557, %v2895
      %v2944 = vadd.f32 %v2558, %v2898
      %v2945 = vadd.f32 %v2559, %v2903
      %v2946 = vadd.f32 %v2560, %v2906
      %v2947 = vadd.f32 %v2561, %v2911
      %v2948 = vadd.f32 %v2562, %v2914
      %v2949 = vld [vmem:[%s235] sm:$0xf]
      %v2950 = vld [vmem:[%s235 + $0x4] sm:$0xf]
      %v2951 = vld [vmem:[%s235 + $0x8] sm:$0x1]
      %v2952 = vld [vmem:[%s235 + $0xc] sm:$0xf]
      %v2953 = vld [vmem:[%s235 + $0x10] sm:$0xf]
      %v2954 = vld [vmem:[%s235 + $0x14] sm:$0x1]
      %v2955 = vld [vmem:[%s235 + $0x18] sm:$0xf]
      %v2956 = vld [vmem:[%s235 + $0x1c] sm:$0xf]
      %v2957 = vld [vmem:[%s235 + $0x20] sm:$0x1]
      %v2958 = vld [vmem:[%s235 + $0x24] sm:$0xf]
      %v2959 = vld [vmem:[%s235 + $0x28] sm:$0xf]
      %v2960 = vld [vmem:[%s235 + $0x2c] sm:$0x1]
      %v2961 = vld [vmem:[%s235 + $0x30] sm:$0xf]
      %v2962 = vld [vmem:[%s235 + $0x34] sm:$0xf]
      %v2963 = vld [vmem:[%s235 + $0x38] sm:$0x1]
      %v2964 = vld [vmem:[%s235 + $0x3c] sm:$0xf]
      %v2965 = vld [vmem:[%s235 + $0x40] sm:$0xf]
      %v2966 = vld [vmem:[%s235 + $0x44] sm:$0x1]
      %v2967 = vld [vmem:[%s235 + $0x48] sm:$0xf]
      %v2968 = vld [vmem:[%s235 + $0x4c] sm:$0xf]
      %v2969 = vld [vmem:[%s235 + $0x50] sm:$0x1]
      %v2970 = vld [vmem:[%s235 + $0x54] sm:$0xf]
      %v2971 = vld [vmem:[%s235 + $0x58] sm:$0xf]
      %v2972 = vld [vmem:[%s235 + $0x5c] sm:$0x1]
      %v2973 = vld [vmem:[%s235 + $0x60] sm:$0xf]
      %v2974 = vld [vmem:[%s235 + $0x64] sm:$0xf]
      %v2975 = vld [vmem:[%s235 + $0x68] sm:$0x1]
      %v2976 = vld [vmem:[%s235 + $0x6c] sm:$0xf]
      %v2977 = vld [vmem:[%s235 + $0x70] sm:$0xf]
      %v2978 = vld [vmem:[%s235 + $0x74] sm:$0x1]
      %v2979 = vld [vmem:[%s235 + $0x78] sm:$0xf]
      %v2980 = vld [vmem:[%s235 + $0x7c] sm:$0xf]
      %v2981 = vld [vmem:[%s235 + $0x80] sm:$0x1]
      %v2982 = vld [vmem:[%s235 + $0x84] sm:$0xf]
      %v2983 = vld [vmem:[%s235 + $0x88] sm:$0xf]
      %v2984 = vld [vmem:[%s235 + $0x8c] sm:$0x1]
      %v2985 = vld [vmem:[%s235 + $0x90] sm:$0xf]
      %v2986 = vld [vmem:[%s235 + $0x94] sm:$0xf]
      %v2987 = vld [vmem:[%s235 + $0x98] sm:$0x1]
      %v2988 = vld [vmem:[%s235 + $0x9c] sm:$0xf]
      %v2989 = vld [vmem:[%s235 + $0xa0] sm:$0xf]
      %v2990 = vld [vmem:[%s235 + $0xa4] sm:$0x1]
      %v2991 = vld [vmem:[%s235 + $0xa8] sm:$0xf]
      %v2992 = vld [vmem:[%s235 + $0xac] sm:$0xf]
      %v2993 = vld [vmem:[%s235 + $0xb0] sm:$0x1]
      %v2994 = vld [vmem:[%s235 + $0xb4] sm:$0xf]
      %v2995 = vld [vmem:[%s235 + $0xb8] sm:$0xf]
      %v2996 = vld [vmem:[%s235 + $0xbc] sm:$0x1]
      %v2998 = vshrl.u32 %v2949, 16
      %v3000 = vrot.slane %v2998, 4
      %v3001 = vshll.u32 %v2949, 16
      %v3003 = vrot.slane %v3001, 5
      %v3004 = vor.u32 %v3000, %v3003
      %v3005 = vrot.slane %v3004, 4
      %v3007 = vshll.u32 %v2950, 16
      %v3009 = vrot.slane %v3007, 5
      %v3010 = vsel %vm1355, %v3005, %v3009
      %v3011 = vshrl.u32 %v2950, 16
      %v3013 = vrot.slane %v3011, 4
      %v3014 = vor.u32 %v3013, %v3009
      %v3015 = vrot.slane %v3014, 4
      %v3017 = vshll.u32 %v2951, 16
      %v3019 = vrot.slane %v3017, 5
      %v3020 = vsel %vm1355, %v3015, %v3019
      %v3022 = vshrl.u32 %v2952, 16
      %v3024 = vrot.slane %v3022, 4
      %v3025 = vshll.u32 %v2952, 16
      %v3027 = vrot.slane %v3025, 5
      %v3028 = vor.u32 %v3024, %v3027
      %v3029 = vrot.slane %v3028, 4
      %v3031 = vshll.u32 %v2953, 16
      %v3033 = vrot.slane %v3031, 5
      %v3034 = vsel %vm1355, %v3029, %v3033
      %v3035 = vshrl.u32 %v2953, 16
      %v3037 = vrot.slane %v3035, 4
      %v3038 = vor.u32 %v3037, %v3033
      %v3039 = vrot.slane %v3038, 4
      %v3041 = vshll.u32 %v2954, 16
      %v3043 = vrot.slane %v3041, 5
      %v3044 = vsel %vm1355, %v3039, %v3043
      %v3046 = vshrl.u32 %v2955, 16
      %v3048 = vrot.slane %v3046, 4
      %v3049 = vshll.u32 %v2955, 16
      %v3051 = vrot.slane %v3049, 5
      %v3052 = vor.u32 %v3048, %v3051
      %v3053 = vrot.slane %v3052, 4
      %v3055 = vshll.u32 %v2956, 16
      %v3057 = vrot.slane %v3055, 5
      %v3058 = vsel %vm1355, %v3053, %v3057
      %v3059 = vshrl.u32 %v2956, 16
      %v3061 = vrot.slane %v3059, 4
      %v3062 = vor.u32 %v3061, %v3057
      %v3063 = vrot.slane %v3062, 4
      %v3065 = vshll.u32 %v2957, 16
      %v3067 = vrot.slane %v3065, 5
      %v3068 = vsel %vm1355, %v3063, %v3067
      %v3070 = vshrl.u32 %v2958, 16
      %v3072 = vrot.slane %v3070, 4
      %v3073 = vshll.u32 %v2958, 16
      %v3075 = vrot.slane %v3073, 5
      %v3076 = vor.u32 %v3072, %v3075
      %v3077 = vrot.slane %v3076, 4
      %v3079 = vshll.u32 %v2959, 16
      %v3081 = vrot.slane %v3079, 5
      %v3082 = vsel %vm1355, %v3077, %v3081
      %v3083 = vshrl.u32 %v2959, 16
      %v3085 = vrot.slane %v3083, 4
      %v3086 = vor.u32 %v3085, %v3081
      %v3087 = vrot.slane %v3086, 4
      %v3089 = vshll.u32 %v2960, 16
      %v3091 = vrot.slane %v3089, 5
      %v3092 = vsel %vm1355, %v3087, %v3091
      %v3094 = vshrl.u32 %v2961, 16
      %v3096 = vrot.slane %v3094, 4
      %v3097 = vshll.u32 %v2961, 16
      %v3099 = vrot.slane %v3097, 5
      %v3100 = vor.u32 %v3096, %v3099
      %v3101 = vrot.slane %v3100, 4
      %v3103 = vshll.u32 %v2962, 16
      %v3105 = vrot.slane %v3103, 5
      %v3106 = vsel %vm1355, %v3101, %v3105
      %v3107 = vshrl.u32 %v2962, 16
      %v3109 = vrot.slane %v3107, 4
      %v3110 = vor.u32 %v3109, %v3105
      %v3111 = vrot.slane %v3110, 4
      %v3113 = vshll.u32 %v2963, 16
      %v3115 = vrot.slane %v3113, 5
      %v3116 = vsel %vm1355, %v3111, %v3115
      %v3118 = vshrl.u32 %v2964, 16
      %v3120 = vrot.slane %v3118, 4
      %v3121 = vshll.u32 %v2964, 16
      %v3123 = vrot.slane %v3121, 5
      %v3124 = vor.u32 %v3120, %v3123
      %v3125 = vrot.slane %v3124, 4
      %v3127 = vshll.u32 %v2965, 16
      %v3129 = vrot.slane %v3127, 5
      %v3130 = vsel %vm1355, %v3125, %v3129
      %v3131 = vshrl.u32 %v2965, 16
      %v3133 = vrot.slane %v3131, 4
      %v3134 = vor.u32 %v3133, %v3129
      %v3135 = vrot.slane %v3134, 4
      %v3137 = vshll.u32 %v2966, 16
      %v3139 = vrot.slane %v3137, 5
      %v3140 = vsel %vm1355, %v3135, %v3139
      %v3142 = vshrl.u32 %v2967, 16
      %v3144 = vrot.slane %v3142, 4
      %v3145 = vshll.u32 %v2967, 16
      %v3147 = vrot.slane %v3145, 5
      %v3148 = vor.u32 %v3144, %v3147
      %v3149 = vrot.slane %v3148, 4
      %v3151 = vshll.u32 %v2968, 16
      %v3153 = vrot.slane %v3151, 5
      %v3154 = vsel %vm1355, %v3149, %v3153
      %v3155 = vshrl.u32 %v2968, 16
      %v3157 = vrot.slane %v3155, 4
      %v3158 = vor.u32 %v3157, %v3153
      %v3159 = vrot.slane %v3158, 4
      %v3161 = vshll.u32 %v2969, 16
      %v3163 = vrot.slane %v3161, 5
      %v3164 = vsel %vm1355, %v3159, %v3163
      %v3166 = vshrl.u32 %v2970, 16
      %v3168 = vrot.slane %v3166, 4
      %v3169 = vshll.u32 %v2970, 16
      %v3171 = vrot.slane %v3169, 5
      %v3172 = vor.u32 %v3168, %v3171
      %v3173 = vrot.slane %v3172, 4
      %v3175 = vshll.u32 %v2971, 16
      %v3177 = vrot.slane %v3175, 5
      %v3178 = vsel %vm1355, %v3173, %v3177
      %v3179 = vshrl.u32 %v2971, 16
      %v3181 = vrot.slane %v3179, 4
      %v3182 = vor.u32 %v3181, %v3177
      %v3183 = vrot.slane %v3182, 4
      %v3185 = vshll.u32 %v2972, 16
      %v3187 = vrot.slane %v3185, 5
      %v3188 = vsel %vm1355, %v3183, %v3187
      %v3190 = vshrl.u32 %v2973, 16
      %v3192 = vrot.slane %v3190, 4
      %v3193 = vshll.u32 %v2973, 16
      %v3195 = vrot.slane %v3193, 5
      %v3196 = vor.u32 %v3192, %v3195
      %v3197 = vrot.slane %v3196, 4
      %v3199 = vshll.u32 %v2974, 16
      %v3201 = vrot.slane %v3199, 5
      %v3202 = vsel %vm1355, %v3197, %v3201
      %v3203 = vshrl.u32 %v2974, 16
      %v3205 = vrot.slane %v3203, 4
      %v3206 = vor.u32 %v3205, %v3201
      %v3207 = vrot.slane %v3206, 4
      %v3209 = vshll.u32 %v2975, 16
      %v3211 = vrot.slane %v3209, 5
      %v3212 = vsel %vm1355, %v3207, %v3211
      %v3214 = vshrl.u32 %v2976, 16
      %v3216 = vrot.slane %v3214, 4
      %v3217 = vshll.u32 %v2976, 16
      %v3219 = vrot.slane %v3217, 5
      %v3220 = vor.u32 %v3216, %v3219
      %v3221 = vrot.slane %v3220, 4
      %v3223 = vshll.u32 %v2977, 16
      %v3225 = vrot.slane %v3223, 5
      %v3226 = vsel %vm1355, %v3221, %v3225
      %v3227 = vshrl.u32 %v2977, 16
      %v3229 = vrot.slane %v3227, 4
      %v3230 = vor.u32 %v3229, %v3225
      %v3231 = vrot.slane %v3230, 4
      %v3233 = vshll.u32 %v2978, 16
      %v3235 = vrot.slane %v3233, 5
      %v3236 = vsel %vm1355, %v3231, %v3235
      %v3238 = vshrl.u32 %v2979, 16
      %v3240 = vrot.slane %v3238, 4
      %v3241 = vshll.u32 %v2979, 16
      %v3243 = vrot.slane %v3241, 5
      %v3244 = vor.u32 %v3240, %v3243
      %v3245 = vrot.slane %v3244, 4
      %v3247 = vshll.u32 %v2980, 16
      %v3249 = vrot.slane %v3247, 5
      %v3250 = vsel %vm1355, %v3245, %v3249
      %v3251 = vshrl.u32 %v2980, 16
      %v3253 = vrot.slane %v3251, 4
      %v3254 = vor.u32 %v3253, %v3249
      %v3255 = vrot.slane %v3254, 4
      %v3257 = vshll.u32 %v2981, 16
      %v3259 = vrot.slane %v3257, 5
      %v3260 = vsel %vm1355, %v3255, %v3259
      %v3262 = vshrl.u32 %v2982, 16
      %v3264 = vrot.slane %v3262, 4
      %v3265 = vshll.u32 %v2982, 16
      %v3267 = vrot.slane %v3265, 5
      %v3268 = vor.u32 %v3264, %v3267
      %v3269 = vrot.slane %v3268, 4
      %v3271 = vshll.u32 %v2983, 16
      %v3273 = vrot.slane %v3271, 5
      %v3274 = vsel %vm1355, %v3269, %v3273
      %v3275 = vshrl.u32 %v2983, 16
      %v3277 = vrot.slane %v3275, 4
      %v3278 = vor.u32 %v3277, %v3273
      %v3279 = vrot.slane %v3278, 4
      %v3281 = vshll.u32 %v2984, 16
      %v3283 = vrot.slane %v3281, 5
      %v3284 = vsel %vm1355, %v3279, %v3283
      %v3286 = vshrl.u32 %v2985, 16
      %v3288 = vrot.slane %v3286, 4
      %v3289 = vshll.u32 %v2985, 16
      %v3291 = vrot.slane %v3289, 5
      %v3292 = vor.u32 %v3288, %v3291
      %v3293 = vrot.slane %v3292, 4
      %v3295 = vshll.u32 %v2986, 16
      %v3297 = vrot.slane %v3295, 5
      %v3298 = vsel %vm1355, %v3293, %v3297
      %v3299 = vshrl.u32 %v2986, 16
      %v3301 = vrot.slane %v3299, 4
      %v3302 = vor.u32 %v3301, %v3297
      %v3303 = vrot.slane %v3302, 4
      %v3305 = vshll.u32 %v2987, 16
      %v3307 = vrot.slane %v3305, 5
      %v3308 = vsel %vm1355, %v3303, %v3307
      %v3310 = vshrl.u32 %v2988, 16
      %v3312 = vrot.slane %v3310, 4
      %v3313 = vshll.u32 %v2988, 16
      %v3315 = vrot.slane %v3313, 5
      %v3316 = vor.u32 %v3312, %v3315
      %v3317 = vrot.slane %v3316, 4
      %v3319 = vshll.u32 %v2989, 16
      %v3321 = vrot.slane %v3319, 5
      %v3322 = vsel %vm1355, %v3317, %v3321
      %v3323 = vshrl.u32 %v2989, 16
      %v3325 = vrot.slane %v3323, 4
      %v3326 = vor.u32 %v3325, %v3321
      %v3327 = vrot.slane %v3326, 4
      %v3329 = vshll.u32 %v2990, 16
      %v3331 = vrot.slane %v3329, 5
      %v3332 = vsel %vm1355, %v3327, %v3331
      %v3334 = vshrl.u32 %v2991, 16
      %v3336 = vrot.slane %v3334, 4
      %v3337 = vshll.u32 %v2991, 16
      %v3339 = vrot.slane %v3337, 5
      %v3340 = vor.u32 %v3336, %v3339
      %v3341 = vrot.slane %v3340, 4
      %v3343 = vshll.u32 %v2992, 16
      %v3345 = vrot.slane %v3343, 5
      %v3346 = vsel %vm1355, %v3341, %v3345
      %v3347 = vshrl.u32 %v2992, 16
      %v3349 = vrot.slane %v3347, 4
      %v3350 = vor.u32 %v3349, %v3345
      %v3351 = vrot.slane %v3350, 4
      %v3353 = vshll.u32 %v2993, 16
      %v3355 = vrot.slane %v3353, 5
      %v3356 = vsel %vm1355, %v3351, %v3355
      %v3358 = vshrl.u32 %v2994, 16
      %v3360 = vrot.slane %v3358, 4
      %v3361 = vshll.u32 %v2994, 16
      %v3363 = vrot.slane %v3361, 5
      %v3364 = vor.u32 %v3360, %v3363
      %v3365 = vrot.slane %v3364, 4
      %v3367 = vshll.u32 %v2995, 16
      %v3369 = vrot.slane %v3367, 5
      %v3370 = vsel %vm1355, %v3365, %v3369
      %v3371 = vshrl.u32 %v2995, 16
      %v3373 = vrot.slane %v3371, 4
      %v3374 = vor.u32 %v3373, %v3369
      %v3375 = vrot.slane %v3374, 4
      %v3377 = vshll.u32 %v2996, 16
      %v3379 = vrot.slane %v3377, 5
      %v3380 = vsel %vm1355, %v3375, %v3379
      %s3381 = scalar_lea.vmem %s1, 128
      %v3382 = vld [vmem:[%s3381] sm:$0xf]
      %v3383 = vld [vmem:[%s3381 + $0x4] sm:$0xf]
      %v3384 = vld [vmem:[%s3381 + $0x8] sm:$0xf]
      %v3385 = vld [vmem:[%s3381 + $0xc] sm:$0xf]
      %v3386 = vld [vmem:[%s3381 + $0x10] sm:$0xf]
      %v3387 = vld [vmem:[%s3381 + $0x14] sm:$0xf]
      %v3388 = vld [vmem:[%s3381 + $0x18] sm:$0xf]
      %v3389 = vld [vmem:[%s3381 + $0x1c] sm:$0xf]
      %v3390 = vunpack.c.l.b16 %v3010
      %v3391 = vunpack.c.l.b16 %v3020
      %v3392 = vunpack.c.l.b16 %v3034
      %v3393 = vunpack.c.l.b16 %v3044
      %v3394 = vunpack.c.l.b16 %v3058
      %v3395 = vunpack.c.l.b16 %v3068
      %v3396 = vunpack.c.l.b16 %v3082
      %v3397 = vunpack.c.l.b16 %v3092
      %v3398 = vunpack.c.l.b16 %v3106
      %v3399 = vunpack.c.l.b16 %v3116
      %v3400 = vunpack.c.l.b16 %v3130
      %v3401 = vunpack.c.l.b16 %v3140
      %v3402 = vunpack.c.l.b16 %v3154
      %v3403 = vunpack.c.l.b16 %v3164
      %v3404 = vunpack.c.l.b16 %v3178
      %v3405 = vunpack.c.l.b16 %v3188
      %v3406 = vunpack.c.l.b16 %v3202
      %v3407 = vunpack.c.l.b16 %v3212
      %v3408 = vunpack.c.l.b16 %v3226
      %v3409 = vunpack.c.l.b16 %v3236
      %v3410 = vunpack.c.l.b16 %v3250
      %v3411 = vunpack.c.l.b16 %v3260
      %v3412 = vunpack.c.l.b16 %v3274
      %v3413 = vunpack.c.l.b16 %v3284
      %v3414 = vunpack.c.l.b16 %v3298
      %v3415 = vunpack.c.l.b16 %v3308
      %v3416 = vunpack.c.l.b16 %v3322
      %v3417 = vunpack.c.l.b16 %v3332
      %v3418 = vunpack.c.l.b16 %v3346
      %v3419 = vunpack.c.l.b16 %v3356
      %v3420 = vunpack.c.l.b16 %v3370
      %v3421 = vunpack.c.l.b16 %v3380
      %v3422 = vpack.c.b16 %v3391, %v3390
      %v3423 = vpack.c.b16 %v3393, %v3392
      %v3424 = vpack.c.b16 %v3395, %v3394
      %v3425 = vpack.c.b16 %v3397, %v3396
      %v3426 = vpack.c.b16 %v3399, %v3398
      %v3427 = vpack.c.b16 %v3401, %v3400
      %v3428 = vpack.c.b16 %v3403, %v3402
      %v3429 = vpack.c.b16 %v3405, %v3404
      %v3430 = vpack.c.b16 %v3407, %v3406
      %v3431 = vpack.c.b16 %v3409, %v3408
      %v3432 = vpack.c.b16 %v3411, %v3410
      %v3433 = vpack.c.b16 %v3413, %v3412
      %v3434 = vpack.c.b16 %v3415, %v3414
      %v3435 = vpack.c.b16 %v3417, %v3416
      %v3436 = vpack.c.b16 %v3419, %v3418
      %v3437 = vpack.c.b16 %v3421, %v3420
      %v3446 = vunpack.c.l.b16 %v3382
      %v3447 = vunpack.c.l.b16 %v3383
      %v3448 = vunpack.c.l.b16 %v3384
      %v3449 = vunpack.c.l.b16 %v3385
      %v3450 = vunpack.c.l.b16 %v3386
      %v3451 = vunpack.c.l.b16 %v3387
      %v3452 = vunpack.c.l.b16 %v3388
      %v3453 = vunpack.c.l.b16 %v3389
      %v3454 = vpack.c.b16 %v3447, %v3446
      %v3455 = vpack.c.b16 %v3449, %v3448
      %v3456 = vpack.c.b16 %v3451, %v3450
      %v3457 = vpack.c.b16 %v3453, %v3452
      %v3463 = vsel %vm1063, %v3422, 0
      %v3466 = vsel %vm1063, %v3423, 0
      %v3469 = vsel %vm1063, %v3424, 0
      %v3472 = vsel %vm1063, %v3425, 0
      %v3475 = vsel %vm1063, %v3426, 0
      %v3478 = vsel %vm1063, %v3427, 0
      %v3481 = vsel %vm1063, %v3428, 0
      %v3484 = vsel %vm1063, %v3429, 0
      %v3487 = vsel %vm1063, %v3430, 0
      %v3490 = vsel %vm1063, %v3431, 0
      %v3493 = vsel %vm1063, %v3432, 0
      %v3496 = vsel %vm1063, %v3433, 0
      %v3499 = vsel %vm1063, %v3434, 0
      %v3502 = vsel %vm1063, %v3435, 0
      %v3505 = vsel %vm1063, %v3436, 0
      %v3508 = vsel %vm1063, %v3437, 0
      %3510 = vmatprep.subr.bf16.mxu0 0
      %3511 = vmatpush1.bf16.msra.mxu0 %v3454
      %3512 = vmatprep.subr.bf16.mxu0 0
      %3513 = vmatpush1.bf16.msra.mxu0 %v3455
      %3514 = vmatprep.subr.bf16.mxu0 0
      %3515 = vmatpush1.bf16.msra.mxu0 %v3456
      %3516 = vmatprep.subr.bf16.mxu0 0
      %3517 = vmatpush1.bf16.msra.mxu0 %v3457
      %3518 = vmatprep.subr.bf16.mxu0 0
      %3519 = vmatpush1.bf16.msra.mxu0 0
      %3520 = vmatprep.subr.bf16.mxu0 0
      %3521 = vmatpush1.bf16.msra.mxu0 0
      %3522 = vmatprep.subr.bf16.mxu0 0
      %3523 = vmatpush1.bf16.msra.mxu0 0
      %3524 = vmatprep.subr.bf16.mxu0 0
      %3525 = vmatpush1.bf16.msra.mxu0 0
      %3526 = vmatprep.subr.bf16.mxu0 0
      %3527 = vmatpush1.bf16.msra.mxu0 0
      %3528 = vmatprep.subr.bf16.mxu0 0
      %3529 = vmatpush1.bf16.msra.mxu0 0
      %3530 = vmatprep.subr.bf16.mxu0 0
      %3531 = vmatpush1.bf16.msra.mxu0 0
      %3532 = vmatprep.subr.bf16.mxu0 0
      %3533 = vmatpush1.bf16.msra.mxu0 0
      %3534 = vmatprep.subr.bf16.mxu0 0
      %3535 = vmatpush1.bf16.msra.mxu0 0
      %3536 = vmatprep.subr.bf16.mxu0 0
      %3537 = vmatpush1.bf16.msra.mxu0 0
      %3538 = vmatprep.subr.bf16.mxu0 0
      %3539 = vmatpush1.bf16.msra.mxu0 0
      %3540 = vmatprep.subr.bf16.mxu0 0
      %3541 = vmatpush1.bf16.msra.mxu0 0
      %3542 = vmatprep.mubr.bf16.mxu0 0
      %3543 = vmatmul.mubr.bf16.gmra.mrb[0].mxu0 %v3463
      %v3544 = vpop.f32.mrb[0].mxu0
      %v3545 = vadd.f32 0.0, %v3544
      %v3546 = vpop.f32.mrb[0].mxu0
      %v3547 = vpop.f32.mrb[0].mxu0
      %v3548 = vadd.f32 0.0, %v3547
      %v3549 = vpop.f32.mrb[0].mxu0
      %3550 = vmatprep.mubr.bf16.mxu0 0
      %3551 = vmatmul.mubr.bf16.gmra.mrb[0].mxu0 %v3466
      %v3552 = vpop.f32.mrb[0].mxu0
      %v3553 = vadd.f32 0.0, %v3552
      %v3554 = vpop.f32.mrb[0].mxu0
      %v3555 = vpop.f32.mrb[0].mxu0
      %v3556 = vadd.f32 0.0, %v3555
      %v3557 = vpop.f32.mrb[0].mxu0
      %3558 = vmatprep.mubr.bf16.mxu0 0
      %3559 = vmatmul.mubr.bf16.gmra.mrb[0].mxu0 %v3469
      %v3560 = vpop.f32.mrb[0].mxu0
      %v3561 = vadd.f32 0.0, %v3560
      %v3562 = vpop.f32.mrb[0].mxu0
      %v3563 = vpop.f32.mrb[0].mxu0
      %v3564 = vadd.f32 0.0, %v3563
      %v3565 = vpop.f32.mrb[0].mxu0
      %3566 = vmatprep.mubr.bf16.mxu0 0
      %3567 = vmatmul.mubr.bf16.gmra.mrb[0].mxu0 %v3472
      %v3568 = vpop.f32.mrb[0].mxu0
      %v3569 = vadd.f32 0.0, %v3568
      %v3570 = vpop.f32.mrb[0].mxu0
      %v3571 = vpop.f32.mrb[0].mxu0
      %v3572 = vadd.f32 0.0, %v3571
      %v3573 = vpop.f32.mrb[0].mxu0
      %3574 = vmatprep.mubr.bf16.mxu0 0
      %3575 = vmatmul.mubr.bf16.gmra.mrb[0].mxu0 %v3475
      %v3576 = vpop.f32.mrb[0].mxu0
      %v3577 = vadd.f32 0.0, %v3576
      %v3578 = vpop.f32.mrb[0].mxu0
      %v3579 = vpop.f32.mrb[0].mxu0
      %v3580 = vadd.f32 0.0, %v3579
      %v3581 = vpop.f32.mrb[0].mxu0
      %3582 = vmatprep.mubr.bf16.mxu0 0
      %3583 = vmatmul.mubr.bf16.gmra.mrb[0].mxu0 %v3478
      %v3584 = vpop.f32.mrb[0].mxu0
      %v3585 = vadd.f32 0.0, %v3584
      %v3586 = vpop.f32.mrb[0].mxu0
      %v3587 = vpop.f32.mrb[0].mxu0
      %v3588 = vadd.f32 0.0, %v3587
      %v3589 = vpop.f32.mrb[0].mxu0
      %3590 = vmatprep.mubr.bf16.mxu0 0
      %3591 = vmatmul.mubr.bf16.gmra.mrb[0].mxu0 %v3481
      %v3592 = vpop.f32.mrb[0].mxu0
      %v3593 = vadd.f32 0.0, %v3592
      %v3594 = vpop.f32.mrb[0].mxu0
      %v3595 = vpop.f32.mrb[0].mxu0
      %v3596 = vadd.f32 0.0, %v3595
      %v3597 = vpop.f32.mrb[0].mxu0
      %3598 = vmatprep.mubr.bf16.mxu0 0
      %3599 = vmatmul.mubr.bf16.gmra.mrb[0].mxu0 %v3484
      %v3600 = vpop.f32.mrb[0].mxu0
      %v3601 = vadd.f32 0.0, %v3600
      %v3602 = vpop.f32.mrb[0].mxu0
      %v3603 = vpop.f32.mrb[0].mxu0
      %v3604 = vadd.f32 0.0, %v3603
      %v3605 = vpop.f32.mrb[0].mxu0
      %3606 = vmatprep.mubr.bf16.mxu0 0
      %3607 = vmatmul.mubr.bf16.gmra.mrb[0].mxu0 %v3487
      %v3608 = vpop.f32.mrb[0].mxu0
      %v3609 = vadd.f32 0.0, %v3608
      %v3610 = vpop.f32.mrb[0].mxu0
      %v3611 = vpop.f32.mrb[0].mxu0
      %v3612 = vadd.f32 0.0, %v3611
      %v3613 = vpop.f32.mrb[0].mxu0
      %3614 = vmatprep.mubr.bf16.mxu0 0
      %3615 = vmatmul.mubr.bf16.gmra.mrb[0].mxu0 %v3490
      %v3616 = vpop.f32.mrb[0].mxu0
      %v3617 = vadd.f32 0.0, %v3616
      %v3618 = vpop.f32.mrb[0].mxu0
      %v3619 = vpop.f32.mrb[0].mxu0
      %v3620 = vadd.f32 0.0, %v3619
      %v3621 = vpop.f32.mrb[0].mxu0
      %3622 = vmatprep.mubr.bf16.mxu0 0
      %3623 = vmatmul.mubr.bf16.gmra.mrb[0].mxu0 %v3493
      %v3624 = vpop.f32.mrb[0].mxu0
      %v3625 = vadd.f32 0.0, %v3624
      %v3626 = vpop.f32.mrb[0].mxu0
      %v3627 = vpop.f32.mrb[0].mxu0
      %v3628 = vadd.f32 0.0, %v3627
      %v3629 = vpop.f32.mrb[0].mxu0
      %3630 = vmatprep.mubr.bf16.mxu0 0
      %3631 = vmatmul.mubr.bf16.gmra.mrb[0].mxu0 %v3496
      %v3632 = vpop.f32.mrb[0].mxu0
      %v3633 = vadd.f32 0.0, %v3632
      %v3634 = vpop.f32.mrb[0].mxu0
      %v3635 = vpop.f32.mrb[0].mxu0
      %v3636 = vadd.f32 0.0, %v3635
      %v3637 = vpop.f32.mrb[0].mxu0
      %3638 = vmatprep.mubr.bf16.mxu0 0
      %3639 = vmatmul.mubr.bf16.gmra.mrb[0].mxu0 %v3499
      %v3640 = vpop.f32.mrb[0].mxu0
      %v3641 = vadd.f32 0.0, %v3640
      %v3642 = vpop.f32.mrb[0].mxu0
      %v3643 = vpop.f32.mrb[0].mxu0
      %v3644 = vadd.f32 0.0, %v3643
      %v3645 = vpop.f32.mrb[0].mxu0
      %3646 = vmatprep.mubr.bf16.mxu0 0
      %3647 = vmatmul.mubr.bf16.gmra.mrb[0].mxu0 %v3502
      %v3648 = vpop.f32.mrb[0].mxu0
      %v3649 = vadd.f32 0.0, %v3648
      %v3650 = vpop.f32.mrb[0].mxu0
      %v3651 = vpop.f32.mrb[0].mxu0
      %v3652 = vadd.f32 0.0, %v3651
      %v3653 = vpop.f32.mrb[0].mxu0
      %3654 = vmatprep.mubr.bf16.mxu0 0
      %3655 = vmatmul.mubr.bf16.gmra.mrb[0].mxu0 %v3505
      %v3656 = vpop.f32.mrb[0].mxu0
      %v3657 = vadd.f32 0.0, %v3656
      %v3658 = vpop.f32.mrb[0].mxu0
      %v3659 = vpop.f32.mrb[0].mxu0
      %v3660 = vadd.f32 0.0, %v3659
      %v3661 = vpop.f32.mrb[0].mxu0
      %3662 = vmatprep.mubr.bf16.mxu0 0
      %3663 = vmatmul.mubr.bf16.gmra.mrb[0].mxu0 %v3508
      %v3664 = vpop.f32.mrb[0].mxu0
      %v3665 = vadd.f32 0.0, %v3664
      %v3666 = vpop.f32.mrb[0].mxu0
      %v3667 = vpop.f32.mrb[0].mxu0
      %v3668 = vadd.f32 0.0, %v3667
      %v3669 = vpop.f32.mrb[0].mxu0
      %3670 = vdwg.mxu0
      %v3671 = vadd.f32 %v2917, %v3545
      %v3672 = vadd.f32 %v2918, %v3548
      %v3673 = vadd.f32 %v2919, %v3553
      %v3674 = vadd.f32 %v2920, %v3556
      %v3675 = vadd.f32 %v2921, %v3561
      %v3676 = vadd.f32 %v2922, %v3564
      %v3677 = vadd.f32 %v2923, %v3569
      %v3678 = vadd.f32 %v2924, %v3572
      %v3679 = vadd.f32 %v2925, %v3577
      %v3680 = vadd.f32 %v2926, %v3580
      %v3681 = vadd.f32 %v2927, %v3585
      %v3682 = vadd.f32 %v2928, %v3588
      %v3683 = vadd.f32 %v2929, %v3593
      %v3684 = vadd.f32 %v2930, %v3596
      %v3685 = vadd.f32 %v2931, %v3601
      %v3686 = vadd.f32 %v2932, %v3604
      %v3687 = vadd.f32 %v2933, %v3609
      %v3688 = vadd.f32 %v2934, %v3612
      %v3689 = vadd.f32 %v2935, %v3617
      %v3690 = vadd.f32 %v2936, %v3620
      %v3691 = vadd.f32 %v2937, %v3625
      %v3692 = vadd.f32 %v2938, %v3628
      %v3693 = vadd.f32 %v2939, %v3633
      %v3694 = vadd.f32 %v2940, %v3636
      %v3695 = vadd.f32 %v2941, %v3641
      %v3696 = vadd.f32 %v2942, %v3644
      %v3697 = vadd.f32 %v2943, %v3649
      %v3698 = vadd.f32 %v2944, %v3652
      %v3699 = vadd.f32 %v2945, %v3657
      %v3700 = vadd.f32 %v2946, %v3660
      %v3701 = vadd.f32 %v2947, %v3665
      %v3702 = vadd.f32 %v2948, %v3668
      %v3703 = vld [vmem:[%s235] sm:$0xe]
      %v3704 = vld [vmem:[%s235 + $0xc] sm:$0xe]
      %v3705 = vld [vmem:[%s235 + $0x18] sm:$0xe]
      %v3706 = vld [vmem:[%s235 + $0x24] sm:$0xe]
      %v3707 = vld [vmem:[%s235 + $0x30] sm:$0xe]
      %v3708 = vld [vmem:[%s235 + $0x3c] sm:$0xe]
      %v3709 = vld [vmem:[%s235 + $0x48] sm:$0xe]
      %v3710 = vld [vmem:[%s235 + $0x54] sm:$0xe]
      %v3711 = vld [vmem:[%s235 + $0x60] sm:$0xe]
      %v3712 = vld [vmem:[%s235 + $0x6c] sm:$0xe]
      %v3713 = vld [vmem:[%s235 + $0x78] sm:$0xe]
      %v3714 = vld [vmem:[%s235 + $0x84] sm:$0xe]
      %v3715 = vld [vmem:[%s235 + $0x90] sm:$0xe]
      %v3716 = vld [vmem:[%s235 + $0x9c] sm:$0xe]
      %v3717 = vld [vmem:[%s235 + $0xa8] sm:$0xe]
      %v3718 = vld [vmem:[%s235 + $0xb4] sm:$0xe]
      %v3767 = vrot.slane %v3703, 5
      %v3768 = vrot.slane %v3767, 4
      %v3769 = vrot.slane %v2950, 5
      %v3770 = vsel %vm2128, %v3768, %v3769
      %v3771 = vrot.slane %v3769, 4
      %v3772 = vrot.slane %v2951, 5
      %v3773 = vsel %vm2128, %v3771, %v3772
      %v3774 = vrot.slane %v3704, 5
      %v3775 = vrot.slane %v3774, 4
      %v3776 = vrot.slane %v2953, 5
      %v3777 = vsel %vm2128, %v3775, %v3776
      %v3778 = vrot.slane %v3776, 4
      %v3779 = vrot.slane %v2954, 5
      %v3780 = vsel %vm2128, %v3778, %v3779
      %v3781 = vrot.slane %v3705, 5
      %v3782 = vrot.slane %v3781, 4
      %v3783 = vrot.slane %v2956, 5
      %v3784 = vsel %vm2128, %v3782, %v3783
      %v3785 = vrot.slane %v3783, 4
      %v3786 = vrot.slane %v2957, 5
      %v3787 = vsel %vm2128, %v3785, %v3786
      %v3788 = vrot.slane %v3706, 5
      %v3789 = vrot.slane %v3788, 4
      %v3790 = vrot.slane %v2959, 5
      %v3791 = vsel %vm2128, %v3789, %v3790
      %v3792 = vrot.slane %v3790, 4
      %v3793 = vrot.slane %v2960, 5
      %v3794 = vsel %vm2128, %v3792, %v3793
      %v3795 = vrot.slane %v3707, 5
      %v3796 = vrot.slane %v3795, 4
      %v3797 = vrot.slane %v2962, 5
      %v3798 = vsel %vm2128, %v3796, %v3797
      %v3799 = vrot.slane %v3797, 4
      %v3800 = vrot.slane %v2963, 5
      %v3801 = vsel %vm2128, %v3799, %v3800
      %v3802 = vrot.slane %v3708, 5
      %v3803 = vrot.slane %v3802, 4
      %v3804 = vrot.slane %v2965, 5
      %v3805 = vsel %vm2128, %v3803, %v3804
      %v3806 = vrot.slane %v3804, 4
      %v3807 = vrot.slane %v2966, 5
      %v3808 = vsel %vm2128, %v3806, %v3807
      %v3809 = vrot.slane %v3709, 5
      %v3810 = vrot.slane %v3809, 4
      %v3811 = vrot.slane %v2968, 5
      %v3812 = vsel %vm2128, %v3810, %v3811
      %v3813 = vrot.slane %v3811, 4
      %v3814 = vrot.slane %v2969, 5
      %v3815 = vsel %vm2128, %v3813, %v3814
      %v3816 = vrot.slane %v3710, 5
      %v3817 = vrot.slane %v3816, 4
      %v3818 = vrot.slane %v2971, 5
      %v3819 = vsel %vm2128, %v3817, %v3818
      %v3820 = vrot.slane %v3818, 4
      %v3821 = vrot.slane %v2972, 5
      %v3822 = vsel %vm2128, %v3820, %v3821
      %v3823 = vrot.slane %v3711, 5
      %v3824 = vrot.slane %v3823, 4
      %v3825 = vrot.slane %v2974, 5
      %v3826 = vsel %vm2128, %v3824, %v3825
      %v3827 = vrot.slane %v3825, 4
      %v3828 = vrot.slane %v2975, 5
      %v3829 = vsel %vm2128, %v3827, %v3828
      %v3830 = vrot.slane %v3712, 5
      %v3831 = vrot.slane %v3830, 4
      %v3832 = vrot.slane %v2977, 5
      %v3833 = vsel %vm2128, %v3831, %v3832
      %v3834 = vrot.slane %v3832, 4
      %v3835 = vrot.slane %v2978, 5
      %v3836 = vsel %vm2128, %v3834, %v3835
      %v3837 = vrot.slane %v3713, 5
      %v3838 = vrot.slane %v3837, 4
      %v3839 = vrot.slane %v2980, 5
      %v3840 = vsel %vm2128, %v3838, %v3839
      %v3841 = vrot.slane %v3839, 4
      %v3842 = vrot.slane %v2981, 5
      %v3843 = vsel %vm2128, %v3841, %v3842
      %v3844 = vrot.slane %v3714, 5
      %v3845 = vrot.slane %v3844, 4
      %v3846 = vrot.slane %v2983, 5
      %v3847 = vsel %vm2128, %v3845, %v3846
      %v3848 = vrot.slane %v3846, 4
      %v3849 = vrot.slane %v2984, 5
      %v3850 = vsel %vm2128, %v3848, %v3849
      %v3851 = vrot.slane %v3715, 5
      %v3852 = vrot.slane %v3851, 4
      %v3853 = vrot.slane %v2986, 5
      %v3854 = vsel %vm2128, %v3852, %v3853
      %v3855 = vrot.slane %v3853, 4
      %v3856 = vrot.slane %v2987, 5
      %v3857 = vsel %vm2128, %v3855, %v3856
      %v3858 = vrot.slane %v3716, 5
      %v3859 = vrot.slane %v3858, 4
      %v3860 = vrot.slane %v2989, 5
      %v3861 = vsel %vm2128, %v3859, %v3860
      %v3862 = vrot.slane %v3860, 4
      %v3863 = vrot.slane %v2990, 5
      %v3864 = vsel %vm2128, %v3862, %v3863
      %v3865 = vrot.slane %v3717, 5
      %v3866 = vrot.slane %v3865, 4
      %v3867 = vrot.slane %v2992, 5
      %v3868 = vsel %vm2128, %v3866, %v3867
      %v3869 = vrot.slane %v3867, 4
      %v3870 = vrot.slane %v2993, 5
      %v3871 = vsel %vm2128, %v3869, %v3870
      %v3872 = vrot.slane %v3718, 5
      %v3873 = vrot.slane %v3872, 4
      %v3874 = vrot.slane %v2995, 5
      %v3875 = vsel %vm2128, %v3873, %v3874
      %v3876 = vrot.slane %v3874, 4
      %v3877 = vrot.slane %v2996, 5
      %v3878 = vsel %vm2128, %v3876, %v3877
      %s3879 = scalar_lea.vmem %s1, 160
      %v3880 = vld [vmem:[%s3879] sm:$0xf]
      %v3881 = vld [vmem:[%s3879 + $0x4] sm:$0xf]
      %v3882 = vld [vmem:[%s3879 + $0x8] sm:$0xf]
      %v3883 = vld [vmem:[%s3879 + $0xc] sm:$0xf]
      %v3884 = vld [vmem:[%s3879 + $0x10] sm:$0xf]
      %v3885 = vld [vmem:[%s3879 + $0x14] sm:$0xf]
      %v3886 = vld [vmem:[%s3879 + $0x18] sm:$0xf]
      %v3887 = vld [vmem:[%s3879 + $0x1c] sm:$0xf]
      %v3888 = vunpack.c.l.b16 %v3770
      %v3889 = vunpack.c.l.b16 %v3773
      %v3890 = vunpack.c.l.b16 %v3777
      %v3891 = vunpack.c.l.b16 %v3780
      %v3892 = vunpack.c.l.b16 %v3784
      %v3893 = vunpack.c.l.b16 %v3787
      %v3894 = vunpack.c.l.b16 %v3791
      %v3895 = vunpack.c.l.b16 %v3794
      %v3896 = vunpack.c.l.b16 %v3798
      %v3897 = vunpack.c.l.b16 %v3801
      %v3898 = vunpack.c.l.b16 %v3805
      %v3899 = vunpack.c.l.b16 %v3808
      %v3900 = vunpack.c.l.b16 %v3812
      %v3901 = vunpack.c.l.b16 %v3815
      %v3902 = vunpack.c.l.b16 %v3819
      %v3903 = vunpack.c.l.b16 %v3822
      %v3904 = vunpack.c.l.b16 %v3826
      %v3905 = vunpack.c.l.b16 %v3829
      %v3906 = vunpack.c.l.b16 %v3833
      %v3907 = vunpack.c.l.b16 %v3836
      %v3908 = vunpack.c.l.b16 %v3840
      %v3909 = vunpack.c.l.b16 %v3843
      %v3910 = vunpack.c.l.b16 %v3847
      %v3911 = vunpack.c.l.b16 %v3850
      %v3912 = vunpack.c.l.b16 %v3854
      %v3913 = vunpack.c.l.b16 %v3857
      %v3914 = vunpack.c.l.b16 %v3861
      %v3915 = vunpack.c.l.b16 %v3864
      %v3916 = vunpack.c.l.b16 %v3868
      %v3917 = vunpack.c.l.b16 %v3871
      %v3918 = vunpack.c.l.b16 %v3875
      %v3919 = vunpack.c.l.b16 %v3878
      %v3920 = vpack.c.b16 %v3889, %v3888
      %v3921 = vpack.c.b16 %v3891, %v3890
      %v3922 = vpack.c.b16 %v3893, %v3892
      %v3923 = vpack.c.b16 %v3895, %v3894
      %v3924 = vpack.c.b16 %v3897, %v3896
      %v3925 = vpack.c.b16 %v3899, %v3898
      %v3926 = vpack.c.b16 %v3901, %v3900
      %v3927 = vpack.c.b16 %v3903, %v3902
      %v3928 = vpack.c.b16 %v3905, %v3904
      %v3929 = vpack.c.b16 %v3907, %v3906
      %v3930 = vpack.c.b16 %v3909, %v3908
      %v3931 = vpack.c.b16 %v3911, %v3910
      %v3932 = vpack.c.b16 %v3913, %v3912
      %v3933 = vpack.c.b16 %v3915, %v3914
      %v3934 = vpack.c.b16 %v3917, %v3916
      %v3935 = vpack.c.b16 %v3919, %v3918
      %v3944 = vunpack.c.l.b16 %v3880
      %v3945 = vunpack.c.l.b16 %v3881
      %v3946 = vunpack.c.l.b16 %v3882
      %v3947 = vunpack.c.l.b16 %v3883
      %v3948 = vunpack.c.l.b16 %v3884
      %v3949 = vunpack.c.l.b16 %v3885
      %v3950 = vunpack.c.l.b16 %v3886
      %v3951 = vunpack.c.l.b16 %v3887
      %v3952 = vpack.c.b16 %v3945, %v3944
      %v3953 = vpack.c.b16 %v3947, %v3946
      %v3954 = vpack.c.b16 %v3949, %v3948
      %v3955 = vpack.c.b16 %v3951, %v3950
      %v3961 = vsel %vm1063, %v3920, 0
      %v3964 = vsel %vm1063, %v3921, 0
      %v3967 = vsel %vm1063, %v3922, 0
      %v3970 = vsel %vm1063, %v3923, 0
      %v3973 = vsel %vm1063, %v3924, 0
      %v3976 = vsel %vm1063, %v3925, 0
      %v3979 = vsel %vm1063, %v3926, 0
      %v3982 = vsel %vm1063, %v3927, 0
      %v3985 = vsel %vm1063, %v3928, 0
      %v3988 = vsel %vm1063, %v3929, 0
      %v3991 = vsel %vm1063, %v3930, 0
      %v3994 = vsel %vm1063, %v3931, 0
      %v3997 = vsel %vm1063, %v3932, 0
      %v4000 = vsel %vm1063, %v3933, 0
      %v4003 = vsel %vm1063, %v3934, 0
      %v4006 = vsel %vm1063, %v3935, 0
      %4008 = vmatprep.subr.bf16.mxu0 0
      %4009 = vmatpush1.bf16.msra.mxu0 %v3952
      %4010 = vmatprep.subr.bf16.mxu0 0
      %4011 = vmatpush1.bf16.msra.mxu0 %v3953
      %4012 = vmatprep.subr.bf16.mxu0 0
      %4013 = vmatpush1.bf16.msra.mxu0 %v3954
      %4014 = vmatprep.subr.bf16.mxu0 0
      %4015 = vmatpush1.bf16.msra.mxu0 %v3955
      %4016 = vmatprep.subr.bf16.mxu0 0
      %4017 = vmatpush1.bf16.msra.mxu0 0
      %4018 = vmatprep.subr.bf16.mxu0 0
      %4019 = vmatpush1.bf16.msra.mxu0 0
      %4020 = vmatprep.subr.bf16.mxu0 0
      %4021 = vmatpush1.bf16.msra.mxu0 0
      %4022 = vmatprep.subr.bf16.mxu0 0
      %4023 = vmatpush1.bf16.msra.mxu0 0
      %4024 = vmatprep.subr.bf16.mxu0 0
      %4025 = vmatpush1.bf16.msra.mxu0 0
      %4026 = vmatprep.subr.bf16.mxu0 0
      %4027 = vmatpush1.bf16.msra.mxu0 0
      %4028 = vmatprep.subr.bf16.mxu0 0
      %4029 = vmatpush1.bf16.msra.mxu0 0
      %4030 = vmatprep.subr.bf16.mxu0 0
      %4031 = vmatpush1.bf16.msra.mxu0 0
      %4032 = vmatprep.subr.bf16.mxu0 0
      %4033 = vmatpush1.bf16.msra.mxu0 0
      %4034 = vmatprep.subr.bf16.mxu0 0
      %4035 = vmatpush1.bf16.msra.mxu0 0
      %4036 = vmatprep.subr.bf16.mxu0 0
      %4037 = vmatpush1.bf16.msra.mxu0 0
      %4038 = vmatprep.subr.bf16.mxu0 0
      %4039 = vmatpush1.bf16.msra.mxu0 0
      %4040 = vmatprep.mubr.bf16.mxu0 0
      %4041 = vmatmul.mubr.bf16.gmra.mrb[0].mxu0 %v3961
      %v4042 = vpop.f32.mrb[0].mxu0
      %v4043 = vadd.f32 0.0, %v4042
      %v4044 = vpop.f32.mrb[0].mxu0
      %v4045 = vpop.f32.mrb[0].mxu0
      %v4046 = vadd.f32 0.0, %v4045
      %v4047 = vpop.f32.mrb[0].mxu0
      %4048 = vmatprep.mubr.bf16.mxu0 0
      %4049 = vmatmul.mubr.bf16.gmra.mrb[0].mxu0 %v3964
      %v4050 = vpop.f32.mrb[0].mxu0
      %v4051 = vadd.f32 0.0, %v4050
      %v4052 = vpop.f32.mrb[0].mxu0
      %v4053 = vpop.f32.mrb[0].mxu0
      %v4054 = vadd.f32 0.0, %v4053
      %v4055 = vpop.f32.mrb[0].mxu0
      %4056 = vmatprep.mubr.bf16.mxu0 0
      %4057 = vmatmul.mubr.bf16.gmra.mrb[0].mxu0 %v3967
      %v4058 = vpop.f32.mrb[0].mxu0
      %v4059 = vadd.f32 0.0, %v4058
      %v4060 = vpop.f32.mrb[0].mxu0
      %v4061 = vpop.f32.mrb[0].mxu0
      %v4062 = vadd.f32 0.0, %v4061
      %v4063 = vpop.f32.mrb[0].mxu0
      %4064 = vmatprep.mubr.bf16.mxu0 0
      %4065 = vmatmul.mubr.bf16.gmra.mrb[0].mxu0 %v3970
      %v4066 = vpop.f32.mrb[0].mxu0
      %v4067 = vadd.f32 0.0, %v4066
      %v4068 = vpop.f32.mrb[0].mxu0
      %v4069 = vpop.f32.mrb[0].mxu0
      %v4070 = vadd.f32 0.0, %v4069
      %v4071 = vpop.f32.mrb[0].mxu0
      %4072 = vmatprep.mubr.bf16.mxu0 0
      %4073 = vmatmul.mubr.bf16.gmra.mrb[0].mxu0 %v3973
      %v4074 = vpop.f32.mrb[0].mxu0
      %v4075 = vadd.f32 0.0, %v4074
      %v4076 = vpop.f32.mrb[0].mxu0
      %v4077 = vpop.f32.mrb[0].mxu0
      %v4078 = vadd.f32 0.0, %v4077
      %v4079 = vpop.f32.mrb[0].mxu0
      %4080 = vmatprep.mubr.bf16.mxu0 0
      %4081 = vmatmul.mubr.bf16.gmra.mrb[0].mxu0 %v3976
      %v4082 = vpop.f32.mrb[0].mxu0
      %v4083 = vadd.f32 0.0, %v4082
      %v4084 = vpop.f32.mrb[0].mxu0
      %v4085 = vpop.f32.mrb[0].mxu0
      %v4086 = vadd.f32 0.0, %v4085
      %v4087 = vpop.f32.mrb[0].mxu0
      %4088 = vmatprep.mubr.bf16.mxu0 0
      %4089 = vmatmul.mubr.bf16.gmra.mrb[0].mxu0 %v3979
      %v4090 = vpop.f32.mrb[0].mxu0
      %v4091 = vadd.f32 0.0, %v4090
      %v4092 = vpop.f32.mrb[0].mxu0
      %v4093 = vpop.f32.mrb[0].mxu0
      %v4094 = vadd.f32 0.0, %v4093
      %v4095 = vpop.f32.mrb[0].mxu0
      %4096 = vmatprep.mubr.bf16.mxu0 0
      %4097 = vmatmul.mubr.bf16.gmra.mrb[0].mxu0 %v3982
      %v4098 = vpop.f32.mrb[0].mxu0
      %v4099 = vadd.f32 0.0, %v4098
      %v4100 = vpop.f32.mrb[0].mxu0
      %v4101 = vpop.f32.mrb[0].mxu0
      %v4102 = vadd.f32 0.0, %v4101
      %v4103 = vpop.f32.mrb[0].mxu0
      %4104 = vmatprep.mubr.bf16.mxu0 0
      %4105 = vmatmul.mubr.bf16.gmra.mrb[0].mxu0 %v3985
      %v4106 = vpop.f32.mrb[0].mxu0
      %v4107 = vadd.f32 0.0, %v4106
      %v4108 = vpop.f32.mrb[0].mxu0
      %v4109 = vpop.f32.mrb[0].mxu0
      %v4110 = vadd.f32 0.0, %v4109
      %v4111 = vpop.f32.mrb[0].mxu0
      %4112 = vmatprep.mubr.bf16.mxu0 0
      %4113 = vmatmul.mubr.bf16.gmra.mrb[0].mxu0 %v3988
      %v4114 = vpop.f32.mrb[0].mxu0
      %v4115 = vadd.f32 0.0, %v4114
      %v4116 = vpop.f32.mrb[0].mxu0
      %v4117 = vpop.f32.mrb[0].mxu0
      %v4118 = vadd.f32 0.0, %v4117
      %v4119 = vpop.f32.mrb[0].mxu0
      %4120 = vmatprep.mubr.bf16.mxu0 0
      %4121 = vmatmul.mubr.bf16.gmra.mrb[0].mxu0 %v3991
      %v4122 = vpop.f32.mrb[0].mxu0
      %v4123 = vadd.f32 0.0, %v4122
      %v4124 = vpop.f32.mrb[0].mxu0
      %v4125 = vpop.f32.mrb[0].mxu0
      %v4126 = vadd.f32 0.0, %v4125
      %v4127 = vpop.f32.mrb[0].mxu0
      %4128 = vmatprep.mubr.bf16.mxu0 0
      %4129 = vmatmul.mubr.bf16.gmra.mrb[0].mxu0 %v3994
      %v4130 = vpop.f32.mrb[0].mxu0
      %v4131 = vadd.f32 0.0, %v4130
      %v4132 = vpop.f32.mrb[0].mxu0
      %v4133 = vpop.f32.mrb[0].mxu0
      %v4134 = vadd.f32 0.0, %v4133
      %v4135 = vpop.f32.mrb[0].mxu0
      %4136 = vmatprep.mubr.bf16.mxu0 0
      %4137 = vmatmul.mubr.bf16.gmra.mrb[0].mxu0 %v3997
      %v4138 = vpop.f32.mrb[0].mxu0
      %v4139 = vadd.f32 0.0, %v4138
      %v4140 = vpop.f32.mrb[0].mxu0
      %v4141 = vpop.f32.mrb[0].mxu0
      %v4142 = vadd.f32 0.0, %v4141
      %v4143 = vpop.f32.mrb[0].mxu0
      %4144 = vmatprep.mubr.bf16.mxu0 0
      %4145 = vmatmul.mubr.bf16.gmra.mrb[0].mxu0 %v4000
      %v4146 = vpop.f32.mrb[0].mxu0
      %v4147 = vadd.f32 0.0, %v4146
      %v4148 = vpop.f32.mrb[0].mxu0
      %v4149 = vpop.f32.mrb[0].mxu0
      %v4150 = vadd.f32 0.0, %v4149
      %v4151 = vpop.f32.mrb[0].mxu0
      %4152 = vmatprep.mubr.bf16.mxu0 0
      %4153 = vmatmul.mubr.bf16.gmra.mrb[0].mxu0 %v4003
      %v4154 = vpop.f32.mrb[0].mxu0
      %v4155 = vadd.f32 0.0, %v4154
      %v4156 = vpop.f32.mrb[0].mxu0
      %v4157 = vpop.f32.mrb[0].mxu0
      %v4158 = vadd.f32 0.0, %v4157
      %v4159 = vpop.f32.mrb[0].mxu0
      %4160 = vmatprep.mubr.bf16.mxu0 0
      %4161 = vmatmul.mubr.bf16.gmra.mrb[0].mxu0 %v4006
      %v4162 = vpop.f32.mrb[0].mxu0
      %v4163 = vadd.f32 0.0, %v4162
      %v4164 = vpop.f32.mrb[0].mxu0
      %v4165 = vpop.f32.mrb[0].mxu0
      %v4166 = vadd.f32 0.0, %v4165
      %v4167 = vpop.f32.mrb[0].mxu0
      %4168 = vdwg.mxu0
      %v4169 = vadd.f32 %v3671, %v4043
      %v4170 = vadd.f32 %v3672, %v4046
      %v4171 = vadd.f32 %v3673, %v4051
      %v4172 = vadd.f32 %v3674, %v4054
      %v4173 = vadd.f32 %v3675, %v4059
      %v4174 = vadd.f32 %v3676, %v4062
      %v4175 = vadd.f32 %v3677, %v4067
      %v4176 = vadd.f32 %v3678, %v4070
      %v4177 = vadd.f32 %v3679, %v4075
      %v4178 = vadd.f32 %v3680, %v4078
      %v4179 = vadd.f32 %v3681, %v4083
      %v4180 = vadd.f32 %v3682, %v4086
      %v4181 = vadd.f32 %v3683, %v4091
      %v4182 = vadd.f32 %v3684, %v4094
      %v4183 = vadd.f32 %v3685, %v4099
      %v4184 = vadd.f32 %v3686, %v4102
      %v4185 = vadd.f32 %v3687, %v4107
      %v4186 = vadd.f32 %v3688, %v4110
      %v4187 = vadd.f32 %v3689, %v4115
      %v4188 = vadd.f32 %v3690, %v4118
      %v4189 = vadd.f32 %v3691, %v4123
      %v4190 = vadd.f32 %v3692, %v4126
      %v4191 = vadd.f32 %v3693, %v4131
      %v4192 = vadd.f32 %v3694, %v4134
      %v4193 = vadd.f32 %v3695, %v4139
      %v4194 = vadd.f32 %v3696, %v4142
      %v4195 = vadd.f32 %v3697, %v4147
      %v4196 = vadd.f32 %v3698, %v4150
      %v4197 = vadd.f32 %v3699, %v4155
      %v4198 = vadd.f32 %v3700, %v4158
      %v4199 = vadd.f32 %v3701, %v4163
      %v4200 = vadd.f32 %v3702, %v4166
      %s4201 = scalar_lea.vmem [#allocation2], 24
      %v4202 = vld [vmem:[%s4201] sm:$0xf]
      %v4203 = vld [vmem:[%s4201 + $0x4] sm:$0xf]
      %v4204 = vld [vmem:[%s4201 + $0xc] sm:$0xf]
      %v4205 = vld [vmem:[%s4201 + $0x10] sm:$0xf]
      %v4206 = vld [vmem:[%s4201 + $0x18] sm:$0xf]
      %v4207 = vld [vmem:[%s4201 + $0x1c] sm:$0xf]
      %v4208 = vld [vmem:[%s4201 + $0x24] sm:$0xf]
      %v4209 = vld [vmem:[%s4201 + $0x28] sm:$0xf]
      %v4210 = vld [vmem:[%s4201 + $0x30] sm:$0xf]
      %v4211 = vld [vmem:[%s4201 + $0x34] sm:$0xf]
      %v4212 = vld [vmem:[%s4201 + $0x3c] sm:$0xf]
      %v4213 = vld [vmem:[%s4201 + $0x40] sm:$0xf]
      %v4214 = vld [vmem:[%s4201 + $0x48] sm:$0xf]
      %v4215 = vld [vmem:[%s4201 + $0x4c] sm:$0xf]
      %v4216 = vld [vmem:[%s4201 + $0x54] sm:$0xf]
      %v4217 = vld [vmem:[%s4201 + $0x58] sm:$0xf]
      %v4218 = vld [vmem:[%s4201 + $0x60] sm:$0xf]
      %v4219 = vld [vmem:[%s4201 + $0x64] sm:$0xf]
      %v4220 = vld [vmem:[%s4201 + $0x6c] sm:$0xf]
      %v4221 = vld [vmem:[%s4201 + $0x70] sm:$0xf]
      %v4222 = vld [vmem:[%s4201 + $0x78] sm:$0xf]
      %v4223 = vld [vmem:[%s4201 + $0x7c] sm:$0xf]
      %v4224 = vld [vmem:[%s4201 + $0x84] sm:$0xf]
      %v4225 = vld [vmem:[%s4201 + $0x88] sm:$0xf]
      %v4226 = vld [vmem:[%s4201 + $0x90] sm:$0xf]
      %v4227 = vld [vmem:[%s4201 + $0x94] sm:$0xf]
      %v4228 = vld [vmem:[%s4201 + $0x9c] sm:$0xf]
      %v4229 = vld [vmem:[%s4201 + $0xa0] sm:$0xf]
      %v4230 = vld [vmem:[%s4201 + $0xa8] sm:$0xf]
      %v4231 = vld [vmem:[%s4201 + $0xac] sm:$0xf]
      %v4232 = vld [vmem:[%s4201 + $0xb4] sm:$0xf]
      %v4233 = vld [vmem:[%s4201 + $0xb8] sm:$0xf]
      %s4234 = scalar_lea.vmem %s1, 192
      %v4235 = vld [vmem:[%s4234] sm:$0xf]
      %v4236 = vld [vmem:[%s4234 + $0x4] sm:$0xf]
      %v4237 = vld [vmem:[%s4234 + $0x8] sm:$0xf]
      %v4238 = vld [vmem:[%s4234 + $0xc] sm:$0xf]
      %v4239 = vld [vmem:[%s4234 + $0x10] sm:$0xf]
      %v4240 = vld [vmem:[%s4234 + $0x14] sm:$0xf]
      %v4241 = vld [vmem:[%s4234 + $0x18] sm:$0xf]
      %v4242 = vld [vmem:[%s4234 + $0x1c] sm:$0xf]
      %v4275 = vunpack.c.l.b16 %v4202
      %v4276 = vunpack.c.l.b16 %v4203
      %v4277 = vunpack.c.l.b16 %v4204
      %v4278 = vunpack.c.l.b16 %v4205
      %v4279 = vunpack.c.l.b16 %v4206
      %v4280 = vunpack.c.l.b16 %v4207
      %v4281 = vunpack.c.l.b16 %v4208
      %v4282 = vunpack.c.l.b16 %v4209
      %v4283 = vunpack.c.l.b16 %v4210
      %v4284 = vunpack.c.l.b16 %v4211
      %v4285 = vunpack.c.l.b16 %v4212
      %v4286 = vunpack.c.l.b16 %v4213
      %v4287 = vunpack.c.l.b16 %v4214
      %v4288 = vunpack.c.l.b16 %v4215
      %v4289 = vunpack.c.l.b16 %v4216
      %v4290 = vunpack.c.l.b16 %v4217
      %v4291 = vunpack.c.l.b16 %v4218
      %v4292 = vunpack.c.l.b16 %v4219
      %v4293 = vunpack.c.l.b16 %v4220
      %v4294 = vunpack.c.l.b16 %v4221
      %v4295 = vunpack.c.l.b16 %v4222
      %v4296 = vunpack.c.l.b16 %v4223
      %v4297 = vunpack.c.l.b16 %v4224
      %v4298 = vunpack.c.l.b16 %v4225
      %v4299 = vunpack.c.l.b16 %v4226
      %v4300 = vunpack.c.l.b16 %v4227
      %v4301 = vunpack.c.l.b16 %v4228
      %v4302 = vunpack.c.l.b16 %v4229
      %v4303 = vunpack.c.l.b16 %v4230
      %v4304 = vunpack.c.l.b16 %v4231
      %v4305 = vunpack.c.l.b16 %v4232
      %v4306 = vunpack.c.l.b16 %v4233
      %v4307 = vpack.c.b16 %v4276, %v4275
      %v4308 = vpack.c.b16 %v4278, %v4277
      %v4309 = vpack.c.b16 %v4280, %v4279
      %v4310 = vpack.c.b16 %v4282, %v4281
      %v4311 = vpack.c.b16 %v4284, %v4283
      %v4312 = vpack.c.b16 %v4286, %v4285
      %v4313 = vpack.c.b16 %v4288, %v4287
      %v4314 = vpack.c.b16 %v4290, %v4289
      %v4315 = vpack.c.b16 %v4292, %v4291
      %v4316 = vpack.c.b16 %v4294, %v4293
      %v4317 = vpack.c.b16 %v4296, %v4295
      %v4318 = vpack.c.b16 %v4298, %v4297
      %v4319 = vpack.c.b16 %v4300, %v4299
      %v4320 = vpack.c.b16 %v4302, %v4301
      %v4321 = vpack.c.b16 %v4304, %v4303
      %v4322 = vpack.c.b16 %v4306, %v4305
      %v4331 = vunpack.c.l.b16 %v4235
      %v4332 = vunpack.c.l.b16 %v4236
      %v4333 = vunpack.c.l.b16 %v4237
      %v4334 = vunpack.c.l.b16 %v4238
      %v4335 = vunpack.c.l.b16 %v4239
      %v4336 = vunpack.c.l.b16 %v4240
      %v4337 = vunpack.c.l.b16 %v4241
      %v4338 = vunpack.c.l.b16 %v4242
      %v4339 = vpack.c.b16 %v4332, %v4331
      %v4340 = vpack.c.b16 %v4334, %v4333
      %v4341 = vpack.c.b16 %v4336, %v4335
      %v4342 = vpack.c.b16 %v4338, %v4337
      %v4348 = vsel %vm1063, %v4307, 0
      %v4351 = vsel %vm1063, %v4308, 0
      %v4354 = vsel %vm1063, %v4309, 0
      %v4357 = vsel %vm1063, %v4310, 0
      %v4360 = vsel %vm1063, %v4311, 0
      %v4363 = vsel %vm1063, %v4312, 0
      %v4366 = vsel %vm1063, %v4313, 0
      %v4369 = vsel %vm1063, %v4314, 0
      %v4372 = vsel %vm1063, %v4315, 0
      %v4375 = vsel %vm1063, %v4316, 0
      %v4378 = vsel %vm1063, %v4317, 0
      %v4381 = vsel %vm1063, %v4318, 0
      %v4384 = vsel %vm1063, %v4319, 0
      %v4387 = vsel %vm1063, %v4320, 0
      %v4390 = vsel %vm1063, %v4321, 0
      %v4393 = vsel %vm1063, %v4322, 0
      %4395 = vmatprep.subr.bf16.mxu0 0
      %4396 = vmatpush1.bf16.msra.mxu0 %v4339
      %4397 = vmatprep.subr.bf16.mxu0 0
      %4398 = vmatpush1.bf16.msra.mxu0 %v4340
      %4399 = vmatprep.subr.bf16.mxu0 0
      %4400 = vmatpush1.bf16.msra.mxu0 %v4341
      %4401 = vmatprep.subr.bf16.mxu0 0
      %4402 = vmatpush1.bf16.msra.mxu0 %v4342
      %4403 = vmatprep.subr.bf16.mxu0 0
      %4404 = vmatpush1.bf16.msra.mxu0 0
      %4405 = vmatprep.subr.bf16.mxu0 0
      %4406 = vmatpush1.bf16.msra.mxu0 0
      %4407 = vmatprep.subr.bf16.mxu0 0
      %4408 = vmatpush1.bf16.msra.mxu0 0
      %4409 = vmatprep.subr.bf16.mxu0 0
      %4410 = vmatpush1.bf16.msra.mxu0 0
      %4411 = vmatprep.subr.bf16.mxu0 0
      %4412 = vmatpush1.bf16.msra.mxu0 0
      %4413 = vmatprep.subr.bf16.mxu0 0
      %4414 = vmatpush1.bf16.msra.mxu0 0
      %4415 = vmatprep.subr.bf16.mxu0 0
      %4416 = vmatpush1.bf16.msra.mxu0 0
      %4417 = vmatprep.subr.bf16.mxu0 0
      %4418 = vmatpush1.bf16.msra.mxu0 0
      %4419 = vmatprep.subr.bf16.mxu0 0
      %4420 = vmatpush1.bf16.msra.mxu0 0
      %4421 = vmatprep.subr.bf16.mxu0 0
      %4422 = vmatpush1.bf16.msra.mxu0 0
      %4423 = vmatprep.subr.bf16.mxu0 0
      %4424 = vmatpush1.bf16.msra.mxu0 0
      %4425 = vmatprep.subr.bf16.mxu0 0
      %4426 = vmatpush1.bf16.msra.mxu0 0
      %4427 = vmatprep.mubr.bf16.mxu0 0
      %4428 = vmatmul.mubr.bf16.gmra.mrb[0].mxu0 %v4348
      %v4429 = vpop.f32.mrb[0].mxu0
      %v4430 = vadd.f32 0.0, %v4429
      %v4431 = vpop.f32.mrb[0].mxu0
      %v4432 = vpop.f32.mrb[0].mxu0
      %v4433 = vadd.f32 0.0, %v4432
      %v4434 = vpop.f32.mrb[0].mxu0
      %4435 = vmatprep.mubr.bf16.mxu0 0
      %4436 = vmatmul.mubr.bf16.gmra.mrb[0].mxu0 %v4351
      %v4437 = vpop.f32.mrb[0].mxu0
      %v4438 = vadd.f32 0.0, %v4437
      %v4439 = vpop.f32.mrb[0].mxu0
      %v4440 = vpop.f32.mrb[0].mxu0
      %v4441 = vadd.f32 0.0, %v4440
      %v4442 = vpop.f32.mrb[0].mxu0
      %4443 = vmatprep.mubr.bf16.mxu0 0
      %4444 = vmatmul.mubr.bf16.gmra.mrb[0].mxu0 %v4354
      %v4445 = vpop.f32.mrb[0].mxu0
      %v4446 = vadd.f32 0.0, %v4445
      %v4447 = vpop.f32.mrb[0].mxu0
      %v4448 = vpop.f32.mrb[0].mxu0
      %v4449 = vadd.f32 0.0, %v4448
      %v4450 = vpop.f32.mrb[0].mxu0
      %4451 = vmatprep.mubr.bf16.mxu0 0
      %4452 = vmatmul.mubr.bf16.gmra.mrb[0].mxu0 %v4357
      %v4453 = vpop.f32.mrb[0].mxu0
      %v4454 = vadd.f32 0.0, %v4453
      %v4455 = vpop.f32.mrb[0].mxu0
      %v4456 = vpop.f32.mrb[0].mxu0
      %v4457 = vadd.f32 0.0, %v4456
      %v4458 = vpop.f32.mrb[0].mxu0
      %4459 = vmatprep.mubr.bf16.mxu0 0
      %4460 = vmatmul.mubr.bf16.gmra.mrb[0].mxu0 %v4360
      %v4461 = vpop.f32.mrb[0].mxu0
      %v4462 = vadd.f32 0.0, %v4461
      %v4463 = vpop.f32.mrb[0].mxu0
      %v4464 = vpop.f32.mrb[0].mxu0
      %v4465 = vadd.f32 0.0, %v4464
      %v4466 = vpop.f32.mrb[0].mxu0
      %4467 = vmatprep.mubr.bf16.mxu0 0
      %4468 = vmatmul.mubr.bf16.gmra.mrb[0].mxu0 %v4363
      %v4469 = vpop.f32.mrb[0].mxu0
      %v4470 = vadd.f32 0.0, %v4469
      %v4471 = vpop.f32.mrb[0].mxu0
      %v4472 = vpop.f32.mrb[0].mxu0
      %v4473 = vadd.f32 0.0, %v4472
      %v4474 = vpop.f32.mrb[0].mxu0
      %4475 = vmatprep.mubr.bf16.mxu0 0
      %4476 = vmatmul.mubr.bf16.gmra.mrb[0].mxu0 %v4366
      %v4477 = vpop.f32.mrb[0].mxu0
      %v4478 = vadd.f32 0.0, %v4477
      %v4479 = vpop.f32.mrb[0].mxu0
      %v4480 = vpop.f32.mrb[0].mxu0
      %v4481 = vadd.f32 0.0, %v4480
      %v4482 = vpop.f32.mrb[0].mxu0
      %4483 = vmatprep.mubr.bf16.mxu0 0
      %4484 = vmatmul.mubr.bf16.gmra.mrb[0].mxu0 %v4369
      %v4485 = vpop.f32.mrb[0].mxu0
      %v4486 = vadd.f32 0.0, %v4485
      %v4487 = vpop.f32.mrb[0].mxu0
      %v4488 = vpop.f32.mrb[0].mxu0
      %v4489 = vadd.f32 0.0, %v4488
      %v4490 = vpop.f32.mrb[0].mxu0
      %4491 = vmatprep.mubr.bf16.mxu0 0
      %4492 = vmatmul.mubr.bf16.gmra.mrb[0].mxu0 %v4372
      %v4493 = vpop.f32.mrb[0].mxu0
      %v4494 = vadd.f32 0.0, %v4493
      %v4495 = vpop.f32.mrb[0].mxu0
      %v4496 = vpop.f32.mrb[0].mxu0
      %v4497 = vadd.f32 0.0, %v4496
      %v4498 = vpop.f32.mrb[0].mxu0
      %4499 = vmatprep.mubr.bf16.mxu0 0
      %4500 = vmatmul.mubr.bf16.gmra.mrb[0].mxu0 %v4375
      %v4501 = vpop.f32.mrb[0].mxu0
      %v4502 = vadd.f32 0.0, %v4501
      %v4503 = vpop.f32.mrb[0].mxu0
      %v4504 = vpop.f32.mrb[0].mxu0
      %v4505 = vadd.f32 0.0, %v4504
      %v4506 = vpop.f32.mrb[0].mxu0
      %4507 = vmatprep.mubr.bf16.mxu0 0
      %4508 = vmatmul.mubr.bf16.gmra.mrb[0].mxu0 %v4378
      %v4509 = vpop.f32.mrb[0].mxu0
      %v4510 = vadd.f32 0.0, %v4509
      %v4511 = vpop.f32.mrb[0].mxu0
      %v4512 = vpop.f32.mrb[0].mxu0
      %v4513 = vadd.f32 0.0, %v4512
      %v4514 = vpop.f32.mrb[0].mxu0
      %4515 = vmatprep.mubr.bf16.mxu0 0
      %4516 = vmatmul.mubr.bf16.gmra.mrb[0].mxu0 %v4381
      %v4517 = vpop.f32.mrb[0].mxu0
      %v4518 = vadd.f32 0.0, %v4517
      %v4519 = vpop.f32.mrb[0].mxu0
      %v4520 = vpop.f32.mrb[0].mxu0
      %v4521 = vadd.f32 0.0, %v4520
      %v4522 = vpop.f32.mrb[0].mxu0
      %4523 = vmatprep.mubr.bf16.mxu0 0
      %4524 = vmatmul.mubr.bf16.gmra.mrb[0].mxu0 %v4384
      %v4525 = vpop.f32.mrb[0].mxu0
      %v4526 = vadd.f32 0.0, %v4525
      %v4527 = vpop.f32.mrb[0].mxu0
      %v4528 = vpop.f32.mrb[0].mxu0
      %v4529 = vadd.f32 0.0, %v4528
      %v4530 = vpop.f32.mrb[0].mxu0
      %4531 = vmatprep.mubr.bf16.mxu0 0
      %4532 = vmatmul.mubr.bf16.gmra.mrb[0].mxu0 %v4387
      %v4533 = vpop.f32.mrb[0].mxu0
      %v4534 = vadd.f32 0.0, %v4533
      %v4535 = vpop.f32.mrb[0].mxu0
      %v4536 = vpop.f32.mrb[0].mxu0
      %v4537 = vadd.f32 0.0, %v4536
      %v4538 = vpop.f32.mrb[0].mxu0
      %4539 = vmatprep.mubr.bf16.mxu0 0
      %4540 = vmatmul.mubr.bf16.gmra.mrb[0].mxu0 %v4390
      %v4541 = vpop.f32.mrb[0].mxu0
      %v4542 = vadd.f32 0.0, %v4541
      %v4543 = vpop.f32.mrb[0].mxu0
      %v4544 = vpop.f32.mrb[0].mxu0
      %v4545 = vadd.f32 0.0, %v4544
      %v4546 = vpop.f32.mrb[0].mxu0
      %4547 = vmatprep.mubr.bf16.mxu0 0
      %4548 = vmatmul.mubr.bf16.gmra.mrb[0].mxu0 %v4393
      %v4549 = vpop.f32.mrb[0].mxu0
      %v4550 = vadd.f32 0.0, %v4549
      %v4551 = vpop.f32.mrb[0].mxu0
      %v4552 = vpop.f32.mrb[0].mxu0
      %v4553 = vadd.f32 0.0, %v4552
      %v4554 = vpop.f32.mrb[0].mxu0
      %4555 = vdwg.mxu0
      %v4556 = vadd.f32 %v4169, %v4430
      %v4557 = vadd.f32 %v4170, %v4433
      %v4558 = vadd.f32 %v4171, %v4438
      %v4559 = vadd.f32 %v4172, %v4441
      %v4560 = vadd.f32 %v4173, %v4446
      %v4561 = vadd.f32 %v4174, %v4449
      %v4562 = vadd.f32 %v4175, %v4454
      %v4563 = vadd.f32 %v4176, %v4457
      %v4564 = vadd.f32 %v4177, %v4462
      %v4565 = vadd.f32 %v4178, %v4465
      %v4566 = vadd.f32 %v4179, %v4470
      %v4567 = vadd.f32 %v4180, %v4473
      %v4568 = vadd.f32 %v4181, %v4478
      %v4569 = vadd.f32 %v4182, %v4481
      %v4570 = vadd.f32 %v4183, %v4486
      %v4571 = vadd.f32 %v4184, %v4489
      %v4572 = vadd.f32 %v4185, %v4494
      %v4573 = vadd.f32 %v4186, %v4497
      %v4574 = vadd.f32 %v4187, %v4502
      %v4575 = vadd.f32 %v4188, %v4505
      %v4576 = vadd.f32 %v4189, %v4510
      %v4577 = vadd.f32 %v4190, %v4513
      %v4578 = vadd.f32 %v4191, %v4518
      %v4579 = vadd.f32 %v4192, %v4521
      %v4580 = vadd.f32 %v4193, %v4526
      %v4581 = vadd.f32 %v4194, %v4529
      %v4582 = vadd.f32 %v4195, %v4534
      %v4583 = vadd.f32 %v4196, %v4537
      %v4584 = vadd.f32 %v4197, %v4542
      %v4585 = vadd.f32 %v4198, %v4545
      %v4586 = vadd.f32 %v4199, %v4550
      %v4587 = vadd.f32 %v4200, %v4553
      %v4588 = vld [vmem:[%s4201] sm:$0xf]
      %v4589 = vld [vmem:[%s4201 + $0x4] sm:$0xf]
      %v4590 = vld [vmem:[%s4201 + $0x8] sm:$0x1]
      %v4591 = vld [vmem:[%s4201 + $0xc] sm:$0xf]
      %v4592 = vld [vmem:[%s4201 + $0x10] sm:$0xf]
      %v4593 = vld [vmem:[%s4201 + $0x14] sm:$0x1]
      %v4594 = vld [vmem:[%s4201 + $0x18] sm:$0xf]
      %v4595 = vld [vmem:[%s4201 + $0x1c] sm:$0xf]
      %v4596 = vld [vmem:[%s4201 + $0x20] sm:$0x1]
      %v4597 = vld [vmem:[%s4201 + $0x24] sm:$0xf]
      %v4598 = vld [vmem:[%s4201 + $0x28] sm:$0xf]
      %v4599 = vld [vmem:[%s4201 + $0x2c] sm:$0x1]
      %v4600 = vld [vmem:[%s4201 + $0x30] sm:$0xf]
      %v4601 = vld [vmem:[%s4201 + $0x34] sm:$0xf]
      %v4602 = vld [vmem:[%s4201 + $0x38] sm:$0x1]
      %v4603 = vld [vmem:[%s4201 + $0x3c] sm:$0xf]
      %v4604 = vld [vmem:[%s4201 + $0x40] sm:$0xf]
      %v4605 = vld [vmem:[%s4201 + $0x44] sm:$0x1]
      %v4606 = vld [vmem:[%s4201 + $0x48] sm:$0xf]
      %v4607 = vld [vmem:[%s4201 + $0x4c] sm:$0xf]
      %v4608 = vld [vmem:[%s4201 + $0x50] sm:$0x1]
      %v4609 = vld [vmem:[%s4201 + $0x54] sm:$0xf]
      %v4610 = vld [vmem:[%s4201 + $0x58] sm:$0xf]
      %v4611 = vld [vmem:[%s4201 + $0x5c] sm:$0x1]
      %v4612 = vld [vmem:[%s4201 + $0x60] sm:$0xf]
      %v4613 = vld [vmem:[%s4201 + $0x64] sm:$0xf]
      %v4614 = vld [vmem:[%s4201 + $0x68] sm:$0x1]
      %v4615 = vld [vmem:[%s4201 + $0x6c] sm:$0xf]
      %v4616 = vld [vmem:[%s4201 + $0x70] sm:$0xf]
      %v4617 = vld [vmem:[%s4201 + $0x74] sm:$0x1]
      %v4618 = vld [vmem:[%s4201 + $0x78] sm:$0xf]
      %v4619 = vld [vmem:[%s4201 + $0x7c] sm:$0xf]
      %v4620 = vld [vmem:[%s4201 + $0x80] sm:$0x1]
      %v4621 = vld [vmem:[%s4201 + $0x84] sm:$0xf]
      %v4622 = vld [vmem:[%s4201 + $0x88] sm:$0xf]
      %v4623 = vld [vmem:[%s4201 + $0x8c] sm:$0x1]
      %v4624 = vld [vmem:[%s4201 + $0x90] sm:$0xf]
      %v4625 = vld [vmem:[%s4201 + $0x94] sm:$0xf]
      %v4626 = vld [vmem:[%s4201 + $0x98] sm:$0x1]
      %v4627 = vld [vmem:[%s4201 + $0x9c] sm:$0xf]
      %v4628 = vld [vmem:[%s4201 + $0xa0] sm:$0xf]
      %v4629 = vld [vmem:[%s4201 + $0xa4] sm:$0x1]
      %v4630 = vld [vmem:[%s4201 + $0xa8] sm:$0xf]
      %v4631 = vld [vmem:[%s4201 + $0xac] sm:$0xf]
      %v4632 = vld [vmem:[%s4201 + $0xb0] sm:$0x1]
      %v4633 = vld [vmem:[%s4201 + $0xb4] sm:$0xf]
      %v4634 = vld [vmem:[%s4201 + $0xb8] sm:$0xf]
      %v4635 = vld [vmem:[%s4201 + $0xbc] sm:$0x1]
      %v4637 = vshrl.u32 %v4588, 16
      %v4639 = vrot.slane %v4637, 4
      %v4640 = vshll.u32 %v4588, 16
      %v4642 = vrot.slane %v4640, 5
      %v4643 = vor.u32 %v4639, %v4642
      %v4644 = vrot.slane %v4643, 4
      %v4646 = vshll.u32 %v4589, 16
      %v4648 = vrot.slane %v4646, 5
      %v4649 = vsel %vm1355, %v4644, %v4648
      %v4650 = vshrl.u32 %v4589, 16
      %v4652 = vrot.slane %v4650, 4
      %v4653 = vor.u32 %v4652, %v4648
      %v4654 = vrot.slane %v4653, 4
      %v4656 = vshll.u32 %v4590, 16
      %v4658 = vrot.slane %v4656, 5
      %v4659 = vsel %vm1355, %v4654, %v4658
      %v4661 = vshrl.u32 %v4591, 16
      %v4663 = vrot.slane %v4661, 4
      %v4664 = vshll.u32 %v4591, 16
      %v4666 = vrot.slane %v4664, 5
      %v4667 = vor.u32 %v4663, %v4666
      %v4668 = vrot.slane %v4667, 4
      %v4670 = vshll.u32 %v4592, 16
      %v4672 = vrot.slane %v4670, 5
      %v4673 = vsel %vm1355, %v4668, %v4672
      %v4674 = vshrl.u32 %v4592, 16
      %v4676 = vrot.slane %v4674, 4
      %v4677 = vor.u32 %v4676, %v4672
      %v4678 = vrot.slane %v4677, 4
      %v4680 = vshll.u32 %v4593, 16
      %v4682 = vrot.slane %v4680, 5
      %v4683 = vsel %vm1355, %v4678, %v4682
      %v4685 = vshrl.u32 %v4594, 16
      %v4687 = vrot.slane %v4685, 4
      %v4688 = vshll.u32 %v4594, 16
      %v4690 = vrot.slane %v4688, 5
      %v4691 = vor.u32 %v4687, %v4690
      %v4692 = vrot.slane %v4691, 4
      %v4694 = vshll.u32 %v4595, 16
      %v4696 = vrot.slane %v4694, 5
      %v4697 = vsel %vm1355, %v4692, %v4696
      %v4698 = vshrl.u32 %v4595, 16
      %v4700 = vrot.slane %v4698, 4
      %v4701 = vor.u32 %v4700, %v4696
      %v4702 = vrot.slane %v4701, 4
      %v4704 = vshll.u32 %v4596, 16
      %v4706 = vrot.slane %v4704, 5
      %v4707 = vsel %vm1355, %v4702, %v4706
      %v4709 = vshrl.u32 %v4597, 16
      %v4711 = vrot.slane %v4709, 4
      %v4712 = vshll.u32 %v4597, 16
      %v4714 = vrot.slane %v4712, 5
      %v4715 = vor.u32 %v4711, %v4714
      %v4716 = vrot.slane %v4715, 4
      %v4718 = vshll.u32 %v4598, 16
      %v4720 = vrot.slane %v4718, 5
      %v4721 = vsel %vm1355, %v4716, %v4720
      %v4722 = vshrl.u32 %v4598, 16
      %v4724 = vrot.slane %v4722, 4
      %v4725 = vor.u32 %v4724, %v4720
      %v4726 = vrot.slane %v4725, 4
      %v4728 = vshll.u32 %v4599, 16
      %v4730 = vrot.slane %v4728, 5
      %v4731 = vsel %vm1355, %v4726, %v4730
      %v4733 = vshrl.u32 %v4600, 16
      %v4735 = vrot.slane %v4733, 4
      %v4736 = vshll.u32 %v4600, 16
      %v4738 = vrot.slane %v4736, 5
      %v4739 = vor.u32 %v4735, %v4738
      %v4740 = vrot.slane %v4739, 4
      %v4742 = vshll.u32 %v4601, 16
      %v4744 = vrot.slane %v4742, 5
      %v4745 = vsel %vm1355, %v4740, %v4744
      %v4746 = vshrl.u32 %v4601, 16
      %v4748 = vrot.slane %v4746, 4
      %v4749 = vor.u32 %v4748, %v4744
      %v4750 = vrot.slane %v4749, 4
      %v4752 = vshll.u32 %v4602, 16
      %v4754 = vrot.slane %v4752, 5
      %v4755 = vsel %vm1355, %v4750, %v4754
      %v4757 = vshrl.u32 %v4603, 16
      %v4759 = vrot.slane %v4757, 4
      %v4760 = vshll.u32 %v4603, 16
      %v4762 = vrot.slane %v4760, 5
      %v4763 = vor.u32 %v4759, %v4762
      %v4764 = vrot.slane %v4763, 4
      %v4766 = vshll.u32 %v4604, 16
      %v4768 = vrot.slane %v4766, 5
      %v4769 = vsel %vm1355, %v4764, %v4768
      %v4770 = vshrl.u32 %v4604, 16
      %v4772 = vrot.slane %v4770, 4
      %v4773 = vor.u32 %v4772, %v4768
      %v4774 = vrot.slane %v4773, 4
      %v4776 = vshll.u32 %v4605, 16
      %v4778 = vrot.slane %v4776, 5
      %v4779 = vsel %vm1355, %v4774, %v4778
      %v4781 = vshrl.u32 %v4606, 16
      %v4783 = vrot.slane %v4781, 4
      %v4784 = vshll.u32 %v4606, 16
      %v4786 = vrot.slane %v4784, 5
      %v4787 = vor.u32 %v4783, %v4786
      %v4788 = vrot.slane %v4787, 4
      %v4790 = vshll.u32 %v4607, 16
      %v4792 = vrot.slane %v4790, 5
      %v4793 = vsel %vm1355, %v4788, %v4792
      %v4794 = vshrl.u32 %v4607, 16
      %v4796 = vrot.slane %v4794, 4
      %v4797 = vor.u32 %v4796, %v4792
      %v4798 = vrot.slane %v4797, 4
      %v4800 = vshll.u32 %v4608, 16
      %v4802 = vrot.slane %v4800, 5
      %v4803 = vsel %vm1355, %v4798, %v4802
      %v4805 = vshrl.u32 %v4609, 16
      %v4807 = vrot.slane %v4805, 4
      %v4808 = vshll.u32 %v4609, 16
      %v4810 = vrot.slane %v4808, 5
      %v4811 = vor.u32 %v4807, %v4810
      %v4812 = vrot.slane %v4811, 4
      %v4814 = vshll.u32 %v4610, 16
      %v4816 = vrot.slane %v4814, 5
      %v4817 = vsel %vm1355, %v4812, %v4816
      %v4818 = vshrl.u32 %v4610, 16
      %v4820 = vrot.slane %v4818, 4
      %v4821 = vor.u32 %v4820, %v4816
      %v4822 = vrot.slane %v4821, 4
      %v4824 = vshll.u32 %v4611, 16
      %v4826 = vrot.slane %v4824, 5
      %v4827 = vsel %vm1355, %v4822, %v4826
      %v4829 = vshrl.u32 %v4612, 16
      %v4831 = vrot.slane %v4829, 4
      %v4832 = vshll.u32 %v4612, 16
      %v4834 = vrot.slane %v4832, 5
      %v4835 = vor.u32 %v4831, %v4834
      %v4836 = vrot.slane %v4835, 4
      %v4838 = vshll.u32 %v4613, 16
      %v4840 = vrot.slane %v4838, 5
      %v4841 = vsel %vm1355, %v4836, %v4840
      %v4842 = vshrl.u32 %v4613, 16
      %v4844 = vrot.slane %v4842, 4
      %v4845 = vor.u32 %v4844, %v4840
      %v4846 = vrot.slane %v4845, 4
      %v4848 = vshll.u32 %v4614, 16
      %v4850 = vrot.slane %v4848, 5
      %v4851 = vsel %vm1355, %v4846, %v4850
      %v4853 = vshrl.u32 %v4615, 16
      %v4855 = vrot.slane %v4853, 4
      %v4856 = vshll.u32 %v4615, 16
      %v4858 = vrot.slane %v4856, 5
      %v4859 = vor.u32 %v4855, %v4858
      %v4860 = vrot.slane %v4859, 4
      %v4862 = vshll.u32 %v4616, 16
      %v4864 = vrot.slane %v4862, 5
      %v4865 = vsel %vm1355, %v4860, %v4864
      %v4866 = vshrl.u32 %v4616, 16
      %v4868 = vrot.slane %v4866, 4
      %v4869 = vor.u32 %v4868, %v4864
      %v4870 = vrot.slane %v4869, 4
      %v4872 = vshll.u32 %v4617, 16
      %v4874 = vrot.slane %v4872, 5
      %v4875 = vsel %vm1355, %v4870, %v4874
      %v4877 = vshrl.u32 %v4618, 16
      %v4879 = vrot.slane %v4877, 4
      %v4880 = vshll.u32 %v4618, 16
      %v4882 = vrot.slane %v4880, 5
      %v4883 = vor.u32 %v4879, %v4882
      %v4884 = vrot.slane %v4883, 4
      %v4886 = vshll.u32 %v4619, 16
      %v4888 = vrot.slane %v4886, 5
      %v4889 = vsel %vm1355, %v4884, %v4888
      %v4890 = vshrl.u32 %v4619, 16
      %v4892 = vrot.slane %v4890, 4
      %v4893 = vor.u32 %v4892, %v4888
      %v4894 = vrot.slane %v4893, 4
      %v4896 = vshll.u32 %v4620, 16
      %v4898 = vrot.slane %v4896, 5
      %v4899 = vsel %vm1355, %v4894, %v4898
      %v4901 = vshrl.u32 %v4621, 16
      %v4903 = vrot.slane %v4901, 4
      %v4904 = vshll.u32 %v4621, 16
      %v4906 = vrot.slane %v4904, 5
      %v4907 = vor.u32 %v4903, %v4906
      %v4908 = vrot.slane %v4907, 4
      %v4910 = vshll.u32 %v4622, 16
      %v4912 = vrot.slane %v4910, 5
      %v4913 = vsel %vm1355, %v4908, %v4912
      %v4914 = vshrl.u32 %v4622, 16
      %v4916 = vrot.slane %v4914, 4
      %v4917 = vor.u32 %v4916, %v4912
      %v4918 = vrot.slane %v4917, 4
      %v4920 = vshll.u32 %v4623, 16
      %v4922 = vrot.slane %v4920, 5
      %v4923 = vsel %vm1355, %v4918, %v4922
      %v4925 = vshrl.u32 %v4624, 16
      %v4927 = vrot.slane %v4925, 4
      %v4928 = vshll.u32 %v4624, 16
      %v4930 = vrot.slane %v4928, 5
      %v4931 = vor.u32 %v4927, %v4930
      %v4932 = vrot.slane %v4931, 4
      %v4934 = vshll.u32 %v4625, 16
      %v4936 = vrot.slane %v4934, 5
      %v4937 = vsel %vm1355, %v4932, %v4936
      %v4938 = vshrl.u32 %v4625, 16
      %v4940 = vrot.slane %v4938, 4
      %v4941 = vor.u32 %v4940, %v4936
      %v4942 = vrot.slane %v4941, 4
      %v4944 = vshll.u32 %v4626, 16
      %v4946 = vrot.slane %v4944, 5
      %v4947 = vsel %vm1355, %v4942, %v4946
      %v4949 = vshrl.u32 %v4627, 16
      %v4951 = vrot.slane %v4949, 4
      %v4952 = vshll.u32 %v4627, 16
      %v4954 = vrot.slane %v4952, 5
      %v4955 = vor.u32 %v4951, %v4954
      %v4956 = vrot.slane %v4955, 4
      %v4958 = vshll.u32 %v4628, 16
      %v4960 = vrot.slane %v4958, 5
      %v4961 = vsel %vm1355, %v4956, %v4960
      %v4962 = vshrl.u32 %v4628, 16
      %v4964 = vrot.slane %v4962, 4
      %v4965 = vor.u32 %v4964, %v4960
      %v4966 = vrot.slane %v4965, 4
      %v4968 = vshll.u32 %v4629, 16
      %v4970 = vrot.slane %v4968, 5
      %v4971 = vsel %vm1355, %v4966, %v4970
      %v4973 = vshrl.u32 %v4630, 16
      %v4975 = vrot.slane %v4973, 4
      %v4976 = vshll.u32 %v4630, 16
      %v4978 = vrot.slane %v4976, 5
      %v4979 = vor.u32 %v4975, %v4978
      %v4980 = vrot.slane %v4979, 4
      %v4982 = vshll.u32 %v4631, 16
      %v4984 = vrot.slane %v4982, 5
      %v4985 = vsel %vm1355, %v4980, %v4984
      %v4986 = vshrl.u32 %v4631, 16
      %v4988 = vrot.slane %v4986, 4
      %v4989 = vor.u32 %v4988, %v4984
      %v4990 = vrot.slane %v4989, 4
      %v4992 = vshll.u32 %v4632, 16
      %v4994 = vrot.slane %v4992, 5
      %v4995 = vsel %vm1355, %v4990, %v4994
      %v4997 = vshrl.u32 %v4633, 16
      %v4999 = vrot.slane %v4997, 4
      %v5000 = vshll.u32 %v4633, 16
      %v5002 = vrot.slane %v5000, 5
      %v5003 = vor.u32 %v4999, %v5002
      %v5004 = vrot.slane %v5003, 4
      %v5006 = vshll.u32 %v4634, 16
      %v5008 = vrot.slane %v5006, 5
      %v5009 = vsel %vm1355, %v5004, %v5008
      %v5010 = vshrl.u32 %v4634, 16
      %v5012 = vrot.slane %v5010, 4
      %v5013 = vor.u32 %v5012, %v5008
      %v5014 = vrot.slane %v5013, 4
      %v5016 = vshll.u32 %v4635, 16
      %v5018 = vrot.slane %v5016, 5
      %v5019 = vsel %vm1355, %v5014, %v5018
      %s5020 = scalar_lea.vmem %s1, 224
      %v5021 = vld [vmem:[%s5020] sm:$0xf]
      %v5022 = vld [vmem:[%s5020 + $0x4] sm:$0xf]
      %v5023 = vld [vmem:[%s5020 + $0x8] sm:$0xf]
      %v5024 = vld [vmem:[%s5020 + $0xc] sm:$0xf]
      %v5025 = vld [vmem:[%s5020 + $0x10] sm:$0xf]
      %v5026 = vld [vmem:[%s5020 + $0x14] sm:$0xf]
      %v5027 = vld [vmem:[%s5020 + $0x18] sm:$0xf]
      %v5028 = vld [vmem:[%s5020 + $0x1c] sm:$0xf]
      %v5029 = vunpack.c.l.b16 %v4649
      %v5030 = vunpack.c.l.b16 %v4659
      %v5031 = vunpack.c.l.b16 %v4673
      %v5032 = vunpack.c.l.b16 %v4683
      %v5033 = vunpack.c.l.b16 %v4697
      %v5034 = vunpack.c.l.b16 %v4707
      %v5035 = vunpack.c.l.b16 %v4721
      %v5036 = vunpack.c.l.b16 %v4731
      %v5037 = vunpack.c.l.b16 %v4745
      %v5038 = vunpack.c.l.b16 %v4755
      %v5039 = vunpack.c.l.b16 %v4769
      %v5040 = vunpack.c.l.b16 %v4779
      %v5041 = vunpack.c.l.b16 %v4793
      %v5042 = vunpack.c.l.b16 %v4803
      %v5043 = vunpack.c.l.b16 %v4817
      %v5044 = vunpack.c.l.b16 %v4827
      %v5045 = vunpack.c.l.b16 %v4841
      %v5046 = vunpack.c.l.b16 %v4851
      %v5047 = vunpack.c.l.b16 %v4865
      %v5048 = vunpack.c.l.b16 %v4875
      %v5049 = vunpack.c.l.b16 %v4889
      %v5050 = vunpack.c.l.b16 %v4899
      %v5051 = vunpack.c.l.b16 %v4913
      %v5052 = vunpack.c.l.b16 %v4923
      %v5053 = vunpack.c.l.b16 %v4937
      %v5054 = vunpack.c.l.b16 %v4947
      %v5055 = vunpack.c.l.b16 %v4961
      %v5056 = vunpack.c.l.b16 %v4971
      %v5057 = vunpack.c.l.b16 %v4985
      %v5058 = vunpack.c.l.b16 %v4995
      %v5059 = vunpack.c.l.b16 %v5009
      %v5060 = vunpack.c.l.b16 %v5019
      %v5061 = vpack.c.b16 %v5030, %v5029
      %v5062 = vpack.c.b16 %v5032, %v5031
      %v5063 = vpack.c.b16 %v5034, %v5033
      %v5064 = vpack.c.b16 %v5036, %v5035
      %v5065 = vpack.c.b16 %v5038, %v5037
      %v5066 = vpack.c.b16 %v5040, %v5039
      %v5067 = vpack.c.b16 %v5042, %v5041
      %v5068 = vpack.c.b16 %v5044, %v5043
      %v5069 = vpack.c.b16 %v5046, %v5045
      %v5070 = vpack.c.b16 %v5048, %v5047
      %v5071 = vpack.c.b16 %v5050, %v5049
      %v5072 = vpack.c.b16 %v5052, %v5051
      %v5073 = vpack.c.b16 %v5054, %v5053
      %v5074 = vpack.c.b16 %v5056, %v5055
      %v5075 = vpack.c.b16 %v5058, %v5057
      %v5076 = vpack.c.b16 %v5060, %v5059
      %v5085 = vunpack.c.l.b16 %v5021
      %v5086 = vunpack.c.l.b16 %v5022
      %v5087 = vunpack.c.l.b16 %v5023
      %v5088 = vunpack.c.l.b16 %v5024
      %v5089 = vunpack.c.l.b16 %v5025
      %v5090 = vunpack.c.l.b16 %v5026
      %v5091 = vunpack.c.l.b16 %v5027
      %v5092 = vunpack.c.l.b16 %v5028
      %v5093 = vpack.c.b16 %v5086, %v5085
      %v5094 = vpack.c.b16 %v5088, %v5087
      %v5095 = vpack.c.b16 %v5090, %v5089
      %v5096 = vpack.c.b16 %v5092, %v5091
      %v5102 = vsel %vm1063, %v5061, 0
      %v5105 = vsel %vm1063, %v5062, 0
      %v5108 = vsel %vm1063, %v5063, 0
      %v5111 = vsel %vm1063, %v5064, 0
      %v5114 = vsel %vm1063, %v5065, 0
      %v5117 = vsel %vm1063, %v5066, 0
      %v5120 = vsel %vm1063, %v5067, 0
      %v5123 = vsel %vm1063, %v5068, 0
      %v5126 = vsel %vm1063, %v5069, 0
      %v5129 = vsel %vm1063, %v5070, 0
      %v5132 = vsel %vm1063, %v5071, 0
      %v5135 = vsel %vm1063, %v5072, 0
      %v5138 = vsel %vm1063, %v5073, 0
      %v5141 = vsel %vm1063, %v5074, 0
      %v5144 = vsel %vm1063, %v5075, 0
      %v5147 = vsel %vm1063, %v5076, 0
      %5149 = vmatprep.subr.bf16.mxu0 0
      %5150 = vmatpush1.bf16.msra.mxu0 %v5093
      %5151 = vmatprep.subr.bf16.mxu0 0
      %5152 = vmatpush1.bf16.msra.mxu0 %v5094
      %5153 = vmatprep.subr.bf16.mxu0 0
      %5154 = vmatpush1.bf16.msra.mxu0 %v5095
      %5155 = vmatprep.subr.bf16.mxu0 0
      %5156 = vmatpush1.bf16.msra.mxu0 %v5096
      %5157 = vmatprep.subr.bf16.mxu0 0
      %5158 = vmatpush1.bf16.msra.mxu0 0
      %5159 = vmatprep.subr.bf16.mxu0 0
      %5160 = vmatpush1.bf16.msra.mxu0 0
      %5161 = vmatprep.subr.bf16.mxu0 0
      %5162 = vmatpush1.bf16.msra.mxu0 0
      %5163 = vmatprep.subr.bf16.mxu0 0
      %5164 = vmatpush1.bf16.msra.mxu0 0
      %5165 = vmatprep.subr.bf16.mxu0 0
      %5166 = vmatpush1.bf16.msra.mxu0 0
      %5167 = vmatprep.subr.bf16.mxu0 0
      %5168 = vmatpush1.bf16.msra.mxu0 0
      %5169 = vmatprep.subr.bf16.mxu0 0
      %5170 = vmatpush1.bf16.msra.mxu0 0
      %5171 = vmatprep.subr.bf16.mxu0 0
      %5172 = vmatpush1.bf16.msra.mxu0 0
      %5173 = vmatprep.subr.bf16.mxu0 0
      %5174 = vmatpush1.bf16.msra.mxu0 0
      %5175 = vmatprep.subr.bf16.mxu0 0
      %5176 = vmatpush1.bf16.msra.mxu0 0
      %5177 = vmatprep.subr.bf16.mxu0 0
      %5178 = vmatpush1.bf16.msra.mxu0 0
      %5179 = vmatprep.subr.bf16.mxu0 0
      %5180 = vmatpush1.bf16.msra.mxu0 0
      %5181 = vmatprep.mubr.bf16.mxu0 0
      %5182 = vmatmul.mubr.bf16.gmra.mrb[0].mxu0 %v5102
      %v5183 = vpop.f32.mrb[0].mxu0
      %v5184 = vadd.f32 0.0, %v5183
      %v5185 = vpop.f32.mrb[0].mxu0
      %v5186 = vpop.f32.mrb[0].mxu0
      %v5187 = vadd.f32 0.0, %v5186
      %v5188 = vpop.f32.mrb[0].mxu0
      %5189 = vmatprep.mubr.bf16.mxu0 0
      %5190 = vmatmul.mubr.bf16.gmra.mrb[0].mxu0 %v5105
      %v5191 = vpop.f32.mrb[0].mxu0
      %v5192 = vadd.f32 0.0, %v5191
      %v5193 = vpop.f32.mrb[0].mxu0
      %v5194 = vpop.f32.mrb[0].mxu0
      %v5195 = vadd.f32 0.0, %v5194
      %v5196 = vpop.f32.mrb[0].mxu0
      %5197 = vmatprep.mubr.bf16.mxu0 0
      %5198 = vmatmul.mubr.bf16.gmra.mrb[0].mxu0 %v5108
      %v5199 = vpop.f32.mrb[0].mxu0
      %v5200 = vadd.f32 0.0, %v5199
      %v5201 = vpop.f32.mrb[0].mxu0
      %v5202 = vpop.f32.mrb[0].mxu0
      %v5203 = vadd.f32 0.0, %v5202
      %v5204 = vpop.f32.mrb[0].mxu0
      %5205 = vmatprep.mubr.bf16.mxu0 0
      %5206 = vmatmul.mubr.bf16.gmra.mrb[0].mxu0 %v5111
      %v5207 = vpop.f32.mrb[0].mxu0
      %v5208 = vadd.f32 0.0, %v5207
      %v5209 = vpop.f32.mrb[0].mxu0
      %v5210 = vpop.f32.mrb[0].mxu0
      %v5211 = vadd.f32 0.0, %v5210
      %v5212 = vpop.f32.mrb[0].mxu0
      %5213 = vmatprep.mubr.bf16.mxu0 0
      %5214 = vmatmul.mubr.bf16.gmra.mrb[0].mxu0 %v5114
      %v5215 = vpop.f32.mrb[0].mxu0
      %v5216 = vadd.f32 0.0, %v5215
      %v5217 = vpop.f32.mrb[0].mxu0
      %v5218 = vpop.f32.mrb[0].mxu0
      %v5219 = vadd.f32 0.0, %v5218
      %v5220 = vpop.f32.mrb[0].mxu0
      %5221 = vmatprep.mubr.bf16.mxu0 0
      %5222 = vmatmul.mubr.bf16.gmra.mrb[0].mxu0 %v5117
      %v5223 = vpop.f32.mrb[0].mxu0
      %v5224 = vadd.f32 0.0, %v5223
      %v5225 = vpop.f32.mrb[0].mxu0
      %v5226 = vpop.f32.mrb[0].mxu0
      %v5227 = vadd.f32 0.0, %v5226
      %v5228 = vpop.f32.mrb[0].mxu0
      %5229 = vmatprep.mubr.bf16.mxu0 0
      %5230 = vmatmul.mubr.bf16.gmra.mrb[0].mxu0 %v5120
      %v5231 = vpop.f32.mrb[0].mxu0
      %v5232 = vadd.f32 0.0, %v5231
      %v5233 = vpop.f32.mrb[0].mxu0
      %v5234 = vpop.f32.mrb[0].mxu0
      %v5235 = vadd.f32 0.0, %v5234
      %v5236 = vpop.f32.mrb[0].mxu0
      %5237 = vmatprep.mubr.bf16.mxu0 0
      %5238 = vmatmul.mubr.bf16.gmra.mrb[0].mxu0 %v5123
      %v5239 = vpop.f32.mrb[0].mxu0
      %v5240 = vadd.f32 0.0, %v5239
      %v5241 = vpop.f32.mrb[0].mxu0
      %v5242 = vpop.f32.mrb[0].mxu0
      %v5243 = vadd.f32 0.0, %v5242
      %v5244 = vpop.f32.mrb[0].mxu0
      %5245 = vmatprep.mubr.bf16.mxu0 0
      %5246 = vmatmul.mubr.bf16.gmra.mrb[0].mxu0 %v5126
      %v5247 = vpop.f32.mrb[0].mxu0
      %v5248 = vadd.f32 0.0, %v5247
      %v5249 = vpop.f32.mrb[0].mxu0
      %v5250 = vpop.f32.mrb[0].mxu0
      %v5251 = vadd.f32 0.0, %v5250
      %v5252 = vpop.f32.mrb[0].mxu0
      %5253 = vmatprep.mubr.bf16.mxu0 0
      %5254 = vmatmul.mubr.bf16.gmra.mrb[0].mxu0 %v5129
      %v5255 = vpop.f32.mrb[0].mxu0
      %v5256 = vadd.f32 0.0, %v5255
      %v5257 = vpop.f32.mrb[0].mxu0
      %v5258 = vpop.f32.mrb[0].mxu0
      %v5259 = vadd.f32 0.0, %v5258
      %v5260 = vpop.f32.mrb[0].mxu0
      %5261 = vmatprep.mubr.bf16.mxu0 0
      %5262 = vmatmul.mubr.bf16.gmra.mrb[0].mxu0 %v5132
      %v5263 = vpop.f32.mrb[0].mxu0
      %v5264 = vadd.f32 0.0, %v5263
      %v5265 = vpop.f32.mrb[0].mxu0
      %v5266 = vpop.f32.mrb[0].mxu0
      %v5267 = vadd.f32 0.0, %v5266
      %v5268 = vpop.f32.mrb[0].mxu0
      %5269 = vmatprep.mubr.bf16.mxu0 0
      %5270 = vmatmul.mubr.bf16.gmra.mrb[0].mxu0 %v5135
      %v5271 = vpop.f32.mrb[0].mxu0
      %v5272 = vadd.f32 0.0, %v5271
      %v5273 = vpop.f32.mrb[0].mxu0
      %v5274 = vpop.f32.mrb[0].mxu0
      %v5275 = vadd.f32 0.0, %v5274
      %v5276 = vpop.f32.mrb[0].mxu0
      %5277 = vmatprep.mubr.bf16.mxu0 0
      %5278 = vmatmul.mubr.bf16.gmra.mrb[0].mxu0 %v5138
      %v5279 = vpop.f32.mrb[0].mxu0
      %v5280 = vadd.f32 0.0, %v5279
      %v5281 = vpop.f32.mrb[0].mxu0
      %v5282 = vpop.f32.mrb[0].mxu0
      %v5283 = vadd.f32 0.0, %v5282
      %v5284 = vpop.f32.mrb[0].mxu0
      %5285 = vmatprep.mubr.bf16.mxu0 0
      %5286 = vmatmul.mubr.bf16.gmra.mrb[0].mxu0 %v5141
      %v5287 = vpop.f32.mrb[0].mxu0
      %v5288 = vadd.f32 0.0, %v5287
      %v5289 = vpop.f32.mrb[0].mxu0
      %v5290 = vpop.f32.mrb[0].mxu0
      %v5291 = vadd.f32 0.0, %v5290
      %v5292 = vpop.f32.mrb[0].mxu0
      %5293 = vmatprep.mubr.bf16.mxu0 0
      %5294 = vmatmul.mubr.bf16.gmra.mrb[0].mxu0 %v5144
      %v5295 = vpop.f32.mrb[0].mxu0
      %v5296 = vadd.f32 0.0, %v5295
      %v5297 = vpop.f32.mrb[0].mxu0
      %v5298 = vpop.f32.mrb[0].mxu0
      %v5299 = vadd.f32 0.0, %v5298
      %v5300 = vpop.f32.mrb[0].mxu0
      %5301 = vmatprep.mubr.bf16.mxu0 0
      %5302 = vmatmul.mubr.bf16.gmra.mrb[0].mxu0 %v5147
      %v5303 = vpop.f32.mrb[0].mxu0
      %v5304 = vadd.f32 0.0, %v5303
      %v5305 = vpop.f32.mrb[0].mxu0
      %v5306 = vpop.f32.mrb[0].mxu0
      %v5307 = vadd.f32 0.0, %v5306
      %v5308 = vpop.f32.mrb[0].mxu0
      %5309 = vdwg.mxu0
      %v5310 = vadd.f32 %v4556, %v5184
      %v5311 = vadd.f32 %v4557, %v5187
      %v5312 = vadd.f32 %v4558, %v5192
      %v5313 = vadd.f32 %v4559, %v5195
      %v5314 = vadd.f32 %v4560, %v5200
      %v5315 = vadd.f32 %v4561, %v5203
      %v5316 = vadd.f32 %v4562, %v5208
      %v5317 = vadd.f32 %v4563, %v5211
      %v5318 = vadd.f32 %v4564, %v5216
      %v5319 = vadd.f32 %v4565, %v5219
      %v5320 = vadd.f32 %v4566, %v5224
      %v5321 = vadd.f32 %v4567, %v5227
      %v5322 = vadd.f32 %v4568, %v5232
      %v5323 = vadd.f32 %v4569, %v5235
      %v5324 = vadd.f32 %v4570, %v5240
      %v5325 = vadd.f32 %v4571, %v5243
      %v5326 = vadd.f32 %v4572, %v5248
      %v5327 = vadd.f32 %v4573, %v5251
      %v5328 = vadd.f32 %v4574, %v5256
      %v5329 = vadd.f32 %v4575, %v5259
      %v5330 = vadd.f32 %v4576, %v5264
      %v5331 = vadd.f32 %v4577, %v5267
      %v5332 = vadd.f32 %v4578, %v5272
      %v5333 = vadd.f32 %v4579, %v5275
      %v5334 = vadd.f32 %v4580, %v5280
      %v5335 = vadd.f32 %v4581, %v5283
      %v5336 = vadd.f32 %v4582, %v5288
      %v5337 = vadd.f32 %v4583, %v5291
      %v5338 = vadd.f32 %v4584, %v5296
      %v5339 = vadd.f32 %v4585, %v5299
      %v5340 = vadd.f32 %v4586, %v5304
      %v5341 = vadd.f32 %v4587, %v5307
      %v5342 = vld [vmem:[%s4201] sm:$0xe]
      %v5343 = vld [vmem:[%s4201 + $0xc] sm:$0xe]
      %v5344 = vld [vmem:[%s4201 + $0x18] sm:$0xe]
      %v5345 = vld [vmem:[%s4201 + $0x24] sm:$0xe]
      %v5346 = vld [vmem:[%s4201 + $0x30] sm:$0xe]
      %v5347 = vld [vmem:[%s4201 + $0x3c] sm:$0xe]
      %v5348 = vld [vmem:[%s4201 + $0x48] sm:$0xe]
      %v5349 = vld [vmem:[%s4201 + $0x54] sm:$0xe]
      %v5350 = vld [vmem:[%s4201 + $0x60] sm:$0xe]
      %v5351 = vld [vmem:[%s4201 + $0x6c] sm:$0xe]
      %v5352 = vld [vmem:[%s4201 + $0x78] sm:$0xe]
      %v5353 = vld [vmem:[%s4201 + $0x84] sm:$0xe]
      %v5354 = vld [vmem:[%s4201 + $0x90] sm:$0xe]
      %v5355 = vld [vmem:[%s4201 + $0x9c] sm:$0xe]
      %v5356 = vld [vmem:[%s4201 + $0xa8] sm:$0xe]
      %v5357 = vld [vmem:[%s4201 + $0xb4] sm:$0xe]
      %v5406 = vrot.slane %v5342, 5
      %v5407 = vrot.slane %v5406, 4
      %v5408 = vrot.slane %v4589, 5
      %v5409 = vsel %vm2128, %v5407, %v5408
      %v5410 = vrot.slane %v5408, 4
      %v5411 = vrot.slane %v4590, 5
      %v5412 = vsel %vm2128, %v5410, %v5411
      %v5413 = vrot.slane %v5343, 5
      %v5414 = vrot.slane %v5413, 4
      %v5415 = vrot.slane %v4592, 5
      %v5416 = vsel %vm2128, %v5414, %v5415
      %v5417 = vrot.slane %v5415, 4
      %v5418 = vrot.slane %v4593, 5
      %v5419 = vsel %vm2128, %v5417, %v5418
      %v5420 = vrot.slane %v5344, 5
      %v5421 = vrot.slane %v5420, 4
      %v5422 = vrot.slane %v4595, 5
      %v5423 = vsel %vm2128, %v5421, %v5422
      %v5424 = vrot.slane %v5422, 4
      %v5425 = vrot.slane %v4596, 5
      %v5426 = vsel %vm2128, %v5424, %v5425
      %v5427 = vrot.slane %v5345, 5
      %v5428 = vrot.slane %v5427, 4
      %v5429 = vrot.slane %v4598, 5
      %v5430 = vsel %vm2128, %v5428, %v5429
      %v5431 = vrot.slane %v5429, 4
      %v5432 = vrot.slane %v4599, 5
      %v5433 = vsel %vm2128, %v5431, %v5432
      %v5434 = vrot.slane %v5346, 5
      %v5435 = vrot.slane %v5434, 4
      %v5436 = vrot.slane %v4601, 5
      %v5437 = vsel %vm2128, %v5435, %v5436
      %v5438 = vrot.slane %v5436, 4
      %v5439 = vrot.slane %v4602, 5
      %v5440 = vsel %vm2128, %v5438, %v5439
      %v5441 = vrot.slane %v5347, 5
      %v5442 = vrot.slane %v5441, 4
      %v5443 = vrot.slane %v4604, 5
      %v5444 = vsel %vm2128, %v5442, %v5443
      %v5445 = vrot.slane %v5443, 4
      %v5446 = vrot.slane %v4605, 5
      %v5447 = vsel %vm2128, %v5445, %v5446
      %v5448 = vrot.slane %v5348, 5
      %v5449 = vrot.slane %v5448, 4
      %v5450 = vrot.slane %v4607, 5
      %v5451 = vsel %vm2128, %v5449, %v5450
      %v5452 = vrot.slane %v5450, 4
      %v5453 = vrot.slane %v4608, 5
      %v5454 = vsel %vm2128, %v5452, %v5453
      %v5455 = vrot.slane %v5349, 5
      %v5456 = vrot.slane %v5455, 4
      %v5457 = vrot.slane %v4610, 5
      %v5458 = vsel %vm2128, %v5456, %v5457
      %v5459 = vrot.slane %v5457, 4
      %v5460 = vrot.slane %v4611, 5
      %v5461 = vsel %vm2128, %v5459, %v5460
      %v5462 = vrot.slane %v5350, 5
      %v5463 = vrot.slane %v5462, 4
      %v5464 = vrot.slane %v4613, 5
      %v5465 = vsel %vm2128, %v5463, %v5464
      %v5466 = vrot.slane %v5464, 4
      %v5467 = vrot.slane %v4614, 5
      %v5468 = vsel %vm2128, %v5466, %v5467
      %v5469 = vrot.slane %v5351, 5
      %v5470 = vrot.slane %v5469, 4
      %v5471 = vrot.slane %v4616, 5
      %v5472 = vsel %vm2128, %v5470, %v5471
      %v5473 = vrot.slane %v5471, 4
      %v5474 = vrot.slane %v4617, 5
      %v5475 = vsel %vm2128, %v5473, %v5474
      %v5476 = vrot.slane %v5352, 5
      %v5477 = vrot.slane %v5476, 4
      %v5478 = vrot.slane %v4619, 5
      %v5479 = vsel %vm2128, %v5477, %v5478
      %v5480 = vrot.slane %v5478, 4
      %v5481 = vrot.slane %v4620, 5
      %v5482 = vsel %vm2128, %v5480, %v5481
      %v5483 = vrot.slane %v5353, 5
      %v5484 = vrot.slane %v5483, 4
      %v5485 = vrot.slane %v4622, 5
      %v5486 = vsel %vm2128, %v5484, %v5485
      %v5487 = vrot.slane %v5485, 4
      %v5488 = vrot.slane %v4623, 5
      %v5489 = vsel %vm2128, %v5487, %v5488
      %v5490 = vrot.slane %v5354, 5
      %v5491 = vrot.slane %v5490, 4
      %v5492 = vrot.slane %v4625, 5
      %v5493 = vsel %vm2128, %v5491, %v5492
      %v5494 = vrot.slane %v5492, 4
      %v5495 = vrot.slane %v4626, 5
      %v5496 = vsel %vm2128, %v5494, %v5495
      %v5497 = vrot.slane %v5355, 5
      %v5498 = vrot.slane %v5497, 4
      %v5499 = vrot.slane %v4628, 5
      %v5500 = vsel %vm2128, %v5498, %v5499
      %v5501 = vrot.slane %v5499, 4
      %v5502 = vrot.slane %v4629, 5
      %v5503 = vsel %vm2128, %v5501, %v5502
      %v5504 = vrot.slane %v5356, 5
      %v5505 = vrot.slane %v5504, 4
      %v5506 = vrot.slane %v4631, 5
      %v5507 = vsel %vm2128, %v5505, %v5506
      %v5508 = vrot.slane %v5506, 4
      %v5509 = vrot.slane %v4632, 5
      %v5510 = vsel %vm2128, %v5508, %v5509
      %v5511 = vrot.slane %v5357, 5
      %v5512 = vrot.slane %v5511, 4
      %v5513 = vrot.slane %v4634, 5
      %v5514 = vsel %vm2128, %v5512, %v5513
      %v5515 = vrot.slane %v5513, 4
      %v5516 = vrot.slane %v4635, 5
      %v5517 = vsel %vm2128, %v5515, %v5516
      %s5518 = scalar_lea.vmem %s1, 256
      %v5519 = vld [vmem:[%s5518] sm:$0xf]
      %v5520 = vld [vmem:[%s5518 + $0x4] sm:$0xf]
      %v5521 = vld [vmem:[%s5518 + $0x8] sm:$0xf]
      %v5522 = vld [vmem:[%s5518 + $0xc] sm:$0xf]
      %v5523 = vld [vmem:[%s5518 + $0x10] sm:$0xf]
      %v5524 = vld [vmem:[%s5518 + $0x14] sm:$0xf]
      %v5525 = vld [vmem:[%s5518 + $0x18] sm:$0xf]
      %v5526 = vld [vmem:[%s5518 + $0x1c] sm:$0xf]
      %v5527 = vunpack.c.l.b16 %v5409
      %v5528 = vunpack.c.l.b16 %v5412
      %v5529 = vunpack.c.l.b16 %v5416
      %v5530 = vunpack.c.l.b16 %v5419
      %v5531 = vunpack.c.l.b16 %v5423
      %v5532 = vunpack.c.l.b16 %v5426
      %v5533 = vunpack.c.l.b16 %v5430
      %v5534 = vunpack.c.l.b16 %v5433
      %v5535 = vunpack.c.l.b16 %v5437
      %v5536 = vunpack.c.l.b16 %v5440
      %v5537 = vunpack.c.l.b16 %v5444
      %v5538 = vunpack.c.l.b16 %v5447
      %v5539 = vunpack.c.l.b16 %v5451
      %v5540 = vunpack.c.l.b16 %v5454
      %v5541 = vunpack.c.l.b16 %v5458
      %v5542 = vunpack.c.l.b16 %v5461
      %v5543 = vunpack.c.l.b16 %v5465
      %v5544 = vunpack.c.l.b16 %v5468
      %v5545 = vunpack.c.l.b16 %v5472
      %v5546 = vunpack.c.l.b16 %v5475
      %v5547 = vunpack.c.l.b16 %v5479
      %v5548 = vunpack.c.l.b16 %v5482
      %v5549 = vunpack.c.l.b16 %v5486
      %v5550 = vunpack.c.l.b16 %v5489
      %v5551 = vunpack.c.l.b16 %v5493
      %v5552 = vunpack.c.l.b16 %v5496
      %v5553 = vunpack.c.l.b16 %v5500
      %v5554 = vunpack.c.l.b16 %v5503
      %v5555 = vunpack.c.l.b16 %v5507
      %v5556 = vunpack.c.l.b16 %v5510
      %v5557 = vunpack.c.l.b16 %v5514
      %v5558 = vunpack.c.l.b16 %v5517
      %v5559 = vpack.c.b16 %v5528, %v5527
      %v5560 = vpack.c.b16 %v5530, %v5529
      %v5561 = vpack.c.b16 %v5532, %v5531
      %v5562 = vpack.c.b16 %v5534, %v5533
      %v5563 = vpack.c.b16 %v5536, %v5535
      %v5564 = vpack.c.b16 %v5538, %v5537
      %v5565 = vpack.c.b16 %v5540, %v5539
      %v5566 = vpack.c.b16 %v5542, %v5541
      %v5567 = vpack.c.b16 %v5544, %v5543
      %v5568 = vpack.c.b16 %v5546, %v5545
      %v5569 = vpack.c.b16 %v5548, %v5547
      %v5570 = vpack.c.b16 %v5550, %v5549
      %v5571 = vpack.c.b16 %v5552, %v5551
      %v5572 = vpack.c.b16 %v5554, %v5553
      %v5573 = vpack.c.b16 %v5556, %v5555
      %v5574 = vpack.c.b16 %v5558, %v5557
      %v5583 = vunpack.c.l.b16 %v5519
      %v5584 = vunpack.c.l.b16 %v5520
      %v5585 = vunpack.c.l.b16 %v5521
      %v5586 = vunpack.c.l.b16 %v5522
      %v5587 = vunpack.c.l.b16 %v5523
      %v5588 = vunpack.c.l.b16 %v5524
      %v5589 = vunpack.c.l.b16 %v5525
      %v5590 = vunpack.c.l.b16 %v5526
      %v5591 = vpack.c.b16 %v5584, %v5583
      %v5592 = vpack.c.b16 %v5586, %v5585
      %v5593 = vpack.c.b16 %v5588, %v5587
      %v5594 = vpack.c.b16 %v5590, %v5589
      %v5600 = vsel %vm1063, %v5559, 0
      %v5603 = vsel %vm1063, %v5560, 0
      %v5606 = vsel %vm1063, %v5561, 0
      %v5609 = vsel %vm1063, %v5562, 0
      %v5612 = vsel %vm1063, %v5563, 0
      %v5615 = vsel %vm1063, %v5564, 0
      %v5618 = vsel %vm1063, %v5565, 0
      %v5621 = vsel %vm1063, %v5566, 0
      %v5624 = vsel %vm1063, %v5567, 0
      %v5627 = vsel %vm1063, %v5568, 0
      %v5630 = vsel %vm1063, %v5569, 0
      %v5633 = vsel %vm1063, %v5570, 0
      %v5636 = vsel %vm1063, %v5571, 0
      %v5639 = vsel %vm1063, %v5572, 0
      %v5642 = vsel %vm1063, %v5573, 0
      %v5645 = vsel %vm1063, %v5574, 0
      %5647 = vmatprep.subr.bf16.mxu0 0
      %5648 = vmatpush1.bf16.msra.mxu0 %v5591
      %5649 = vmatprep.subr.bf16.mxu0 0
      %5650 = vmatpush1.bf16.msra.mxu0 %v5592
      %5651 = vmatprep.subr.bf16.mxu0 0
      %5652 = vmatpush1.bf16.msra.mxu0 %v5593
      %5653 = vmatprep.subr.bf16.mxu0 0
      %5654 = vmatpush1.bf16.msra.mxu0 %v5594
      %5655 = vmatprep.subr.bf16.mxu0 0
      %5656 = vmatpush1.bf16.msra.mxu0 0
      %5657 = vmatprep.subr.bf16.mxu0 0
      %5658 = vmatpush1.bf16.msra.mxu0 0
      %5659 = vmatprep.subr.bf16.mxu0 0
      %5660 = vmatpush1.bf16.msra.mxu0 0
      %5661 = vmatprep.subr.bf16.mxu0 0
      %5662 = vmatpush1.bf16.msra.mxu0 0
      %5663 = vmatprep.subr.bf16.mxu0 0
      %5664 = vmatpush1.bf16.msra.mxu0 0
      %5665 = vmatprep.subr.bf16.mxu0 0
      %5666 = vmatpush1.bf16.msra.mxu0 0
      %5667 = vmatprep.subr.bf16.mxu0 0
      %5668 = vmatpush1.bf16.msra.mxu0 0
      %5669 = vmatprep.subr.bf16.mxu0 0
      %5670 = vmatpush1.bf16.msra.mxu0 0
      %5671 = vmatprep.subr.bf16.mxu0 0
      %5672 = vmatpush1.bf16.msra.mxu0 0
      %5673 = vmatprep.subr.bf16.mxu0 0
      %5674 = vmatpush1.bf16.msra.mxu0 0
      %5675 = vmatprep.subr.bf16.mxu0 0
      %5676 = vmatpush1.bf16.msra.mxu0 0
      %5677 = vmatprep.subr.bf16.mxu0 0
      %5678 = vmatpush1.bf16.msra.mxu0 0
      %5679 = vmatprep.mubr.bf16.mxu0 0
      %5680 = vmatmul.mubr.bf16.gmra.mrb[0].mxu0 %v5600
      %v5681 = vpop.f32.mrb[0].mxu0
      %v5682 = vadd.f32 0.0, %v5681
      %v5683 = vpop.f32.mrb[0].mxu0
      %v5684 = vpop.f32.mrb[0].mxu0
      %v5685 = vadd.f32 0.0, %v5684
      %v5686 = vpop.f32.mrb[0].mxu0
      %5687 = vmatprep.mubr.bf16.mxu0 0
      %5688 = vmatmul.mubr.bf16.gmra.mrb[0].mxu0 %v5603
      %v5689 = vpop.f32.mrb[0].mxu0
      %v5690 = vadd.f32 0.0, %v5689
      %v5691 = vpop.f32.mrb[0].mxu0
      %v5692 = vpop.f32.mrb[0].mxu0
      %v5693 = vadd.f32 0.0, %v5692
      %v5694 = vpop.f32.mrb[0].mxu0
      %5695 = vmatprep.mubr.bf16.mxu0 0
      %5696 = vmatmul.mubr.bf16.gmra.mrb[0].mxu0 %v5606
      %v5697 = vpop.f32.mrb[0].mxu0
      %v5698 = vadd.f32 0.0, %v5697
      %v5699 = vpop.f32.mrb[0].mxu0
      %v5700 = vpop.f32.mrb[0].mxu0
      %v5701 = vadd.f32 0.0, %v5700
      %v5702 = vpop.f32.mrb[0].mxu0
      %5703 = vmatprep.mubr.bf16.mxu0 0
      %5704 = vmatmul.mubr.bf16.gmra.mrb[0].mxu0 %v5609
      %v5705 = vpop.f32.mrb[0].mxu0
      %v5706 = vadd.f32 0.0, %v5705
      %v5707 = vpop.f32.mrb[0].mxu0
      %v5708 = vpop.f32.mrb[0].mxu0
      %v5709 = vadd.f32 0.0, %v5708
      %v5710 = vpop.f32.mrb[0].mxu0
      %5711 = vmatprep.mubr.bf16.mxu0 0
      %5712 = vmatmul.mubr.bf16.gmra.mrb[0].mxu0 %v5612
      %v5713 = vpop.f32.mrb[0].mxu0
      %v5714 = vadd.f32 0.0, %v5713
      %v5715 = vpop.f32.mrb[0].mxu0
      %v5716 = vpop.f32.mrb[0].mxu0
      %v5717 = vadd.f32 0.0, %v5716
      %v5718 = vpop.f32.mrb[0].mxu0
      %5719 = vmatprep.mubr.bf16.mxu0 0
      %5720 = vmatmul.mubr.bf16.gmra.mrb[0].mxu0 %v5615
      %v5721 = vpop.f32.mrb[0].mxu0
      %v5722 = vadd.f32 0.0, %v5721
      %v5723 = vpop.f32.mrb[0].mxu0
      %v5724 = vpop.f32.mrb[0].mxu0
      %v5725 = vadd.f32 0.0, %v5724
      %v5726 = vpop.f32.mrb[0].mxu0
      %5727 = vmatprep.mubr.bf16.mxu0 0
      %5728 = vmatmul.mubr.bf16.gmra.mrb[0].mxu0 %v5618
      %v5729 = vpop.f32.mrb[0].mxu0
      %v5730 = vadd.f32 0.0, %v5729
      %v5731 = vpop.f32.mrb[0].mxu0
      %v5732 = vpop.f32.mrb[0].mxu0
      %v5733 = vadd.f32 0.0, %v5732
      %v5734 = vpop.f32.mrb[0].mxu0
      %5735 = vmatprep.mubr.bf16.mxu0 0
      %5736 = vmatmul.mubr.bf16.gmra.mrb[0].mxu0 %v5621
      %v5737 = vpop.f32.mrb[0].mxu0
      %v5738 = vadd.f32 0.0, %v5737
      %v5739 = vpop.f32.mrb[0].mxu0
      %v5740 = vpop.f32.mrb[0].mxu0
      %v5741 = vadd.f32 0.0, %v5740
      %v5742 = vpop.f32.mrb[0].mxu0
      %5743 = vmatprep.mubr.bf16.mxu0 0
      %5744 = vmatmul.mubr.bf16.gmra.mrb[0].mxu0 %v5624
      %v5745 = vpop.f32.mrb[0].mxu0
      %v5746 = vadd.f32 0.0, %v5745
      %v5747 = vpop.f32.mrb[0].mxu0
      %v5748 = vpop.f32.mrb[0].mxu0
      %v5749 = vadd.f32 0.0, %v5748
      %v5750 = vpop.f32.mrb[0].mxu0
      %5751 = vmatprep.mubr.bf16.mxu0 0
      %5752 = vmatmul.mubr.bf16.gmra.mrb[0].mxu0 %v5627
      %v5753 = vpop.f32.mrb[0].mxu0
      %v5754 = vadd.f32 0.0, %v5753
      %v5755 = vpop.f32.mrb[0].mxu0
      %v5756 = vpop.f32.mrb[0].mxu0
      %v5757 = vadd.f32 0.0, %v5756
      %v5758 = vpop.f32.mrb[0].mxu0
      %5759 = vmatprep.mubr.bf16.mxu0 0
      %5760 = vmatmul.mubr.bf16.gmra.mrb[0].mxu0 %v5630
      %v5761 = vpop.f32.mrb[0].mxu0
      %v5762 = vadd.f32 0.0, %v5761
      %v5763 = vpop.f32.mrb[0].mxu0
      %v5764 = vpop.f32.mrb[0].mxu0
      %v5765 = vadd.f32 0.0, %v5764
      %v5766 = vpop.f32.mrb[0].mxu0
      %5767 = vmatprep.mubr.bf16.mxu0 0
      %5768 = vmatmul.mubr.bf16.gmra.mrb[0].mxu0 %v5633
      %v5769 = vpop.f32.mrb[0].mxu0
      %v5770 = vadd.f32 0.0, %v5769
      %v5771 = vpop.f32.mrb[0].mxu0
      %v5772 = vpop.f32.mrb[0].mxu0
      %v5773 = vadd.f32 0.0, %v5772
      %v5774 = vpop.f32.mrb[0].mxu0
      %5775 = vmatprep.mubr.bf16.mxu0 0
      %5776 = vmatmul.mubr.bf16.gmra.mrb[0].mxu0 %v5636
      %v5777 = vpop.f32.mrb[0].mxu0
      %v5778 = vadd.f32 0.0, %v5777
      %v5779 = vpop.f32.mrb[0].mxu0
      %v5780 = vpop.f32.mrb[0].mxu0
      %v5781 = vadd.f32 0.0, %v5780
      %v5782 = vpop.f32.mrb[0].mxu0
      %5783 = vmatprep.mubr.bf16.mxu0 0
      %5784 = vmatmul.mubr.bf16.gmra.mrb[0].mxu0 %v5639
      %v5785 = vpop.f32.mrb[0].mxu0
      %v5786 = vadd.f32 0.0, %v5785
      %v5787 = vpop.f32.mrb[0].mxu0
      %v5788 = vpop.f32.mrb[0].mxu0
      %v5789 = vadd.f32 0.0, %v5788
      %v5790 = vpop.f32.mrb[0].mxu0
      %5791 = vmatprep.mubr.bf16.mxu0 0
      %5792 = vmatmul.mubr.bf16.gmra.mrb[0].mxu0 %v5642
      %v5793 = vpop.f32.mrb[0].mxu0
      %v5794 = vadd.f32 0.0, %v5793
      %v5795 = vpop.f32.mrb[0].mxu0
      %v5796 = vpop.f32.mrb[0].mxu0
      %v5797 = vadd.f32 0.0, %v5796
      %v5798 = vpop.f32.mrb[0].mxu0
      %5799 = vmatprep.mubr.bf16.mxu0 0
      %5800 = vmatmul.mubr.bf16.gmra.mrb[0].mxu0 %v5645
      %v5801 = vpop.f32.mrb[0].mxu0
      %v5802 = vadd.f32 0.0, %v5801
      %v5803 = vpop.f32.mrb[0].mxu0
      %v5804 = vpop.f32.mrb[0].mxu0
      %v5805 = vadd.f32 0.0, %v5804
      %v5806 = vpop.f32.mrb[0].mxu0
      %5807 = vdwg.mxu0
      %v5808 = vadd.f32 %v5310, %v5682
      %v5809 = vadd.f32 %v5311, %v5685
      %v5810 = vadd.f32 %v5312, %v5690
      %v5811 = vadd.f32 %v5313, %v5693
      %v5812 = vadd.f32 %v5314, %v5698
      %v5813 = vadd.f32 %v5315, %v5701
      %v5814 = vadd.f32 %v5316, %v5706
      %v5815 = vadd.f32 %v5317, %v5709
      %v5816 = vadd.f32 %v5318, %v5714
      %v5817 = vadd.f32 %v5319, %v5717
      %v5818 = vadd.f32 %v5320, %v5722
      %v5819 = vadd.f32 %v5321, %v5725
      %v5820 = vadd.f32 %v5322, %v5730
      %v5821 = vadd.f32 %v5323, %v5733
      %v5822 = vadd.f32 %v5324, %v5738
      %v5823 = vadd.f32 %v5325, %v5741
      %v5824 = vadd.f32 %v5326, %v5746
      %v5825 = vadd.f32 %v5327, %v5749
      %v5826 = vadd.f32 %v5328, %v5754
      %v5827 = vadd.f32 %v5329, %v5757
      %v5828 = vadd.f32 %v5330, %v5762
      %v5829 = vadd.f32 %v5331, %v5765
      %v5830 = vadd.f32 %v5332, %v5770
      %v5831 = vadd.f32 %v5333, %v5773
      %v5832 = vadd.f32 %v5334, %v5778
      %v5833 = vadd.f32 %v5335, %v5781
      %v5834 = vadd.f32 %v5336, %v5786
      %v5835 = vadd.f32 %v5337, %v5789
      %v5836 = vadd.f32 %v5338, %v5794
      %v5837 = vadd.f32 %v5339, %v5797
      %v5838 = vadd.f32 %v5340, %v5802
      %v5839 = vadd.f32 %v5341, %v5805
      %v5840 = vmul.f32 %v5808, 0.2
      %v5841 = vmul.f32 %v5809, 0.2
      %v5842 = vmul.f32 %v5810, 0.2
      %v5843 = vmul.f32 %v5811, 0.2
      %v5844 = vmul.f32 %v5812, 0.2
      %v5845 = vmul.f32 %v5813, 0.2
      %v5846 = vmul.f32 %v5814, 0.2
      %v5847 = vmul.f32 %v5815, 0.2
      %v5848 = vmul.f32 %v5816, 0.2
      %v5849 = vmul.f32 %v5817, 0.2
      %v5850 = vmul.f32 %v5818, 0.2
      %v5851 = vmul.f32 %v5819, 0.2
      %v5852 = vmul.f32 %v5820, 0.2
      %v5853 = vmul.f32 %v5821, 0.2
      %v5854 = vmul.f32 %v5822, 0.2
      %v5855 = vmul.f32 %v5823, 0.2
      %v5856 = vmul.f32 %v5824, 0.2
      %v5857 = vmul.f32 %v5825, 0.2
      %v5858 = vmul.f32 %v5826, 0.2
      %v5859 = vmul.f32 %v5827, 0.2
      %v5860 = vmul.f32 %v5828, 0.2
      %v5861 = vmul.f32 %v5829, 0.2
      %v5862 = vmul.f32 %v5830, 0.2
      %v5863 = vmul.f32 %v5831, 0.2
      %v5864 = vmul.f32 %v5832, 0.2
      %v5865 = vmul.f32 %v5833, 0.2
      %v5866 = vmul.f32 %v5834, 0.2
      %v5867 = vmul.f32 %v5835, 0.2
      %v5868 = vmul.f32 %v5836, 0.2
      %v5869 = vmul.f32 %v5837, 0.2
      %v5870 = vmul.f32 %v5838, 0.2
      %v5871 = vmul.f32 %v5839, 0.2
      %v5872 = vmax.f32 %v5808, %v5840
      %v5873 = vmax.f32 %v5809, %v5841
      %v5874 = vmax.f32 %v5810, %v5842
      %v5875 = vmax.f32 %v5811, %v5843
      %v5876 = vmax.f32 %v5812, %v5844
      %v5877 = vmax.f32 %v5813, %v5845
      %v5878 = vmax.f32 %v5814, %v5846
      %v5879 = vmax.f32 %v5815, %v5847
      %v5880 = vmax.f32 %v5816, %v5848
      %v5881 = vmax.f32 %v5817, %v5849
      %v5882 = vmax.f32 %v5818, %v5850
      %v5883 = vmax.f32 %v5819, %v5851
      %v5884 = vmax.f32 %v5820, %v5852
      %v5885 = vmax.f32 %v5821, %v5853
      %v5886 = vmax.f32 %v5822, %v5854
      %v5887 = vmax.f32 %v5823, %v5855
      %v5888 = vmax.f32 %v5824, %v5856
      %v5889 = vmax.f32 %v5825, %v5857
      %v5890 = vmax.f32 %v5826, %v5858
      %v5891 = vmax.f32 %v5827, %v5859
      %v5892 = vmax.f32 %v5828, %v5860
      %v5893 = vmax.f32 %v5829, %v5861
      %v5894 = vmax.f32 %v5830, %v5862
      %v5895 = vmax.f32 %v5831, %v5863
      %v5896 = vmax.f32 %v5832, %v5864
      %v5897 = vmax.f32 %v5833, %v5865
      %v5898 = vmax.f32 %v5834, %v5866
      %v5899 = vmax.f32 %v5835, %v5867
      %v5900 = vmax.f32 %v5836, %v5868
      %v5901 = vmax.f32 %v5837, %v5869
      %v5902 = vmax.f32 %v5838, %v5870
      %v5903 = vmax.f32 %v5839, %v5871
      %v5904 = vpack.c.bf16 %v5873, %v5872
      %v5905 = vpack.c.bf16 %v5875, %v5874
      %v5906 = vpack.c.bf16 %v5877, %v5876
      %v5907 = vpack.c.bf16 %v5879, %v5878
      %v5908 = vpack.c.bf16 %v5881, %v5880
      %v5909 = vpack.c.bf16 %v5883, %v5882
      %v5910 = vpack.c.bf16 %v5885, %v5884
      %v5911 = vpack.c.bf16 %v5887, %v5886
      %v5912 = vpack.c.bf16 %v5889, %v5888
      %v5913 = vpack.c.bf16 %v5891, %v5890
      %v5914 = vpack.c.bf16 %v5893, %v5892
      %v5915 = vpack.c.bf16 %v5895, %v5894
      %v5916 = vpack.c.bf16 %v5897, %v5896
      %v5917 = vpack.c.bf16 %v5899, %v5898
      %v5918 = vpack.c.bf16 %v5901, %v5900
      %v5919 = vpack.c.bf16 %v5903, %v5902
      %v5936 = vunpack.c.l.b16 %v5904
      %v5937 = vunpack.c.h.b16 %v5904
      %v5938 = vunpack.c.l.b16 %v5905
      %v5939 = vunpack.c.h.b16 %v5905
      %v5940 = vunpack.c.l.b16 %v5906
      %v5941 = vunpack.c.h.b16 %v5906
      %v5942 = vunpack.c.l.b16 %v5907
      %v5943 = vunpack.c.h.b16 %v5907
      %v5944 = vunpack.c.l.b16 %v5908
      %v5945 = vunpack.c.h.b16 %v5908
      %v5946 = vunpack.c.l.b16 %v5909
      %v5947 = vunpack.c.h.b16 %v5909
      %v5948 = vunpack.c.l.b16 %v5910
      %v5949 = vunpack.c.h.b16 %v5910
      %v5950 = vunpack.c.l.b16 %v5911
      %v5951 = vunpack.c.h.b16 %v5911
      %v5952 = vunpack.c.l.b16 %v5912
      %v5953 = vunpack.c.h.b16 %v5912
      %v5954 = vunpack.c.l.b16 %v5913
      %v5955 = vunpack.c.h.b16 %v5913
      %v5956 = vunpack.c.l.b16 %v5914
      %v5957 = vunpack.c.h.b16 %v5914
      %v5958 = vunpack.c.l.b16 %v5915
      %v5959 = vunpack.c.h.b16 %v5915
      %v5960 = vunpack.c.l.b16 %v5916
      %v5961 = vunpack.c.h.b16 %v5916
      %v5962 = vunpack.c.l.b16 %v5917
      %v5963 = vunpack.c.h.b16 %v5917
      %v5964 = vunpack.c.l.b16 %v5918
      %v5965 = vunpack.c.h.b16 %v5918
      %v5966 = vunpack.c.l.b16 %v5919
      %v5967 = vunpack.c.h.b16 %v5919
      %v5968 = vpack.c.b16 %v5936, %v5936
      %v5969 = vpack.c.b16 %v5937, %v5937
      %v5970 = vpack.c.b16 %v5938, %v5938
      %v5971 = vpack.c.b16 %v5939, %v5939
      %v5972 = vpack.c.b16 %v5940, %v5940
      %v5973 = vpack.c.b16 %v5941, %v5941
      %v5974 = vpack.c.b16 %v5942, %v5942
      %v5975 = vpack.c.b16 %v5943, %v5943
      %v5976 = vpack.c.b16 %v5944, %v5944
      %v5977 = vpack.c.b16 %v5945, %v5945
      %v5978 = vpack.c.b16 %v5946, %v5946
      %v5979 = vpack.c.b16 %v5947, %v5947
      %v5980 = vpack.c.b16 %v5948, %v5948
      %v5981 = vpack.c.b16 %v5949, %v5949
      %v5982 = vpack.c.b16 %v5950, %v5950
      %v5983 = vpack.c.b16 %v5951, %v5951
      %v5984 = vpack.c.b16 %v5952, %v5952
      %v5985 = vpack.c.b16 %v5953, %v5953
      %v5986 = vpack.c.b16 %v5954, %v5954
      %v5987 = vpack.c.b16 %v5955, %v5955
      %v5988 = vpack.c.b16 %v5956, %v5956
      %v5989 = vpack.c.b16 %v5957, %v5957
      %v5990 = vpack.c.b16 %v5958, %v5958
      %v5991 = vpack.c.b16 %v5959, %v5959
      %v5992 = vpack.c.b16 %v5960, %v5960
      %v5993 = vpack.c.b16 %v5961, %v5961
      %v5994 = vpack.c.b16 %v5962, %v5962
      %v5995 = vpack.c.b16 %v5963, %v5963
      %v5996 = vpack.c.b16 %v5964, %v5964
      %v5997 = vpack.c.b16 %v5965, %v5965
      %v5998 = vpack.c.b16 %v5966, %v5966
      %v5999 = vpack.c.b16 %v5967, %v5967
      %v6001 = vshrl.u32 %v5968, 16
      %v6003 = vrot.slane %v6001, 7
      %v6004 = vshll.u32 %v5968, 16
      %v6006 = vor.u32 %v6003, %v6004
      %v6007 = vrot.slane %v6003, 4
      %v6009 = vshrl.u32 %v5969, 16
      %v6011 = vrot.slane %v6009, 7
      %v6012 = vshll.u32 %v5969, 16
      %v6014 = vor.u32 %v6011, %v6012
      %v6015 = vsel %vm477, %v6007, %v6014
      %v6016 = vrot.slane %v6011, 4
      %v6018 = vshrl.u32 %v5970, 16
      %v6020 = vrot.slane %v6018, 7
      %v6021 = vshll.u32 %v5970, 16
      %v6023 = vor.u32 %v6020, %v6021
      %v6024 = vrot.slane %v6020, 4
      %v6026 = vshrl.u32 %v5971, 16
      %v6028 = vrot.slane %v6026, 7
      %v6029 = vshll.u32 %v5971, 16
      %v6031 = vor.u32 %v6028, %v6029
      %v6032 = vsel %vm477, %v6024, %v6031
      %v6033 = vrot.slane %v6028, 4
      %v6035 = vshrl.u32 %v5972, 16
      %v6037 = vrot.slane %v6035, 7
      %v6038 = vshll.u32 %v5972, 16
      %v6040 = vor.u32 %v6037, %v6038
      %v6041 = vrot.slane %v6037, 4
      %v6043 = vshrl.u32 %v5973, 16
      %v6045 = vrot.slane %v6043, 7
      %v6046 = vshll.u32 %v5973, 16
      %v6048 = vor.u32 %v6045, %v6046
      %v6049 = vsel %vm477, %v6041, %v6048
      %v6050 = vrot.slane %v6045, 4
      %v6052 = vshrl.u32 %v5974, 16
      %v6054 = vrot.slane %v6052, 7
      %v6055 = vshll.u32 %v5974, 16
      %v6057 = vor.u32 %v6054, %v6055
      %v6058 = vrot.slane %v6054, 4
      %v6060 = vshrl.u32 %v5975, 16
      %v6062 = vrot.slane %v6060, 7
      %v6063 = vshll.u32 %v5975, 16
      %v6065 = vor.u32 %v6062, %v6063
      %v6066 = vsel %vm477, %v6058, %v6065
      %v6067 = vrot.slane %v6062, 4
      %v6069 = vshrl.u32 %v5976, 16
      %v6071 = vrot.slane %v6069, 7
      %v6072 = vshll.u32 %v5976, 16
      %v6074 = vor.u32 %v6071, %v6072
      %v6075 = vrot.slane %v6071, 4
      %v6077 = vshrl.u32 %v5977, 16
      %v6079 = vrot.slane %v6077, 7
      %v6080 = vshll.u32 %v5977, 16
      %v6082 = vor.u32 %v6079, %v6080
      %v6083 = vsel %vm477, %v6075, %v6082
      %v6084 = vrot.slane %v6079, 4
      %v6086 = vshrl.u32 %v5978, 16
      %v6088 = vrot.slane %v6086, 7
      %v6089 = vshll.u32 %v5978, 16
      %v6091 = vor.u32 %v6088, %v6089
      %v6092 = vrot.slane %v6088, 4
      %v6094 = vshrl.u32 %v5979, 16
      %v6096 = vrot.slane %v6094, 7
      %v6097 = vshll.u32 %v5979, 16
      %v6099 = vor.u32 %v6096, %v6097
      %v6100 = vsel %vm477, %v6092, %v6099
      %v6101 = vrot.slane %v6096, 4
      %v6103 = vshrl.u32 %v5980, 16
      %v6105 = vrot.slane %v6103, 7
      %v6106 = vshll.u32 %v5980, 16
      %v6108 = vor.u32 %v6105, %v6106
      %v6109 = vrot.slane %v6105, 4
      %v6111 = vshrl.u32 %v5981, 16
      %v6113 = vrot.slane %v6111, 7
      %v6114 = vshll.u32 %v5981, 16
      %v6116 = vor.u32 %v6113, %v6114
      %v6117 = vsel %vm477, %v6109, %v6116
      %v6118 = vrot.slane %v6113, 4
      %v6120 = vshrl.u32 %v5982, 16
      %v6122 = vrot.slane %v6120, 7
      %v6123 = vshll.u32 %v5982, 16
      %v6125 = vor.u32 %v6122, %v6123
      %v6126 = vrot.slane %v6122, 4
      %v6128 = vshrl.u32 %v5983, 16
      %v6130 = vrot.slane %v6128, 7
      %v6131 = vshll.u32 %v5983, 16
      %v6133 = vor.u32 %v6130, %v6131
      %v6134 = vsel %vm477, %v6126, %v6133
      %v6135 = vrot.slane %v6130, 4
      %v6137 = vshrl.u32 %v5984, 16
      %v6139 = vrot.slane %v6137, 7
      %v6140 = vshll.u32 %v5984, 16
      %v6142 = vor.u32 %v6139, %v6140
      %v6143 = vrot.slane %v6139, 4
      %v6145 = vshrl.u32 %v5985, 16
      %v6147 = vrot.slane %v6145, 7
      %v6148 = vshll.u32 %v5985, 16
      %v6150 = vor.u32 %v6147, %v6148
      %v6151 = vsel %vm477, %v6143, %v6150
      %v6152 = vrot.slane %v6147, 4
      %v6154 = vshrl.u32 %v5986, 16
      %v6156 = vrot.slane %v6154, 7
      %v6157 = vshll.u32 %v5986, 16
      %v6159 = vor.u32 %v6156, %v6157
      %v6160 = vrot.slane %v6156, 4
      %v6162 = vshrl.u32 %v5987, 16
      %v6164 = vrot.slane %v6162, 7
      %v6165 = vshll.u32 %v5987, 16
      %v6167 = vor.u32 %v6164, %v6165
      %v6168 = vsel %vm477, %v6160, %v6167
      %v6169 = vrot.slane %v6164, 4
      %v6171 = vshrl.u32 %v5988, 16
      %v6173 = vrot.slane %v6171, 7
      %v6174 = vshll.u32 %v5988, 16
      %v6176 = vor.u32 %v6173, %v6174
      %v6177 = vrot.slane %v6173, 4
      %v6179 = vshrl.u32 %v5989, 16
      %v6181 = vrot.slane %v6179, 7
      %v6182 = vshll.u32 %v5989, 16
      %v6184 = vor.u32 %v6181, %v6182
      %v6185 = vsel %vm477, %v6177, %v6184
      %v6186 = vrot.slane %v6181, 4
      %v6188 = vshrl.u32 %v5990, 16
      %v6190 = vrot.slane %v6188, 7
      %v6191 = vshll.u32 %v5990, 16
      %v6193 = vor.u32 %v6190, %v6191
      %v6194 = vrot.slane %v6190, 4
      %v6196 = vshrl.u32 %v5991, 16
      %v6198 = vrot.slane %v6196, 7
      %v6199 = vshll.u32 %v5991, 16
      %v6201 = vor.u32 %v6198, %v6199
      %v6202 = vsel %vm477, %v6194, %v6201
      %v6203 = vrot.slane %v6198, 4
      %v6205 = vshrl.u32 %v5992, 16
      %v6207 = vrot.slane %v6205, 7
      %v6208 = vshll.u32 %v5992, 16
      %v6210 = vor.u32 %v6207, %v6208
      %v6211 = vrot.slane %v6207, 4
      %v6213 = vshrl.u32 %v5993, 16
      %v6215 = vrot.slane %v6213, 7
      %v6216 = vshll.u32 %v5993, 16
      %v6218 = vor.u32 %v6215, %v6216
      %v6219 = vsel %vm477, %v6211, %v6218
      %v6220 = vrot.slane %v6215, 4
      %v6222 = vshrl.u32 %v5994, 16
      %v6224 = vrot.slane %v6222, 7
      %v6225 = vshll.u32 %v5994, 16
      %v6227 = vor.u32 %v6224, %v6225
      %v6228 = vrot.slane %v6224, 4
      %v6230 = vshrl.u32 %v5995, 16
      %v6232 = vrot.slane %v6230, 7
      %v6233 = vshll.u32 %v5995, 16
      %v6235 = vor.u32 %v6232, %v6233
      %v6236 = vsel %vm477, %v6228, %v6235
      %v6237 = vrot.slane %v6232, 4
      %v6239 = vshrl.u32 %v5996, 16
      %v6241 = vrot.slane %v6239, 7
      %v6242 = vshll.u32 %v5996, 16
      %v6244 = vor.u32 %v6241, %v6242
      %v6245 = vrot.slane %v6241, 4
      %v6247 = vshrl.u32 %v5997, 16
      %v6249 = vrot.slane %v6247, 7
      %v6250 = vshll.u32 %v5997, 16
      %v6252 = vor.u32 %v6249, %v6250
      %v6253 = vsel %vm477, %v6245, %v6252
      %v6254 = vrot.slane %v6249, 4
      %v6256 = vshrl.u32 %v5998, 16
      %v6258 = vrot.slane %v6256, 7
      %v6259 = vshll.u32 %v5998, 16
      %v6261 = vor.u32 %v6258, %v6259
      %v6262 = vrot.slane %v6258, 4
      %v6264 = vshrl.u32 %v5999, 16
      %v6266 = vrot.slane %v6264, 7
      %v6267 = vshll.u32 %v5999, 16
      %v6269 = vor.u32 %v6266, %v6267
      %v6270 = vsel %vm477, %v6262, %v6269
      %v6271 = vrot.slane %v6266, 4
      %vm6320 = vcmask 1043456
      %vm6321 = vmand %vm6320, %vm287
      %v6322 = vld [vmem:[%s344] sm:$0xf]
      %v6323 = vsel %vm6321, %v6006, %v6322
      %6324 = vst [vmem:[%s344] sm:$0xf] %v6323
      %6325 = vst [vmem:[%s344 + $0x4] sm:$0xf] %v6015
      %v6326 = vld [vmem:[%s344 + $0x8] sm:$0x1]
      %v6327 = vsel %vm346, %v6016, %v6326
      %6328 = vst [vmem:[%s344 + $0x8] sm:$0x1] %v6327
      %v6329 = vld [vmem:[%s344 + $0xc] sm:$0xf]
      %v6330 = vsel %vm6321, %v6023, %v6329
      %6331 = vst [vmem:[%s344 + $0xc] sm:$0xf] %v6330
      %6332 = vst [vmem:[%s344 + $0x10] sm:$0xf] %v6032
      %v6333 = vld [vmem:[%s344 + $0x14] sm:$0x1]
      %v6334 = vsel %vm346, %v6033, %v6333
      %6335 = vst [vmem:[%s344 + $0x14] sm:$0x1] %v6334
      %v6336 = vld [vmem:[%s344 + $0x18] sm:$0xf]
      %v6337 = vsel %vm6321, %v6040, %v6336
      %6338 = vst [vmem:[%s344 + $0x18] sm:$0xf] %v6337
      %6339 = vst [vmem:[%s344 + $0x1c] sm:$0xf] %v6049
      %v6340 = vld [vmem:[%s344 + $0x20] sm:$0x1]
      %v6341 = vsel %vm346, %v6050, %v6340
      %6342 = vst [vmem:[%s344 + $0x20] sm:$0x1] %v6341
      %v6343 = vld [vmem:[%s344 + $0x24] sm:$0xf]
      %v6344 = vsel %vm6321, %v6057, %v6343
      %6345 = vst [vmem:[%s344 + $0x24] sm:$0xf] %v6344
      %6346 = vst [vmem:[%s344 + $0x28] sm:$0xf] %v6066
      %v6347 = vld [vmem:[%s344 + $0x2c] sm:$0x1]
      %v6348 = vsel %vm346, %v6067, %v6347
      %6349 = vst [vmem:[%s344 + $0x2c] sm:$0x1] %v6348
      %v6350 = vld [vmem:[%s344 + $0x30] sm:$0xf]
      %v6351 = vsel %vm6321, %v6074, %v6350
      %6352 = vst [vmem:[%s344 + $0x30] sm:$0xf] %v6351
      %6353 = vst [vmem:[%s344 + $0x34] sm:$0xf] %v6083
      %v6354 = vld [vmem:[%s344 + $0x38] sm:$0x1]
      %v6355 = vsel %vm346, %v6084, %v6354
      %6356 = vst [vmem:[%s344 + $0x38] sm:$0x1] %v6355
      %v6357 = vld [vmem:[%s344 + $0x3c] sm:$0xf]
      %v6358 = vsel %vm6321, %v6091, %v6357
      %6359 = vst [vmem:[%s344 + $0x3c] sm:$0xf] %v6358
      %6360 = vst [vmem:[%s344 + $0x40] sm:$0xf] %v6100
      %v6361 = vld [vmem:[%s344 + $0x44] sm:$0x1]
      %v6362 = vsel %vm346, %v6101, %v6361
      %6363 = vst [vmem:[%s344 + $0x44] sm:$0x1] %v6362
      %v6364 = vld [vmem:[%s344 + $0x48] sm:$0xf]
      %v6365 = vsel %vm6321, %v6108, %v6364
      %6366 = vst [vmem:[%s344 + $0x48] sm:$0xf] %v6365
      %6367 = vst [vmem:[%s344 + $0x4c] sm:$0xf] %v6117
      %v6368 = vld [vmem:[%s344 + $0x50] sm:$0x1]
      %v6369 = vsel %vm346, %v6118, %v6368
      %6370 = vst [vmem:[%s344 + $0x50] sm:$0x1] %v6369
      %v6371 = vld [vmem:[%s344 + $0x54] sm:$0xf]
      %v6372 = vsel %vm6321, %v6125, %v6371
      %6373 = vst [vmem:[%s344 + $0x54] sm:$0xf] %v6372
      %6374 = vst [vmem:[%s344 + $0x58] sm:$0xf] %v6134
      %v6375 = vld [vmem:[%s344 + $0x5c] sm:$0x1]
      %v6376 = vsel %vm346, %v6135, %v6375
      %6377 = vst [vmem:[%s344 + $0x5c] sm:$0x1] %v6376
      %v6378 = vld [vmem:[%s344 + $0x60] sm:$0xf]
      %v6379 = vsel %vm6321, %v6142, %v6378
      %6380 = vst [vmem:[%s344 + $0x60] sm:$0xf] %v6379
      %6381 = vst [vmem:[%s344 + $0x64] sm:$0xf] %v6151
      %v6382 = vld [vmem:[%s344 + $0x68] sm:$0x1]
      %v6383 = vsel %vm346, %v6152, %v6382
      %6384 = vst [vmem:[%s344 + $0x68] sm:$0x1] %v6383
      %v6385 = vld [vmem:[%s344 + $0x6c] sm:$0xf]
      %v6386 = vsel %vm6321, %v6159, %v6385
      %6387 = vst [vmem:[%s344 + $0x6c] sm:$0xf] %v6386
      %6388 = vst [vmem:[%s344 + $0x70] sm:$0xf] %v6168
      %v6389 = vld [vmem:[%s344 + $0x74] sm:$0x1]
      %v6390 = vsel %vm346, %v6169, %v6389
      %6391 = vst [vmem:[%s344 + $0x74] sm:$0x1] %v6390
      %v6392 = vld [vmem:[%s344 + $0x78] sm:$0xf]
      %v6393 = vsel %vm6321, %v6176, %v6392
      %6394 = vst [vmem:[%s344 + $0x78] sm:$0xf] %v6393
      %6395 = vst [vmem:[%s344 + $0x7c] sm:$0xf] %v6185
      %v6396 = vld [vmem:[%s344 + $0x80] sm:$0x1]
      %v6397 = vsel %vm346, %v6186, %v6396
      %6398 = vst [vmem:[%s344 + $0x80] sm:$0x1] %v6397
      %v6399 = vld [vmem:[%s344 + $0x84] sm:$0xf]
      %v6400 = vsel %vm6321, %v6193, %v6399
      %6401 = vst [vmem:[%s344 + $0x84] sm:$0xf] %v6400
      %6402 = vst [vmem:[%s344 + $0x88] sm:$0xf] %v6202
      %v6403 = vld [vmem:[%s344 + $0x8c] sm:$0x1]
      %v6404 = vsel %vm346, %v6203, %v6403
      %6405 = vst [vmem:[%s344 + $0x8c] sm:$0x1] %v6404
      %v6406 = vld [vmem:[%s344 + $0x90] sm:$0xf]
      %v6407 = vsel %vm6321, %v6210, %v6406
      %6408 = vst [vmem:[%s344 + $0x90] sm:$0xf] %v6407
      %6409 = vst [vmem:[%s344 + $0x94] sm:$0xf] %v6219
      %v6410 = vld [vmem:[%s344 + $0x98] sm:$0x1]
      %v6411 = vsel %vm346, %v6220, %v6410
      %6412 = vst [vmem:[%s344 + $0x98] sm:$0x1] %v6411
      %v6413 = vld [vmem:[%s344 + $0x9c] sm:$0xf]
      %v6414 = vsel %vm6321, %v6227, %v6413
      %6415 = vst [vmem:[%s344 + $0x9c] sm:$0xf] %v6414
      %6416 = vst [vmem:[%s344 + $0xa0] sm:$0xf] %v6236
      %v6417 = vld [vmem:[%s344 + $0xa4] sm:$0x1]
      %v6418 = vsel %vm346, %v6237, %v6417
      %6419 = vst [vmem:[%s344 + $0xa4] sm:$0x1] %v6418
      %v6420 = vld [vmem:[%s344 + $0xa8] sm:$0xf]
      %v6421 = vsel %vm6321, %v6244, %v6420
      %6422 = vst [vmem:[%s344 + $0xa8] sm:$0xf] %v6421
      %6423 = vst [vmem:[%s344 + $0xac] sm:$0xf] %v6253
      %v6424 = vld [vmem:[%s344 + $0xb0] sm:$0x1]
      %v6425 = vsel %vm346, %v6254, %v6424
      %6426 = vst [vmem:[%s344 + $0xb0] sm:$0x1] %v6425
      %v6427 = vld [vmem:[%s344 + $0xb4] sm:$0xf]
      %v6428 = vsel %vm6321, %v6261, %v6427
      %6429 = vst [vmem:[%s344 + $0xb4] sm:$0xf] %v6428
      %6430 = vst [vmem:[%s344 + $0xb8] sm:$0xf] %v6270
      %v6431 = vld [vmem:[%s344 + $0xbc] sm:$0x1]
      %v6432 = vsel %vm346, %v6271, %v6431
      %6433 = vst [vmem:[%s344 + $0xbc] sm:$0x1] %v6432
      %v6434 = vld [vmem:[%s4] sm:$0x1]
      %v6436 = vlaneseq
      %v6437 = vshrl.u32 %v6436, 7
      %v6438 = vsub.s32 0, %v6437
      %v6439 = vrot.slane %v6434, %v6438
      %v6441 = vld [vmem:[#allocation3] sm:$0xf]
      %v6442 = vld [vmem:[#allocation3 + $0x4] sm:$0xf]
      %v6443 = vld [vmem:[#allocation3 + $0xc] sm:$0xf]
      %v6444 = vld [vmem:[#allocation3 + $0x10] sm:$0xf]
      %v6445 = vld [vmem:[#allocation3 + $0x18] sm:$0xf]
      %v6446 = vld [vmem:[#allocation3 + $0x1c] sm:$0xf]
      %v6447 = vld [vmem:[#allocation3 + $0x24] sm:$0xf]
      %v6448 = vld [vmem:[#allocation3 + $0x28] sm:$0xf]
      %v6449 = vld [vmem:[#allocation3 + $0x30] sm:$0xf]
      %v6450 = vld [vmem:[#allocation3 + $0x34] sm:$0xf]
      %v6451 = vld [vmem:[#allocation3 + $0x3c] sm:$0xf]
      %v6452 = vld [vmem:[#allocation3 + $0x40] sm:$0xf]
      %v6453 = vld [vmem:[#allocation3 + $0x48] sm:$0xf]
      %v6454 = vld [vmem:[#allocation3 + $0x4c] sm:$0xf]
      %v6455 = vld [vmem:[#allocation3 + $0x54] sm:$0xf]
      %v6456 = vld [vmem:[#allocation3 + $0x58] sm:$0xf]
      %v6457 = vld [vmem:[#allocation3 + $0x60] sm:$0xf]
      %v6458 = vld [vmem:[#allocation3 + $0x64] sm:$0xf]
      %v6459 = vld [vmem:[#allocation3 + $0x6c] sm:$0xf]
      %v6460 = vld [vmem:[#allocation3 + $0x70] sm:$0xf]
      %v6461 = vld [vmem:[#allocation3 + $0x78] sm:$0xf]
      %v6462 = vld [vmem:[#allocation3 + $0x7c] sm:$0xf]
      %v6463 = vld [vmem:[#allocation3 + $0x84] sm:$0xf]
      %v6464 = vld [vmem:[#allocation3 + $0x88] sm:$0xf]
      %v6465 = vld [vmem:[#allocation3 + $0x90] sm:$0xf]
      %v6466 = vld [vmem:[#allocation3 + $0x94] sm:$0xf]
      %v6467 = vld [vmem:[#allocation3 + $0x9c] sm:$0xf]
      %v6468 = vld [vmem:[#allocation3 + $0xa0] sm:$0xf]
      %v6469 = vld [vmem:[#allocation3 + $0xa8] sm:$0xf]
      %v6470 = vld [vmem:[#allocation3 + $0xac] sm:$0xf]
      %v6471 = vld [vmem:[#allocation3 + $0xb4] sm:$0xf]
      %v6472 = vld [vmem:[#allocation3 + $0xb8] sm:$0xf]
      %v6473 = vld [vmem:[%s3] sm:$0xf]
      %v6474 = vld [vmem:[%s3 + $0x4] sm:$0xf]
      %v6475 = vld [vmem:[%s3 + $0x8] sm:$0xf]
      %v6476 = vld [vmem:[%s3 + $0xc] sm:$0xf]
      %v6477 = vld [vmem:[%s3 + $0x10] sm:$0xf]
      %v6478 = vld [vmem:[%s3 + $0x14] sm:$0xf]
      %v6479 = vld [vmem:[%s3 + $0x18] sm:$0xf]
      %v6480 = vld [vmem:[%s3 + $0x1c] sm:$0xf]
      %v6481 = vld [vmem:[%s3 + $0x20] sm:$0xf]
      %v6482 = vld [vmem:[%s3 + $0x24] sm:$0xf]
      %v6483 = vld [vmem:[%s3 + $0x28] sm:$0xf]
      %v6484 = vld [vmem:[%s3 + $0x2c] sm:$0xf]
      %v6485 = vld [vmem:[%s3 + $0x30] sm:$0xf]
      %v6486 = vld [vmem:[%s3 + $0x34] sm:$0xf]
      %v6487 = vld [vmem:[%s3 + $0x38] sm:$0xf]
      %v6488 = vld [vmem:[%s3 + $0x3c] sm:$0xf]
      %v6521 = vunpack.c.l.b16 %v6441
      %v6522 = vunpack.c.l.b16 %v6442
      %v6523 = vunpack.c.l.b16 %v6443
      %v6524 = vunpack.c.l.b16 %v6444
      %v6525 = vunpack.c.l.b16 %v6445
      %v6526 = vunpack.c.l.b16 %v6446
      %v6527 = vunpack.c.l.b16 %v6447
      %v6528 = vunpack.c.l.b16 %v6448
      %v6529 = vunpack.c.l.b16 %v6449
      %v6530 = vunpack.c.l.b16 %v6450
      %v6531 = vunpack.c.l.b16 %v6451
      %v6532 = vunpack.c.l.b16 %v6452
      %v6533 = vunpack.c.l.b16 %v6453
      %v6534 = vunpack.c.l.b16 %v6454
      %v6535 = vunpack.c.l.b16 %v6455
      %v6536 = vunpack.c.l.b16 %v6456
      %v6537 = vunpack.c.l.b16 %v6457
      %v6538 = vunpack.c.l.b16 %v6458
      %v6539 = vunpack.c.l.b16 %v6459
      %v6540 = vunpack.c.l.b16 %v6460
      %v6541 = vunpack.c.l.b16 %v6461
      %v6542 = vunpack.c.l.b16 %v6462
      %v6543 = vunpack.c.l.b16 %v6463
      %v6544 = vunpack.c.l.b16 %v6464
      %v6545 = vunpack.c.l.b16 %v6465
      %v6546 = vunpack.c.l.b16 %v6466
      %v6547 = vunpack.c.l.b16 %v6467
      %v6548 = vunpack.c.l.b16 %v6468
      %v6549 = vunpack.c.l.b16 %v6469
      %v6550 = vunpack.c.l.b16 %v6470
      %v6551 = vunpack.c.l.b16 %v6471
      %v6552 = vunpack.c.l.b16 %v6472
      %v6553 = vpack.c.b16 %v6522, %v6521
      %v6554 = vpack.c.b16 %v6524, %v6523
      %v6555 = vpack.c.b16 %v6526, %v6525
      %v6556 = vpack.c.b16 %v6528, %v6527
      %v6557 = vpack.c.b16 %v6530, %v6529
      %v6558 = vpack.c.b16 %v6532, %v6531
      %v6559 = vpack.c.b16 %v6534, %v6533
      %v6560 = vpack.c.b16 %v6536, %v6535
      %v6561 = vpack.c.b16 %v6538, %v6537
      %v6562 = vpack.c.b16 %v6540, %v6539
      %v6563 = vpack.c.b16 %v6542, %v6541
      %v6564 = vpack.c.b16 %v6544, %v6543
      %v6565 = vpack.c.b16 %v6546, %v6545
      %v6566 = vpack.c.b16 %v6548, %v6547
      %v6567 = vpack.c.b16 %v6550, %v6549
      %v6568 = vpack.c.b16 %v6552, %v6551
      %v6601 = vunpack.c.l.b16 %v6473
      %v6602 = vunpack.c.l.b16 %v6474
      %v6603 = vunpack.c.l.b16 %v6475
      %v6604 = vunpack.c.l.b16 %v6476
      %v6605 = vunpack.c.l.b16 %v6477
      %v6606 = vunpack.c.l.b16 %v6478
      %v6607 = vunpack.c.l.b16 %v6479
      %v6608 = vunpack.c.l.b16 %v6480
      %v6609 = vunpack.c.l.b16 %v6481
      %v6610 = vunpack.c.l.b16 %v6482
      %v6611 = vunpack.c.l.b16 %v6483
      %v6612 = vunpack.c.l.b16 %v6484
      %v6613 = vunpack.c.l.b16 %v6485
      %v6614 = vunpack.c.l.b16 %v6486
      %v6615 = vunpack.c.l.b16 %v6487
      %v6616 = vunpack.c.l.b16 %v6488
      %v6617 = vpack.c.b16 %v6602, %v6601
      %v6618 = vpack.c.b16 %v6604, %v6603
      %v6619 = vpack.c.b16 %v6606, %v6605
      %v6620 = vpack.c.b16 %v6608, %v6607
      %v6621 = vpack.c.b16 %v6610, %v6609
      %v6622 = vpack.c.b16 %v6612, %v6611
      %v6623 = vpack.c.b16 %v6614, %v6613
      %v6624 = vpack.c.b16 %v6616, %v6615
      %6633 = vmatprep.subr.bf16.mxu0 0
      %6634 = vmatpush1.bf16.msra.mxu0 %v6617
      %6635 = vmatprep.subr.bf16.mxu0 0
      %6636 = vmatpush1.bf16.msra.mxu0 %v6618
      %6637 = vmatprep.subr.bf16.mxu0 0
      %6638 = vmatpush1.bf16.msra.mxu0 %v6619
      %6639 = vmatprep.subr.bf16.mxu0 0
      %6640 = vmatpush1.bf16.msra.mxu0 %v6620
      %6641 = vmatprep.subr.bf16.mxu0 0
      %6642 = vmatpush1.bf16.msra.mxu0 %v6621
      %6643 = vmatprep.subr.bf16.mxu0 0
      %6644 = vmatpush1.bf16.msra.mxu0 %v6622
      %6645 = vmatprep.subr.bf16.mxu0 0
      %6646 = vmatpush1.bf16.msra.mxu0 %v6623
      %6647 = vmatprep.subr.bf16.mxu0 0
      %6648 = vmatpush1.bf16.msra.mxu0 %v6624
      %6649 = vmatprep.subr.bf16.mxu0 0
      %6650 = vmatpush1.bf16.msra.mxu0 0
      %6651 = vmatprep.subr.bf16.mxu0 0
      %6652 = vmatpush1.bf16.msra.mxu0 0
      %6653 = vmatprep.subr.bf16.mxu0 0
      %6654 = vmatpush1.bf16.msra.mxu0 0
      %6655 = vmatprep.subr.bf16.mxu0 0
      %6656 = vmatpush1.bf16.msra.mxu0 0
      %6657 = vmatprep.subr.bf16.mxu0 0
      %6658 = vmatpush1.bf16.msra.mxu0 0
      %6659 = vmatprep.subr.bf16.mxu0 0
      %6660 = vmatpush1.bf16.msra.mxu0 0
      %6661 = vmatprep.subr.bf16.mxu0 0
      %6662 = vmatpush1.bf16.msra.mxu0 0
      %6663 = vmatprep.subr.bf16.mxu0 0
      %6664 = vmatpush1.bf16.msra.mxu0 0
      %6665 = vmatprep.mubr.bf16.mxu0 0
      %6666 = vmatmul.mubr.bf16.gmra.mrb[0].mxu0 %v6553
      %v6667 = vpop.f32.mrb[0].mxu0
      %v6668 = vadd.f32 0.0, %v6667
      %v6669 = vpop.f32.mrb[0].mxu0
      %v6670 = vpop.f32.mrb[0].mxu0
      %v6671 = vadd.f32 0.0, %v6670
      %v6672 = vpop.f32.mrb[0].mxu0
      %6673 = vmatprep.mubr.bf16.mxu0 0
      %6674 = vmatmul.mubr.bf16.gmra.mrb[0].mxu0 %v6554
      %v6675 = vpop.f32.mrb[0].mxu0
      %v6676 = vadd.f32 0.0, %v6675
      %v6677 = vpop.f32.mrb[0].mxu0
      %v6678 = vpop.f32.mrb[0].mxu0
      %v6679 = vadd.f32 0.0, %v6678
      %v6680 = vpop.f32.mrb[0].mxu0
      %6681 = vmatprep.mubr.bf16.mxu0 0
      %6682 = vmatmul.mubr.bf16.gmra.mrb[0].mxu0 %v6555
      %v6683 = vpop.f32.mrb[0].mxu0
      %v6684 = vadd.f32 0.0, %v6683
      %v6685 = vpop.f32.mrb[0].mxu0
      %v6686 = vpop.f32.mrb[0].mxu0
      %v6687 = vadd.f32 0.0, %v6686
      %v6688 = vpop.f32.mrb[0].mxu0
      %6689 = vmatprep.mubr.bf16.mxu0 0
      %6690 = vmatmul.mubr.bf16.gmra.mrb[0].mxu0 %v6556
      %v6691 = vpop.f32.mrb[0].mxu0
      %v6692 = vadd.f32 0.0, %v6691
      %v6693 = vpop.f32.mrb[0].mxu0
      %v6694 = vpop.f32.mrb[0].mxu0
      %v6695 = vadd.f32 0.0, %v6694
      %v6696 = vpop.f32.mrb[0].mxu0
      %6697 = vmatprep.mubr.bf16.mxu0 0
      %6698 = vmatmul.mubr.bf16.gmra.mrb[0].mxu0 %v6557
      %v6699 = vpop.f32.mrb[0].mxu0
      %v6700 = vadd.f32 0.0, %v6699
      %v6701 = vpop.f32.mrb[0].mxu0
      %v6702 = vpop.f32.mrb[0].mxu0
      %v6703 = vadd.f32 0.0, %v6702
      %v6704 = vpop.f32.mrb[0].mxu0
      %6705 = vmatprep.mubr.bf16.mxu0 0
      %6706 = vmatmul.mubr.bf16.gmra.mrb[0].mxu0 %v6558
      %v6707 = vpop.f32.mrb[0].mxu0
      %v6708 = vadd.f32 0.0, %v6707
      %v6709 = vpop.f32.mrb[0].mxu0
      %v6710 = vpop.f32.mrb[0].mxu0
      %v6711 = vadd.f32 0.0, %v6710
      %v6712 = vpop.f32.mrb[0].mxu0
      %6713 = vmatprep.mubr.bf16.mxu0 0
      %6714 = vmatmul.mubr.bf16.gmra.mrb[0].mxu0 %v6559
      %v6715 = vpop.f32.mrb[0].mxu0
      %v6716 = vadd.f32 0.0, %v6715
      %v6717 = vpop.f32.mrb[0].mxu0
      %v6718 = vpop.f32.mrb[0].mxu0
      %v6719 = vadd.f32 0.0, %v6718
      %v6720 = vpop.f32.mrb[0].mxu0
      %6721 = vmatprep.mubr.bf16.mxu0 0
      %6722 = vmatmul.mubr.bf16.gmra.mrb[0].mxu0 %v6560
      %v6723 = vpop.f32.mrb[0].mxu0
      %v6724 = vadd.f32 0.0, %v6723
      %v6725 = vpop.f32.mrb[0].mxu0
      %v6726 = vpop.f32.mrb[0].mxu0
      %v6727 = vadd.f32 0.0, %v6726
      %v6728 = vpop.f32.mrb[0].mxu0
      %6729 = vmatprep.mubr.bf16.mxu0 0
      %6730 = vmatmul.mubr.bf16.gmra.mrb[0].mxu0 %v6561
      %v6731 = vpop.f32.mrb[0].mxu0
      %v6732 = vadd.f32 0.0, %v6731
      %v6733 = vpop.f32.mrb[0].mxu0
      %v6734 = vpop.f32.mrb[0].mxu0
      %v6735 = vadd.f32 0.0, %v6734
      %v6736 = vpop.f32.mrb[0].mxu0
      %6737 = vmatprep.mubr.bf16.mxu0 0
      %6738 = vmatmul.mubr.bf16.gmra.mrb[0].mxu0 %v6562
      %v6739 = vpop.f32.mrb[0].mxu0
      %v6740 = vadd.f32 0.0, %v6739
      %v6741 = vpop.f32.mrb[0].mxu0
      %v6742 = vpop.f32.mrb[0].mxu0
      %v6743 = vadd.f32 0.0, %v6742
      %v6744 = vpop.f32.mrb[0].mxu0
      %6745 = vmatprep.mubr.bf16.mxu0 0
      %6746 = vmatmul.mubr.bf16.gmra.mrb[0].mxu0 %v6563
      %v6747 = vpop.f32.mrb[0].mxu0
      %v6748 = vadd.f32 0.0, %v6747
      %v6749 = vpop.f32.mrb[0].mxu0
      %v6750 = vpop.f32.mrb[0].mxu0
      %v6751 = vadd.f32 0.0, %v6750
      %v6752 = vpop.f32.mrb[0].mxu0
      %6753 = vmatprep.mubr.bf16.mxu0 0
      %6754 = vmatmul.mubr.bf16.gmra.mrb[0].mxu0 %v6564
      %v6755 = vpop.f32.mrb[0].mxu0
      %v6756 = vadd.f32 0.0, %v6755
      %v6757 = vpop.f32.mrb[0].mxu0
      %v6758 = vpop.f32.mrb[0].mxu0
      %v6759 = vadd.f32 0.0, %v6758
      %v6760 = vpop.f32.mrb[0].mxu0
      %6761 = vmatprep.mubr.bf16.mxu0 0
      %6762 = vmatmul.mubr.bf16.gmra.mrb[0].mxu0 %v6565
      %v6763 = vpop.f32.mrb[0].mxu0
      %v6764 = vadd.f32 0.0, %v6763
      %v6765 = vpop.f32.mrb[0].mxu0
      %v6766 = vpop.f32.mrb[0].mxu0
      %v6767 = vadd.f32 0.0, %v6766
      %v6768 = vpop.f32.mrb[0].mxu0
      %6769 = vmatprep.mubr.bf16.mxu0 0
      %6770 = vmatmul.mubr.bf16.gmra.mrb[0].mxu0 %v6566
      %v6771 = vpop.f32.mrb[0].mxu0
      %v6772 = vadd.f32 0.0, %v6771
      %v6773 = vpop.f32.mrb[0].mxu0
      %v6774 = vpop.f32.mrb[0].mxu0
      %v6775 = vadd.f32 0.0, %v6774
      %v6776 = vpop.f32.mrb[0].mxu0
      %6777 = vmatprep.mubr.bf16.mxu0 0
      %6778 = vmatmul.mubr.bf16.gmra.mrb[0].mxu0 %v6567
      %v6779 = vpop.f32.mrb[0].mxu0
      %v6780 = vadd.f32 0.0, %v6779
      %v6781 = vpop.f32.mrb[0].mxu0
      %v6782 = vpop.f32.mrb[0].mxu0
      %v6783 = vadd.f32 0.0, %v6782
      %v6784 = vpop.f32.mrb[0].mxu0
      %6785 = vmatprep.mubr.bf16.mxu0 0
      %6786 = vmatmul.mubr.bf16.gmra.mrb[0].mxu0 %v6568
      %v6787 = vpop.f32.mrb[0].mxu0
      %v6788 = vadd.f32 0.0, %v6787
      %v6789 = vpop.f32.mrb[0].mxu0
      %v6790 = vpop.f32.mrb[0].mxu0
      %v6791 = vadd.f32 0.0, %v6790
      %v6792 = vpop.f32.mrb[0].mxu0
      %6793 = vdwg.mxu0
      %v6794 = vadd.f32 %v6439, %v6668
      %v6795 = vadd.f32 %v6439, %v6671
      %v6796 = vadd.f32 %v6439, %v6676
      %v6797 = vadd.f32 %v6439, %v6679
      %v6798 = vadd.f32 %v6439, %v6684
      %v6799 = vadd.f32 %v6439, %v6687
      %v6800 = vadd.f32 %v6439, %v6692
      %v6801 = vadd.f32 %v6439, %v6695
      %v6802 = vadd.f32 %v6439, %v6700
      %v6803 = vadd.f32 %v6439, %v6703
      %v6804 = vadd.f32 %v6439, %v6708
      %v6805 = vadd.f32 %v6439, %v6711
      %v6806 = vadd.f32 %v6439, %v6716
      %v6807 = vadd.f32 %v6439, %v6719
      %v6808 = vadd.f32 %v6439, %v6724
      %v6809 = vadd.f32 %v6439, %v6727
      %v6810 = vadd.f32 %v6439, %v6732
      %v6811 = vadd.f32 %v6439, %v6735
      %v6812 = vadd.f32 %v6439, %v6740
      %v6813 = vadd.f32 %v6439, %v6743
      %v6814 = vadd.f32 %v6439, %v6748
      %v6815 = vadd.f32 %v6439, %v6751
      %v6816 = vadd.f32 %v6439, %v6756
      %v6817 = vadd.f32 %v6439, %v6759
      %v6818 = vadd.f32 %v6439, %v6764
      %v6819 = vadd.f32 %v6439, %v6767
      %v6820 = vadd.f32 %v6439, %v6772
      %v6821 = vadd.f32 %v6439, %v6775
      %v6822 = vadd.f32 %v6439, %v6780
      %v6823 = vadd.f32 %v6439, %v6783
      %v6824 = vadd.f32 %v6439, %v6788
      %v6825 = vadd.f32 %v6439, %v6791
      %v6826 = vld [vmem:[#allocation3] sm:$0xf]
      %v6827 = vld [vmem:[#allocation3 + $0x4] sm:$0xf]
      %v6828 = vld [vmem:[#allocation3 + $0x8] sm:$0x1]
      %v6829 = vld [vmem:[#allocation3 + $0xc] sm:$0xf]
      %v6830 = vld [vmem:[#allocation3 + $0x10] sm:$0xf]
      %v6831 = vld [vmem:[#allocation3 + $0x14] sm:$0x1]
      %v6832 = vld [vmem:[#allocation3 + $0x18] sm:$0xf]
      %v6833 = vld [vmem:[#allocation3 + $0x1c] sm:$0xf]
      %v6834 = vld [vmem:[#allocation3 + $0x20] sm:$0x1]
      %v6835 = vld [vmem:[#allocation3 + $0x24] sm:$0xf]
      %v6836 = vld [vmem:[#allocation3 + $0x28] sm:$0xf]
      %v6837 = vld [vmem:[#allocation3 + $0x2c] sm:$0x1]
      %v6838 = vld [vmem:[#allocation3 + $0x30] sm:$0xf]
      %v6839 = vld [vmem:[#allocation3 + $0x34] sm:$0xf]
      %v6840 = vld [vmem:[#allocation3 + $0x38] sm:$0x1]
      %v6841 = vld [vmem:[#allocation3 + $0x3c] sm:$0xf]
      %v6842 = vld [vmem:[#allocation3 + $0x40] sm:$0xf]
      %v6843 = vld [vmem:[#allocation3 + $0x44] sm:$0x1]
      %v6844 = vld [vmem:[#allocation3 + $0x48] sm:$0xf]
      %v6845 = vld [vmem:[#allocation3 + $0x4c] sm:$0xf]
      %v6846 = vld [vmem:[#allocation3 + $0x50] sm:$0x1]
      %v6847 = vld [vmem:[#allocation3 + $0x54] sm:$0xf]
      %v6848 = vld [vmem:[#allocation3 + $0x58] sm:$0xf]
      %v6849 = vld [vmem:[#allocation3 + $0x5c] sm:$0x1]
      %v6850 = vld [vmem:[#allocation3 + $0x60] sm:$0xf]
      %v6851 = vld [vmem:[#allocation3 + $0x64] sm:$0xf]
      %v6852 = vld [vmem:[#allocation3 + $0x68] sm:$0x1]
      %v6853 = vld [vmem:[#allocation3 + $0x6c] sm:$0xf]
      %v6854 = vld [vmem:[#allocation3 + $0x70] sm:$0xf]
      %v6855 = vld [vmem:[#allocation3 + $0x74] sm:$0x1]
      %v6856 = vld [vmem:[#allocation3 + $0x78] sm:$0xf]
      %v6857 = vld [vmem:[#allocation3 + $0x7c] sm:$0xf]
      %v6858 = vld [vmem:[#allocation3 + $0x80] sm:$0x1]
      %v6859 = vld [vmem:[#allocation3 + $0x84] sm:$0xf]
      %v6860 = vld [vmem:[#allocation3 + $0x88] sm:$0xf]
      %v6861 = vld [vmem:[#allocation3 + $0x8c] sm:$0x1]
      %v6862 = vld [vmem:[#allocation3 + $0x90] sm:$0xf]
      %v6863 = vld [vmem:[#allocation3 + $0x94] sm:$0xf]
      %v6864 = vld [vmem:[#allocation3 + $0x98] sm:$0x1]
      %v6865 = vld [vmem:[#allocation3 + $0x9c] sm:$0xf]
      %v6866 = vld [vmem:[#allocation3 + $0xa0] sm:$0xf]
      %v6867 = vld [vmem:[#allocation3 + $0xa4] sm:$0x1]
      %v6868 = vld [vmem:[#allocation3 + $0xa8] sm:$0xf]
      %v6869 = vld [vmem:[#allocation3 + $0xac] sm:$0xf]
      %v6870 = vld [vmem:[#allocation3 + $0xb0] sm:$0x1]
      %v6871 = vld [vmem:[#allocation3 + $0xb4] sm:$0xf]
      %v6872 = vld [vmem:[#allocation3 + $0xb8] sm:$0xf]
      %v6873 = vld [vmem:[#allocation3 + $0xbc] sm:$0x1]
      %v6875 = vshrl.u32 %v6826, 16
      %v6877 = vrot.slane %v6875, 4
      %v6878 = vshll.u32 %v6826, 16
      %v6880 = vrot.slane %v6878, 5
      %v6881 = vor.u32 %v6877, %v6880
      %v6882 = vrot.slane %v6881, 4
      %v6884 = vshll.u32 %v6827, 16
      %v6886 = vrot.slane %v6884, 5
      %v6887 = vsel %vm1355, %v6882, %v6886
      %v6888 = vshrl.u32 %v6827, 16
      %v6890 = vrot.slane %v6888, 4
      %v6891 = vor.u32 %v6890, %v6886
      %v6892 = vrot.slane %v6891, 4
      %v6894 = vshll.u32 %v6828, 16
      %v6896 = vrot.slane %v6894, 5
      %v6897 = vsel %vm1355, %v6892, %v6896
      %v6899 = vshrl.u32 %v6829, 16
      %v6901 = vrot.slane %v6899, 4
      %v6902 = vshll.u32 %v6829, 16
      %v6904 = vrot.slane %v6902, 5
      %v6905 = vor.u32 %v6901, %v6904
      %v6906 = vrot.slane %v6905, 4
      %v6908 = vshll.u32 %v6830, 16
      %v6910 = vrot.slane %v6908, 5
      %v6911 = vsel %vm1355, %v6906, %v6910
      %v6912 = vshrl.u32 %v6830, 16
      %v6914 = vrot.slane %v6912, 4
      %v6915 = vor.u32 %v6914, %v6910
      %v6916 = vrot.slane %v6915, 4
      %v6918 = vshll.u32 %v6831, 16
      %v6920 = vrot.slane %v6918, 5
      %v6921 = vsel %vm1355, %v6916, %v6920
      %v6923 = vshrl.u32 %v6832, 16
      %v6925 = vrot.slane %v6923, 4
      %v6926 = vshll.u32 %v6832, 16
      %v6928 = vrot.slane %v6926, 5
      %v6929 = vor.u32 %v6925, %v6928
      %v6930 = vrot.slane %v6929, 4
      %v6932 = vshll.u32 %v6833, 16
      %v6934 = vrot.slane %v6932, 5
      %v6935 = vsel %vm1355, %v6930, %v6934
      %v6936 = vshrl.u32 %v6833, 16
      %v6938 = vrot.slane %v6936, 4
      %v6939 = vor.u32 %v6938, %v6934
      %v6940 = vrot.slane %v6939, 4
      %v6942 = vshll.u32 %v6834, 16
      %v6944 = vrot.slane %v6942, 5
      %v6945 = vsel %vm1355, %v6940, %v6944
      %v6947 = vshrl.u32 %v6835, 16
      %v6949 = vrot.slane %v6947, 4
      %v6950 = vshll.u32 %v6835, 16
      %v6952 = vrot.slane %v6950, 5
      %v6953 = vor.u32 %v6949, %v6952
      %v6954 = vrot.slane %v6953, 4
      %v6956 = vshll.u32 %v6836, 16
      %v6958 = vrot.slane %v6956, 5
      %v6959 = vsel %vm1355, %v6954, %v6958
      %v6960 = vshrl.u32 %v6836, 16
      %v6962 = vrot.slane %v6960, 4
      %v6963 = vor.u32 %v6962, %v6958
      %v6964 = vrot.slane %v6963, 4
      %v6966 = vshll.u32 %v6837, 16
      %v6968 = vrot.slane %v6966, 5
      %v6969 = vsel %vm1355, %v6964, %v6968
      %v6971 = vshrl.u32 %v6838, 16
      %v6973 = vrot.slane %v6971, 4
      %v6974 = vshll.u32 %v6838, 16
      %v6976 = vrot.slane %v6974, 5
      %v6977 = vor.u32 %v6973, %v6976
      %v6978 = vrot.slane %v6977, 4
      %v6980 = vshll.u32 %v6839, 16
      %v6982 = vrot.slane %v6980, 5
      %v6983 = vsel %vm1355, %v6978, %v6982
      %v6984 = vshrl.u32 %v6839, 16
      %v6986 = vrot.slane %v6984, 4
      %v6987 = vor.u32 %v6986, %v6982
      %v6988 = vrot.slane %v6987, 4
      %v6990 = vshll.u32 %v6840, 16
      %v6992 = vrot.slane %v6990, 5
      %v6993 = vsel %vm1355, %v6988, %v6992
      %v6995 = vshrl.u32 %v6841, 16
      %v6997 = vrot.slane %v6995, 4
      %v6998 = vshll.u32 %v6841, 16
      %v7000 = vrot.slane %v6998, 5
      %v7001 = vor.u32 %v6997, %v7000
      %v7002 = vrot.slane %v7001, 4
      %v7004 = vshll.u32 %v6842, 16
      %v7006 = vrot.slane %v7004, 5
      %v7007 = vsel %vm1355, %v7002, %v7006
      %v7008 = vshrl.u32 %v6842, 16
      %v7010 = vrot.slane %v7008, 4
      %v7011 = vor.u32 %v7010, %v7006
      %v7012 = vrot.slane %v7011, 4
      %v7014 = vshll.u32 %v6843, 16
      %v7016 = vrot.slane %v7014, 5
      %v7017 = vsel %vm1355, %v7012, %v7016
      %v7019 = vshrl.u32 %v6844, 16
      %v7021 = vrot.slane %v7019, 4
      %v7022 = vshll.u32 %v6844, 16
      %v7024 = vrot.slane %v7022, 5
      %v7025 = vor.u32 %v7021, %v7024
      %v7026 = vrot.slane %v7025, 4
      %v7028 = vshll.u32 %v6845, 16
      %v7030 = vrot.slane %v7028, 5
      %v7031 = vsel %vm1355, %v7026, %v7030
      %v7032 = vshrl.u32 %v6845, 16
      %v7034 = vrot.slane %v7032, 4
      %v7035 = vor.u32 %v7034, %v7030
      %v7036 = vrot.slane %v7035, 4
      %v7038 = vshll.u32 %v6846, 16
      %v7040 = vrot.slane %v7038, 5
      %v7041 = vsel %vm1355, %v7036, %v7040
      %v7043 = vshrl.u32 %v6847, 16
      %v7045 = vrot.slane %v7043, 4
      %v7046 = vshll.u32 %v6847, 16
      %v7048 = vrot.slane %v7046, 5
      %v7049 = vor.u32 %v7045, %v7048
      %v7050 = vrot.slane %v7049, 4
      %v7052 = vshll.u32 %v6848, 16
      %v7054 = vrot.slane %v7052, 5
      %v7055 = vsel %vm1355, %v7050, %v7054
      %v7056 = vshrl.u32 %v6848, 16
      %v7058 = vrot.slane %v7056, 4
      %v7059 = vor.u32 %v7058, %v7054
      %v7060 = vrot.slane %v7059, 4
      %v7062 = vshll.u32 %v6849, 16
      %v7064 = vrot.slane %v7062, 5
      %v7065 = vsel %vm1355, %v7060, %v7064
      %v7067 = vshrl.u32 %v6850, 16
      %v7069 = vrot.slane %v7067, 4
      %v7070 = vshll.u32 %v6850, 16
      %v7072 = vrot.slane %v7070, 5
      %v7073 = vor.u32 %v7069, %v7072
      %v7074 = vrot.slane %v7073, 4
      %v7076 = vshll.u32 %v6851, 16
      %v7078 = vrot.slane %v7076, 5
      %v7079 = vsel %vm1355, %v7074, %v7078
      %v7080 = vshrl.u32 %v6851, 16
      %v7082 = vrot.slane %v7080, 4
      %v7083 = vor.u32 %v7082, %v7078
      %v7084 = vrot.slane %v7083, 4
      %v7086 = vshll.u32 %v6852, 16
      %v7088 = vrot.slane %v7086, 5
      %v7089 = vsel %vm1355, %v7084, %v7088
      %v7091 = vshrl.u32 %v6853, 16
      %v7093 = vrot.slane %v7091, 4
      %v7094 = vshll.u32 %v6853, 16
      %v7096 = vrot.slane %v7094, 5
      %v7097 = vor.u32 %v7093, %v7096
      %v7098 = vrot.slane %v7097, 4
      %v7100 = vshll.u32 %v6854, 16
      %v7102 = vrot.slane %v7100, 5
      %v7103 = vsel %vm1355, %v7098, %v7102
      %v7104 = vshrl.u32 %v6854, 16
      %v7106 = vrot.slane %v7104, 4
      %v7107 = vor.u32 %v7106, %v7102
      %v7108 = vrot.slane %v7107, 4
      %v7110 = vshll.u32 %v6855, 16
      %v7112 = vrot.slane %v7110, 5
      %v7113 = vsel %vm1355, %v7108, %v7112
      %v7115 = vshrl.u32 %v6856, 16
      %v7117 = vrot.slane %v7115, 4
      %v7118 = vshll.u32 %v6856, 16
      %v7120 = vrot.slane %v7118, 5
      %v7121 = vor.u32 %v7117, %v7120
      %v7122 = vrot.slane %v7121, 4
      %v7124 = vshll.u32 %v6857, 16
      %v7126 = vrot.slane %v7124, 5
      %v7127 = vsel %vm1355, %v7122, %v7126
      %v7128 = vshrl.u32 %v6857, 16
      %v7130 = vrot.slane %v7128, 4
      %v7131 = vor.u32 %v7130, %v7126
      %v7132 = vrot.slane %v7131, 4
      %v7134 = vshll.u32 %v6858, 16
      %v7136 = vrot.slane %v7134, 5
      %v7137 = vsel %vm1355, %v7132, %v7136
      %v7139 = vshrl.u32 %v6859, 16
      %v7141 = vrot.slane %v7139, 4
      %v7142 = vshll.u32 %v6859, 16
      %v7144 = vrot.slane %v7142, 5
      %v7145 = vor.u32 %v7141, %v7144
      %v7146 = vrot.slane %v7145, 4
      %v7148 = vshll.u32 %v6860, 16
      %v7150 = vrot.slane %v7148, 5
      %v7151 = vsel %vm1355, %v7146, %v7150
      %v7152 = vshrl.u32 %v6860, 16
      %v7154 = vrot.slane %v7152, 4
      %v7155 = vor.u32 %v7154, %v7150
      %v7156 = vrot.slane %v7155, 4
      %v7158 = vshll.u32 %v6861, 16
      %v7160 = vrot.slane %v7158, 5
      %v7161 = vsel %vm1355, %v7156, %v7160
      %v7163 = vshrl.u32 %v6862, 16
      %v7165 = vrot.slane %v7163, 4
      %v7166 = vshll.u32 %v6862, 16
      %v7168 = vrot.slane %v7166, 5
      %v7169 = vor.u32 %v7165, %v7168
      %v7170 = vrot.slane %v7169, 4
      %v7172 = vshll.u32 %v6863, 16
      %v7174 = vrot.slane %v7172, 5
      %v7175 = vsel %vm1355, %v7170, %v7174
      %v7176 = vshrl.u32 %v6863, 16
      %v7178 = vrot.slane %v7176, 4
      %v7179 = vor.u32 %v7178, %v7174
      %v7180 = vrot.slane %v7179, 4
      %v7182 = vshll.u32 %v6864, 16
      %v7184 = vrot.slane %v7182, 5
      %v7185 = vsel %vm1355, %v7180, %v7184
      %v7187 = vshrl.u32 %v6865, 16
      %v7189 = vrot.slane %v7187, 4
      %v7190 = vshll.u32 %v6865, 16
      %v7192 = vrot.slane %v7190, 5
      %v7193 = vor.u32 %v7189, %v7192
      %v7194 = vrot.slane %v7193, 4
      %v7196 = vshll.u32 %v6866, 16
      %v7198 = vrot.slane %v7196, 5
      %v7199 = vsel %vm1355, %v7194, %v7198
      %v7200 = vshrl.u32 %v6866, 16
      %v7202 = vrot.slane %v7200, 4
      %v7203 = vor.u32 %v7202, %v7198
      %v7204 = vrot.slane %v7203, 4
      %v7206 = vshll.u32 %v6867, 16
      %v7208 = vrot.slane %v7206, 5
      %v7209 = vsel %vm1355, %v7204, %v7208
      %v7211 = vshrl.u32 %v6868, 16
      %v7213 = vrot.slane %v7211, 4
      %v7214 = vshll.u32 %v6868, 16
      %v7216 = vrot.slane %v7214, 5
      %v7217 = vor.u32 %v7213, %v7216
      %v7218 = vrot.slane %v7217, 4
      %v7220 = vshll.u32 %v6869, 16
      %v7222 = vrot.slane %v7220, 5
      %v7223 = vsel %vm1355, %v7218, %v7222
      %v7224 = vshrl.u32 %v6869, 16
      %v7226 = vrot.slane %v7224, 4
      %v7227 = vor.u32 %v7226, %v7222
      %v7228 = vrot.slane %v7227, 4
      %v7230 = vshll.u32 %v6870, 16
      %v7232 = vrot.slane %v7230, 5
      %v7233 = vsel %vm1355, %v7228, %v7232
      %v7235 = vshrl.u32 %v6871, 16
      %v7237 = vrot.slane %v7235, 4
      %v7238 = vshll.u32 %v6871, 16
      %v7240 = vrot.slane %v7238, 5
      %v7241 = vor.u32 %v7237, %v7240
      %v7242 = vrot.slane %v7241, 4
      %v7244 = vshll.u32 %v6872, 16
      %v7246 = vrot.slane %v7244, 5
      %v7247 = vsel %vm1355, %v7242, %v7246
      %v7248 = vshrl.u32 %v6872, 16
      %v7250 = vrot.slane %v7248, 4
      %v7251 = vor.u32 %v7250, %v7246
      %v7252 = vrot.slane %v7251, 4
      %v7254 = vshll.u32 %v6873, 16
      %v7256 = vrot.slane %v7254, 5
      %v7257 = vsel %vm1355, %v7252, %v7256
      %s7258 = scalar_lea.vmem %s3, 64
      %v7259 = vld [vmem:[%s7258] sm:$0xf]
      %v7260 = vld [vmem:[%s7258 + $0x4] sm:$0xf]
      %v7261 = vld [vmem:[%s7258 + $0x8] sm:$0xf]
      %v7262 = vld [vmem:[%s7258 + $0xc] sm:$0xf]
      %v7263 = vld [vmem:[%s7258 + $0x10] sm:$0xf]
      %v7264 = vld [vmem:[%s7258 + $0x14] sm:$0xf]
      %v7265 = vld [vmem:[%s7258 + $0x18] sm:$0xf]
      %v7266 = vld [vmem:[%s7258 + $0x1c] sm:$0xf]
      %v7267 = vld [vmem:[%s7258 + $0x20] sm:$0xf]
      %v7268 = vld [vmem:[%s7258 + $0x24] sm:$0xf]
      %v7269 = vld [vmem:[%s7258 + $0x28] sm:$0xf]
      %v7270 = vld [vmem:[%s7258 + $0x2c] sm:$0xf]
      %v7271 = vld [vmem:[%s7258 + $0x30] sm:$0xf]
      %v7272 = vld [vmem:[%s7258 + $0x34] sm:$0xf]
      %v7273 = vld [vmem:[%s7258 + $0x38] sm:$0xf]
      %v7274 = vld [vmem:[%s7258 + $0x3c] sm:$0xf]
      %v7275 = vunpack.c.l.b16 %v6887
      %v7276 = vunpack.c.l.b16 %v6897
      %v7277 = vunpack.c.l.b16 %v6911
      %v7278 = vunpack.c.l.b16 %v6921
      %v7279 = vunpack.c.l.b16 %v6935
      %v7280 = vunpack.c.l.b16 %v6945
      %v7281 = vunpack.c.l.b16 %v6959
      %v7282 = vunpack.c.l.b16 %v6969
      %v7283 = vunpack.c.l.b16 %v6983
      %v7284 = vunpack.c.l.b16 %v6993
      %v7285 = vunpack.c.l.b16 %v7007
      %v7286 = vunpack.c.l.b16 %v7017
      %v7287 = vunpack.c.l.b16 %v7031
      %v7288 = vunpack.c.l.b16 %v7041
      %v7289 = vunpack.c.l.b16 %v7055
      %v7290 = vunpack.c.l.b16 %v7065
      %v7291 = vunpack.c.l.b16 %v7079
      %v7292 = vunpack.c.l.b16 %v7089
      %v7293 = vunpack.c.l.b16 %v7103
      %v7294 = vunpack.c.l.b16 %v7113
      %v7295 = vunpack.c.l.b16 %v7127
      %v7296 = vunpack.c.l.b16 %v7137
      %v7297 = vunpack.c.l.b16 %v7151
      %v7298 = vunpack.c.l.b16 %v7161
      %v7299 = vunpack.c.l.b16 %v7175
      %v7300 = vunpack.c.l.b16 %v7185
      %v7301 = vunpack.c.l.b16 %v7199
      %v7302 = vunpack.c.l.b16 %v7209
      %v7303 = vunpack.c.l.b16 %v7223
      %v7304 = vunpack.c.l.b16 %v7233
      %v7305 = vunpack.c.l.b16 %v7247
      %v7306 = vunpack.c.l.b16 %v7257
      %v7307 = vpack.c.b16 %v7276, %v7275
      %v7308 = vpack.c.b16 %v7278, %v7277
      %v7309 = vpack.c.b16 %v7280, %v7279
      %v7310 = vpack.c.b16 %v7282, %v7281
      %v7311 = vpack.c.b16 %v7284, %v7283
      %v7312 = vpack.c.b16 %v7286, %v7285
      %v7313 = vpack.c.b16 %v7288, %v7287
      %v7314 = vpack.c.b16 %v7290, %v7289
      %v7315 = vpack.c.b16 %v7292, %v7291
      %v7316 = vpack.c.b16 %v7294, %v7293
      %v7317 = vpack.c.b16 %v7296, %v7295
      %v7318 = vpack.c.b16 %v7298, %v7297
      %v7319 = vpack.c.b16 %v7300, %v7299
      %v7320 = vpack.c.b16 %v7302, %v7301
      %v7321 = vpack.c.b16 %v7304, %v7303
      %v7322 = vpack.c.b16 %v7306, %v7305
      %v7355 = vunpack.c.l.b16 %v7259
      %v7356 = vunpack.c.l.b16 %v7260
      %v7357 = vunpack.c.l.b16 %v7261
      %v7358 = vunpack.c.l.b16 %v7262
      %v7359 = vunpack.c.l.b16 %v7263
      %v7360 = vunpack.c.l.b16 %v7264
      %v7361 = vunpack.c.l.b16 %v7265
      %v7362 = vunpack.c.l.b16 %v7266
      %v7363 = vunpack.c.l.b16 %v7267
      %v7364 = vunpack.c.l.b16 %v7268
      %v7365 = vunpack.c.l.b16 %v7269
      %v7366 = vunpack.c.l.b16 %v7270
      %v7367 = vunpack.c.l.b16 %v7271
      %v7368 = vunpack.c.l.b16 %v7272
      %v7369 = vunpack.c.l.b16 %v7273
      %v7370 = vunpack.c.l.b16 %v7274
      %v7371 = vpack.c.b16 %v7356, %v7355
      %v7372 = vpack.c.b16 %v7358, %v7357
      %v7373 = vpack.c.b16 %v7360, %v7359
      %v7374 = vpack.c.b16 %v7362, %v7361
      %v7375 = vpack.c.b16 %v7364, %v7363
      %v7376 = vpack.c.b16 %v7366, %v7365
      %v7377 = vpack.c.b16 %v7368, %v7367
      %v7378 = vpack.c.b16 %v7370, %v7369
      %7387 = vmatprep.subr.bf16.mxu0 0
      %7388 = vmatpush1.bf16.msra.mxu0 %v7371
      %7389 = vmatprep.subr.bf16.mxu0 0
      %7390 = vmatpush1.bf16.msra.mxu0 %v7372
      %7391 = vmatprep.subr.bf16.mxu0 0
      %7392 = vmatpush1.bf16.msra.mxu0 %v7373
      %7393 = vmatprep.subr.bf16.mxu0 0
      %7394 = vmatpush1.bf16.msra.mxu0 %v7374
      %7395 = vmatprep.subr.bf16.mxu0 0
      %7396 = vmatpush1.bf16.msra.mxu0 %v7375
      %7397 = vmatprep.subr.bf16.mxu0 0
      %7398 = vmatpush1.bf16.msra.mxu0 %v7376
      %7399 = vmatprep.subr.bf16.mxu0 0
      %7400 = vmatpush1.bf16.msra.mxu0 %v7377
      %7401 = vmatprep.subr.bf16.mxu0 0
      %7402 = vmatpush1.bf16.msra.mxu0 %v7378
      %7403 = vmatprep.subr.bf16.mxu0 0
      %7404 = vmatpush1.bf16.msra.mxu0 0
      %7405 = vmatprep.subr.bf16.mxu0 0
      %7406 = vmatpush1.bf16.msra.mxu0 0
      %7407 = vmatprep.subr.bf16.mxu0 0
      %7408 = vmatpush1.bf16.msra.mxu0 0
      %7409 = vmatprep.subr.bf16.mxu0 0
      %7410 = vmatpush1.bf16.msra.mxu0 0
      %7411 = vmatprep.subr.bf16.mxu0 0
      %7412 = vmatpush1.bf16.msra.mxu0 0
      %7413 = vmatprep.subr.bf16.mxu0 0
      %7414 = vmatpush1.bf16.msra.mxu0 0
      %7415 = vmatprep.subr.bf16.mxu0 0
      %7416 = vmatpush1.bf16.msra.mxu0 0
      %7417 = vmatprep.subr.bf16.mxu0 0
      %7418 = vmatpush1.bf16.msra.mxu0 0
      %7419 = vmatprep.mubr.bf16.mxu0 0
      %7420 = vmatmul.mubr.bf16.gmra.mrb[0].mxu0 %v7307
      %v7421 = vpop.f32.mrb[0].mxu0
      %v7422 = vadd.f32 0.0, %v7421
      %v7423 = vpop.f32.mrb[0].mxu0
      %v7424 = vpop.f32.mrb[0].mxu0
      %v7425 = vadd.f32 0.0, %v7424
      %v7426 = vpop.f32.mrb[0].mxu0
      %7427 = vmatprep.mubr.bf16.mxu0 0
      %7428 = vmatmul.mubr.bf16.gmra.mrb[0].mxu0 %v7308
      %v7429 = vpop.f32.mrb[0].mxu0
      %v7430 = vadd.f32 0.0, %v7429
      %v7431 = vpop.f32.mrb[0].mxu0
      %v7432 = vpop.f32.mrb[0].mxu0
      %v7433 = vadd.f32 0.0, %v7432
      %v7434 = vpop.f32.mrb[0].mxu0
      %7435 = vmatprep.mubr.bf16.mxu0 0
      %7436 = vmatmul.mubr.bf16.gmra.mrb[0].mxu0 %v7309
      %v7437 = vpop.f32.mrb[0].mxu0
      %v7438 = vadd.f32 0.0, %v7437
      %v7439 = vpop.f32.mrb[0].mxu0
      %v7440 = vpop.f32.mrb[0].mxu0
      %v7441 = vadd.f32 0.0, %v7440
      %v7442 = vpop.f32.mrb[0].mxu0
      %7443 = vmatprep.mubr.bf16.mxu0 0
      %7444 = vmatmul.mubr.bf16.gmra.mrb[0].mxu0 %v7310
      %v7445 = vpop.f32.mrb[0].mxu0
      %v7446 = vadd.f32 0.0, %v7445
      %v7447 = vpop.f32.mrb[0].mxu0
      %v7448 = vpop.f32.mrb[0].mxu0
      %v7449 = vadd.f32 0.0, %v7448
      %v7450 = vpop.f32.mrb[0].mxu0
      %7451 = vmatprep.mubr.bf16.mxu0 0
      %7452 = vmatmul.mubr.bf16.gmra.mrb[0].mxu0 %v7311
      %v7453 = vpop.f32.mrb[0].mxu0
      %v7454 = vadd.f32 0.0, %v7453
      %v7455 = vpop.f32.mrb[0].mxu0
      %v7456 = vpop.f32.mrb[0].mxu0
      %v7457 = vadd.f32 0.0, %v7456
      %v7458 = vpop.f32.mrb[0].mxu0
      %7459 = vmatprep.mubr.bf16.mxu0 0
      %7460 = vmatmul.mubr.bf16.gmra.mrb[0].mxu0 %v7312
      %v7461 = vpop.f32.mrb[0].mxu0
      %v7462 = vadd.f32 0.0, %v7461
      %v7463 = vpop.f32.mrb[0].mxu0
      %v7464 = vpop.f32.mrb[0].mxu0
      %v7465 = vadd.f32 0.0, %v7464
      %v7466 = vpop.f32.mrb[0].mxu0
      %7467 = vmatprep.mubr.bf16.mxu0 0
      %7468 = vmatmul.mubr.bf16.gmra.mrb[0].mxu0 %v7313
      %v7469 = vpop.f32.mrb[0].mxu0
      %v7470 = vadd.f32 0.0, %v7469
      %v7471 = vpop.f32.mrb[0].mxu0
      %v7472 = vpop.f32.mrb[0].mxu0
      %v7473 = vadd.f32 0.0, %v7472
      %v7474 = vpop.f32.mrb[0].mxu0
      %7475 = vmatprep.mubr.bf16.mxu0 0
      %7476 = vmatmul.mubr.bf16.gmra.mrb[0].mxu0 %v7314
      %v7477 = vpop.f32.mrb[0].mxu0
      %v7478 = vadd.f32 0.0, %v7477
      %v7479 = vpop.f32.mrb[0].mxu0
      %v7480 = vpop.f32.mrb[0].mxu0
      %v7481 = vadd.f32 0.0, %v7480
      %v7482 = vpop.f32.mrb[0].mxu0
      %7483 = vmatprep.mubr.bf16.mxu0 0
      %7484 = vmatmul.mubr.bf16.gmra.mrb[0].mxu0 %v7315
      %v7485 = vpop.f32.mrb[0].mxu0
      %v7486 = vadd.f32 0.0, %v7485
      %v7487 = vpop.f32.mrb[0].mxu0
      %v7488 = vpop.f32.mrb[0].mxu0
      %v7489 = vadd.f32 0.0, %v7488
      %v7490 = vpop.f32.mrb[0].mxu0
      %7491 = vmatprep.mubr.bf16.mxu0 0
      %7492 = vmatmul.mubr.bf16.gmra.mrb[0].mxu0 %v7316
      %v7493 = vpop.f32.mrb[0].mxu0
      %v7494 = vadd.f32 0.0, %v7493
      %v7495 = vpop.f32.mrb[0].mxu0
      %v7496 = vpop.f32.mrb[0].mxu0
      %v7497 = vadd.f32 0.0, %v7496
      %v7498 = vpop.f32.mrb[0].mxu0
      %7499 = vmatprep.mubr.bf16.mxu0 0
      %7500 = vmatmul.mubr.bf16.gmra.mrb[0].mxu0 %v7317
      %v7501 = vpop.f32.mrb[0].mxu0
      %v7502 = vadd.f32 0.0, %v7501
      %v7503 = vpop.f32.mrb[0].mxu0
      %v7504 = vpop.f32.mrb[0].mxu0
      %v7505 = vadd.f32 0.0, %v7504
      %v7506 = vpop.f32.mrb[0].mxu0
      %7507 = vmatprep.mubr.bf16.mxu0 0
      %7508 = vmatmul.mubr.bf16.gmra.mrb[0].mxu0 %v7318
      %v7509 = vpop.f32.mrb[0].mxu0
      %v7510 = vadd.f32 0.0, %v7509
      %v7511 = vpop.f32.mrb[0].mxu0
      %v7512 = vpop.f32.mrb[0].mxu0
      %v7513 = vadd.f32 0.0, %v7512
      %v7514 = vpop.f32.mrb[0].mxu0
      %7515 = vmatprep.mubr.bf16.mxu0 0
      %7516 = vmatmul.mubr.bf16.gmra.mrb[0].mxu0 %v7319
      %v7517 = vpop.f32.mrb[0].mxu0
      %v7518 = vadd.f32 0.0, %v7517
      %v7519 = vpop.f32.mrb[0].mxu0
      %v7520 = vpop.f32.mrb[0].mxu0
      %v7521 = vadd.f32 0.0, %v7520
      %v7522 = vpop.f32.mrb[0].mxu0
      %7523 = vmatprep.mubr.bf16.mxu0 0
      %7524 = vmatmul.mubr.bf16.gmra.mrb[0].mxu0 %v7320
      %v7525 = vpop.f32.mrb[0].mxu0
      %v7526 = vadd.f32 0.0, %v7525
      %v7527 = vpop.f32.mrb[0].mxu0
      %v7528 = vpop.f32.mrb[0].mxu0
      %v7529 = vadd.f32 0.0, %v7528
      %v7530 = vpop.f32.mrb[0].mxu0
      %7531 = vmatprep.mubr.bf16.mxu0 0
      %7532 = vmatmul.mubr.bf16.gmra.mrb[0].mxu0 %v7321
      %v7533 = vpop.f32.mrb[0].mxu0
      %v7534 = vadd.f32 0.0, %v7533
      %v7535 = vpop.f32.mrb[0].mxu0
      %v7536 = vpop.f32.mrb[0].mxu0
      %v7537 = vadd.f32 0.0, %v7536
      %v7538 = vpop.f32.mrb[0].mxu0
      %7539 = vmatprep.mubr.bf16.mxu0 0
      %7540 = vmatmul.mubr.bf16.gmra.mrb[0].mxu0 %v7322
      %v7541 = vpop.f32.mrb[0].mxu0
      %v7542 = vadd.f32 0.0, %v7541
      %v7543 = vpop.f32.mrb[0].mxu0
      %v7544 = vpop.f32.mrb[0].mxu0
      %v7545 = vadd.f32 0.0, %v7544
      %v7546 = vpop.f32.mrb[0].mxu0
      %7547 = vdwg.mxu0
      %v7548 = vadd.f32 %v6794, %v7422
      %v7549 = vadd.f32 %v6795, %v7425
      %v7550 = vadd.f32 %v6796, %v7430
      %v7551 = vadd.f32 %v6797, %v7433
      %v7552 = vadd.f32 %v6798, %v7438
      %v7553 = vadd.f32 %v6799, %v7441
      %v7554 = vadd.f32 %v6800, %v7446
      %v7555 = vadd.f32 %v6801, %v7449
      %v7556 = vadd.f32 %v6802, %v7454
      %v7557 = vadd.f32 %v6803, %v7457
      %v7558 = vadd.f32 %v6804, %v7462
      %v7559 = vadd.f32 %v6805, %v7465
      %v7560 = vadd.f32 %v6806, %v7470
      %v7561 = vadd.f32 %v6807, %v7473
      %v7562 = vadd.f32 %v6808, %v7478
      %v7563 = vadd.f32 %v6809, %v7481
      %v7564 = vadd.f32 %v6810, %v7486
      %v7565 = vadd.f32 %v6811, %v7489
      %v7566 = vadd.f32 %v6812, %v7494
      %v7567 = vadd.f32 %v6813, %v7497
      %v7568 = vadd.f32 %v6814, %v7502
      %v7569 = vadd.f32 %v6815, %v7505
      %v7570 = vadd.f32 %v6816, %v7510
      %v7571 = vadd.f32 %v6817, %v7513
      %v7572 = vadd.f32 %v6818, %v7518
      %v7573 = vadd.f32 %v6819, %v7521
      %v7574 = vadd.f32 %v6820, %v7526
      %v7575 = vadd.f32 %v6821, %v7529
      %v7576 = vadd.f32 %v6822, %v7534
      %v7577 = vadd.f32 %v6823, %v7537
      %v7578 = vadd.f32 %v6824, %v7542
      %v7579 = vadd.f32 %v6825, %v7545
      %v7580 = vld [vmem:[#allocation3] sm:$0xe]
      %v7581 = vld [vmem:[#allocation3 + $0xc] sm:$0xe]
      %v7582 = vld [vmem:[#allocation3 + $0x18] sm:$0xe]
      %v7583 = vld [vmem:[#allocation3 + $0x24] sm:$0xe]
      %v7584 = vld [vmem:[#allocation3 + $0x30] sm:$0xe]
      %v7585 = vld [vmem:[#allocation3 + $0x3c] sm:$0xe]
      %v7586 = vld [vmem:[#allocation3 + $0x48] sm:$0xe]
      %v7587 = vld [vmem:[#allocation3 + $0x54] sm:$0xe]
      %v7588 = vld [vmem:[#allocation3 + $0x60] sm:$0xe]
      %v7589 = vld [vmem:[#allocation3 + $0x6c] sm:$0xe]
      %v7590 = vld [vmem:[#allocation3 + $0x78] sm:$0xe]
      %v7591 = vld [vmem:[#allocation3 + $0x84] sm:$0xe]
      %v7592 = vld [vmem:[#allocation3 + $0x90] sm:$0xe]
      %v7593 = vld [vmem:[#allocation3 + $0x9c] sm:$0xe]
      %v7594 = vld [vmem:[#allocation3 + $0xa8] sm:$0xe]
      %v7595 = vld [vmem:[#allocation3 + $0xb4] sm:$0xe]
      %v7644 = vrot.slane %v7580, 5
      %v7645 = vrot.slane %v7644, 4
      %v7646 = vrot.slane %v6827, 5
      %v7647 = vsel %vm2128, %v7645, %v7646
      %v7648 = vrot.slane %v7646, 4
      %v7649 = vrot.slane %v6828, 5
      %v7650 = vsel %vm2128, %v7648, %v7649
      %v7651 = vrot.slane %v7581, 5
      %v7652 = vrot.slane %v7651, 4
      %v7653 = vrot.slane %v6830, 5
      %v7654 = vsel %vm2128, %v7652, %v7653
      %v7655 = vrot.slane %v7653, 4
      %v7656 = vrot.slane %v6831, 5
      %v7657 = vsel %vm2128, %v7655, %v7656
      %v7658 = vrot.slane %v7582, 5
      %v7659 = vrot.slane %v7658, 4
      %v7660 = vrot.slane %v6833, 5
      %v7661 = vsel %vm2128, %v7659, %v7660
      %v7662 = vrot.slane %v7660, 4
      %v7663 = vrot.slane %v6834, 5
      %v7664 = vsel %vm2128, %v7662, %v7663
      %v7665 = vrot.slane %v7583, 5
      %v7666 = vrot.slane %v7665, 4
      %v7667 = vrot.slane %v6836, 5
      %v7668 = vsel %vm2128, %v7666, %v7667
      %v7669 = vrot.slane %v7667, 4
      %v7670 = vrot.slane %v6837, 5
      %v7671 = vsel %vm2128, %v7669, %v7670
      %v7672 = vrot.slane %v7584, 5
      %v7673 = vrot.slane %v7672, 4
      %v7674 = vrot.slane %v6839, 5
      %v7675 = vsel %vm2128, %v7673, %v7674
      %v7676 = vrot.slane %v7674, 4
      %v7677 = vrot.slane %v6840, 5
      %v7678 = vsel %vm2128, %v7676, %v7677
      %v7679 = vrot.slane %v7585, 5
      %v7680 = vrot.slane %v7679, 4
      %v7681 = vrot.slane %v6842, 5
      %v7682 = vsel %vm2128, %v7680, %v7681
      %v7683 = vrot.slane %v7681, 4
      %v7684 = vrot.slane %v6843, 5
      %v7685 = vsel %vm2128, %v7683, %v7684
      %v7686 = vrot.slane %v7586, 5
      %v7687 = vrot.slane %v7686, 4
      %v7688 = vrot.slane %v6845, 5
      %v7689 = vsel %vm2128, %v7687, %v7688
      %v7690 = vrot.slane %v7688, 4
      %v7691 = vrot.slane %v6846, 5
      %v7692 = vsel %vm2128, %v7690, %v7691
      %v7693 = vrot.slane %v7587, 5
      %v7694 = vrot.slane %v7693, 4
      %v7695 = vrot.slane %v6848, 5
      %v7696 = vsel %vm2128, %v7694, %v7695
      %v7697 = vrot.slane %v7695, 4
      %v7698 = vrot.slane %v6849, 5
      %v7699 = vsel %vm2128, %v7697, %v7698
      %v7700 = vrot.slane %v7588, 5
      %v7701 = vrot.slane %v7700, 4
      %v7702 = vrot.slane %v6851, 5
      %v7703 = vsel %vm2128, %v7701, %v7702
      %v7704 = vrot.slane %v7702, 4
      %v7705 = vrot.slane %v6852, 5
      %v7706 = vsel %vm2128, %v7704, %v7705
      %v7707 = vrot.slane %v7589, 5
      %v7708 = vrot.slane %v7707, 4
      %v7709 = vrot.slane %v6854, 5
      %v7710 = vsel %vm2128, %v7708, %v7709
      %v7711 = vrot.slane %v7709, 4
      %v7712 = vrot.slane %v6855, 5
      %v7713 = vsel %vm2128, %v7711, %v7712
      %v7714 = vrot.slane %v7590, 5
      %v7715 = vrot.slane %v7714, 4
      %v7716 = vrot.slane %v6857, 5
      %v7717 = vsel %vm2128, %v7715, %v7716
      %v7718 = vrot.slane %v7716, 4
      %v7719 = vrot.slane %v6858, 5
      %v7720 = vsel %vm2128, %v7718, %v7719
      %v7721 = vrot.slane %v7591, 5
      %v7722 = vrot.slane %v7721, 4
      %v7723 = vrot.slane %v6860, 5
      %v7724 = vsel %vm2128, %v7722, %v7723
      %v7725 = vrot.slane %v7723, 4
      %v7726 = vrot.slane %v6861, 5
      %v7727 = vsel %vm2128, %v7725, %v7726
      %v7728 = vrot.slane %v7592, 5
      %v7729 = vrot.slane %v7728, 4
      %v7730 = vrot.slane %v6863, 5
      %v7731 = vsel %vm2128, %v7729, %v7730
      %v7732 = vrot.slane %v7730, 4
      %v7733 = vrot.slane %v6864, 5
      %v7734 = vsel %vm2128, %v7732, %v7733
      %v7735 = vrot.slane %v7593, 5
      %v7736 = vrot.slane %v7735, 4
      %v7737 = vrot.slane %v6866, 5
      %v7738 = vsel %vm2128, %v7736, %v7737
      %v7739 = vrot.slane %v7737, 4
      %v7740 = vrot.slane %v6867, 5
      %v7741 = vsel %vm2128, %v7739, %v7740
      %v7742 = vrot.slane %v7594, 5
      %v7743 = vrot.slane %v7742, 4
      %v7744 = vrot.slane %v6869, 5
      %v7745 = vsel %vm2128, %v7743, %v7744
      %v7746 = vrot.slane %v7744, 4
      %v7747 = vrot.slane %v6870, 5
      %v7748 = vsel %vm2128, %v7746, %v7747
      %v7749 = vrot.slane %v7595, 5
      %v7750 = vrot.slane %v7749, 4
      %v7751 = vrot.slane %v6872, 5
      %v7752 = vsel %vm2128, %v7750, %v7751
      %v7753 = vrot.slane %v7751, 4
      %v7754 = vrot.slane %v6873, 5
      %v7755 = vsel %vm2128, %v7753, %v7754
      %s7756 = scalar_lea.vmem %s3, 128
      %v7757 = vld [vmem:[%s7756] sm:$0xf]
      %v7758 = vld [vmem:[%s7756 + $0x4] sm:$0xf]
      %v7759 = vld [vmem:[%s7756 + $0x8] sm:$0xf]
      %v7760 = vld [vmem:[%s7756 + $0xc] sm:$0xf]
      %v7761 = vld [vmem:[%s7756 + $0x10] sm:$0xf]
      %v7762 = vld [vmem:[%s7756 + $0x14] sm:$0xf]
      %v7763 = vld [vmem:[%s7756 + $0x18] sm:$0xf]
      %v7764 = vld [vmem:[%s7756 + $0x1c] sm:$0xf]
      %v7765 = vld [vmem:[%s7756 + $0x20] sm:$0xf]
      %v7766 = vld [vmem:[%s7756 + $0x24] sm:$0xf]
      %v7767 = vld [vmem:[%s7756 + $0x28] sm:$0xf]
      %v7768 = vld [vmem:[%s7756 + $0x2c] sm:$0xf]
      %v7769 = vld [vmem:[%s7756 + $0x30] sm:$0xf]
      %v7770 = vld [vmem:[%s7756 + $0x34] sm:$0xf]
      %v7771 = vld [vmem:[%s7756 + $0x38] sm:$0xf]
      %v7772 = vld [vmem:[%s7756 + $0x3c] sm:$0xf]
      %v7773 = vunpack.c.l.b16 %v7647
      %v7774 = vunpack.c.l.b16 %v7650
      %v7775 = vunpack.c.l.b16 %v7654
      %v7776 = vunpack.c.l.b16 %v7657
      %v7777 = vunpack.c.l.b16 %v7661
      %v7778 = vunpack.c.l.b16 %v7664
      %v7779 = vunpack.c.l.b16 %v7668
      %v7780 = vunpack.c.l.b16 %v7671
      %v7781 = vunpack.c.l.b16 %v7675
      %v7782 = vunpack.c.l.b16 %v7678
      %v7783 = vunpack.c.l.b16 %v7682
      %v7784 = vunpack.c.l.b16 %v7685
      %v7785 = vunpack.c.l.b16 %v7689
      %v7786 = vunpack.c.l.b16 %v7692
      %v7787 = vunpack.c.l.b16 %v7696
      %v7788 = vunpack.c.l.b16 %v7699
      %v7789 = vunpack.c.l.b16 %v7703
      %v7790 = vunpack.c.l.b16 %v7706
      %v7791 = vunpack.c.l.b16 %v7710
      %v7792 = vunpack.c.l.b16 %v7713
      %v7793 = vunpack.c.l.b16 %v7717
      %v7794 = vunpack.c.l.b16 %v7720
      %v7795 = vunpack.c.l.b16 %v7724
      %v7796 = vunpack.c.l.b16 %v7727
      %v7797 = vunpack.c.l.b16 %v7731
      %v7798 = vunpack.c.l.b16 %v7734
      %v7799 = vunpack.c.l.b16 %v7738
      %v7800 = vunpack.c.l.b16 %v7741
      %v7801 = vunpack.c.l.b16 %v7745
      %v7802 = vunpack.c.l.b16 %v7748
      %v7803 = vunpack.c.l.b16 %v7752
      %v7804 = vunpack.c.l.b16 %v7755
      %v7805 = vpack.c.b16 %v7774, %v7773
      %v7806 = vpack.c.b16 %v7776, %v7775
      %v7807 = vpack.c.b16 %v7778, %v7777
      %v7808 = vpack.c.b16 %v7780, %v7779
      %v7809 = vpack.c.b16 %v7782, %v7781
      %v7810 = vpack.c.b16 %v7784, %v7783
      %v7811 = vpack.c.b16 %v7786, %v7785
      %v7812 = vpack.c.b16 %v7788, %v7787
      %v7813 = vpack.c.b16 %v7790, %v7789
      %v7814 = vpack.c.b16 %v7792, %v7791
      %v7815 = vpack.c.b16 %v7794, %v7793
      %v7816 = vpack.c.b16 %v7796, %v7795
      %v7817 = vpack.c.b16 %v7798, %v7797
      %v7818 = vpack.c.b16 %v7800, %v7799
      %v7819 = vpack.c.b16 %v7802, %v7801
      %v7820 = vpack.c.b16 %v7804, %v7803
      %v7853 = vunpack.c.l.b16 %v7757
      %v7854 = vunpack.c.l.b16 %v7758
      %v7855 = vunpack.c.l.b16 %v7759
      %v7856 = vunpack.c.l.b16 %v7760
      %v7857 = vunpack.c.l.b16 %v7761
      %v7858 = vunpack.c.l.b16 %v7762
      %v7859 = vunpack.c.l.b16 %v7763
      %v7860 = vunpack.c.l.b16 %v7764
      %v7861 = vunpack.c.l.b16 %v7765
      %v7862 = vunpack.c.l.b16 %v7766
      %v7863 = vunpack.c.l.b16 %v7767
      %v7864 = vunpack.c.l.b16 %v7768
      %v7865 = vunpack.c.l.b16 %v7769
      %v7866 = vunpack.c.l.b16 %v7770
      %v7867 = vunpack.c.l.b16 %v7771
      %v7868 = vunpack.c.l.b16 %v7772
      %v7869 = vpack.c.b16 %v7854, %v7853
      %v7870 = vpack.c.b16 %v7856, %v7855
      %v7871 = vpack.c.b16 %v7858, %v7857
      %v7872 = vpack.c.b16 %v7860, %v7859
      %v7873 = vpack.c.b16 %v7862, %v7861
      %v7874 = vpack.c.b16 %v7864, %v7863
      %v7875 = vpack.c.b16 %v7866, %v7865
      %v7876 = vpack.c.b16 %v7868, %v7867
      %7885 = vmatprep.subr.bf16.mxu0 0
      %7886 = vmatpush1.bf16.msra.mxu0 %v7869
      %7887 = vmatprep.subr.bf16.mxu0 0
      %7888 = vmatpush1.bf16.msra.mxu0 %v7870
      %7889 = vmatprep.subr.bf16.mxu0 0
      %7890 = vmatpush1.bf16.msra.mxu0 %v7871
      %7891 = vmatprep.subr.bf16.mxu0 0
      %7892 = vmatpush1.bf16.msra.mxu0 %v7872
      %7893 = vmatprep.subr.bf16.mxu0 0
      %7894 = vmatpush1.bf16.msra.mxu0 %v7873
      %7895 = vmatprep.subr.bf16.mxu0 0
      %7896 = vmatpush1.bf16.msra.mxu0 %v7874
      %7897 = vmatprep.subr.bf16.mxu0 0
      %7898 = vmatpush1.bf16.msra.mxu0 %v7875
      %7899 = vmatprep.subr.bf16.mxu0 0
      %7900 = vmatpush1.bf16.msra.mxu0 %v7876
      %7901 = vmatprep.subr.bf16.mxu0 0
      %7902 = vmatpush1.bf16.msra.mxu0 0
      %7903 = vmatprep.subr.bf16.mxu0 0
      %7904 = vmatpush1.bf16.msra.mxu0 0
      %7905 = vmatprep.subr.bf16.mxu0 0
      %7906 = vmatpush1.bf16.msra.mxu0 0
      %7907 = vmatprep.subr.bf16.mxu0 0
      %7908 = vmatpush1.bf16.msra.mxu0 0
      %7909 = vmatprep.subr.bf16.mxu0 0
      %7910 = vmatpush1.bf16.msra.mxu0 0
      %7911 = vmatprep.subr.bf16.mxu0 0
      %7912 = vmatpush1.bf16.msra.mxu0 0
      %7913 = vmatprep.subr.bf16.mxu0 0
      %7914 = vmatpush1.bf16.msra.mxu0 0
      %7915 = vmatprep.subr.bf16.mxu0 0
      %7916 = vmatpush1.bf16.msra.mxu0 0
      %7917 = vmatprep.mubr.bf16.mxu0 0
      %7918 = vmatmul.mubr.bf16.gmra.mrb[0].mxu0 %v7805
      %v7919 = vpop.f32.mrb[0].mxu0
      %v7920 = vadd.f32 0.0, %v7919
      %v7921 = vpop.f32.mrb[0].mxu0
      %v7922 = vpop.f32.mrb[0].mxu0
      %v7923 = vadd.f32 0.0, %v7922
      %v7924 = vpop.f32.mrb[0].mxu0
      %7925 = vmatprep.mubr.bf16.mxu0 0
      %7926 = vmatmul.mubr.bf16.gmra.mrb[0].mxu0 %v7806
      %v7927 = vpop.f32.mrb[0].mxu0
      %v7928 = vadd.f32 0.0, %v7927
      %v7929 = vpop.f32.mrb[0].mxu0
      %v7930 = vpop.f32.mrb[0].mxu0
      %v7931 = vadd.f32 0.0, %v7930
      %v7932 = vpop.f32.mrb[0].mxu0
      %7933 = vmatprep.mubr.bf16.mxu0 0
      %7934 = vmatmul.mubr.bf16.gmra.mrb[0].mxu0 %v7807
      %v7935 = vpop.f32.mrb[0].mxu0
      %v7936 = vadd.f32 0.0, %v7935
      %v7937 = vpop.f32.mrb[0].mxu0
      %v7938 = vpop.f32.mrb[0].mxu0
      %v7939 = vadd.f32 0.0, %v7938
      %v7940 = vpop.f32.mrb[0].mxu0
      %7941 = vmatprep.mubr.bf16.mxu0 0
      %7942 = vmatmul.mubr.bf16.gmra.mrb[0].mxu0 %v7808
      %v7943 = vpop.f32.mrb[0].mxu0
      %v7944 = vadd.f32 0.0, %v7943
      %v7945 = vpop.f32.mrb[0].mxu0
      %v7946 = vpop.f32.mrb[0].mxu0
      %v7947 = vadd.f32 0.0, %v7946
      %v7948 = vpop.f32.mrb[0].mxu0
      %7949 = vmatprep.mubr.bf16.mxu0 0
      %7950 = vmatmul.mubr.bf16.gmra.mrb[0].mxu0 %v7809
      %v7951 = vpop.f32.mrb[0].mxu0
      %v7952 = vadd.f32 0.0, %v7951
      %v7953 = vpop.f32.mrb[0].mxu0
      %v7954 = vpop.f32.mrb[0].mxu0
      %v7955 = vadd.f32 0.0, %v7954
      %v7956 = vpop.f32.mrb[0].mxu0
      %7957 = vmatprep.mubr.bf16.mxu0 0
      %7958 = vmatmul.mubr.bf16.gmra.mrb[0].mxu0 %v7810
      %v7959 = vpop.f32.mrb[0].mxu0
      %v7960 = vadd.f32 0.0, %v7959
      %v7961 = vpop.f32.mrb[0].mxu0
      %v7962 = vpop.f32.mrb[0].mxu0
      %v7963 = vadd.f32 0.0, %v7962
      %v7964 = vpop.f32.mrb[0].mxu0
      %7965 = vmatprep.mubr.bf16.mxu0 0
      %7966 = vmatmul.mubr.bf16.gmra.mrb[0].mxu0 %v7811
      %v7967 = vpop.f32.mrb[0].mxu0
      %v7968 = vadd.f32 0.0, %v7967
      %v7969 = vpop.f32.mrb[0].mxu0
      %v7970 = vpop.f32.mrb[0].mxu0
      %v7971 = vadd.f32 0.0, %v7970
      %v7972 = vpop.f32.mrb[0].mxu0
      %7973 = vmatprep.mubr.bf16.mxu0 0
      %7974 = vmatmul.mubr.bf16.gmra.mrb[0].mxu0 %v7812
      %v7975 = vpop.f32.mrb[0].mxu0
      %v7976 = vadd.f32 0.0, %v7975
      %v7977 = vpop.f32.mrb[0].mxu0
      %v7978 = vpop.f32.mrb[0].mxu0
      %v7979 = vadd.f32 0.0, %v7978
      %v7980 = vpop.f32.mrb[0].mxu0
      %7981 = vmatprep.mubr.bf16.mxu0 0
      %7982 = vmatmul.mubr.bf16.gmra.mrb[0].mxu0 %v7813
      %v7983 = vpop.f32.mrb[0].mxu0
      %v7984 = vadd.f32 0.0, %v7983
      %v7985 = vpop.f32.mrb[0].mxu0
      %v7986 = vpop.f32.mrb[0].mxu0
      %v7987 = vadd.f32 0.0, %v7986
      %v7988 = vpop.f32.mrb[0].mxu0
      %7989 = vmatprep.mubr.bf16.mxu0 0
      %7990 = vmatmul.mubr.bf16.gmra.mrb[0].mxu0 %v7814
      %v7991 = vpop.f32.mrb[0].mxu0
      %v7992 = vadd.f32 0.0, %v7991
      %v7993 = vpop.f32.mrb[0].mxu0
      %v7994 = vpop.f32.mrb[0].mxu0
      %v7995 = vadd.f32 0.0, %v7994
      %v7996 = vpop.f32.mrb[0].mxu0
      %7997 = vmatprep.mubr.bf16.mxu0 0
      %7998 = vmatmul.mubr.bf16.gmra.mrb[0].mxu0 %v7815
      %v7999 = vpop.f32.mrb[0].mxu0
      %v8000 = vadd.f32 0.0, %v7999
      %v8001 = vpop.f32.mrb[0].mxu0
      %v8002 = vpop.f32.mrb[0].mxu0
      %v8003 = vadd.f32 0.0, %v8002
      %v8004 = vpop.f32.mrb[0].mxu0
      %8005 = vmatprep.mubr.bf16.mxu0 0
      %8006 = vmatmul.mubr.bf16.gmra.mrb[0].mxu0 %v7816
      %v8007 = vpop.f32.mrb[0].mxu0
      %v8008 = vadd.f32 0.0, %v8007
      %v8009 = vpop.f32.mrb[0].mxu0
      %v8010 = vpop.f32.mrb[0].mxu0
      %v8011 = vadd.f32 0.0, %v8010
      %v8012 = vpop.f32.mrb[0].mxu0
      %8013 = vmatprep.mubr.bf16.mxu0 0
      %8014 = vmatmul.mubr.bf16.gmra.mrb[0].mxu0 %v7817
      %v8015 = vpop.f32.mrb[0].mxu0
      %v8016 = vadd.f32 0.0, %v8015
      %v8017 = vpop.f32.mrb[0].mxu0
      %v8018 = vpop.f32.mrb[0].mxu0
      %v8019 = vadd.f32 0.0, %v8018
      %v8020 = vpop.f32.mrb[0].mxu0
      %8021 = vmatprep.mubr.bf16.mxu0 0
      %8022 = vmatmul.mubr.bf16.gmra.mrb[0].mxu0 %v7818
      %v8023 = vpop.f32.mrb[0].mxu0
      %v8024 = vadd.f32 0.0, %v8023
      %v8025 = vpop.f32.mrb[0].mxu0
      %v8026 = vpop.f32.mrb[0].mxu0
      %v8027 = vadd.f32 0.0, %v8026
      %v8028 = vpop.f32.mrb[0].mxu0
      %8029 = vmatprep.mubr.bf16.mxu0 0
      %8030 = vmatmul.mubr.bf16.gmra.mrb[0].mxu0 %v7819
      %v8031 = vpop.f32.mrb[0].mxu0
      %v8032 = vadd.f32 0.0, %v8031
      %v8033 = vpop.f32.mrb[0].mxu0
      %v8034 = vpop.f32.mrb[0].mxu0
      %v8035 = vadd.f32 0.0, %v8034
      %v8036 = vpop.f32.mrb[0].mxu0
      %8037 = vmatprep.mubr.bf16.mxu0 0
      %8038 = vmatmul.mubr.bf16.gmra.mrb[0].mxu0 %v7820
      %v8039 = vpop.f32.mrb[0].mxu0
      %v8040 = vadd.f32 0.0, %v8039
      %v8041 = vpop.f32.mrb[0].mxu0
      %v8042 = vpop.f32.mrb[0].mxu0
      %v8043 = vadd.f32 0.0, %v8042
      %v8044 = vpop.f32.mrb[0].mxu0
      %8045 = vdwg.mxu0
      %v8046 = vadd.f32 %v7548, %v7920
      %v8047 = vadd.f32 %v7549, %v7923
      %v8048 = vadd.f32 %v7550, %v7928
      %v8049 = vadd.f32 %v7551, %v7931
      %v8050 = vadd.f32 %v7552, %v7936
      %v8051 = vadd.f32 %v7553, %v7939
      %v8052 = vadd.f32 %v7554, %v7944
      %v8053 = vadd.f32 %v7555, %v7947
      %v8054 = vadd.f32 %v7556, %v7952
      %v8055 = vadd.f32 %v7557, %v7955
      %v8056 = vadd.f32 %v7558, %v7960
      %v8057 = vadd.f32 %v7559, %v7963
      %v8058 = vadd.f32 %v7560, %v7968
      %v8059 = vadd.f32 %v7561, %v7971
      %v8060 = vadd.f32 %v7562, %v7976
      %v8061 = vadd.f32 %v7563, %v7979
      %v8062 = vadd.f32 %v7564, %v7984
      %v8063 = vadd.f32 %v7565, %v7987
      %v8064 = vadd.f32 %v7566, %v7992
      %v8065 = vadd.f32 %v7567, %v7995
      %v8066 = vadd.f32 %v7568, %v8000
      %v8067 = vadd.f32 %v7569, %v8003
      %v8068 = vadd.f32 %v7570, %v8008
      %v8069 = vadd.f32 %v7571, %v8011
      %v8070 = vadd.f32 %v7572, %v8016
      %v8071 = vadd.f32 %v7573, %v8019
      %v8072 = vadd.f32 %v7574, %v8024
      %v8073 = vadd.f32 %v7575, %v8027
      %v8074 = vadd.f32 %v7576, %v8032
      %v8075 = vadd.f32 %v7577, %v8035
      %v8076 = vadd.f32 %v7578, %v8040
      %v8077 = vadd.f32 %v7579, %v8043
      %v8078 = vld [vmem:[%s344] sm:$0xf]
      %v8079 = vld [vmem:[%s344 + $0x4] sm:$0xf]
      %v8080 = vld [vmem:[%s344 + $0xc] sm:$0xf]
      %v8081 = vld [vmem:[%s344 + $0x10] sm:$0xf]
      %v8082 = vld [vmem:[%s344 + $0x18] sm:$0xf]
      %v8083 = vld [vmem:[%s344 + $0x1c] sm:$0xf]
      %v8084 = vld [vmem:[%s344 + $0x24] sm:$0xf]
      %v8085 = vld [vmem:[%s344 + $0x28] sm:$0xf]
      %v8086 = vld [vmem:[%s344 + $0x30] sm:$0xf]
      %v8087 = vld [vmem:[%s344 + $0x34] sm:$0xf]
      %v8088 = vld [vmem:[%s344 + $0x3c] sm:$0xf]
      %v8089 = vld [vmem:[%s344 + $0x40] sm:$0xf]
      %v8090 = vld [vmem:[%s344 + $0x48] sm:$0xf]
      %v8091 = vld [vmem:[%s344 + $0x4c] sm:$0xf]
      %v8092 = vld [vmem:[%s344 + $0x54] sm:$0xf]
      %v8093 = vld [vmem:[%s344 + $0x58] sm:$0xf]
      %v8094 = vld [vmem:[%s344 + $0x60] sm:$0xf]
      %v8095 = vld [vmem:[%s344 + $0x64] sm:$0xf]
      %v8096 = vld [vmem:[%s344 + $0x6c] sm:$0xf]
      %v8097 = vld [vmem:[%s344 + $0x70] sm:$0xf]
      %v8098 = vld [vmem:[%s344 + $0x78] sm:$0xf]
      %v8099 = vld [vmem:[%s344 + $0x7c] sm:$0xf]
      %v8100 = vld [vmem:[%s344 + $0x84] sm:$0xf]
      %v8101 = vld [vmem:[%s344 + $0x88] sm:$0xf]
      %v8102 = vld [vmem:[%s344 + $0x90] sm:$0xf]
      %v8103 = vld [vmem:[%s344 + $0x94] sm:$0xf]
      %v8104 = vld [vmem:[%s344 + $0x9c] sm:$0xf]
      %v8105 = vld [vmem:[%s344 + $0xa0] sm:$0xf]
      %v8106 = vld [vmem:[%s344 + $0xa8] sm:$0xf]
      %v8107 = vld [vmem:[%s344 + $0xac] sm:$0xf]
      %v8108 = vld [vmem:[%s344 + $0xb4] sm:$0xf]
      %v8109 = vld [vmem:[%s344 + $0xb8] sm:$0xf]
      %s8110 = scalar_lea.vmem %s3, 192
      %v8111 = vld [vmem:[%s8110] sm:$0xf]
      %v8112 = vld [vmem:[%s8110 + $0x4] sm:$0xf]
      %v8113 = vld [vmem:[%s8110 + $0x8] sm:$0xf]
      %v8114 = vld [vmem:[%s8110 + $0xc] sm:$0xf]
      %v8115 = vld [vmem:[%s8110 + $0x10] sm:$0xf]
      %v8116 = vld [vmem:[%s8110 + $0x14] sm:$0xf]
      %v8117 = vld [vmem:[%s8110 + $0x18] sm:$0xf]
      %v8118 = vld [vmem:[%s8110 + $0x1c] sm:$0xf]
      %v8119 = vld [vmem:[%s8110 + $0x20] sm:$0xf]
      %v8120 = vld [vmem:[%s8110 + $0x24] sm:$0xf]
      %v8121 = vld [vmem:[%s8110 + $0x28] sm:$0xf]
      %v8122 = vld [vmem:[%s8110 + $0x2c] sm:$0xf]
      %v8123 = vld [vmem:[%s8110 + $0x30] sm:$0xf]
      %v8124 = vld [vmem:[%s8110 + $0x34] sm:$0xf]
      %v8125 = vld [vmem:[%s8110 + $0x38] sm:$0xf]
      %v8126 = vld [vmem:[%s8110 + $0x3c] sm:$0xf]
      %v8159 = vunpack.c.l.b16 %v8078
      %v8160 = vunpack.c.l.b16 %v8079
      %v8161 = vunpack.c.l.b16 %v8080
      %v8162 = vunpack.c.l.b16 %v8081
      %v8163 = vunpack.c.l.b16 %v8082
      %v8164 = vunpack.c.l.b16 %v8083
      %v8165 = vunpack.c.l.b16 %v8084
      %v8166 = vunpack.c.l.b16 %v8085
      %v8167 = vunpack.c.l.b16 %v8086
      %v8168 = vunpack.c.l.b16 %v8087
      %v8169 = vunpack.c.l.b16 %v8088
      %v8170 = vunpack.c.l.b16 %v8089
      %v8171 = vunpack.c.l.b16 %v8090
      %v8172 = vunpack.c.l.b16 %v8091
      %v8173 = vunpack.c.l.b16 %v8092
      %v8174 = vunpack.c.l.b16 %v8093
      %v8175 = vunpack.c.l.b16 %v8094
      %v8176 = vunpack.c.l.b16 %v8095
      %v8177 = vunpack.c.l.b16 %v8096
      %v8178 = vunpack.c.l.b16 %v8097
      %v8179 = vunpack.c.l.b16 %v8098
      %v8180 = vunpack.c.l.b16 %v8099
      %v8181 = vunpack.c.l.b16 %v8100
      %v8182 = vunpack.c.l.b16 %v8101
      %v8183 = vunpack.c.l.b16 %v8102
      %v8184 = vunpack.c.l.b16 %v8103
      %v8185 = vunpack.c.l.b16 %v8104
      %v8186 = vunpack.c.l.b16 %v8105
      %v8187 = vunpack.c.l.b16 %v8106
      %v8188 = vunpack.c.l.b16 %v8107
      %v8189 = vunpack.c.l.b16 %v8108
      %v8190 = vunpack.c.l.b16 %v8109
      %v8191 = vpack.c.b16 %v8160, %v8159
      %v8192 = vpack.c.b16 %v8162, %v8161
      %v8193 = vpack.c.b16 %v8164, %v8163
      %v8194 = vpack.c.b16 %v8166, %v8165
      %v8195 = vpack.c.b16 %v8168, %v8167
      %v8196 = vpack.c.b16 %v8170, %v8169
      %v8197 = vpack.c.b16 %v8172, %v8171
      %v8198 = vpack.c.b16 %v8174, %v8173
      %v8199 = vpack.c.b16 %v8176, %v8175
      %v8200 = vpack.c.b16 %v8178, %v8177
      %v8201 = vpack.c.b16 %v8180, %v8179
      %v8202 = vpack.c.b16 %v8182, %v8181
      %v8203 = vpack.c.b16 %v8184, %v8183
      %v8204 = vpack.c.b16 %v8186, %v8185
      %v8205 = vpack.c.b16 %v8188, %v8187
      %v8206 = vpack.c.b16 %v8190, %v8189
      %v8239 = vunpack.c.l.b16 %v8111
      %v8240 = vunpack.c.l.b16 %v8112
      %v8241 = vunpack.c.l.b16 %v8113
      %v8242 = vunpack.c.l.b16 %v8114
      %v8243 = vunpack.c.l.b16 %v8115
      %v8244 = vunpack.c.l.b16 %v8116
      %v8245 = vunpack.c.l.b16 %v8117
      %v8246 = vunpack.c.l.b16 %v8118
      %v8247 = vunpack.c.l.b16 %v8119
      %v8248 = vunpack.c.l.b16 %v8120
      %v8249 = vunpack.c.l.b16 %v8121
      %v8250 = vunpack.c.l.b16 %v8122
      %v8251 = vunpack.c.l.b16 %v8123
      %v8252 = vunpack.c.l.b16 %v8124
      %v8253 = vunpack.c.l.b16 %v8125
      %v8254 = vunpack.c.l.b16 %v8126
      %v8255 = vpack.c.b16 %v8240, %v8239
      %v8256 = vpack.c.b16 %v8242, %v8241
      %v8257 = vpack.c.b16 %v8244, %v8243
      %v8258 = vpack.c.b16 %v8246, %v8245
      %v8259 = vpack.c.b16 %v8248, %v8247
      %v8260 = vpack.c.b16 %v8250, %v8249
      %v8261 = vpack.c.b16 %v8252, %v8251
      %v8262 = vpack.c.b16 %v8254, %v8253
      %8271 = vmatprep.subr.bf16.mxu0 0
      %8272 = vmatpush1.bf16.msra.mxu0 %v8255
      %8273 = vmatprep.subr.bf16.mxu0 0
      %8274 = vmatpush1.bf16.msra.mxu0 %v8256
      %8275 = vmatprep.subr.bf16.mxu0 0
      %8276 = vmatpush1.bf16.msra.mxu0 %v8257
      %8277 = vmatprep.subr.bf16.mxu0 0
      %8278 = vmatpush1.bf16.msra.mxu0 %v8258
      %8279 = vmatprep.subr.bf16.mxu0 0
      %8280 = vmatpush1.bf16.msra.mxu0 %v8259
      %8281 = vmatprep.subr.bf16.mxu0 0
      %8282 = vmatpush1.bf16.msra.mxu0 %v8260
      %8283 = vmatprep.subr.bf16.mxu0 0
      %8284 = vmatpush1.bf16.msra.mxu0 %v8261
      %8285 = vmatprep.subr.bf16.mxu0 0
      %8286 = vmatpush1.bf16.msra.mxu0 %v8262
      %8287 = vmatprep.subr.bf16.mxu0 0
      %8288 = vmatpush1.bf16.msra.mxu0 0
      %8289 = vmatprep.subr.bf16.mxu0 0
      %8290 = vmatpush1.bf16.msra.mxu0 0
      %8291 = vmatprep.subr.bf16.mxu0 0
      %8292 = vmatpush1.bf16.msra.mxu0 0
      %8293 = vmatprep.subr.bf16.mxu0 0
      %8294 = vmatpush1.bf16.msra.mxu0 0
      %8295 = vmatprep.subr.bf16.mxu0 0
      %8296 = vmatpush1.bf16.msra.mxu0 0
      %8297 = vmatprep.subr.bf16.mxu0 0
      %8298 = vmatpush1.bf16.msra.mxu0 0
      %8299 = vmatprep.subr.bf16.mxu0 0
      %8300 = vmatpush1.bf16.msra.mxu0 0
      %8301 = vmatprep.subr.bf16.mxu0 0
      %8302 = vmatpush1.bf16.msra.mxu0 0
      %8303 = vmatprep.mubr.bf16.mxu0 0
      %8304 = vmatmul.mubr.bf16.gmra.mrb[0].mxu0 %v8191
      %v8305 = vpop.f32.mrb[0].mxu0
      %v8306 = vadd.f32 0.0, %v8305
      %v8307 = vpop.f32.mrb[0].mxu0
      %v8308 = vpop.f32.mrb[0].mxu0
      %v8309 = vadd.f32 0.0, %v8308
      %v8310 = vpop.f32.mrb[0].mxu0
      %8311 = vmatprep.mubr.bf16.mxu0 0
      %8312 = vmatmul.mubr.bf16.gmra.mrb[0].mxu0 %v8192
      %v8313 = vpop.f32.mrb[0].mxu0
      %v8314 = vadd.f32 0.0, %v8313
      %v8315 = vpop.f32.mrb[0].mxu0
      %v8316 = vpop.f32.mrb[0].mxu0
      %v8317 = vadd.f32 0.0, %v8316
      %v8318 = vpop.f32.mrb[0].mxu0
      %8319 = vmatprep.mubr.bf16.mxu0 0
      %8320 = vmatmul.mubr.bf16.gmra.mrb[0].mxu0 %v8193
      %v8321 = vpop.f32.mrb[0].mxu0
      %v8322 = vadd.f32 0.0, %v8321
      %v8323 = vpop.f32.mrb[0].mxu0
      %v8324 = vpop.f32.mrb[0].mxu0
      %v8325 = vadd.f32 0.0, %v8324
      %v8326 = vpop.f32.mrb[0].mxu0
      %8327 = vmatprep.mubr.bf16.mxu0 0
      %8328 = vmatmul.mubr.bf16.gmra.mrb[0].mxu0 %v8194
      %v8329 = vpop.f32.mrb[0].mxu0
      %v8330 = vadd.f32 0.0, %v8329
      %v8331 = vpop.f32.mrb[0].mxu0
      %v8332 = vpop.f32.mrb[0].mxu0
      %v8333 = vadd.f32 0.0, %v8332
      %v8334 = vpop.f32.mrb[0].mxu0
      %8335 = vmatprep.mubr.bf16.mxu0 0
      %8336 = vmatmul.mubr.bf16.gmra.mrb[0].mxu0 %v8195
      %v8337 = vpop.f32.mrb[0].mxu0
      %v8338 = vadd.f32 0.0, %v8337
      %v8339 = vpop.f32.mrb[0].mxu0
      %v8340 = vpop.f32.mrb[0].mxu0
      %v8341 = vadd.f32 0.0, %v8340
      %v8342 = vpop.f32.mrb[0].mxu0
      %8343 = vmatprep.mubr.bf16.mxu0 0
      %8344 = vmatmul.mubr.bf16.gmra.mrb[0].mxu0 %v8196
      %v8345 = vpop.f32.mrb[0].mxu0
      %v8346 = vadd.f32 0.0, %v8345
      %v8347 = vpop.f32.mrb[0].mxu0
      %v8348 = vpop.f32.mrb[0].mxu0
      %v8349 = vadd.f32 0.0, %v8348
      %v8350 = vpop.f32.mrb[0].mxu0
      %8351 = vmatprep.mubr.bf16.mxu0 0
      %8352 = vmatmul.mubr.bf16.gmra.mrb[0].mxu0 %v8197
      %v8353 = vpop.f32.mrb[0].mxu0
      %v8354 = vadd.f32 0.0, %v8353
      %v8355 = vpop.f32.mrb[0].mxu0
      %v8356 = vpop.f32.mrb[0].mxu0
      %v8357 = vadd.f32 0.0, %v8356
      %v8358 = vpop.f32.mrb[0].mxu0
      %8359 = vmatprep.mubr.bf16.mxu0 0
      %8360 = vmatmul.mubr.bf16.gmra.mrb[0].mxu0 %v8198
      %v8361 = vpop.f32.mrb[0].mxu0
      %v8362 = vadd.f32 0.0, %v8361
      %v8363 = vpop.f32.mrb[0].mxu0
      %v8364 = vpop.f32.mrb[0].mxu0
      %v8365 = vadd.f32 0.0, %v8364
      %v8366 = vpop.f32.mrb[0].mxu0
      %8367 = vmatprep.mubr.bf16.mxu0 0
      %8368 = vmatmul.mubr.bf16.gmra.mrb[0].mxu0 %v8199
      %v8369 = vpop.f32.mrb[0].mxu0
      %v8370 = vadd.f32 0.0, %v8369
      %v8371 = vpop.f32.mrb[0].mxu0
      %v8372 = vpop.f32.mrb[0].mxu0
      %v8373 = vadd.f32 0.0, %v8372
      %v8374 = vpop.f32.mrb[0].mxu0
      %8375 = vmatprep.mubr.bf16.mxu0 0
      %8376 = vmatmul.mubr.bf16.gmra.mrb[0].mxu0 %v8200
      %v8377 = vpop.f32.mrb[0].mxu0
      %v8378 = vadd.f32 0.0, %v8377
      %v8379 = vpop.f32.mrb[0].mxu0
      %v8380 = vpop.f32.mrb[0].mxu0
      %v8381 = vadd.f32 0.0, %v8380
      %v8382 = vpop.f32.mrb[0].mxu0
      %8383 = vmatprep.mubr.bf16.mxu0 0
      %8384 = vmatmul.mubr.bf16.gmra.mrb[0].mxu0 %v8201
      %v8385 = vpop.f32.mrb[0].mxu0
      %v8386 = vadd.f32 0.0, %v8385
      %v8387 = vpop.f32.mrb[0].mxu0
      %v8388 = vpop.f32.mrb[0].mxu0
      %v8389 = vadd.f32 0.0, %v8388
      %v8390 = vpop.f32.mrb[0].mxu0
      %8391 = vmatprep.mubr.bf16.mxu0 0
      %8392 = vmatmul.mubr.bf16.gmra.mrb[0].mxu0 %v8202
      %v8393 = vpop.f32.mrb[0].mxu0
      %v8394 = vadd.f32 0.0, %v8393
      %v8395 = vpop.f32.mrb[0].mxu0
      %v8396 = vpop.f32.mrb[0].mxu0
      %v8397 = vadd.f32 0.0, %v8396
      %v8398 = vpop.f32.mrb[0].mxu0
      %8399 = vmatprep.mubr.bf16.mxu0 0
      %8400 = vmatmul.mubr.bf16.gmra.mrb[0].mxu0 %v8203
      %v8401 = vpop.f32.mrb[0].mxu0
      %v8402 = vadd.f32 0.0, %v8401
      %v8403 = vpop.f32.mrb[0].mxu0
      %v8404 = vpop.f32.mrb[0].mxu0
      %v8405 = vadd.f32 0.0, %v8404
      %v8406 = vpop.f32.mrb[0].mxu0
      %8407 = vmatprep.mubr.bf16.mxu0 0
      %8408 = vmatmul.mubr.bf16.gmra.mrb[0].mxu0 %v8204
      %v8409 = vpop.f32.mrb[0].mxu0
      %v8410 = vadd.f32 0.0, %v8409
      %v8411 = vpop.f32.mrb[0].mxu0
      %v8412 = vpop.f32.mrb[0].mxu0
      %v8413 = vadd.f32 0.0, %v8412
      %v8414 = vpop.f32.mrb[0].mxu0
      %8415 = vmatprep.mubr.bf16.mxu0 0
      %8416 = vmatmul.mubr.bf16.gmra.mrb[0].mxu0 %v8205
      %v8417 = vpop.f32.mrb[0].mxu0
      %v8418 = vadd.f32 0.0, %v8417
      %v8419 = vpop.f32.mrb[0].mxu0
      %v8420 = vpop.f32.mrb[0].mxu0
      %v8421 = vadd.f32 0.0, %v8420
      %v8422 = vpop.f32.mrb[0].mxu0
      %8423 = vmatprep.mubr.bf16.mxu0 0
      %8424 = vmatmul.mubr.bf16.gmra.mrb[0].mxu0 %v8206
      %v8425 = vpop.f32.mrb[0].mxu0
      %v8426 = vadd.f32 0.0, %v8425
      %v8427 = vpop.f32.mrb[0].mxu0
      %v8428 = vpop.f32.mrb[0].mxu0
      %v8429 = vadd.f32 0.0, %v8428
      %v8430 = vpop.f32.mrb[0].mxu0
      %8431 = vdwg.mxu0
      %v8432 = vadd.f32 %v8046, %v8306
      %v8433 = vadd.f32 %v8047, %v8309
      %v8434 = vadd.f32 %v8048, %v8314
      %v8435 = vadd.f32 %v8049, %v8317
      %v8436 = vadd.f32 %v8050, %v8322
      %v8437 = vadd.f32 %v8051, %v8325
      %v8438 = vadd.f32 %v8052, %v8330
      %v8439 = vadd.f32 %v8053, %v8333
      %v8440 = vadd.f32 %v8054, %v8338
      %v8441 = vadd.f32 %v8055, %v8341
      %v8442 = vadd.f32 %v8056, %v8346
      %v8443 = vadd.f32 %v8057, %v8349
      %v8444 = vadd.f32 %v8058, %v8354
      %v8445 = vadd.f32 %v8059, %v8357
      %v8446 = vadd.f32 %v8060, %v8362
      %v8447 = vadd.f32 %v8061, %v8365
      %v8448 = vadd.f32 %v8062, %v8370
      %v8449 = vadd.f32 %v8063, %v8373
      %v8450 = vadd.f32 %v8064, %v8378
      %v8451 = vadd.f32 %v8065, %v8381
      %v8452 = vadd.f32 %v8066, %v8386
      %v8453 = vadd.f32 %v8067, %v8389
      %v8454 = vadd.f32 %v8068, %v8394
      %v8455 = vadd.f32 %v8069, %v8397
      %v8456 = vadd.f32 %v8070, %v8402
      %v8457 = vadd.f32 %v8071, %v8405
      %v8458 = vadd.f32 %v8072, %v8410
      %v8459 = vadd.f32 %v8073, %v8413
      %v8460 = vadd.f32 %v8074, %v8418
      %v8461 = vadd.f32 %v8075, %v8421
      %v8462 = vadd.f32 %v8076, %v8426
      %v8463 = vadd.f32 %v8077, %v8429
      %v8464 = vld [vmem:[%s344] sm:$0xf]
      %v8465 = vld [vmem:[%s344 + $0x4] sm:$0xf]
      %v8466 = vld [vmem:[%s344 + $0x8] sm:$0x1]
      %v8467 = vld [vmem:[%s344 + $0xc] sm:$0xf]
      %v8468 = vld [vmem:[%s344 + $0x10] sm:$0xf]
      %v8469 = vld [vmem:[%s344 + $0x14] sm:$0x1]
      %v8470 = vld [vmem:[%s344 + $0x18] sm:$0xf]
      %v8471 = vld [vmem:[%s344 + $0x1c] sm:$0xf]
      %v8472 = vld [vmem:[%s344 + $0x20] sm:$0x1]
      %v8473 = vld [vmem:[%s344 + $0x24] sm:$0xf]
      %v8474 = vld [vmem:[%s344 + $0x28] sm:$0xf]
      %v8475 = vld [vmem:[%s344 + $0x2c] sm:$0x1]
      %v8476 = vld [vmem:[%s344 + $0x30] sm:$0xf]
      %v8477 = vld [vmem:[%s344 + $0x34] sm:$0xf]
      %v8478 = vld [vmem:[%s344 + $0x38] sm:$0x1]
      %v8479 = vld [vmem:[%s344 + $0x3c] sm:$0xf]
      %v8480 = vld [vmem:[%s344 + $0x40] sm:$0xf]
      %v8481 = vld [vmem:[%s344 + $0x44] sm:$0x1]
      %v8482 = vld [vmem:[%s344 + $0x48] sm:$0xf]
      %v8483 = vld [vmem:[%s344 + $0x4c] sm:$0xf]
      %v8484 = vld [vmem:[%s344 + $0x50] sm:$0x1]
      %v8485 = vld [vmem:[%s344 + $0x54] sm:$0xf]
      %v8486 = vld [vmem:[%s344 + $0x58] sm:$0xf]
      %v8487 = vld [vmem:[%s344 + $0x5c] sm:$0x1]
      %v8488 = vld [vmem:[%s344 + $0x60] sm:$0xf]
      %v8489 = vld [vmem:[%s344 + $0x64] sm:$0xf]
      %v8490 = vld [vmem:[%s344 + $0x68] sm:$0x1]
      %v8491 = vld [vmem:[%s344 + $0x6c] sm:$0xf]
      %v8492 = vld [vmem:[%s344 + $0x70] sm:$0xf]
      %v8493 = vld [vmem:[%s344 + $0x74] sm:$0x1]
      %v8494 = vld [vmem:[%s344 + $0x78] sm:$0xf]
      %v8495 = vld [vmem:[%s344 + $0x7c] sm:$0xf]
      %v8496 = vld [vmem:[%s344 + $0x80] sm:$0x1]
      %v8497 = vld [vmem:[%s344 + $0x84] sm:$0xf]
      %v8498 = vld [vmem:[%s344 + $0x88] sm:$0xf]
      %v8499 = vld [vmem:[%s344 + $0x8c] sm:$0x1]
      %v8500 = vld [vmem:[%s344 + $0x90] sm:$0xf]
      %v8501 = vld [vmem:[%s344 + $0x94] sm:$0xf]
      %v8502 = vld [vmem:[%s344 + $0x98] sm:$0x1]
      %v8503 = vld [vmem:[%s344 + $0x9c] sm:$0xf]
      %v8504 = vld [vmem:[%s344 + $0xa0] sm:$0xf]
      %v8505 = vld [vmem:[%s344 + $0xa4] sm:$0x1]
      %v8506 = vld [vmem:[%s344 + $0xa8] sm:$0xf]
      %v8507 = vld [vmem:[%s344 + $0xac] sm:$0xf]
      %v8508 = vld [vmem:[%s344 + $0xb0] sm:$0x1]
      %v8509 = vld [vmem:[%s344 + $0xb4] sm:$0xf]
      %v8510 = vld [vmem:[%s344 + $0xb8] sm:$0xf]
      %v8511 = vld [vmem:[%s344 + $0xbc] sm:$0x1]
      %v8513 = vshrl.u32 %v8464, 16
      %v8515 = vrot.slane %v8513, 4
      %v8516 = vshll.u32 %v8464, 16
      %v8518 = vrot.slane %v8516, 5
      %v8519 = vor.u32 %v8515, %v8518
      %v8520 = vrot.slane %v8519, 4
      %v8522 = vshll.u32 %v8465, 16
      %v8524 = vrot.slane %v8522, 5
      %v8525 = vsel %vm1355, %v8520, %v8524
      %v8526 = vshrl.u32 %v8465, 16
      %v8528 = vrot.slane %v8526, 4
      %v8529 = vor.u32 %v8528, %v8524
      %v8530 = vrot.slane %v8529, 4
      %v8532 = vshll.u32 %v8466, 16
      %v8534 = vrot.slane %v8532, 5
      %v8535 = vsel %vm1355, %v8530, %v8534
      %v8537 = vshrl.u32 %v8467, 16
      %v8539 = vrot.slane %v8537, 4
      %v8540 = vshll.u32 %v8467, 16
      %v8542 = vrot.slane %v8540, 5
      %v8543 = vor.u32 %v8539, %v8542
      %v8544 = vrot.slane %v8543, 4
      %v8546 = vshll.u32 %v8468, 16
      %v8548 = vrot.slane %v8546, 5
      %v8549 = vsel %vm1355, %v8544, %v8548
      %v8550 = vshrl.u32 %v8468, 16
      %v8552 = vrot.slane %v8550, 4
      %v8553 = vor.u32 %v8552, %v8548
      %v8554 = vrot.slane %v8553, 4
      %v8556 = vshll.u32 %v8469, 16
      %v8558 = vrot.slane %v8556, 5
      %v8559 = vsel %vm1355, %v8554, %v8558
      %v8561 = vshrl.u32 %v8470, 16
      %v8563 = vrot.slane %v8561, 4
      %v8564 = vshll.u32 %v8470, 16
      %v8566 = vrot.slane %v8564, 5
      %v8567 = vor.u32 %v8563, %v8566
      %v8568 = vrot.slane %v8567, 4
      %v8570 = vshll.u32 %v8471, 16
      %v8572 = vrot.slane %v8570, 5
      %v8573 = vsel %vm1355, %v8568, %v8572
      %v8574 = vshrl.u32 %v8471, 16
      %v8576 = vrot.slane %v8574, 4
      %v8577 = vor.u32 %v8576, %v8572
      %v8578 = vrot.slane %v8577, 4
      %v8580 = vshll.u32 %v8472, 16
      %v8582 = vrot.slane %v8580, 5
      %v8583 = vsel %vm1355, %v8578, %v8582
      %v8585 = vshrl.u32 %v8473, 16
      %v8587 = vrot.slane %v8585, 4
      %v8588 = vshll.u32 %v8473, 16
      %v8590 = vrot.slane %v8588, 5
      %v8591 = vor.u32 %v8587, %v8590
      %v8592 = vrot.slane %v8591, 4
      %v8594 = vshll.u32 %v8474, 16
      %v8596 = vrot.slane %v8594, 5
      %v8597 = vsel %vm1355, %v8592, %v8596
      %v8598 = vshrl.u32 %v8474, 16
      %v8600 = vrot.slane %v8598, 4
      %v8601 = vor.u32 %v8600, %v8596
      %v8602 = vrot.slane %v8601, 4
      %v8604 = vshll.u32 %v8475, 16
      %v8606 = vrot.slane %v8604, 5
      %v8607 = vsel %vm1355, %v8602, %v8606
      %v8609 = vshrl.u32 %v8476, 16
      %v8611 = vrot.slane %v8609, 4
      %v8612 = vshll.u32 %v8476, 16
      %v8614 = vrot.slane %v8612, 5
      %v8615 = vor.u32 %v8611, %v8614
      %v8616 = vrot.slane %v8615, 4
      %v8618 = vshll.u32 %v8477, 16
      %v8620 = vrot.slane %v8618, 5
      %v8621 = vsel %vm1355, %v8616, %v8620
      %v8622 = vshrl.u32 %v8477, 16
      %v8624 = vrot.slane %v8622, 4
      %v8625 = vor.u32 %v8624, %v8620
      %v8626 = vrot.slane %v8625, 4
      %v8628 = vshll.u32 %v8478, 16
      %v8630 = vrot.slane %v8628, 5
      %v8631 = vsel %vm1355, %v8626, %v8630
      %v8633 = vshrl.u32 %v8479, 16
      %v8635 = vrot.slane %v8633, 4
      %v8636 = vshll.u32 %v8479, 16
      %v8638 = vrot.slane %v8636, 5
      %v8639 = vor.u32 %v8635, %v8638
      %v8640 = vrot.slane %v8639, 4
      %v8642 = vshll.u32 %v8480, 16
      %v8644 = vrot.slane %v8642, 5
      %v8645 = vsel %vm1355, %v8640, %v8644
      %v8646 = vshrl.u32 %v8480, 16
      %v8648 = vrot.slane %v8646, 4
      %v8649 = vor.u32 %v8648, %v8644
      %v8650 = vrot.slane %v8649, 4
      %v8652 = vshll.u32 %v8481, 16
      %v8654 = vrot.slane %v8652, 5
      %v8655 = vsel %vm1355, %v8650, %v8654
      %v8657 = vshrl.u32 %v8482, 16
      %v8659 = vrot.slane %v8657, 4
      %v8660 = vshll.u32 %v8482, 16
      %v8662 = vrot.slane %v8660, 5
      %v8663 = vor.u32 %v8659, %v8662
      %v8664 = vrot.slane %v8663, 4
      %v8666 = vshll.u32 %v8483, 16
      %v8668 = vrot.slane %v8666, 5
      %v8669 = vsel %vm1355, %v8664, %v8668
      %v8670 = vshrl.u32 %v8483, 16
      %v8672 = vrot.slane %v8670, 4
      %v8673 = vor.u32 %v8672, %v8668
      %v8674 = vrot.slane %v8673, 4
      %v8676 = vshll.u32 %v8484, 16
      %v8678 = vrot.slane %v8676, 5
      %v8679 = vsel %vm1355, %v8674, %v8678
      %v8681 = vshrl.u32 %v8485, 16
      %v8683 = vrot.slane %v8681, 4
      %v8684 = vshll.u32 %v8485, 16
      %v8686 = vrot.slane %v8684, 5
      %v8687 = vor.u32 %v8683, %v8686
      %v8688 = vrot.slane %v8687, 4
      %v8690 = vshll.u32 %v8486, 16
      %v8692 = vrot.slane %v8690, 5
      %v8693 = vsel %vm1355, %v8688, %v8692
      %v8694 = vshrl.u32 %v8486, 16
      %v8696 = vrot.slane %v8694, 4
      %v8697 = vor.u32 %v8696, %v8692
      %v8698 = vrot.slane %v8697, 4
      %v8700 = vshll.u32 %v8487, 16
      %v8702 = vrot.slane %v8700, 5
      %v8703 = vsel %vm1355, %v8698, %v8702
      %v8705 = vshrl.u32 %v8488, 16
      %v8707 = vrot.slane %v8705, 4
      %v8708 = vshll.u32 %v8488, 16
      %v8710 = vrot.slane %v8708, 5
      %v8711 = vor.u32 %v8707, %v8710
      %v8712 = vrot.slane %v8711, 4
      %v8714 = vshll.u32 %v8489, 16
      %v8716 = vrot.slane %v8714, 5
      %v8717 = vsel %vm1355, %v8712, %v8716
      %v8718 = vshrl.u32 %v8489, 16
      %v8720 = vrot.slane %v8718, 4
      %v8721 = vor.u32 %v8720, %v8716
      %v8722 = vrot.slane %v8721, 4
      %v8724 = vshll.u32 %v8490, 16
      %v8726 = vrot.slane %v8724, 5
      %v8727 = vsel %vm1355, %v8722, %v8726
      %v8729 = vshrl.u32 %v8491, 16
      %v8731 = vrot.slane %v8729, 4
      %v8732 = vshll.u32 %v8491, 16
      %v8734 = vrot.slane %v8732, 5
      %v8735 = vor.u32 %v8731, %v8734
      %v8736 = vrot.slane %v8735, 4
      %v8738 = vshll.u32 %v8492, 16
      %v8740 = vrot.slane %v8738, 5
      %v8741 = vsel %vm1355, %v8736, %v8740
      %v8742 = vshrl.u32 %v8492, 16
      %v8744 = vrot.slane %v8742, 4
      %v8745 = vor.u32 %v8744, %v8740
      %v8746 = vrot.slane %v8745, 4
      %v8748 = vshll.u32 %v8493, 16
      %v8750 = vrot.slane %v8748, 5
      %v8751 = vsel %vm1355, %v8746, %v8750
      %v8753 = vshrl.u32 %v8494, 16
      %v8755 = vrot.slane %v8753, 4
      %v8756 = vshll.u32 %v8494, 16
      %v8758 = vrot.slane %v8756, 5
      %v8759 = vor.u32 %v8755, %v8758
      %v8760 = vrot.slane %v8759, 4
      %v8762 = vshll.u32 %v8495, 16
      %v8764 = vrot.slane %v8762, 5
      %v8765 = vsel %vm1355, %v8760, %v8764
      %v8766 = vshrl.u32 %v8495, 16
      %v8768 = vrot.slane %v8766, 4
      %v8769 = vor.u32 %v8768, %v8764
      %v8770 = vrot.slane %v8769, 4
      %v8772 = vshll.u32 %v8496, 16
      %v8774 = vrot.slane %v8772, 5
      %v8775 = vsel %vm1355, %v8770, %v8774
      %v8777 = vshrl.u32 %v8497, 16
      %v8779 = vrot.slane %v8777, 4
      %v8780 = vshll.u32 %v8497, 16
      %v8782 = vrot.slane %v8780, 5
      %v8783 = vor.u32 %v8779, %v8782
      %v8784 = vrot.slane %v8783, 4
      %v8786 = vshll.u32 %v8498, 16
      %v8788 = vrot.slane %v8786, 5
      %v8789 = vsel %vm1355, %v8784, %v8788
      %v8790 = vshrl.u32 %v8498, 16
      %v8792 = vrot.slane %v8790, 4
      %v8793 = vor.u32 %v8792, %v8788
      %v8794 = vrot.slane %v8793, 4
      %v8796 = vshll.u32 %v8499, 16
      %v8798 = vrot.slane %v8796, 5
      %v8799 = vsel %vm1355, %v8794, %v8798
      %v8801 = vshrl.u32 %v8500, 16
      %v8803 = vrot.slane %v8801, 4
      %v8804 = vshll.u32 %v8500, 16
      %v8806 = vrot.slane %v8804, 5
      %v8807 = vor.u32 %v8803, %v8806
      %v8808 = vrot.slane %v8807, 4
      %v8810 = vshll.u32 %v8501, 16
      %v8812 = vrot.slane %v8810, 5
      %v8813 = vsel %vm1355, %v8808, %v8812
      %v8814 = vshrl.u32 %v8501, 16
      %v8816 = vrot.slane %v8814, 4
      %v8817 = vor.u32 %v8816, %v8812
      %v8818 = vrot.slane %v8817, 4
      %v8820 = vshll.u32 %v8502, 16
      %v8822 = vrot.slane %v8820, 5
      %v8823 = vsel %vm1355, %v8818, %v8822
      %v8825 = vshrl.u32 %v8503, 16
      %v8827 = vrot.slane %v8825, 4
      %v8828 = vshll.u32 %v8503, 16
      %v8830 = vrot.slane %v8828, 5
      %v8831 = vor.u32 %v8827, %v8830
      %v8832 = vrot.slane %v8831, 4
      %v8834 = vshll.u32 %v8504, 16
      %v8836 = vrot.slane %v8834, 5
      %v8837 = vsel %vm1355, %v8832, %v8836
      %v8838 = vshrl.u32 %v8504, 16
      %v8840 = vrot.slane %v8838, 4
      %v8841 = vor.u32 %v8840, %v8836
      %v8842 = vrot.slane %v8841, 4
      %v8844 = vshll.u32 %v8505, 16
      %v8846 = vrot.slane %v8844, 5
      %v8847 = vsel %vm1355, %v8842, %v8846
      %v8849 = vshrl.u32 %v8506, 16
      %v8851 = vrot.slane %v8849, 4
      %v8852 = vshll.u32 %v8506, 16
      %v8854 = vrot.slane %v8852, 5
      %v8855 = vor.u32 %v8851, %v8854
      %v8856 = vrot.slane %v8855, 4
      %v8858 = vshll.u32 %v8507, 16
      %v8860 = vrot.slane %v8858, 5
      %v8861 = vsel %vm1355, %v8856, %v8860
      %v8862 = vshrl.u32 %v8507, 16
      %v8864 = vrot.slane %v8862, 4
      %v8865 = vor.u32 %v8864, %v8860
      %v8866 = vrot.slane %v8865, 4
      %v8868 = vshll.u32 %v8508, 16
      %v8870 = vrot.slane %v8868, 5
      %v8871 = vsel %vm1355, %v8866, %v8870
      %v8873 = vshrl.u32 %v8509, 16
      %v8875 = vrot.slane %v8873, 4
      %v8876 = vshll.u32 %v8509, 16
      %v8878 = vrot.slane %v8876, 5
      %v8879 = vor.u32 %v8875, %v8878
      %v8880 = vrot.slane %v8879, 4
      %v8882 = vshll.u32 %v8510, 16
      %v8884 = vrot.slane %v8882, 5
      %v8885 = vsel %vm1355, %v8880, %v8884
      %v8886 = vshrl.u32 %v8510, 16
      %v8888 = vrot.slane %v8886, 4
      %v8889 = vor.u32 %v8888, %v8884
      %v8890 = vrot.slane %v8889, 4
      %v8892 = vshll.u32 %v8511, 16
      %v8894 = vrot.slane %v8892, 5
      %v8895 = vsel %vm1355, %v8890, %v8894
      %s8896 = scalar_lea.vmem %s3, 256
      %v8897 = vld [vmem:[%s8896] sm:$0xf]
      %v8898 = vld [vmem:[%s8896 + $0x4] sm:$0xf]
      %v8899 = vld [vmem:[%s8896 + $0x8] sm:$0xf]
      %v8900 = vld [vmem:[%s8896 + $0xc] sm:$0xf]
      %v8901 = vld [vmem:[%s8896 + $0x10] sm:$0xf]
      %v8902 = vld [vmem:[%s8896 + $0x14] sm:$0xf]
      %v8903 = vld [vmem:[%s8896 + $0x18] sm:$0xf]
      %v8904 = vld [vmem:[%s8896 + $0x1c] sm:$0xf]
      %v8905 = vld [vmem:[%s8896 + $0x20] sm:$0xf]
      %v8906 = vld [vmem:[%s8896 + $0x24] sm:$0xf]
      %v8907 = vld [vmem:[%s8896 + $0x28] sm:$0xf]
      %v8908 = vld [vmem:[%s8896 + $0x2c] sm:$0xf]
      %v8909 = vld [vmem:[%s8896 + $0x30] sm:$0xf]
      %v8910 = vld [vmem:[%s8896 + $0x34] sm:$0xf]
      %v8911 = vld [vmem:[%s8896 + $0x38] sm:$0xf]
      %v8912 = vld [vmem:[%s8896 + $0x3c] sm:$0xf]
      %v8913 = vunpack.c.l.b16 %v8525
      %v8914 = vunpack.c.l.b16 %v8535
      %v8915 = vunpack.c.l.b16 %v8549
      %v8916 = vunpack.c.l.b16 %v8559
      %v8917 = vunpack.c.l.b16 %v8573
      %v8918 = vunpack.c.l.b16 %v8583
      %v8919 = vunpack.c.l.b16 %v8597
      %v8920 = vunpack.c.l.b16 %v8607
      %v8921 = vunpack.c.l.b16 %v8621
      %v8922 = vunpack.c.l.b16 %v8631
      %v8923 = vunpack.c.l.b16 %v8645
      %v8924 = vunpack.c.l.b16 %v8655
      %v8925 = vunpack.c.l.b16 %v8669
      %v8926 = vunpack.c.l.b16 %v8679
      %v8927 = vunpack.c.l.b16 %v8693
      %v8928 = vunpack.c.l.b16 %v8703
      %v8929 = vunpack.c.l.b16 %v8717
      %v8930 = vunpack.c.l.b16 %v8727
      %v8931 = vunpack.c.l.b16 %v8741
      %v8932 = vunpack.c.l.b16 %v8751
      %v8933 = vunpack.c.l.b16 %v8765
      %v8934 = vunpack.c.l.b16 %v8775
      %v8935 = vunpack.c.l.b16 %v8789
      %v8936 = vunpack.c.l.b16 %v8799
      %v8937 = vunpack.c.l.b16 %v8813
      %v8938 = vunpack.c.l.b16 %v8823
      %v8939 = vunpack.c.l.b16 %v8837
      %v8940 = vunpack.c.l.b16 %v8847
      %v8941 = vunpack.c.l.b16 %v8861
      %v8942 = vunpack.c.l.b16 %v8871
      %v8943 = vunpack.c.l.b16 %v8885
      %v8944 = vunpack.c.l.b16 %v8895
      %v8945 = vpack.c.b16 %v8914, %v8913
      %v8946 = vpack.c.b16 %v8916, %v8915
      %v8947 = vpack.c.b16 %v8918, %v8917
      %v8948 = vpack.c.b16 %v8920, %v8919
      %v8949 = vpack.c.b16 %v8922, %v8921
      %v8950 = vpack.c.b16 %v8924, %v8923
      %v8951 = vpack.c.b16 %v8926, %v8925
      %v8952 = vpack.c.b16 %v8928, %v8927
      %v8953 = vpack.c.b16 %v8930, %v8929
      %v8954 = vpack.c.b16 %v8932, %v8931
      %v8955 = vpack.c.b16 %v8934, %v8933
      %v8956 = vpack.c.b16 %v8936, %v8935
      %v8957 = vpack.c.b16 %v8938, %v8937
      %v8958 = vpack.c.b16 %v8940, %v8939
      %v8959 = vpack.c.b16 %v8942, %v8941
      %v8960 = vpack.c.b16 %v8944, %v8943
      %v8993 = vunpack.c.l.b16 %v8897
      %v8994 = vunpack.c.l.b16 %v8898
      %v8995 = vunpack.c.l.b16 %v8899
      %v8996 = vunpack.c.l.b16 %v8900
      %v8997 = vunpack.c.l.b16 %v8901
      %v8998 = vunpack.c.l.b16 %v8902
      %v8999 = vunpack.c.l.b16 %v8903
      %v9000 = vunpack.c.l.b16 %v8904
      %v9001 = vunpack.c.l.b16 %v8905
      %v9002 = vunpack.c.l.b16 %v8906
      %v9003 = vunpack.c.l.b16 %v8907
      %v9004 = vunpack.c.l.b16 %v8908
      %v9005 = vunpack.c.l.b16 %v8909
      %v9006 = vunpack.c.l.b16 %v8910
      %v9007 = vunpack.c.l.b16 %v8911
      %v9008 = vunpack.c.l.b16 %v8912
      %v9009 = vpack.c.b16 %v8994, %v8993
      %v9010 = vpack.c.b16 %v8996, %v8995
      %v9011 = vpack.c.b16 %v8998, %v8997
      %v9012 = vpack.c.b16 %v9000, %v8999
      %v9013 = vpack.c.b16 %v9002, %v9001
      %v9014 = vpack.c.b16 %v9004, %v9003
      %v9015 = vpack.c.b16 %v9006, %v9005
      %v9016 = vpack.c.b16 %v9008, %v9007
      %9025 = vmatprep.subr.bf16.mxu0 0
      %9026 = vmatpush1.bf16.msra.mxu0 %v9009
      %9027 = vmatprep.subr.bf16.mxu0 0
      %9028 = vmatpush1.bf16.msra.mxu0 %v9010
      %9029 = vmatprep.subr.bf16.mxu0 0
      %9030 = vmatpush1.bf16.msra.mxu0 %v9011
      %9031 = vmatprep.subr.bf16.mxu0 0
      %9032 = vmatpush1.bf16.msra.mxu0 %v9012
      %9033 = vmatprep.subr.bf16.mxu0 0
      %9034 = vmatpush1.bf16.msra.mxu0 %v9013
      %9035 = vmatprep.subr.bf16.mxu0 0
      %9036 = vmatpush1.bf16.msra.mxu0 %v9014
      %9037 = vmatprep.subr.bf16.mxu0 0
      %9038 = vmatpush1.bf16.msra.mxu0 %v9015
      %9039 = vmatprep.subr.bf16.mxu0 0
      %9040 = vmatpush1.bf16.msra.mxu0 %v9016
      %9041 = vmatprep.subr.bf16.mxu0 0
      %9042 = vmatpush1.bf16.msra.mxu0 0
      %9043 = vmatprep.subr.bf16.mxu0 0
      %9044 = vmatpush1.bf16.msra.mxu0 0
      %9045 = vmatprep.subr.bf16.mxu0 0
      %9046 = vmatpush1.bf16.msra.mxu0 0
      %9047 = vmatprep.subr.bf16.mxu0 0
      %9048 = vmatpush1.bf16.msra.mxu0 0
      %9049 = vmatprep.subr.bf16.mxu0 0
      %9050 = vmatpush1.bf16.msra.mxu0 0
      %9051 = vmatprep.subr.bf16.mxu0 0
      %9052 = vmatpush1.bf16.msra.mxu0 0
      %9053 = vmatprep.subr.bf16.mxu0 0
      %9054 = vmatpush1.bf16.msra.mxu0 0
      %9055 = vmatprep.subr.bf16.mxu0 0
      %9056 = vmatpush1.bf16.msra.mxu0 0
      %9057 = vmatprep.mubr.bf16.mxu0 0
      %9058 = vmatmul.mubr.bf16.gmra.mrb[0].mxu0 %v8945
      %v9059 = vpop.f32.mrb[0].mxu0
      %v9060 = vadd.f32 0.0, %v9059
      %v9061 = vpop.f32.mrb[0].mxu0
      %v9062 = vpop.f32.mrb[0].mxu0
      %v9063 = vadd.f32 0.0, %v9062
      %v9064 = vpop.f32.mrb[0].mxu0
      %9065 = vmatprep.mubr.bf16.mxu0 0
      %9066 = vmatmul.mubr.bf16.gmra.mrb[0].mxu0 %v8946
      %v9067 = vpop.f32.mrb[0].mxu0
      %v9068 = vadd.f32 0.0, %v9067
      %v9069 = vpop.f32.mrb[0].mxu0
      %v9070 = vpop.f32.mrb[0].mxu0
      %v9071 = vadd.f32 0.0, %v9070
      %v9072 = vpop.f32.mrb[0].mxu0
      %9073 = vmatprep.mubr.bf16.mxu0 0
      %9074 = vmatmul.mubr.bf16.gmra.mrb[0].mxu0 %v8947
      %v9075 = vpop.f32.mrb[0].mxu0
      %v9076 = vadd.f32 0.0, %v9075
      %v9077 = vpop.f32.mrb[0].mxu0
      %v9078 = vpop.f32.mrb[0].mxu0
      %v9079 = vadd.f32 0.0, %v9078
      %v9080 = vpop.f32.mrb[0].mxu0
      %9081 = vmatprep.mubr.bf16.mxu0 0
      %9082 = vmatmul.mubr.bf16.gmra.mrb[0].mxu0 %v8948
      %v9083 = vpop.f32.mrb[0].mxu0
      %v9084 = vadd.f32 0.0, %v9083
      %v9085 = vpop.f32.mrb[0].mxu0
      %v9086 = vpop.f32.mrb[0].mxu0
      %v9087 = vadd.f32 0.0, %v9086
      %v9088 = vpop.f32.mrb[0].mxu0
      %9089 = vmatprep.mubr.bf16.mxu0 0
      %9090 = vmatmul.mubr.bf16.gmra.mrb[0].mxu0 %v8949
      %v9091 = vpop.f32.mrb[0].mxu0
      %v9092 = vadd.f32 0.0, %v9091
      %v9093 = vpop.f32.mrb[0].mxu0
      %v9094 = vpop.f32.mrb[0].mxu0
      %v9095 = vadd.f32 0.0, %v9094
      %v9096 = vpop.f32.mrb[0].mxu0
      %9097 = vmatprep.mubr.bf16.mxu0 0
      %9098 = vmatmul.mubr.bf16.gmra.mrb[0].mxu0 %v8950
      %v9099 = vpop.f32.mrb[0].mxu0
      %v9100 = vadd.f32 0.0, %v9099
      %v9101 = vpop.f32.mrb[0].mxu0
      %v9102 = vpop.f32.mrb[0].mxu0
      %v9103 = vadd.f32 0.0, %v9102
      %v9104 = vpop.f32.mrb[0].mxu0
      %9105 = vmatprep.mubr.bf16.mxu0 0
      %9106 = vmatmul.mubr.bf16.gmra.mrb[0].mxu0 %v8951
      %v9107 = vpop.f32.mrb[0].mxu0
      %v9108 = vadd.f32 0.0, %v9107
      %v9109 = vpop.f32.mrb[0].mxu0
      %v9110 = vpop.f32.mrb[0].mxu0
      %v9111 = vadd.f32 0.0, %v9110
      %v9112 = vpop.f32.mrb[0].mxu0
      %9113 = vmatprep.mubr.bf16.mxu0 0
      %9114 = vmatmul.mubr.bf16.gmra.mrb[0].mxu0 %v8952
      %v9115 = vpop.f32.mrb[0].mxu0
      %v9116 = vadd.f32 0.0, %v9115
      %v9117 = vpop.f32.mrb[0].mxu0
      %v9118 = vpop.f32.mrb[0].mxu0
      %v9119 = vadd.f32 0.0, %v9118
      %v9120 = vpop.f32.mrb[0].mxu0
      %9121 = vmatprep.mubr.bf16.mxu0 0
      %9122 = vmatmul.mubr.bf16.gmra.mrb[0].mxu0 %v8953
      %v9123 = vpop.f32.mrb[0].mxu0
      %v9124 = vadd.f32 0.0, %v9123
      %v9125 = vpop.f32.mrb[0].mxu0
      %v9126 = vpop.f32.mrb[0].mxu0
      %v9127 = vadd.f32 0.0, %v9126
      %v9128 = vpop.f32.mrb[0].mxu0
      %9129 = vmatprep.mubr.bf16.mxu0 0
      %9130 = vmatmul.mubr.bf16.gmra.mrb[0].mxu0 %v8954
      %v9131 = vpop.f32.mrb[0].mxu0
      %v9132 = vadd.f32 0.0, %v9131
      %v9133 = vpop.f32.mrb[0].mxu0
      %v9134 = vpop.f32.mrb[0].mxu0
      %v9135 = vadd.f32 0.0, %v9134
      %v9136 = vpop.f32.mrb[0].mxu0
      %9137 = vmatprep.mubr.bf16.mxu0 0
      %9138 = vmatmul.mubr.bf16.gmra.mrb[0].mxu0 %v8955
      %v9139 = vpop.f32.mrb[0].mxu0
      %v9140 = vadd.f32 0.0, %v9139
      %v9141 = vpop.f32.mrb[0].mxu0
      %v9142 = vpop.f32.mrb[0].mxu0
      %v9143 = vadd.f32 0.0, %v9142
      %v9144 = vpop.f32.mrb[0].mxu0
      %9145 = vmatprep.mubr.bf16.mxu0 0
      %9146 = vmatmul.mubr.bf16.gmra.mrb[0].mxu0 %v8956
      %v9147 = vpop.f32.mrb[0].mxu0
      %v9148 = vadd.f32 0.0, %v9147
      %v9149 = vpop.f32.mrb[0].mxu0
      %v9150 = vpop.f32.mrb[0].mxu0
      %v9151 = vadd.f32 0.0, %v9150
      %v9152 = vpop.f32.mrb[0].mxu0
      %9153 = vmatprep.mubr.bf16.mxu0 0
      %9154 = vmatmul.mubr.bf16.gmra.mrb[0].mxu0 %v8957
      %v9155 = vpop.f32.mrb[0].mxu0
      %v9156 = vadd.f32 0.0, %v9155
      %v9157 = vpop.f32.mrb[0].mxu0
      %v9158 = vpop.f32.mrb[0].mxu0
      %v9159 = vadd.f32 0.0, %v9158
      %v9160 = vpop.f32.mrb[0].mxu0
      %9161 = vmatprep.mubr.bf16.mxu0 0
      %9162 = vmatmul.mubr.bf16.gmra.mrb[0].mxu0 %v8958
      %v9163 = vpop.f32.mrb[0].mxu0
      %v9164 = vadd.f32 0.0, %v9163
      %v9165 = vpop.f32.mrb[0].mxu0
      %v9166 = vpop.f32.mrb[0].mxu0
      %v9167 = vadd.f32 0.0, %v9166
      %v9168 = vpop.f32.mrb[0].mxu0
      %9169 = vmatprep.mubr.bf16.mxu0 0
      %9170 = vmatmul.mubr.bf16.gmra.mrb[0].mxu0 %v8959
      %v9171 = vpop.f32.mrb[0].mxu0
      %v9172 = vadd.f32 0.0, %v9171
      %v9173 = vpop.f32.mrb[0].mxu0
      %v9174 = vpop.f32.mrb[0].mxu0
      %v9175 = vadd.f32 0.0, %v9174
      %v9176 = vpop.f32.mrb[0].mxu0
      %9177 = vmatprep.mubr.bf16.mxu0 0
      %9178 = vmatmul.mubr.bf16.gmra.mrb[0].mxu0 %v8960
      %v9179 = vpop.f32.mrb[0].mxu0
      %v9180 = vadd.f32 0.0, %v9179
      %v9181 = vpop.f32.mrb[0].mxu0
      %v9182 = vpop.f32.mrb[0].mxu0
      %v9183 = vadd.f32 0.0, %v9182
      %v9184 = vpop.f32.mrb[0].mxu0
      %9185 = vdwg.mxu0
      %v9186 = vadd.f32 %v8432, %v9060
      %v9187 = vadd.f32 %v8433, %v9063
      %v9188 = vadd.f32 %v8434, %v9068
      %v9189 = vadd.f32 %v8435, %v9071
      %v9190 = vadd.f32 %v8436, %v9076
      %v9191 = vadd.f32 %v8437, %v9079
      %v9192 = vadd.f32 %v8438, %v9084
      %v9193 = vadd.f32 %v8439, %v9087
      %v9194 = vadd.f32 %v8440, %v9092
      %v9195 = vadd.f32 %v8441, %v9095
      %v9196 = vadd.f32 %v8442, %v9100
      %v9197 = vadd.f32 %v8443, %v9103
      %v9198 = vadd.f32 %v8444, %v9108
      %v9199 = vadd.f32 %v8445, %v9111
      %v9200 = vadd.f32 %v8446, %v9116
      %v9201 = vadd.f32 %v8447, %v9119
      %v9202 = vadd.f32 %v8448, %v9124
      %v9203 = vadd.f32 %v8449, %v9127
      %v9204 = vadd.f32 %v8450, %v9132
      %v9205 = vadd.f32 %v8451, %v9135
      %v9206 = vadd.f32 %v8452, %v9140
      %v9207 = vadd.f32 %v8453, %v9143
      %v9208 = vadd.f32 %v8454, %v9148
      %v9209 = vadd.f32 %v8455, %v9151
      %v9210 = vadd.f32 %v8456, %v9156
      %v9211 = vadd.f32 %v8457, %v9159
      %v9212 = vadd.f32 %v8458, %v9164
      %v9213 = vadd.f32 %v8459, %v9167
      %v9214 = vadd.f32 %v8460, %v9172
      %v9215 = vadd.f32 %v8461, %v9175
      %v9216 = vadd.f32 %v8462, %v9180
      %v9217 = vadd.f32 %v8463, %v9183
      %v9218 = vld [vmem:[%s344] sm:$0xe]
      %v9219 = vld [vmem:[%s344 + $0xc] sm:$0xe]
      %v9220 = vld [vmem:[%s344 + $0x18] sm:$0xe]
      %v9221 = vld [vmem:[%s344 + $0x24] sm:$0xe]
      %v9222 = vld [vmem:[%s344 + $0x30] sm:$0xe]
      %v9223 = vld [vmem:[%s344 + $0x3c] sm:$0xe]
      %v9224 = vld [vmem:[%s344 + $0x48] sm:$0xe]
      %v9225 = vld [vmem:[%s344 + $0x54] sm:$0xe]
      %v9226 = vld [vmem:[%s344 + $0x60] sm:$0xe]
      %v9227 = vld [vmem:[%s344 + $0x6c] sm:$0xe]
      %v9228 = vld [vmem:[%s344 + $0x78] sm:$0xe]
      %v9229 = vld [vmem:[%s344 + $0x84] sm:$0xe]
      %v9230 = vld [vmem:[%s344 + $0x90] sm:$0xe]
      %v9231 = vld [vmem:[%s344 + $0x9c] sm:$0xe]
      %v9232 = vld [vmem:[%s344 + $0xa8] sm:$0xe]
      %v9233 = vld [vmem:[%s344 + $0xb4] sm:$0xe]
      %v9282 = vrot.slane %v9218, 5
      %v9283 = vrot.slane %v9282, 4
      %v9284 = vrot.slane %v8465, 5
      %v9285 = vsel %vm2128, %v9283, %v9284
      %v9286 = vrot.slane %v9284, 4
      %v9287 = vrot.slane %v8466, 5
      %v9288 = vsel %vm2128, %v9286, %v9287
      %v9289 = vrot.slane %v9219, 5
      %v9290 = vrot.slane %v9289, 4
      %v9291 = vrot.slane %v8468, 5
      %v9292 = vsel %vm2128, %v9290, %v9291
      %v9293 = vrot.slane %v9291, 4
      %v9294 = vrot.slane %v8469, 5
      %v9295 = vsel %vm2128, %v9293, %v9294
      %v9296 = vrot.slane %v9220, 5
      %v9297 = vrot.slane %v9296, 4
      %v9298 = vrot.slane %v8471, 5
      %v9299 = vsel %vm2128, %v9297, %v9298
      %v9300 = vrot.slane %v9298, 4
      %v9301 = vrot.slane %v8472, 5
      %v9302 = vsel %vm2128, %v9300, %v9301
      %v9303 = vrot.slane %v9221, 5
      %v9304 = vrot.slane %v9303, 4
      %v9305 = vrot.slane %v8474, 5
      %v9306 = vsel %vm2128, %v9304, %v9305
      %v9307 = vrot.slane %v9305, 4
      %v9308 = vrot.slane %v8475, 5
      %v9309 = vsel %vm2128, %v9307, %v9308
      %v9310 = vrot.slane %v9222, 5
      %v9311 = vrot.slane %v9310, 4
      %v9312 = vrot.slane %v8477, 5
      %v9313 = vsel %vm2128, %v9311, %v9312
      %v9314 = vrot.slane %v9312, 4
      %v9315 = vrot.slane %v8478, 5
      %v9316 = vsel %vm2128, %v9314, %v9315
      %v9317 = vrot.slane %v9223, 5
      %v9318 = vrot.slane %v9317, 4
      %v9319 = vrot.slane %v8480, 5
      %v9320 = vsel %vm2128, %v9318, %v9319
      %v9321 = vrot.slane %v9319, 4
      %v9322 = vrot.slane %v8481, 5
      %v9323 = vsel %vm2128, %v9321, %v9322
      %v9324 = vrot.slane %v9224, 5
      %v9325 = vrot.slane %v9324, 4
      %v9326 = vrot.slane %v8483, 5
      %v9327 = vsel %vm2128, %v9325, %v9326
      %v9328 = vrot.slane %v9326, 4
      %v9329 = vrot.slane %v8484, 5
      %v9330 = vsel %vm2128, %v9328, %v9329
      %v9331 = vrot.slane %v9225, 5
      %v9332 = vrot.slane %v9331, 4
      %v9333 = vrot.slane %v8486, 5
      %v9334 = vsel %vm2128, %v9332, %v9333
      %v9335 = vrot.slane %v9333, 4
      %v9336 = vrot.slane %v8487, 5
      %v9337 = vsel %vm2128, %v9335, %v9336
      %v9338 = vrot.slane %v9226, 5
      %v9339 = vrot.slane %v9338, 4
      %v9340 = vrot.slane %v8489, 5
      %v9341 = vsel %vm2128, %v9339, %v9340
      %v9342 = vrot.slane %v9340, 4
      %v9343 = vrot.slane %v8490, 5
      %v9344 = vsel %vm2128, %v9342, %v9343
      %v9345 = vrot.slane %v9227, 5
      %v9346 = vrot.slane %v9345, 4
      %v9347 = vrot.slane %v8492, 5
      %v9348 = vsel %vm2128, %v9346, %v9347
      %v9349 = vrot.slane %v9347, 4
      %v9350 = vrot.slane %v8493, 5
      %v9351 = vsel %vm2128, %v9349, %v9350
      %v9352 = vrot.slane %v9228, 5
      %v9353 = vrot.slane %v9352, 4
      %v9354 = vrot.slane %v8495, 5
      %v9355 = vsel %vm2128, %v9353, %v9354
      %v9356 = vrot.slane %v9354, 4
      %v9357 = vrot.slane %v8496, 5
      %v9358 = vsel %vm2128, %v9356, %v9357
      %v9359 = vrot.slane %v9229, 5
      %v9360 = vrot.slane %v9359, 4
      %v9361 = vrot.slane %v8498, 5
      %v9362 = vsel %vm2128, %v9360, %v9361
      %v9363 = vrot.slane %v9361, 4
      %v9364 = vrot.slane %v8499, 5
      %v9365 = vsel %vm2128, %v9363, %v9364
      %v9366 = vrot.slane %v9230, 5
      %v9367 = vrot.slane %v9366, 4
      %v9368 = vrot.slane %v8501, 5
      %v9369 = vsel %vm2128, %v9367, %v9368
      %v9370 = vrot.slane %v9368, 4
      %v9371 = vrot.slane %v8502, 5
      %v9372 = vsel %vm2128, %v9370, %v9371
      %v9373 = vrot.slane %v9231, 5
      %v9374 = vrot.slane %v9373, 4
      %v9375 = vrot.slane %v8504, 5
      %v9376 = vsel %vm2128, %v9374, %v9375
      %v9377 = vrot.slane %v9375, 4
      %v9378 = vrot.slane %v8505, 5
      %v9379 = vsel %vm2128, %v9377, %v9378
      %v9380 = vrot.slane %v9232, 5
      %v9381 = vrot.slane %v9380, 4
      %v9382 = vrot.slane %v8507, 5
      %v9383 = vsel %vm2128, %v9381, %v9382
      %v9384 = vrot.slane %v9382, 4
      %v9385 = vrot.slane %v8508, 5
      %v9386 = vsel %vm2128, %v9384, %v9385
      %v9387 = vrot.slane %v9233, 5
      %v9388 = vrot.slane %v9387, 4
      %v9389 = vrot.slane %v8510, 5
      %v9390 = vsel %vm2128, %v9388, %v9389
      %v9391 = vrot.slane %v9389, 4
      %v9392 = vrot.slane %v8511, 5
      %v9393 = vsel %vm2128, %v9391, %v9392
      %s9394 = scalar_lea.vmem %s3, 320
      %v9395 = vld [vmem:[%s9394] sm:$0xf]
      %v9396 = vld [vmem:[%s9394 + $0x4] sm:$0xf]
      %v9397 = vld [vmem:[%s9394 + $0x8] sm:$0xf]
      %v9398 = vld [vmem:[%s9394 + $0xc] sm:$0xf]
      %v9399 = vld [vmem:[%s9394 + $0x10] sm:$0xf]
      %v9400 = vld [vmem:[%s9394 + $0x14] sm:$0xf]
      %v9401 = vld [vmem:[%s9394 + $0x18] sm:$0xf]
      %v9402 = vld [vmem:[%s9394 + $0x1c] sm:$0xf]
      %v9403 = vld [vmem:[%s9394 + $0x20] sm:$0xf]
      %v9404 = vld [vmem:[%s9394 + $0x24] sm:$0xf]
      %v9405 = vld [vmem:[%s9394 + $0x28] sm:$0xf]
      %v9406 = vld [vmem:[%s9394 + $0x2c] sm:$0xf]
      %v9407 = vld [vmem:[%s9394 + $0x30] sm:$0xf]
      %v9408 = vld [vmem:[%s9394 + $0x34] sm:$0xf]
      %v9409 = vld [vmem:[%s9394 + $0x38] sm:$0xf]
      %v9410 = vld [vmem:[%s9394 + $0x3c] sm:$0xf]
      %v9411 = vunpack.c.l.b16 %v9285
      %v9412 = vunpack.c.l.b16 %v9288
      %v9413 = vunpack.c.l.b16 %v9292
      %v9414 = vunpack.c.l.b16 %v9295
      %v9415 = vunpack.c.l.b16 %v9299
      %v9416 = vunpack.c.l.b16 %v9302
      %v9417 = vunpack.c.l.b16 %v9306
      %v9418 = vunpack.c.l.b16 %v9309
      %v9419 = vunpack.c.l.b16 %v9313
      %v9420 = vunpack.c.l.b16 %v9316
      %v9421 = vunpack.c.l.b16 %v9320
      %v9422 = vunpack.c.l.b16 %v9323
      %v9423 = vunpack.c.l.b16 %v9327
      %v9424 = vunpack.c.l.b16 %v9330
      %v9425 = vunpack.c.l.b16 %v9334
      %v9426 = vunpack.c.l.b16 %v9337
      %v9427 = vunpack.c.l.b16 %v9341
      %v9428 = vunpack.c.l.b16 %v9344
      %v9429 = vunpack.c.l.b16 %v9348
      %v9430 = vunpack.c.l.b16 %v9351
      %v9431 = vunpack.c.l.b16 %v9355
      %v9432 = vunpack.c.l.b16 %v9358
      %v9433 = vunpack.c.l.b16 %v9362
      %v9434 = vunpack.c.l.b16 %v9365
      %v9435 = vunpack.c.l.b16 %v9369
      %v9436 = vunpack.c.l.b16 %v9372
      %v9437 = vunpack.c.l.b16 %v9376
      %v9438 = vunpack.c.l.b16 %v9379
      %v9439 = vunpack.c.l.b16 %v9383
      %v9440 = vunpack.c.l.b16 %v9386
      %v9441 = vunpack.c.l.b16 %v9390
      %v9442 = vunpack.c.l.b16 %v9393
      %v9443 = vpack.c.b16 %v9412, %v9411
      %v9444 = vpack.c.b16 %v9414, %v9413
      %v9445 = vpack.c.b16 %v9416, %v9415
      %v9446 = vpack.c.b16 %v9418, %v9417
      %v9447 = vpack.c.b16 %v9420, %v9419
      %v9448 = vpack.c.b16 %v9422, %v9421
      %v9449 = vpack.c.b16 %v9424, %v9423
      %v9450 = vpack.c.b16 %v9426, %v9425
      %v9451 = vpack.c.b16 %v9428, %v9427
      %v9452 = vpack.c.b16 %v9430, %v9429
      %v9453 = vpack.c.b16 %v9432, %v9431
      %v9454 = vpack.c.b16 %v9434, %v9433
      %v9455 = vpack.c.b16 %v9436, %v9435
      %v9456 = vpack.c.b16 %v9438, %v9437
      %v9457 = vpack.c.b16 %v9440, %v9439
      %v9458 = vpack.c.b16 %v9442, %v9441
      %v9491 = vunpack.c.l.b16 %v9395
      %v9492 = vunpack.c.l.b16 %v9396
      %v9493 = vunpack.c.l.b16 %v9397
      %v9494 = vunpack.c.l.b16 %v9398
      %v9495 = vunpack.c.l.b16 %v9399
      %v9496 = vunpack.c.l.b16 %v9400
      %v9497 = vunpack.c.l.b16 %v9401
      %v9498 = vunpack.c.l.b16 %v9402
      %v9499 = vunpack.c.l.b16 %v9403
      %v9500 = vunpack.c.l.b16 %v9404
      %v9501 = vunpack.c.l.b16 %v9405
      %v9502 = vunpack.c.l.b16 %v9406
      %v9503 = vunpack.c.l.b16 %v9407
      %v9504 = vunpack.c.l.b16 %v9408
      %v9505 = vunpack.c.l.b16 %v9409
      %v9506 = vunpack.c.l.b16 %v9410
      %v9507 = vpack.c.b16 %v9492, %v9491
      %v9508 = vpack.c.b16 %v9494, %v9493
      %v9509 = vpack.c.b16 %v9496, %v9495
      %v9510 = vpack.c.b16 %v9498, %v9497
      %v9511 = vpack.c.b16 %v9500, %v9499
      %v9512 = vpack.c.b16 %v9502, %v9501
      %v9513 = vpack.c.b16 %v9504, %v9503
      %v9514 = vpack.c.b16 %v9506, %v9505
      %9523 = vmatprep.subr.bf16.mxu0 0
      %9524 = vmatpush1.bf16.msra.mxu0 %v9507
      %9525 = vmatprep.subr.bf16.mxu0 0
      %9526 = vmatpush1.bf16.msra.mxu0 %v9508
      %9527 = vmatprep.subr.bf16.mxu0 0
      %9528 = vmatpush1.bf16.msra.mxu0 %v9509
      %9529 = vmatprep.subr.bf16.mxu0 0
      %9530 = vmatpush1.bf16.msra.mxu0 %v9510
      %9531 = vmatprep.subr.bf16.mxu0 0
      %9532 = vmatpush1.bf16.msra.mxu0 %v9511
      %9533 = vmatprep.subr.bf16.mxu0 0
      %9534 = vmatpush1.bf16.msra.mxu0 %v9512
      %9535 = vmatprep.subr.bf16.mxu0 0
      %9536 = vmatpush1.bf16.msra.mxu0 %v9513
      %9537 = vmatprep.subr.bf16.mxu0 0
      %9538 = vmatpush1.bf16.msra.mxu0 %v9514
      %9539 = vmatprep.subr.bf16.mxu0 0
      %9540 = vmatpush1.bf16.msra.mxu0 0
      %9541 = vmatprep.subr.bf16.mxu0 0
      %9542 = vmatpush1.bf16.msra.mxu0 0
      %9543 = vmatprep.subr.bf16.mxu0 0
      %9544 = vmatpush1.bf16.msra.mxu0 0
      %9545 = vmatprep.subr.bf16.mxu0 0
      %9546 = vmatpush1.bf16.msra.mxu0 0
      %9547 = vmatprep.subr.bf16.mxu0 0
      %9548 = vmatpush1.bf16.msra.mxu0 0
      %9549 = vmatprep.subr.bf16.mxu0 0
      %9550 = vmatpush1.bf16.msra.mxu0 0
      %9551 = vmatprep.subr.bf16.mxu0 0
      %9552 = vmatpush1.bf16.msra.mxu0 0
      %9553 = vmatprep.subr.bf16.mxu0 0
      %9554 = vmatpush1.bf16.msra.mxu0 0
      %9555 = vmatprep.mubr.bf16.mxu0 0
      %9556 = vmatmul.mubr.bf16.gmra.mrb[0].mxu0 %v9443
      %v9557 = vpop.f32.mrb[0].mxu0
      %v9558 = vadd.f32 0.0, %v9557
      %v9559 = vpop.f32.mrb[0].mxu0
      %v9560 = vpop.f32.mrb[0].mxu0
      %v9561 = vadd.f32 0.0, %v9560
      %v9562 = vpop.f32.mrb[0].mxu0
      %9563 = vmatprep.mubr.bf16.mxu0 0
      %9564 = vmatmul.mubr.bf16.gmra.mrb[0].mxu0 %v9444
      %v9565 = vpop.f32.mrb[0].mxu0
      %v9566 = vadd.f32 0.0, %v9565
      %v9567 = vpop.f32.mrb[0].mxu0
      %v9568 = vpop.f32.mrb[0].mxu0
      %v9569 = vadd.f32 0.0, %v9568
      %v9570 = vpop.f32.mrb[0].mxu0
      %9571 = vmatprep.mubr.bf16.mxu0 0
      %9572 = vmatmul.mubr.bf16.gmra.mrb[0].mxu0 %v9445
      %v9573 = vpop.f32.mrb[0].mxu0
      %v9574 = vadd.f32 0.0, %v9573
      %v9575 = vpop.f32.mrb[0].mxu0
      %v9576 = vpop.f32.mrb[0].mxu0
      %v9577 = vadd.f32 0.0, %v9576
      %v9578 = vpop.f32.mrb[0].mxu0
      %9579 = vmatprep.mubr.bf16.mxu0 0
      %9580 = vmatmul.mubr.bf16.gmra.mrb[0].mxu0 %v9446
      %v9581 = vpop.f32.mrb[0].mxu0
      %v9582 = vadd.f32 0.0, %v9581
      %v9583 = vpop.f32.mrb[0].mxu0
      %v9584 = vpop.f32.mrb[0].mxu0
      %v9585 = vadd.f32 0.0, %v9584
      %v9586 = vpop.f32.mrb[0].mxu0
      %9587 = vmatprep.mubr.bf16.mxu0 0
      %9588 = vmatmul.mubr.bf16.gmra.mrb[0].mxu0 %v9447
      %v9589 = vpop.f32.mrb[0].mxu0
      %v9590 = vadd.f32 0.0, %v9589
      %v9591 = vpop.f32.mrb[0].mxu0
      %v9592 = vpop.f32.mrb[0].mxu0
      %v9593 = vadd.f32 0.0, %v9592
      %v9594 = vpop.f32.mrb[0].mxu0
      %9595 = vmatprep.mubr.bf16.mxu0 0
      %9596 = vmatmul.mubr.bf16.gmra.mrb[0].mxu0 %v9448
      %v9597 = vpop.f32.mrb[0].mxu0
      %v9598 = vadd.f32 0.0, %v9597
      %v9599 = vpop.f32.mrb[0].mxu0
      %v9600 = vpop.f32.mrb[0].mxu0
      %v9601 = vadd.f32 0.0, %v9600
      %v9602 = vpop.f32.mrb[0].mxu0
      %9603 = vmatprep.mubr.bf16.mxu0 0
      %9604 = vmatmul.mubr.bf16.gmra.mrb[0].mxu0 %v9449
      %v9605 = vpop.f32.mrb[0].mxu0
      %v9606 = vadd.f32 0.0, %v9605
      %v9607 = vpop.f32.mrb[0].mxu0
      %v9608 = vpop.f32.mrb[0].mxu0
      %v9609 = vadd.f32 0.0, %v9608
      %v9610 = vpop.f32.mrb[0].mxu0
      %9611 = vmatprep.mubr.bf16.mxu0 0
      %9612 = vmatmul.mubr.bf16.gmra.mrb[0].mxu0 %v9450
      %v9613 = vpop.f32.mrb[0].mxu0
      %v9614 = vadd.f32 0.0, %v9613
      %v9615 = vpop.f32.mrb[0].mxu0
      %v9616 = vpop.f32.mrb[0].mxu0
      %v9617 = vadd.f32 0.0, %v9616
      %v9618 = vpop.f32.mrb[0].mxu0
      %9619 = vmatprep.mubr.bf16.mxu0 0
      %9620 = vmatmul.mubr.bf16.gmra.mrb[0].mxu0 %v9451
      %v9621 = vpop.f32.mrb[0].mxu0
      %v9622 = vadd.f32 0.0, %v9621
      %v9623 = vpop.f32.mrb[0].mxu0
      %v9624 = vpop.f32.mrb[0].mxu0
      %v9625 = vadd.f32 0.0, %v9624
      %v9626 = vpop.f32.mrb[0].mxu0
      %9627 = vmatprep.mubr.bf16.mxu0 0
      %9628 = vmatmul.mubr.bf16.gmra.mrb[0].mxu0 %v9452
      %v9629 = vpop.f32.mrb[0].mxu0
      %v9630 = vadd.f32 0.0, %v9629
      %v9631 = vpop.f32.mrb[0].mxu0
      %v9632 = vpop.f32.mrb[0].mxu0
      %v9633 = vadd.f32 0.0, %v9632
      %v9634 = vpop.f32.mrb[0].mxu0
      %9635 = vmatprep.mubr.bf16.mxu0 0
      %9636 = vmatmul.mubr.bf16.gmra.mrb[0].mxu0 %v9453
      %v9637 = vpop.f32.mrb[0].mxu0
      %v9638 = vadd.f32 0.0, %v9637
      %v9639 = vpop.f32.mrb[0].mxu0
      %v9640 = vpop.f32.mrb[0].mxu0
      %v9641 = vadd.f32 0.0, %v9640
      %v9642 = vpop.f32.mrb[0].mxu0
      %9643 = vmatprep.mubr.bf16.mxu0 0
      %9644 = vmatmul.mubr.bf16.gmra.mrb[0].mxu0 %v9454
      %v9645 = vpop.f32.mrb[0].mxu0
      %v9646 = vadd.f32 0.0, %v9645
      %v9647 = vpop.f32.mrb[0].mxu0
      %v9648 = vpop.f32.mrb[0].mxu0
      %v9649 = vadd.f32 0.0, %v9648
      %v9650 = vpop.f32.mrb[0].mxu0
      %9651 = vmatprep.mubr.bf16.mxu0 0
      %9652 = vmatmul.mubr.bf16.gmra.mrb[0].mxu0 %v9455
      %v9653 = vpop.f32.mrb[0].mxu0
      %v9654 = vadd.f32 0.0, %v9653
      %v9655 = vpop.f32.mrb[0].mxu0
      %v9656 = vpop.f32.mrb[0].mxu0
      %v9657 = vadd.f32 0.0, %v9656
      %v9658 = vpop.f32.mrb[0].mxu0
      %9659 = vmatprep.mubr.bf16.mxu0 0
      %9660 = vmatmul.mubr.bf16.gmra.mrb[0].mxu0 %v9456
      %v9661 = vpop.f32.mrb[0].mxu0
      %v9662 = vadd.f32 0.0, %v9661
      %v9663 = vpop.f32.mrb[0].mxu0
      %v9664 = vpop.f32.mrb[0].mxu0
      %v9665 = vadd.f32 0.0, %v9664
      %v9666 = vpop.f32.mrb[0].mxu0
      %9667 = vmatprep.mubr.bf16.mxu0 0
      %9668 = vmatmul.mubr.bf16.gmra.mrb[0].mxu0 %v9457
      %v9669 = vpop.f32.mrb[0].mxu0
      %v9670 = vadd.f32 0.0, %v9669
      %v9671 = vpop.f32.mrb[0].mxu0
      %v9672 = vpop.f32.mrb[0].mxu0
      %v9673 = vadd.f32 0.0, %v9672
      %v9674 = vpop.f32.mrb[0].mxu0
      %9675 = vmatprep.mubr.bf16.mxu0 0
      %9676 = vmatmul.mubr.bf16.gmra.mrb[0].mxu0 %v9458
      %v9677 = vpop.f32.mrb[0].mxu0
      %v9678 = vadd.f32 0.0, %v9677
      %v9679 = vpop.f32.mrb[0].mxu0
      %v9680 = vpop.f32.mrb[0].mxu0
      %v9681 = vadd.f32 0.0, %v9680
      %v9682 = vpop.f32.mrb[0].mxu0
      %9683 = vdwg.mxu0
      %v9684 = vadd.f32 %v9186, %v9558
      %v9685 = vadd.f32 %v9187, %v9561
      %v9686 = vadd.f32 %v9188, %v9566
      %v9687 = vadd.f32 %v9189, %v9569
      %v9688 = vadd.f32 %v9190, %v9574
      %v9689 = vadd.f32 %v9191, %v9577
      %v9690 = vadd.f32 %v9192, %v9582
      %v9691 = vadd.f32 %v9193, %v9585
      %v9692 = vadd.f32 %v9194, %v9590
      %v9693 = vadd.f32 %v9195, %v9593
      %v9694 = vadd.f32 %v9196, %v9598
      %v9695 = vadd.f32 %v9197, %v9601
      %v9696 = vadd.f32 %v9198, %v9606
      %v9697 = vadd.f32 %v9199, %v9609
      %v9698 = vadd.f32 %v9200, %v9614
      %v9699 = vadd.f32 %v9201, %v9617
      %v9700 = vadd.f32 %v9202, %v9622
      %v9701 = vadd.f32 %v9203, %v9625
      %v9702 = vadd.f32 %v9204, %v9630
      %v9703 = vadd.f32 %v9205, %v9633
      %v9704 = vadd.f32 %v9206, %v9638
      %v9705 = vadd.f32 %v9207, %v9641
      %v9706 = vadd.f32 %v9208, %v9646
      %v9707 = vadd.f32 %v9209, %v9649
      %v9708 = vadd.f32 %v9210, %v9654
      %v9709 = vadd.f32 %v9211, %v9657
      %v9710 = vadd.f32 %v9212, %v9662
      %v9711 = vadd.f32 %v9213, %v9665
      %v9712 = vadd.f32 %v9214, %v9670
      %v9713 = vadd.f32 %v9215, %v9673
      %v9714 = vadd.f32 %v9216, %v9678
      %v9715 = vadd.f32 %v9217, %v9681
      %s9716 = scalar_lea.vmem [#allocation3], 24
      %v9717 = vld [vmem:[%s9716] sm:$0xf]
      %v9718 = vld [vmem:[%s9716 + $0x4] sm:$0xf]
      %v9719 = vld [vmem:[%s9716 + $0xc] sm:$0xf]
      %v9720 = vld [vmem:[%s9716 + $0x10] sm:$0xf]
      %v9721 = vld [vmem:[%s9716 + $0x18] sm:$0xf]
      %v9722 = vld [vmem:[%s9716 + $0x1c] sm:$0xf]
      %v9723 = vld [vmem:[%s9716 + $0x24] sm:$0xf]
      %v9724 = vld [vmem:[%s9716 + $0x28] sm:$0xf]
      %v9725 = vld [vmem:[%s9716 + $0x30] sm:$0xf]
      %v9726 = vld [vmem:[%s9716 + $0x34] sm:$0xf]
      %v9727 = vld [vmem:[%s9716 + $0x3c] sm:$0xf]
      %v9728 = vld [vmem:[%s9716 + $0x40] sm:$0xf]
      %v9729 = vld [vmem:[%s9716 + $0x48] sm:$0xf]
      %v9730 = vld [vmem:[%s9716 + $0x4c] sm:$0xf]
      %v9731 = vld [vmem:[%s9716 + $0x54] sm:$0xf]
      %v9732 = vld [vmem:[%s9716 + $0x58] sm:$0xf]
      %v9733 = vld [vmem:[%s9716 + $0x60] sm:$0xf]
      %v9734 = vld [vmem:[%s9716 + $0x64] sm:$0xf]
      %v9735 = vld [vmem:[%s9716 + $0x6c] sm:$0xf]
      %v9736 = vld [vmem:[%s9716 + $0x70] sm:$0xf]
      %v9737 = vld [vmem:[%s9716 + $0x78] sm:$0xf]
      %v9738 = vld [vmem:[%s9716 + $0x7c] sm:$0xf]
      %v9739 = vld [vmem:[%s9716 + $0x84] sm:$0xf]
      %v9740 = vld [vmem:[%s9716 + $0x88] sm:$0xf]
      %v9741 = vld [vmem:[%s9716 + $0x90] sm:$0xf]
      %v9742 = vld [vmem:[%s9716 + $0x94] sm:$0xf]
      %v9743 = vld [vmem:[%s9716 + $0x9c] sm:$0xf]
      %v9744 = vld [vmem:[%s9716 + $0xa0] sm:$0xf]
      %v9745 = vld [vmem:[%s9716 + $0xa8] sm:$0xf]
      %v9746 = vld [vmem:[%s9716 + $0xac] sm:$0xf]
      %v9747 = vld [vmem:[%s9716 + $0xb4] sm:$0xf]
      %v9748 = vld [vmem:[%s9716 + $0xb8] sm:$0xf]
      %s9749 = scalar_lea.vmem %s3, 384
      %v9750 = vld [vmem:[%s9749] sm:$0xf]
      %v9751 = vld [vmem:[%s9749 + $0x4] sm:$0xf]
      %v9752 = vld [vmem:[%s9749 + $0x8] sm:$0xf]
      %v9753 = vld [vmem:[%s9749 + $0xc] sm:$0xf]
      %v9754 = vld [vmem:[%s9749 + $0x10] sm:$0xf]
      %v9755 = vld [vmem:[%s9749 + $0x14] sm:$0xf]
      %v9756 = vld [vmem:[%s9749 + $0x18] sm:$0xf]
      %v9757 = vld [vmem:[%s9749 + $0x1c] sm:$0xf]
      %v9758 = vld [vmem:[%s9749 + $0x20] sm:$0xf]
      %v9759 = vld [vmem:[%s9749 + $0x24] sm:$0xf]
      %v9760 = vld [vmem:[%s9749 + $0x28] sm:$0xf]
      %v9761 = vld [vmem:[%s9749 + $0x2c] sm:$0xf]
      %v9762 = vld [vmem:[%s9749 + $0x30] sm:$0xf]
      %v9763 = vld [vmem:[%s9749 + $0x34] sm:$0xf]
      %v9764 = vld [vmem:[%s9749 + $0x38] sm:$0xf]
      %v9765 = vld [vmem:[%s9749 + $0x3c] sm:$0xf]
      %v9798 = vunpack.c.l.b16 %v9717
      %v9799 = vunpack.c.l.b16 %v9718
      %v9800 = vunpack.c.l.b16 %v9719
      %v9801 = vunpack.c.l.b16 %v9720
      %v9802 = vunpack.c.l.b16 %v9721
      %v9803 = vunpack.c.l.b16 %v9722
      %v9804 = vunpack.c.l.b16 %v9723
      %v9805 = vunpack.c.l.b16 %v9724
      %v9806 = vunpack.c.l.b16 %v9725
      %v9807 = vunpack.c.l.b16 %v9726
      %v9808 = vunpack.c.l.b16 %v9727
      %v9809 = vunpack.c.l.b16 %v9728
      %v9810 = vunpack.c.l.b16 %v9729
      %v9811 = vunpack.c.l.b16 %v9730
      %v9812 = vunpack.c.l.b16 %v9731
      %v9813 = vunpack.c.l.b16 %v9732
      %v9814 = vunpack.c.l.b16 %v9733
      %v9815 = vunpack.c.l.b16 %v9734
      %v9816 = vunpack.c.l.b16 %v9735
      %v9817 = vunpack.c.l.b16 %v9736
      %v9818 = vunpack.c.l.b16 %v9737
      %v9819 = vunpack.c.l.b16 %v9738
      %v9820 = vunpack.c.l.b16 %v9739
      %v9821 = vunpack.c.l.b16 %v9740
      %v9822 = vunpack.c.l.b16 %v9741
      %v9823 = vunpack.c.l.b16 %v9742
      %v9824 = vunpack.c.l.b16 %v9743
      %v9825 = vunpack.c.l.b16 %v9744
      %v9826 = vunpack.c.l.b16 %v9745
      %v9827 = vunpack.c.l.b16 %v9746
      %v9828 = vunpack.c.l.b16 %v9747
      %v9829 = vunpack.c.l.b16 %v9748
      %v9830 = vpack.c.b16 %v9799, %v9798
      %v9831 = vpack.c.b16 %v9801, %v9800
      %v9832 = vpack.c.b16 %v9803, %v9802
      %v9833 = vpack.c.b16 %v9805, %v9804
      %v9834 = vpack.c.b16 %v9807, %v9806
      %v9835 = vpack.c.b16 %v9809, %v9808
      %v9836 = vpack.c.b16 %v9811, %v9810
      %v9837 = vpack.c.b16 %v9813, %v9812
      %v9838 = vpack.c.b16 %v9815, %v9814
      %v9839 = vpack.c.b16 %v9817, %v9816
      %v9840 = vpack.c.b16 %v9819, %v9818
      %v9841 = vpack.c.b16 %v9821, %v9820
      %v9842 = vpack.c.b16 %v9823, %v9822
      %v9843 = vpack.c.b16 %v9825, %v9824
      %v9844 = vpack.c.b16 %v9827, %v9826
      %v9845 = vpack.c.b16 %v9829, %v9828
      %v9878 = vunpack.c.l.b16 %v9750
      %v9879 = vunpack.c.l.b16 %v9751
      %v9880 = vunpack.c.l.b16 %v9752
      %v9881 = vunpack.c.l.b16 %v9753
      %v9882 = vunpack.c.l.b16 %v9754
      %v9883 = vunpack.c.l.b16 %v9755
      %v9884 = vunpack.c.l.b16 %v9756
      %v9885 = vunpack.c.l.b16 %v9757
      %v9886 = vunpack.c.l.b16 %v9758
      %v9887 = vunpack.c.l.b16 %v9759
      %v9888 = vunpack.c.l.b16 %v9760
      %v9889 = vunpack.c.l.b16 %v9761
      %v9890 = vunpack.c.l.b16 %v9762
      %v9891 = vunpack.c.l.b16 %v9763
      %v9892 = vunpack.c.l.b16 %v9764
      %v9893 = vunpack.c.l.b16 %v9765
      %v9894 = vpack.c.b16 %v9879, %v9878
      %v9895 = vpack.c.b16 %v9881, %v9880
      %v9896 = vpack.c.b16 %v9883, %v9882
      %v9897 = vpack.c.b16 %v9885, %v9884
      %v9898 = vpack.c.b16 %v9887, %v9886
      %v9899 = vpack.c.b16 %v9889, %v9888
      %v9900 = vpack.c.b16 %v9891, %v9890
      %v9901 = vpack.c.b16 %v9893, %v9892
      %9910 = vmatprep.subr.bf16.mxu0 0
      %9911 = vmatpush1.bf16.msra.mxu0 %v9894
      %9912 = vmatprep.subr.bf16.mxu0 0
      %9913 = vmatpush1.bf16.msra.mxu0 %v9895
      %9914 = vmatprep.subr.bf16.mxu0 0
      %9915 = vmatpush1.bf16.msra.mxu0 %v9896
      %9916 = vmatprep.subr.bf16.mxu0 0
      %9917 = vmatpush1.bf16.msra.mxu0 %v9897
      %9918 = vmatprep.subr.bf16.mxu0 0
      %9919 = vmatpush1.bf16.msra.mxu0 %v9898
      %9920 = vmatprep.subr.bf16.mxu0 0
      %9921 = vmatpush1.bf16.msra.mxu0 %v9899
      %9922 = vmatprep.subr.bf16.mxu0 0
      %9923 = vmatpush1.bf16.msra.mxu0 %v9900
      %9924 = vmatprep.subr.bf16.mxu0 0
      %9925 = vmatpush1.bf16.msra.mxu0 %v9901
      %9926 = vmatprep.subr.bf16.mxu0 0
      %9927 = vmatpush1.bf16.msra.mxu0 0
      %9928 = vmatprep.subr.bf16.mxu0 0
      %9929 = vmatpush1.bf16.msra.mxu0 0
      %9930 = vmatprep.subr.bf16.mxu0 0
      %9931 = vmatpush1.bf16.msra.mxu0 0
      %9932 = vmatprep.subr.bf16.mxu0 0
      %9933 = vmatpush1.bf16.msra.mxu0 0
      %9934 = vmatprep.subr.bf16.mxu0 0
      %9935 = vmatpush1.bf16.msra.mxu0 0
      %9936 = vmatprep.subr.bf16.mxu0 0
      %9937 = vmatpush1.bf16.msra.mxu0 0
      %9938 = vmatprep.subr.bf16.mxu0 0
      %9939 = vmatpush1.bf16.msra.mxu0 0
      %9940 = vmatprep.subr.bf16.mxu0 0
      %9941 = vmatpush1.bf16.msra.mxu0 0
      %9942 = vmatprep.mubr.bf16.mxu0 0
      %9943 = vmatmul.mubr.bf16.gmra.mrb[0].mxu0 %v9830
      %v9944 = vpop.f32.mrb[0].mxu0
      %v9945 = vadd.f32 0.0, %v9944
      %v9946 = vpop.f32.mrb[0].mxu0
      %v9947 = vpop.f32.mrb[0].mxu0
      %v9948 = vadd.f32 0.0, %v9947
      %v9949 = vpop.f32.mrb[0].mxu0
      %9950 = vmatprep.mubr.bf16.mxu0 0
      %9951 = vmatmul.mubr.bf16.gmra.mrb[0].mxu0 %v9831
      %v9952 = vpop.f32.mrb[0].mxu0
      %v9953 = vadd.f32 0.0, %v9952
      %v9954 = vpop.f32.mrb[0].mxu0
      %v9955 = vpop.f32.mrb[0].mxu0
      %v9956 = vadd.f32 0.0, %v9955
      %v9957 = vpop.f32.mrb[0].mxu0
      %9958 = vmatprep.mubr.bf16.mxu0 0
      %9959 = vmatmul.mubr.bf16.gmra.mrb[0].mxu0 %v9832
      %v9960 = vpop.f32.mrb[0].mxu0
      %v9961 = vadd.f32 0.0, %v9960
      %v9962 = vpop.f32.mrb[0].mxu0
      %v9963 = vpop.f32.mrb[0].mxu0
      %v9964 = vadd.f32 0.0, %v9963
      %v9965 = vpop.f32.mrb[0].mxu0
      %9966 = vmatprep.mubr.bf16.mxu0 0
      %9967 = vmatmul.mubr.bf16.gmra.mrb[0].mxu0 %v9833
      %v9968 = vpop.f32.mrb[0].mxu0
      %v9969 = vadd.f32 0.0, %v9968
      %v9970 = vpop.f32.mrb[0].mxu0
      %v9971 = vpop.f32.mrb[0].mxu0
      %v9972 = vadd.f32 0.0, %v9971
      %v9973 = vpop.f32.mrb[0].mxu0
      %9974 = vmatprep.mubr.bf16.mxu0 0
      %9975 = vmatmul.mubr.bf16.gmra.mrb[0].mxu0 %v9834
      %v9976 = vpop.f32.mrb[0].mxu0
      %v9977 = vadd.f32 0.0, %v9976
      %v9978 = vpop.f32.mrb[0].mxu0
      %v9979 = vpop.f32.mrb[0].mxu0
      %v9980 = vadd.f32 0.0, %v9979
      %v9981 = vpop.f32.mrb[0].mxu0
      %9982 = vmatprep.mubr.bf16.mxu0 0
      %9983 = vmatmul.mubr.bf16.gmra.mrb[0].mxu0 %v9835
      %v9984 = vpop.f32.mrb[0].mxu0
      %v9985 = vadd.f32 0.0, %v9984
      %v9986 = vpop.f32.mrb[0].mxu0
      %v9987 = vpop.f32.mrb[0].mxu0
      %v9988 = vadd.f32 0.0, %v9987
      %v9989 = vpop.f32.mrb[0].mxu0
      %9990 = vmatprep.mubr.bf16.mxu0 0
      %9991 = vmatmul.mubr.bf16.gmra.mrb[0].mxu0 %v9836
      %v9992 = vpop.f32.mrb[0].mxu0
      %v9993 = vadd.f32 0.0, %v9992
      %v9994 = vpop.f32.mrb[0].mxu0
      %v9995 = vpop.f32.mrb[0].mxu0
      %v9996 = vadd.f32 0.0, %v9995
      %v9997 = vpop.f32.mrb[0].mxu0
      %9998 = vmatprep.mubr.bf16.mxu0 0
      %9999 = vmatmul.mubr.bf16.gmra.mrb[0].mxu0 %v9837
      %v10000 = vpop.f32.mrb[0].mxu0
      %v10001 = vadd.f32 0.0, %v10000
      %v10002 = vpop.f32.mrb[0].mxu0
      %v10003 = vpop.f32.mrb[0].mxu0
      %v10004 = vadd.f32 0.0, %v10003
      %v10005 = vpop.f32.mrb[0].mxu0
      %10006 = vmatprep.mubr.bf16.mxu0 0
      %10007 = vmatmul.mubr.bf16.gmra.mrb[0].mxu0 %v9838
      %v10008 = vpop.f32.mrb[0].mxu0
      %v10009 = vadd.f32 0.0, %v10008
      %v10010 = vpop.f32.mrb[0].mxu0
      %v10011 = vpop.f32.mrb[0].mxu0
      %v10012 = vadd.f32 0.0, %v10011
      %v10013 = vpop.f32.mrb[0].mxu0
      %10014 = vmatprep.mubr.bf16.mxu0 0
      %10015 = vmatmul.mubr.bf16.gmra.mrb[0].mxu0 %v9839
      %v10016 = vpop.f32.mrb[0].mxu0
      %v10017 = vadd.f32 0.0, %v10016
      %v10018 = vpop.f32.mrb[0].mxu0
      %v10019 = vpop.f32.mrb[0].mxu0
      %v10020 = vadd.f32 0.0, %v10019
      %v10021 = vpop.f32.mrb[0].mxu0
      %10022 = vmatprep.mubr.bf16.mxu0 0
      %10023 = vmatmul.mubr.bf16.gmra.mrb[0].mxu0 %v9840
      %v10024 = vpop.f32.mrb[0].mxu0
      %v10025 = vadd.f32 0.0, %v10024
      %v10026 = vpop.f32.mrb[0].mxu0
      %v10027 = vpop.f32.mrb[0].mxu0
      %v10028 = vadd.f32 0.0, %v10027
      %v10029 = vpop.f32.mrb[0].mxu0
      %10030 = vmatprep.mubr.bf16.mxu0 0
      %10031 = vmatmul.mubr.bf16.gmra.mrb[0].mxu0 %v9841
      %v10032 = vpop.f32.mrb[0].mxu0
      %v10033 = vadd.f32 0.0, %v10032
      %v10034 = vpop.f32.mrb[0].mxu0
      %v10035 = vpop.f32.mrb[0].mxu0
      %v10036 = vadd.f32 0.0, %v10035
      %v10037 = vpop.f32.mrb[0].mxu0
      %10038 = vmatprep.mubr.bf16.mxu0 0
      %10039 = vmatmul.mubr.bf16.gmra.mrb[0].mxu0 %v9842
      %v10040 = vpop.f32.mrb[0].mxu0
      %v10041 = vadd.f32 0.0, %v10040
      %v10042 = vpop.f32.mrb[0].mxu0
      %v10043 = vpop.f32.mrb[0].mxu0
      %v10044 = vadd.f32 0.0, %v10043
      %v10045 = vpop.f32.mrb[0].mxu0
      %10046 = vmatprep.mubr.bf16.mxu0 0
      %10047 = vmatmul.mubr.bf16.gmra.mrb[0].mxu0 %v9843
      %v10048 = vpop.f32.mrb[0].mxu0
      %v10049 = vadd.f32 0.0, %v10048
      %v10050 = vpop.f32.mrb[0].mxu0
      %v10051 = vpop.f32.mrb[0].mxu0
      %v10052 = vadd.f32 0.0, %v10051
      %v10053 = vpop.f32.mrb[0].mxu0
      %10054 = vmatprep.mubr.bf16.mxu0 0
      %10055 = vmatmul.mubr.bf16.gmra.mrb[0].mxu0 %v9844
      %v10056 = vpop.f32.mrb[0].mxu0
      %v10057 = vadd.f32 0.0, %v10056
      %v10058 = vpop.f32.mrb[0].mxu0
      %v10059 = vpop.f32.mrb[0].mxu0
      %v10060 = vadd.f32 0.0, %v10059
      %v10061 = vpop.f32.mrb[0].mxu0
      %10062 = vmatprep.mubr.bf16.mxu0 0
      %10063 = vmatmul.mubr.bf16.gmra.mrb[0].mxu0 %v9845
      %v10064 = vpop.f32.mrb[0].mxu0
      %v10065 = vadd.f32 0.0, %v10064
      %v10066 = vpop.f32.mrb[0].mxu0
      %v10067 = vpop.f32.mrb[0].mxu0
      %v10068 = vadd.f32 0.0, %v10067
      %v10069 = vpop.f32.mrb[0].mxu0
      %10070 = vdwg.mxu0
      %v10071 = vadd.f32 %v9684, %v9945
      %v10072 = vadd.f32 %v9685, %v9948
      %v10073 = vadd.f32 %v9686, %v9953
      %v10074 = vadd.f32 %v9687, %v9956
      %v10075 = vadd.f32 %v9688, %v9961
      %v10076 = vadd.f32 %v9689, %v9964
      %v10077 = vadd.f32 %v9690, %v9969
      %v10078 = vadd.f32 %v9691, %v9972
      %v10079 = vadd.f32 %v9692, %v9977
      %v10080 = vadd.f32 %v9693, %v9980
      %v10081 = vadd.f32 %v9694, %v9985
      %v10082 = vadd.f32 %v9695, %v9988
      %v10083 = vadd.f32 %v9696, %v9993
      %v10084 = vadd.f32 %v9697, %v9996
      %v10085 = vadd.f32 %v9698, %v10001
      %v10086 = vadd.f32 %v9699, %v10004
      %v10087 = vadd.f32 %v9700, %v10009
      %v10088 = vadd.f32 %v9701, %v10012
      %v10089 = vadd.f32 %v9702, %v10017
      %v10090 = vadd.f32 %v9703, %v10020
      %v10091 = vadd.f32 %v9704, %v10025
      %v10092 = vadd.f32 %v9705, %v10028
      %v10093 = vadd.f32 %v9706, %v10033
      %v10094 = vadd.f32 %v9707, %v10036
      %v10095 = vadd.f32 %v9708, %v10041
      %v10096 = vadd.f32 %v9709, %v10044
      %v10097 = vadd.f32 %v9710, %v10049
      %v10098 = vadd.f32 %v9711, %v10052
      %v10099 = vadd.f32 %v9712, %v10057
      %v10100 = vadd.f32 %v9713, %v10060
      %v10101 = vadd.f32 %v9714, %v10065
      %v10102 = vadd.f32 %v9715, %v10068
      %v10103 = vld [vmem:[%s9716] sm:$0xf]
      %v10104 = vld [vmem:[%s9716 + $0x4] sm:$0xf]
      %v10105 = vld [vmem:[%s9716 + $0x8] sm:$0x1]
      %v10106 = vld [vmem:[%s9716 + $0xc] sm:$0xf]
      %v10107 = vld [vmem:[%s9716 + $0x10] sm:$0xf]
      %v10108 = vld [vmem:[%s9716 + $0x14] sm:$0x1]
      %v10109 = vld [vmem:[%s9716 + $0x18] sm:$0xf]
      %v10110 = vld [vmem:[%s9716 + $0x1c] sm:$0xf]
      %v10111 = vld [vmem:[%s9716 + $0x20] sm:$0x1]
      %v10112 = vld [vmem:[%s9716 + $0x24] sm:$0xf]
      %v10113 = vld [vmem:[%s9716 + $0x28] sm:$0xf]
      %v10114 = vld [vmem:[%s9716 + $0x2c] sm:$0x1]
      %v10115 = vld [vmem:[%s9716 + $0x30] sm:$0xf]
      %v10116 = vld [vmem:[%s9716 + $0x34] sm:$0xf]
      %v10117 = vld [vmem:[%s9716 + $0x38] sm:$0x1]
      %v10118 = vld [vmem:[%s9716 + $0x3c] sm:$0xf]
      %v10119 = vld [vmem:[%s9716 + $0x40] sm:$0xf]
      %v10120 = vld [vmem:[%s9716 + $0x44] sm:$0x1]
      %v10121 = vld [vmem:[%s9716 + $0x48] sm:$0xf]
      %v10122 = vld [vmem:[%s9716 + $0x4c] sm:$0xf]
      %v10123 = vld [vmem:[%s9716 + $0x50] sm:$0x1]
      %v10124 = vld [vmem:[%s9716 + $0x54] sm:$0xf]
      %v10125 = vld [vmem:[%s9716 + $0x58] sm:$0xf]
      %v10126 = vld [vmem:[%s9716 + $0x5c] sm:$0x1]
      %v10127 = vld [vmem:[%s9716 + $0x60] sm:$0xf]
      %v10128 = vld [vmem:[%s9716 + $0x64] sm:$0xf]
      %v10129 = vld [vmem:[%s9716 + $0x68] sm:$0x1]
      %v10130 = vld [vmem:[%s9716 + $0x6c] sm:$0xf]
      %v10131 = vld [vmem:[%s9716 + $0x70] sm:$0xf]
      %v10132 = vld [vmem:[%s9716 + $0x74] sm:$0x1]
      %v10133 = vld [vmem:[%s9716 + $0x78] sm:$0xf]
      %v10134 = vld [vmem:[%s9716 + $0x7c] sm:$0xf]
      %v10135 = vld [vmem:[%s9716 + $0x80] sm:$0x1]
      %v10136 = vld [vmem:[%s9716 + $0x84] sm:$0xf]
      %v10137 = vld [vmem:[%s9716 + $0x88] sm:$0xf]
      %v10138 = vld [vmem:[%s9716 + $0x8c] sm:$0x1]
      %v10139 = vld [vmem:[%s9716 + $0x90] sm:$0xf]
      %v10140 = vld [vmem:[%s9716 + $0x94] sm:$0xf]
      %v10141 = vld [vmem:[%s9716 + $0x98] sm:$0x1]
      %v10142 = vld [vmem:[%s9716 + $0x9c] sm:$0xf]
      %v10143 = vld [vmem:[%s9716 + $0xa0] sm:$0xf]
      %v10144 = vld [vmem:[%s9716 + $0xa4] sm:$0x1]
      %v10145 = vld [vmem:[%s9716 + $0xa8] sm:$0xf]
      %v10146 = vld [vmem:[%s9716 + $0xac] sm:$0xf]
      %v10147 = vld [vmem:[%s9716 + $0xb0] sm:$0x1]
      %v10148 = vld [vmem:[%s9716 + $0xb4] sm:$0xf]
      %v10149 = vld [vmem:[%s9716 + $0xb8] sm:$0xf]
      %v10150 = vld [vmem:[%s9716 + $0xbc] sm:$0x1]
      %v10152 = vshrl.u32 %v10103, 16
      %v10154 = vrot.slane %v10152, 4
      %v10155 = vshll.u32 %v10103, 16
      %v10157 = vrot.slane %v10155, 5
      %v10158 = vor.u32 %v10154, %v10157
      %v10159 = vrot.slane %v10158, 4
      %v10161 = vshll.u32 %v10104, 16
      %v10163 = vrot.slane %v10161, 5
      %v10164 = vsel %vm1355, %v10159, %v10163
      %v10165 = vshrl.u32 %v10104, 16
      %v10167 = vrot.slane %v10165, 4
      %v10168 = vor.u32 %v10167, %v10163
      %v10169 = vrot.slane %v10168, 4
      %v10171 = vshll.u32 %v10105, 16
      %v10173 = vrot.slane %v10171, 5
      %v10174 = vsel %vm1355, %v10169, %v10173
      %v10176 = vshrl.u32 %v10106, 16
      %v10178 = vrot.slane %v10176, 4
      %v10179 = vshll.u32 %v10106, 16
      %v10181 = vrot.slane %v10179, 5
      %v10182 = vor.u32 %v10178, %v10181
      %v10183 = vrot.slane %v10182, 4
      %v10185 = vshll.u32 %v10107, 16
      %v10187 = vrot.slane %v10185, 5
      %v10188 = vsel %vm1355, %v10183, %v10187
      %v10189 = vshrl.u32 %v10107, 16
      %v10191 = vrot.slane %v10189, 4
      %v10192 = vor.u32 %v10191, %v10187
      %v10193 = vrot.slane %v10192, 4
      %v10195 = vshll.u32 %v10108, 16
      %v10197 = vrot.slane %v10195, 5
      %v10198 = vsel %vm1355, %v10193, %v10197
      %v10200 = vshrl.u32 %v10109, 16
      %v10202 = vrot.slane %v10200, 4
      %v10203 = vshll.u32 %v10109, 16
      %v10205 = vrot.slane %v10203, 5
      %v10206 = vor.u32 %v10202, %v10205
      %v10207 = vrot.slane %v10206, 4
      %v10209 = vshll.u32 %v10110, 16
      %v10211 = vrot.slane %v10209, 5
      %v10212 = vsel %vm1355, %v10207, %v10211
      %v10213 = vshrl.u32 %v10110, 16
      %v10215 = vrot.slane %v10213, 4
      %v10216 = vor.u32 %v10215, %v10211
      %v10217 = vrot.slane %v10216, 4
      %v10219 = vshll.u32 %v10111, 16
      %v10221 = vrot.slane %v10219, 5
      %v10222 = vsel %vm1355, %v10217, %v10221
      %v10224 = vshrl.u32 %v10112, 16
      %v10226 = vrot.slane %v10224, 4
      %v10227 = vshll.u32 %v10112, 16
      %v10229 = vrot.slane %v10227, 5
      %v10230 = vor.u32 %v10226, %v10229
      %v10231 = vrot.slane %v10230, 4
      %v10233 = vshll.u32 %v10113, 16
      %v10235 = vrot.slane %v10233, 5
      %v10236 = vsel %vm1355, %v10231, %v10235
      %v10237 = vshrl.u32 %v10113, 16
      %v10239 = vrot.slane %v10237, 4
      %v10240 = vor.u32 %v10239, %v10235
      %v10241 = vrot.slane %v10240, 4
      %v10243 = vshll.u32 %v10114, 16
      %v10245 = vrot.slane %v10243, 5
      %v10246 = vsel %vm1355, %v10241, %v10245
      %v10248 = vshrl.u32 %v10115, 16
      %v10250 = vrot.slane %v10248, 4
      %v10251 = vshll.u32 %v10115, 16
      %v10253 = vrot.slane %v10251, 5
      %v10254 = vor.u32 %v10250, %v10253
      %v10255 = vrot.slane %v10254, 4
      %v10257 = vshll.u32 %v10116, 16
      %v10259 = vrot.slane %v10257, 5
      %v10260 = vsel %vm1355, %v10255, %v10259
      %v10261 = vshrl.u32 %v10116, 16
      %v10263 = vrot.slane %v10261, 4
      %v10264 = vor.u32 %v10263, %v10259
      %v10265 = vrot.slane %v10264, 4
      %v10267 = vshll.u32 %v10117, 16
      %v10269 = vrot.slane %v10267, 5
      %v10270 = vsel %vm1355, %v10265, %v10269
      %v10272 = vshrl.u32 %v10118, 16
      %v10274 = vrot.slane %v10272, 4
      %v10275 = vshll.u32 %v10118, 16
      %v10277 = vrot.slane %v10275, 5
      %v10278 = vor.u32 %v10274, %v10277
      %v10279 = vrot.slane %v10278, 4
      %v10281 = vshll.u32 %v10119, 16
      %v10283 = vrot.slane %v10281, 5
      %v10284 = vsel %vm1355, %v10279, %v10283
      %v10285 = vshrl.u32 %v10119, 16
      %v10287 = vrot.slane %v10285, 4
      %v10288 = vor.u32 %v10287, %v10283
      %v10289 = vrot.slane %v10288, 4
      %v10291 = vshll.u32 %v10120, 16
      %v10293 = vrot.slane %v10291, 5
      %v10294 = vsel %vm1355, %v10289, %v10293
      %v10296 = vshrl.u32 %v10121, 16
      %v10298 = vrot.slane %v10296, 4
      %v10299 = vshll.u32 %v10121, 16
      %v10301 = vrot.slane %v10299, 5
      %v10302 = vor.u32 %v10298, %v10301
      %v10303 = vrot.slane %v10302, 4
      %v10305 = vshll.u32 %v10122, 16
      %v10307 = vrot.slane %v10305, 5
      %v10308 = vsel %vm1355, %v10303, %v10307
      %v10309 = vshrl.u32 %v10122, 16
      %v10311 = vrot.slane %v10309, 4
      %v10312 = vor.u32 %v10311, %v10307
      %v10313 = vrot.slane %v10312, 4
      %v10315 = vshll.u32 %v10123, 16
      %v10317 = vrot.slane %v10315, 5
      %v10318 = vsel %vm1355, %v10313, %v10317
      %v10320 = vshrl.u32 %v10124, 16
      %v10322 = vrot.slane %v10320, 4
      %v10323 = vshll.u32 %v10124, 16
      %v10325 = vrot.slane %v10323, 5
      %v10326 = vor.u32 %v10322, %v10325
      %v10327 = vrot.slane %v10326, 4
      %v10329 = vshll.u32 %v10125, 16
      %v10331 = vrot.slane %v10329, 5
      %v10332 = vsel %vm1355, %v10327, %v10331
      %v10333 = vshrl.u32 %v10125, 16
      %v10335 = vrot.slane %v10333, 4
      %v10336 = vor.u32 %v10335, %v10331
      %v10337 = vrot.slane %v10336, 4
      %v10339 = vshll.u32 %v10126, 16
      %v10341 = vrot.slane %v10339, 5
      %v10342 = vsel %vm1355, %v10337, %v10341
      %v10344 = vshrl.u32 %v10127, 16
      %v10346 = vrot.slane %v10344, 4
      %v10347 = vshll.u32 %v10127, 16
      %v10349 = vrot.slane %v10347, 5
      %v10350 = vor.u32 %v10346, %v10349
      %v10351 = vrot.slane %v10350, 4
      %v10353 = vshll.u32 %v10128, 16
      %v10355 = vrot.slane %v10353, 5
      %v10356 = vsel %vm1355, %v10351, %v10355
      %v10357 = vshrl.u32 %v10128, 16
      %v10359 = vrot.slane %v10357, 4
      %v10360 = vor.u32 %v10359, %v10355
      %v10361 = vrot.slane %v10360, 4
      %v10363 = vshll.u32 %v10129, 16
      %v10365 = vrot.slane %v10363, 5
      %v10366 = vsel %vm1355, %v10361, %v10365
      %v10368 = vshrl.u32 %v10130, 16
      %v10370 = vrot.slane %v10368, 4
      %v10371 = vshll.u32 %v10130, 16
      %v10373 = vrot.slane %v10371, 5
      %v10374 = vor.u32 %v10370, %v10373
      %v10375 = vrot.slane %v10374, 4
      %v10377 = vshll.u32 %v10131, 16
      %v10379 = vrot.slane %v10377, 5
      %v10380 = vsel %vm1355, %v10375, %v10379
      %v10381 = vshrl.u32 %v10131, 16
      %v10383 = vrot.slane %v10381, 4
      %v10384 = vor.u32 %v10383, %v10379
      %v10385 = vrot.slane %v10384, 4
      %v10387 = vshll.u32 %v10132, 16
      %v10389 = vrot.slane %v10387, 5
      %v10390 = vsel %vm1355, %v10385, %v10389
      %v10392 = vshrl.u32 %v10133, 16
      %v10394 = vrot.slane %v10392, 4
      %v10395 = vshll.u32 %v10133, 16
      %v10397 = vrot.slane %v10395, 5
      %v10398 = vor.u32 %v10394, %v10397
      %v10399 = vrot.slane %v10398, 4
      %v10401 = vshll.u32 %v10134, 16
      %v10403 = vrot.slane %v10401, 5
      %v10404 = vsel %vm1355, %v10399, %v10403
      %v10405 = vshrl.u32 %v10134, 16
      %v10407 = vrot.slane %v10405, 4
      %v10408 = vor.u32 %v10407, %v10403
      %v10409 = vrot.slane %v10408, 4
      %v10411 = vshll.u32 %v10135, 16
      %v10413 = vrot.slane %v10411, 5
      %v10414 = vsel %vm1355, %v10409, %v10413
      %v10416 = vshrl.u32 %v10136, 16
      %v10418 = vrot.slane %v10416, 4
      %v10419 = vshll.u32 %v10136, 16
      %v10421 = vrot.slane %v10419, 5
      %v10422 = vor.u32 %v10418, %v10421
      %v10423 = vrot.slane %v10422, 4
      %v10425 = vshll.u32 %v10137, 16
      %v10427 = vrot.slane %v10425, 5
      %v10428 = vsel %vm1355, %v10423, %v10427
      %v10429 = vshrl.u32 %v10137, 16
      %v10431 = vrot.slane %v10429, 4
      %v10432 = vor.u32 %v10431, %v10427
      %v10433 = vrot.slane %v10432, 4
      %v10435 = vshll.u32 %v10138, 16
      %v10437 = vrot.slane %v10435, 5
      %v10438 = vsel %vm1355, %v10433, %v10437
      %v10440 = vshrl.u32 %v10139, 16
      %v10442 = vrot.slane %v10440, 4
      %v10443 = vshll.u32 %v10139, 16
      %v10445 = vrot.slane %v10443, 5
      %v10446 = vor.u32 %v10442, %v10445
      %v10447 = vrot.slane %v10446, 4
      %v10449 = vshll.u32 %v10140, 16
      %v10451 = vrot.slane %v10449, 5
      %v10452 = vsel %vm1355, %v10447, %v10451
      %v10453 = vshrl.u32 %v10140, 16
      %v10455 = vrot.slane %v10453, 4
      %v10456 = vor.u32 %v10455, %v10451
      %v10457 = vrot.slane %v10456, 4
      %v10459 = vshll.u32 %v10141, 16
      %v10461 = vrot.slane %v10459, 5
      %v10462 = vsel %vm1355, %v10457, %v10461
      %v10464 = vshrl.u32 %v10142, 16
      %v10466 = vrot.slane %v10464, 4
      %v10467 = vshll.u32 %v10142, 16
      %v10469 = vrot.slane %v10467, 5
      %v10470 = vor.u32 %v10466, %v10469
      %v10471 = vrot.slane %v10470, 4
      %v10473 = vshll.u32 %v10143, 16
      %v10475 = vrot.slane %v10473, 5
      %v10476 = vsel %vm1355, %v10471, %v10475
      %v10477 = vshrl.u32 %v10143, 16
      %v10479 = vrot.slane %v10477, 4
      %v10480 = vor.u32 %v10479, %v10475
      %v10481 = vrot.slane %v10480, 4
      %v10483 = vshll.u32 %v10144, 16
      %v10485 = vrot.slane %v10483, 5
      %v10486 = vsel %vm1355, %v10481, %v10485
      %v10488 = vshrl.u32 %v10145, 16
      %v10490 = vrot.slane %v10488, 4
      %v10491 = vshll.u32 %v10145, 16
      %v10493 = vrot.slane %v10491, 5
      %v10494 = vor.u32 %v10490, %v10493
      %v10495 = vrot.slane %v10494, 4
      %v10497 = vshll.u32 %v10146, 16
      %v10499 = vrot.slane %v10497, 5
      %v10500 = vsel %vm1355, %v10495, %v10499
      %v10501 = vshrl.u32 %v10146, 16
      %v10503 = vrot.slane %v10501, 4
      %v10504 = vor.u32 %v10503, %v10499
      %v10505 = vrot.slane %v10504, 4
      %v10507 = vshll.u32 %v10147, 16
      %v10509 = vrot.slane %v10507, 5
      %v10510 = vsel %vm1355, %v10505, %v10509
      %v10512 = vshrl.u32 %v10148, 16
      %v10514 = vrot.slane %v10512, 4
      %v10515 = vshll.u32 %v10148, 16
      %v10517 = vrot.slane %v10515, 5
      %v10518 = vor.u32 %v10514, %v10517
      %v10519 = vrot.slane %v10518, 4
      %v10521 = vshll.u32 %v10149, 16
      %v10523 = vrot.slane %v10521, 5
      %v10524 = vsel %vm1355, %v10519, %v10523
      %v10525 = vshrl.u32 %v10149, 16
      %v10527 = vrot.slane %v10525, 4
      %v10528 = vor.u32 %v10527, %v10523
      %v10529 = vrot.slane %v10528, 4
      %v10531 = vshll.u32 %v10150, 16
      %v10533 = vrot.slane %v10531, 5
      %v10534 = vsel %vm1355, %v10529, %v10533
      %s10535 = scalar_lea.vmem %s3, 448
      %v10536 = vld [vmem:[%s10535] sm:$0xf]
      %v10537 = vld [vmem:[%s10535 + $0x4] sm:$0xf]
      %v10538 = vld [vmem:[%s10535 + $0x8] sm:$0xf]
      %v10539 = vld [vmem:[%s10535 + $0xc] sm:$0xf]
      %v10540 = vld [vmem:[%s10535 + $0x10] sm:$0xf]
      %v10541 = vld [vmem:[%s10535 + $0x14] sm:$0xf]
      %v10542 = vld [vmem:[%s10535 + $0x18] sm:$0xf]
      %v10543 = vld [vmem:[%s10535 + $0x1c] sm:$0xf]
      %v10544 = vld [vmem:[%s10535 + $0x20] sm:$0xf]
      %v10545 = vld [vmem:[%s10535 + $0x24] sm:$0xf]
      %v10546 = vld [vmem:[%s10535 + $0x28] sm:$0xf]
      %v10547 = vld [vmem:[%s10535 + $0x2c] sm:$0xf]
      %v10548 = vld [vmem:[%s10535 + $0x30] sm:$0xf]
      %v10549 = vld [vmem:[%s10535 + $0x34] sm:$0xf]
      %v10550 = vld [vmem:[%s10535 + $0x38] sm:$0xf]
      %v10551 = vld [vmem:[%s10535 + $0x3c] sm:$0xf]
      %v10552 = vunpack.c.l.b16 %v10164
      %v10553 = vunpack.c.l.b16 %v10174
      %v10554 = vunpack.c.l.b16 %v10188
      %v10555 = vunpack.c.l.b16 %v10198
      %v10556 = vunpack.c.l.b16 %v10212
      %v10557 = vunpack.c.l.b16 %v10222
      %v10558 = vunpack.c.l.b16 %v10236
      %v10559 = vunpack.c.l.b16 %v10246
      %v10560 = vunpack.c.l.b16 %v10260
      %v10561 = vunpack.c.l.b16 %v10270
      %v10562 = vunpack.c.l.b16 %v10284
      %v10563 = vunpack.c.l.b16 %v10294
      %v10564 = vunpack.c.l.b16 %v10308
      %v10565 = vunpack.c.l.b16 %v10318
      %v10566 = vunpack.c.l.b16 %v10332
      %v10567 = vunpack.c.l.b16 %v10342
      %v10568 = vunpack.c.l.b16 %v10356
      %v10569 = vunpack.c.l.b16 %v10366
      %v10570 = vunpack.c.l.b16 %v10380
      %v10571 = vunpack.c.l.b16 %v10390
      %v10572 = vunpack.c.l.b16 %v10404
      %v10573 = vunpack.c.l.b16 %v10414
      %v10574 = vunpack.c.l.b16 %v10428
      %v10575 = vunpack.c.l.b16 %v10438
      %v10576 = vunpack.c.l.b16 %v10452
      %v10577 = vunpack.c.l.b16 %v10462
      %v10578 = vunpack.c.l.b16 %v10476
      %v10579 = vunpack.c.l.b16 %v10486
      %v10580 = vunpack.c.l.b16 %v10500
      %v10581 = vunpack.c.l.b16 %v10510
      %v10582 = vunpack.c.l.b16 %v10524
      %v10583 = vunpack.c.l.b16 %v10534
      %v10584 = vpack.c.b16 %v10553, %v10552
      %v10585 = vpack.c.b16 %v10555, %v10554
      %v10586 = vpack.c.b16 %v10557, %v10556
      %v10587 = vpack.c.b16 %v10559, %v10558
      %v10588 = vpack.c.b16 %v10561, %v10560
      %v10589 = vpack.c.b16 %v10563, %v10562
      %v10590 = vpack.c.b16 %v10565, %v10564
      %v10591 = vpack.c.b16 %v10567, %v10566
      %v10592 = vpack.c.b16 %v10569, %v10568
      %v10593 = vpack.c.b16 %v10571, %v10570
      %v10594 = vpack.c.b16 %v10573, %v10572
      %v10595 = vpack.c.b16 %v10575, %v10574
      %v10596 = vpack.c.b16 %v10577, %v10576
      %v10597 = vpack.c.b16 %v10579, %v10578
      %v10598 = vpack.c.b16 %v10581, %v10580
      %v10599 = vpack.c.b16 %v10583, %v10582
      %v10632 = vunpack.c.l.b16 %v10536
      %v10633 = vunpack.c.l.b16 %v10537
      %v10634 = vunpack.c.l.b16 %v10538
      %v10635 = vunpack.c.l.b16 %v10539
      %v10636 = vunpack.c.l.b16 %v10540
      %v10637 = vunpack.c.l.b16 %v10541
      %v10638 = vunpack.c.l.b16 %v10542
      %v10639 = vunpack.c.l.b16 %v10543
      %v10640 = vunpack.c.l.b16 %v10544
      %v10641 = vunpack.c.l.b16 %v10545
      %v10642 = vunpack.c.l.b16 %v10546
      %v10643 = vunpack.c.l.b16 %v10547
      %v10644 = vunpack.c.l.b16 %v10548
      %v10645 = vunpack.c.l.b16 %v10549
      %v10646 = vunpack.c.l.b16 %v10550
      %v10647 = vunpack.c.l.b16 %v10551
      %v10648 = vpack.c.b16 %v10633, %v10632
      %v10649 = vpack.c.b16 %v10635, %v10634
      %v10650 = vpack.c.b16 %v10637, %v10636
      %v10651 = vpack.c.b16 %v10639, %v10638
      %v10652 = vpack.c.b16 %v10641, %v10640
      %v10653 = vpack.c.b16 %v10643, %v10642
      %v10654 = vpack.c.b16 %v10645, %v10644
      %v10655 = vpack.c.b16 %v10647, %v10646
      %10664 = vmatprep.subr.bf16.mxu0 0
      %10665 = vmatpush1.bf16.msra.mxu0 %v10648
      %10666 = vmatprep.subr.bf16.mxu0 0
      %10667 = vmatpush1.bf16.msra.mxu0 %v10649
      %10668 = vmatprep.subr.bf16.mxu0 0
      %10669 = vmatpush1.bf16.msra.mxu0 %v10650
      %10670 = vmatprep.subr.bf16.mxu0 0
      %10671 = vmatpush1.bf16.msra.mxu0 %v10651
      %10672 = vmatprep.subr.bf16.mxu0 0
      %10673 = vmatpush1.bf16.msra.mxu0 %v10652
      %10674 = vmatprep.subr.bf16.mxu0 0
      %10675 = vmatpush1.bf16.msra.mxu0 %v10653
      %10676 = vmatprep.subr.bf16.mxu0 0
      %10677 = vmatpush1.bf16.msra.mxu0 %v10654
      %10678 = vmatprep.subr.bf16.mxu0 0
      %10679 = vmatpush1.bf16.msra.mxu0 %v10655
      %10680 = vmatprep.subr.bf16.mxu0 0
      %10681 = vmatpush1.bf16.msra.mxu0 0
      %10682 = vmatprep.subr.bf16.mxu0 0
      %10683 = vmatpush1.bf16.msra.mxu0 0
      %10684 = vmatprep.subr.bf16.mxu0 0
      %10685 = vmatpush1.bf16.msra.mxu0 0
      %10686 = vmatprep.subr.bf16.mxu0 0
      %10687 = vmatpush1.bf16.msra.mxu0 0
      %10688 = vmatprep.subr.bf16.mxu0 0
      %10689 = vmatpush1.bf16.msra.mxu0 0
      %10690 = vmatprep.subr.bf16.mxu0 0
      %10691 = vmatpush1.bf16.msra.mxu0 0
      %10692 = vmatprep.subr.bf16.mxu0 0
      %10693 = vmatpush1.bf16.msra.mxu0 0
      %10694 = vmatprep.subr.bf16.mxu0 0
      %10695 = vmatpush1.bf16.msra.mxu0 0
      %10696 = vmatprep.mubr.bf16.mxu0 0
      %10697 = vmatmul.mubr.bf16.gmra.mrb[0].mxu0 %v10584
      %v10698 = vpop.f32.mrb[0].mxu0
      %v10699 = vadd.f32 0.0, %v10698
      %v10700 = vpop.f32.mrb[0].mxu0
      %v10701 = vpop.f32.mrb[0].mxu0
      %v10702 = vadd.f32 0.0, %v10701
      %v10703 = vpop.f32.mrb[0].mxu0
      %10704 = vmatprep.mubr.bf16.mxu0 0
      %10705 = vmatmul.mubr.bf16.gmra.mrb[0].mxu0 %v10585
      %v10706 = vpop.f32.mrb[0].mxu0
      %v10707 = vadd.f32 0.0, %v10706
      %v10708 = vpop.f32.mrb[0].mxu0
      %v10709 = vpop.f32.mrb[0].mxu0
      %v10710 = vadd.f32 0.0, %v10709
      %v10711 = vpop.f32.mrb[0].mxu0
      %10712 = vmatprep.mubr.bf16.mxu0 0
      %10713 = vmatmul.mubr.bf16.gmra.mrb[0].mxu0 %v10586
      %v10714 = vpop.f32.mrb[0].mxu0
      %v10715 = vadd.f32 0.0, %v10714
      %v10716 = vpop.f32.mrb[0].mxu0
      %v10717 = vpop.f32.mrb[0].mxu0
      %v10718 = vadd.f32 0.0, %v10717
      %v10719 = vpop.f32.mrb[0].mxu0
      %10720 = vmatprep.mubr.bf16.mxu0 0
      %10721 = vmatmul.mubr.bf16.gmra.mrb[0].mxu0 %v10587
      %v10722 = vpop.f32.mrb[0].mxu0
      %v10723 = vadd.f32 0.0, %v10722
      %v10724 = vpop.f32.mrb[0].mxu0
      %v10725 = vpop.f32.mrb[0].mxu0
      %v10726 = vadd.f32 0.0, %v10725
      %v10727 = vpop.f32.mrb[0].mxu0
      %10728 = vmatprep.mubr.bf16.mxu0 0
      %10729 = vmatmul.mubr.bf16.gmra.mrb[0].mxu0 %v10588
      %v10730 = vpop.f32.mrb[0].mxu0
      %v10731 = vadd.f32 0.0, %v10730
      %v10732 = vpop.f32.mrb[0].mxu0
      %v10733 = vpop.f32.mrb[0].mxu0
      %v10734 = vadd.f32 0.0, %v10733
      %v10735 = vpop.f32.mrb[0].mxu0
      %10736 = vmatprep.mubr.bf16.mxu0 0
      %10737 = vmatmul.mubr.bf16.gmra.mrb[0].mxu0 %v10589
      %v10738 = vpop.f32.mrb[0].mxu0
      %v10739 = vadd.f32 0.0, %v10738
      %v10740 = vpop.f32.mrb[0].mxu0
      %v10741 = vpop.f32.mrb[0].mxu0
      %v10742 = vadd.f32 0.0, %v10741
      %v10743 = vpop.f32.mrb[0].mxu0
      %10744 = vmatprep.mubr.bf16.mxu0 0
      %10745 = vmatmul.mubr.bf16.gmra.mrb[0].mxu0 %v10590
      %v10746 = vpop.f32.mrb[0].mxu0
      %v10747 = vadd.f32 0.0, %v10746
      %v10748 = vpop.f32.mrb[0].mxu0
      %v10749 = vpop.f32.mrb[0].mxu0
      %v10750 = vadd.f32 0.0, %v10749
      %v10751 = vpop.f32.mrb[0].mxu0
      %10752 = vmatprep.mubr.bf16.mxu0 0
      %10753 = vmatmul.mubr.bf16.gmra.mrb[0].mxu0 %v10591
      %v10754 = vpop.f32.mrb[0].mxu0
      %v10755 = vadd.f32 0.0, %v10754
      %v10756 = vpop.f32.mrb[0].mxu0
      %v10757 = vpop.f32.mrb[0].mxu0
      %v10758 = vadd.f32 0.0, %v10757
      %v10759 = vpop.f32.mrb[0].mxu0
      %10760 = vmatprep.mubr.bf16.mxu0 0
      %10761 = vmatmul.mubr.bf16.gmra.mrb[0].mxu0 %v10592
      %v10762 = vpop.f32.mrb[0].mxu0
      %v10763 = vadd.f32 0.0, %v10762
      %v10764 = vpop.f32.mrb[0].mxu0
      %v10765 = vpop.f32.mrb[0].mxu0
      %v10766 = vadd.f32 0.0, %v10765
      %v10767 = vpop.f32.mrb[0].mxu0
      %10768 = vmatprep.mubr.bf16.mxu0 0
      %10769 = vmatmul.mubr.bf16.gmra.mrb[0].mxu0 %v10593
      %v10770 = vpop.f32.mrb[0].mxu0
      %v10771 = vadd.f32 0.0, %v10770
      %v10772 = vpop.f32.mrb[0].mxu0
      %v10773 = vpop.f32.mrb[0].mxu0
      %v10774 = vadd.f32 0.0, %v10773
      %v10775 = vpop.f32.mrb[0].mxu0
      %10776 = vmatprep.mubr.bf16.mxu0 0
      %10777 = vmatmul.mubr.bf16.gmra.mrb[0].mxu0 %v10594
      %v10778 = vpop.f32.mrb[0].mxu0
      %v10779 = vadd.f32 0.0, %v10778
      %v10780 = vpop.f32.mrb[0].mxu0
      %v10781 = vpop.f32.mrb[0].mxu0
      %v10782 = vadd.f32 0.0, %v10781
      %v10783 = vpop.f32.mrb[0].mxu0
      %10784 = vmatprep.mubr.bf16.mxu0 0
      %10785 = vmatmul.mubr.bf16.gmra.mrb[0].mxu0 %v10595
      %v10786 = vpop.f32.mrb[0].mxu0
      %v10787 = vadd.f32 0.0, %v10786
      %v10788 = vpop.f32.mrb[0].mxu0
      %v10789 = vpop.f32.mrb[0].mxu0
      %v10790 = vadd.f32 0.0, %v10789
      %v10791 = vpop.f32.mrb[0].mxu0
      %10792 = vmatprep.mubr.bf16.mxu0 0
      %10793 = vmatmul.mubr.bf16.gmra.mrb[0].mxu0 %v10596
      %v10794 = vpop.f32.mrb[0].mxu0
      %v10795 = vadd.f32 0.0, %v10794
      %v10796 = vpop.f32.mrb[0].mxu0
      %v10797 = vpop.f32.mrb[0].mxu0
      %v10798 = vadd.f32 0.0, %v10797
      %v10799 = vpop.f32.mrb[0].mxu0
      %10800 = vmatprep.mubr.bf16.mxu0 0
      %10801 = vmatmul.mubr.bf16.gmra.mrb[0].mxu0 %v10597
      %v10802 = vpop.f32.mrb[0].mxu0
      %v10803 = vadd.f32 0.0, %v10802
      %v10804 = vpop.f32.mrb[0].mxu0
      %v10805 = vpop.f32.mrb[0].mxu0
      %v10806 = vadd.f32 0.0, %v10805
      %v10807 = vpop.f32.mrb[0].mxu0
      %10808 = vmatprep.mubr.bf16.mxu0 0
      %10809 = vmatmul.mubr.bf16.gmra.mrb[0].mxu0 %v10598
      %v10810 = vpop.f32.mrb[0].mxu0
      %v10811 = vadd.f32 0.0, %v10810
      %v10812 = vpop.f32.mrb[0].mxu0
      %v10813 = vpop.f32.mrb[0].mxu0
      %v10814 = vadd.f32 0.0, %v10813
      %v10815 = vpop.f32.mrb[0].mxu0
      %10816 = vmatprep.mubr.bf16.mxu0 0
      %10817 = vmatmul.mubr.bf16.gmra.mrb[0].mxu0 %v10599
      %v10818 = vpop.f32.mrb[0].mxu0
      %v10819 = vadd.f32 0.0, %v10818
      %v10820 = vpop.f32.mrb[0].mxu0
      %v10821 = vpop.f32.mrb[0].mxu0
      %v10822 = vadd.f32 0.0, %v10821
      %v10823 = vpop.f32.mrb[0].mxu0
      %10824 = vdwg.mxu0
      %v10825 = vadd.f32 %v10071, %v10699
      %v10826 = vadd.f32 %v10072, %v10702
      %v10827 = vadd.f32 %v10073, %v10707
      %v10828 = vadd.f32 %v10074, %v10710
      %v10829 = vadd.f32 %v10075, %v10715
      %v10830 = vadd.f32 %v10076, %v10718
      %v10831 = vadd.f32 %v10077, %v10723
      %v10832 = vadd.f32 %v10078, %v10726
      %v10833 = vadd.f32 %v10079, %v10731
      %v10834 = vadd.f32 %v10080, %v10734
      %v10835 = vadd.f32 %v10081, %v10739
      %v10836 = vadd.f32 %v10082, %v10742
      %v10837 = vadd.f32 %v10083, %v10747
      %v10838 = vadd.f32 %v10084, %v10750
      %v10839 = vadd.f32 %v10085, %v10755
      %v10840 = vadd.f32 %v10086, %v10758
      %v10841 = vadd.f32 %v10087, %v10763
      %v10842 = vadd.f32 %v10088, %v10766
      %v10843 = vadd.f32 %v10089, %v10771
      %v10844 = vadd.f32 %v10090, %v10774
      %v10845 = vadd.f32 %v10091, %v10779
      %v10846 = vadd.f32 %v10092, %v10782
      %v10847 = vadd.f32 %v10093, %v10787
      %v10848 = vadd.f32 %v10094, %v10790
      %v10849 = vadd.f32 %v10095, %v10795
      %v10850 = vadd.f32 %v10096, %v10798
      %v10851 = vadd.f32 %v10097, %v10803
      %v10852 = vadd.f32 %v10098, %v10806
      %v10853 = vadd.f32 %v10099, %v10811
      %v10854 = vadd.f32 %v10100, %v10814
      %v10855 = vadd.f32 %v10101, %v10819
      %v10856 = vadd.f32 %v10102, %v10822
      %v10857 = vld [vmem:[%s9716] sm:$0xe]
      %v10858 = vld [vmem:[%s9716 + $0xc] sm:$0xe]
      %v10859 = vld [vmem:[%s9716 + $0x18] sm:$0xe]
      %v10860 = vld [vmem:[%s9716 + $0x24] sm:$0xe]
      %v10861 = vld [vmem:[%s9716 + $0x30] sm:$0xe]
      %v10862 = vld [vmem:[%s9716 + $0x3c] sm:$0xe]
      %v10863 = vld [vmem:[%s9716 + $0x48] sm:$0xe]
      %v10864 = vld [vmem:[%s9716 + $0x54] sm:$0xe]
      %v10865 = vld [vmem:[%s9716 + $0x60] sm:$0xe]
      %v10866 = vld [vmem:[%s9716 + $0x6c] sm:$0xe]
      %v10867 = vld [vmem:[%s9716 + $0x78] sm:$0xe]
      %v10868 = vld [vmem:[%s9716 + $0x84] sm:$0xe]
      %v10869 = vld [vmem:[%s9716 + $0x90] sm:$0xe]
      %v10870 = vld [vmem:[%s9716 + $0x9c] sm:$0xe]
      %v10871 = vld [vmem:[%s9716 + $0xa8] sm:$0xe]
      %v10872 = vld [vmem:[%s9716 + $0xb4] sm:$0xe]
      %v10921 = vrot.slane %v10857, 5
      %v10922 = vrot.slane %v10921, 4
      %v10923 = vrot.slane %v10104, 5
      %v10924 = vsel %vm2128, %v10922, %v10923
      %v10925 = vrot.slane %v10923, 4
      %v10926 = vrot.slane %v10105, 5
      %v10927 = vsel %vm2128, %v10925, %v10926
      %v10928 = vrot.slane %v10858, 5
      %v10929 = vrot.slane %v10928, 4
      %v10930 = vrot.slane %v10107, 5
      %v10931 = vsel %vm2128, %v10929, %v10930
      %v10932 = vrot.slane %v10930, 4
      %v10933 = vrot.slane %v10108, 5
      %v10934 = vsel %vm2128, %v10932, %v10933
      %v10935 = vrot.slane %v10859, 5
      %v10936 = vrot.slane %v10935, 4
      %v10937 = vrot.slane %v10110, 5
      %v10938 = vsel %vm2128, %v10936, %v10937
      %v10939 = vrot.slane %v10937, 4
      %v10940 = vrot.slane %v10111, 5
      %v10941 = vsel %vm2128, %v10939, %v10940
      %v10942 = vrot.slane %v10860, 5
      %v10943 = vrot.slane %v10942, 4
      %v10944 = vrot.slane %v10113, 5
      %v10945 = vsel %vm2128, %v10943, %v10944
      %v10946 = vrot.slane %v10944, 4
      %v10947 = vrot.slane %v10114, 5
      %v10948 = vsel %vm2128, %v10946, %v10947
      %v10949 = vrot.slane %v10861, 5
      %v10950 = vrot.slane %v10949, 4
      %v10951 = vrot.slane %v10116, 5
      %v10952 = vsel %vm2128, %v10950, %v10951
      %v10953 = vrot.slane %v10951, 4
      %v10954 = vrot.slane %v10117, 5
      %v10955 = vsel %vm2128, %v10953, %v10954
      %v10956 = vrot.slane %v10862, 5
      %v10957 = vrot.slane %v10956, 4
      %v10958 = vrot.slane %v10119, 5
      %v10959 = vsel %vm2128, %v10957, %v10958
      %v10960 = vrot.slane %v10958, 4
      %v10961 = vrot.slane %v10120, 5
      %v10962 = vsel %vm2128, %v10960, %v10961
      %v10963 = vrot.slane %v10863, 5
      %v10964 = vrot.slane %v10963, 4
      %v10965 = vrot.slane %v10122, 5
      %v10966 = vsel %vm2128, %v10964, %v10965
      %v10967 = vrot.slane %v10965, 4
      %v10968 = vrot.slane %v10123, 5
      %v10969 = vsel %vm2128, %v10967, %v10968
      %v10970 = vrot.slane %v10864, 5
      %v10971 = vrot.slane %v10970, 4
      %v10972 = vrot.slane %v10125, 5
      %v10973 = vsel %vm2128, %v10971, %v10972
      %v10974 = vrot.slane %v10972, 4
      %v10975 = vrot.slane %v10126, 5
      %v10976 = vsel %vm2128, %v10974, %v10975
      %v10977 = vrot.slane %v10865, 5
      %v10978 = vrot.slane %v10977, 4
      %v10979 = vrot.slane %v10128, 5
      %v10980 = vsel %vm2128, %v10978, %v10979
      %v10981 = vrot.slane %v10979, 4
      %v10982 = vrot.slane %v10129, 5
      %v10983 = vsel %vm2128, %v10981, %v10982
      %v10984 = vrot.slane %v10866, 5
      %v10985 = vrot.slane %v10984, 4
      %v10986 = vrot.slane %v10131, 5
      %v10987 = vsel %vm2128, %v10985, %v10986
      %v10988 = vrot.slane %v10986, 4
      %v10989 = vrot.slane %v10132, 5
      %v10990 = vsel %vm2128, %v10988, %v10989
      %v10991 = vrot.slane %v10867, 5
      %v10992 = vrot.slane %v10991, 4
      %v10993 = vrot.slane %v10134, 5
      %v10994 = vsel %vm2128, %v10992, %v10993
      %v10995 = vrot.slane %v10993, 4
      %v10996 = vrot.slane %v10135, 5
      %v10997 = vsel %vm2128, %v10995, %v10996
      %v10998 = vrot.slane %v10868, 5
      %v10999 = vrot.slane %v10998, 4
      %v11000 = vrot.slane %v10137, 5
      %v11001 = vsel %vm2128, %v10999, %v11000
      %v11002 = vrot.slane %v11000, 4
      %v11003 = vrot.slane %v10138, 5
      %v11004 = vsel %vm2128, %v11002, %v11003
      %v11005 = vrot.slane %v10869, 5
      %v11006 = vrot.slane %v11005, 4
      %v11007 = vrot.slane %v10140, 5
      %v11008 = vsel %vm2128, %v11006, %v11007
      %v11009 = vrot.slane %v11007, 4
      %v11010 = vrot.slane %v10141, 5
      %v11011 = vsel %vm2128, %v11009, %v11010
      %v11012 = vrot.slane %v10870, 5
      %v11013 = vrot.slane %v11012, 4
      %v11014 = vrot.slane %v10143, 5
      %v11015 = vsel %vm2128, %v11013, %v11014
      %v11016 = vrot.slane %v11014, 4
      %v11017 = vrot.slane %v10144, 5
      %v11018 = vsel %vm2128, %v11016, %v11017
      %v11019 = vrot.slane %v10871, 5
      %v11020 = vrot.slane %v11019, 4
      %v11021 = vrot.slane %v10146, 5
      %v11022 = vsel %vm2128, %v11020, %v11021
      %v11023 = vrot.slane %v11021, 4
      %v11024 = vrot.slane %v10147, 5
      %v11025 = vsel %vm2128, %v11023, %v11024
      %v11026 = vrot.slane %v10872, 5
      %v11027 = vrot.slane %v11026, 4
      %v11028 = vrot.slane %v10149, 5
      %v11029 = vsel %vm2128, %v11027, %v11028
      %v11030 = vrot.slane %v11028, 4
      %v11031 = vrot.slane %v10150, 5
      %v11032 = vsel %vm2128, %v11030, %v11031
      %s11033 = scalar_lea.vmem %s3, 512
      %v11034 = vld [vmem:[%s11033] sm:$0xf]
      %v11035 = vld [vmem:[%s11033 + $0x4] sm:$0xf]
      %v11036 = vld [vmem:[%s11033 + $0x8] sm:$0xf]
      %v11037 = vld [vmem:[%s11033 + $0xc] sm:$0xf]
      %v11038 = vld [vmem:[%s11033 + $0x10] sm:$0xf]
      %v11039 = vld [vmem:[%s11033 + $0x14] sm:$0xf]
      %v11040 = vld [vmem:[%s11033 + $0x18] sm:$0xf]
      %v11041 = vld [vmem:[%s11033 + $0x1c] sm:$0xf]
      %v11042 = vld [vmem:[%s11033 + $0x20] sm:$0xf]
      %v11043 = vld [vmem:[%s11033 + $0x24] sm:$0xf]
      %v11044 = vld [vmem:[%s11033 + $0x28] sm:$0xf]
      %v11045 = vld [vmem:[%s11033 + $0x2c] sm:$0xf]
      %v11046 = vld [vmem:[%s11033 + $0x30] sm:$0xf]
      %v11047 = vld [vmem:[%s11033 + $0x34] sm:$0xf]
      %v11048 = vld [vmem:[%s11033 + $0x38] sm:$0xf]
      %v11049 = vld [vmem:[%s11033 + $0x3c] sm:$0xf]
      %v11050 = vunpack.c.l.b16 %v10924
      %v11051 = vunpack.c.l.b16 %v10927
      %v11052 = vunpack.c.l.b16 %v10931
      %v11053 = vunpack.c.l.b16 %v10934
      %v11054 = vunpack.c.l.b16 %v10938
      %v11055 = vunpack.c.l.b16 %v10941
      %v11056 = vunpack.c.l.b16 %v10945
      %v11057 = vunpack.c.l.b16 %v10948
      %v11058 = vunpack.c.l.b16 %v10952
      %v11059 = vunpack.c.l.b16 %v10955
      %v11060 = vunpack.c.l.b16 %v10959
      %v11061 = vunpack.c.l.b16 %v10962
      %v11062 = vunpack.c.l.b16 %v10966
      %v11063 = vunpack.c.l.b16 %v10969
      %v11064 = vunpack.c.l.b16 %v10973
      %v11065 = vunpack.c.l.b16 %v10976
      %v11066 = vunpack.c.l.b16 %v10980
      %v11067 = vunpack.c.l.b16 %v10983
      %v11068 = vunpack.c.l.b16 %v10987
      %v11069 = vunpack.c.l.b16 %v10990
      %v11070 = vunpack.c.l.b16 %v10994
      %v11071 = vunpack.c.l.b16 %v10997
      %v11072 = vunpack.c.l.b16 %v11001
      %v11073 = vunpack.c.l.b16 %v11004
      %v11074 = vunpack.c.l.b16 %v11008
      %v11075 = vunpack.c.l.b16 %v11011
      %v11076 = vunpack.c.l.b16 %v11015
      %v11077 = vunpack.c.l.b16 %v11018
      %v11078 = vunpack.c.l.b16 %v11022
      %v11079 = vunpack.c.l.b16 %v11025
      %v11080 = vunpack.c.l.b16 %v11029
      %v11081 = vunpack.c.l.b16 %v11032
      %v11082 = vpack.c.b16 %v11051, %v11050
      %v11083 = vpack.c.b16 %v11053, %v11052
      %v11084 = vpack.c.b16 %v11055, %v11054
      %v11085 = vpack.c.b16 %v11057, %v11056
      %v11086 = vpack.c.b16 %v11059, %v11058
      %v11087 = vpack.c.b16 %v11061, %v11060
      %v11088 = vpack.c.b16 %v11063, %v11062
      %v11089 = vpack.c.b16 %v11065, %v11064
      %v11090 = vpack.c.b16 %v11067, %v11066
      %v11091 = vpack.c.b16 %v11069, %v11068
      %v11092 = vpack.c.b16 %v11071, %v11070
      %v11093 = vpack.c.b16 %v11073, %v11072
      %v11094 = vpack.c.b16 %v11075, %v11074
      %v11095 = vpack.c.b16 %v11077, %v11076
      %v11096 = vpack.c.b16 %v11079, %v11078
      %v11097 = vpack.c.b16 %v11081, %v11080
      %v11130 = vunpack.c.l.b16 %v11034
      %v11131 = vunpack.c.l.b16 %v11035
      %v11132 = vunpack.c.l.b16 %v11036
      %v11133 = vunpack.c.l.b16 %v11037
      %v11134 = vunpack.c.l.b16 %v11038
      %v11135 = vunpack.c.l.b16 %v11039
      %v11136 = vunpack.c.l.b16 %v11040
      %v11137 = vunpack.c.l.b16 %v11041
      %v11138 = vunpack.c.l.b16 %v11042
      %v11139 = vunpack.c.l.b16 %v11043
      %v11140 = vunpack.c.l.b16 %v11044
      %v11141 = vunpack.c.l.b16 %v11045
      %v11142 = vunpack.c.l.b16 %v11046
      %v11143 = vunpack.c.l.b16 %v11047
      %v11144 = vunpack.c.l.b16 %v11048
      %v11145 = vunpack.c.l.b16 %v11049
      %v11146 = vpack.c.b16 %v11131, %v11130
      %v11147 = vpack.c.b16 %v11133, %v11132
      %v11148 = vpack.c.b16 %v11135, %v11134
      %v11149 = vpack.c.b16 %v11137, %v11136
      %v11150 = vpack.c.b16 %v11139, %v11138
      %v11151 = vpack.c.b16 %v11141, %v11140
      %v11152 = vpack.c.b16 %v11143, %v11142
      %v11153 = vpack.c.b16 %v11145, %v11144
      %11162 = vmatprep.subr.bf16.mxu0 0
      %11163 = vmatpush1.bf16.msra.mxu0 %v11146
      %11164 = vmatprep.subr.bf16.mxu0 0
      %11165 = vmatpush1.bf16.msra.mxu0 %v11147
      %11166 = vmatprep.subr.bf16.mxu0 0
      %11167 = vmatpush1.bf16.msra.mxu0 %v11148
      %11168 = vmatprep.subr.bf16.mxu0 0
      %11169 = vmatpush1.bf16.msra.mxu0 %v11149
      %11170 = vmatprep.subr.bf16.mxu0 0
      %11171 = vmatpush1.bf16.msra.mxu0 %v11150
      %11172 = vmatprep.subr.bf16.mxu0 0
      %11173 = vmatpush1.bf16.msra.mxu0 %v11151
      %11174 = vmatprep.subr.bf16.mxu0 0
      %11175 = vmatpush1.bf16.msra.mxu0 %v11152
      %11176 = vmatprep.subr.bf16.mxu0 0
      %11177 = vmatpush1.bf16.msra.mxu0 %v11153
      %11178 = vmatprep.subr.bf16.mxu0 0
      %11179 = vmatpush1.bf16.msra.mxu0 0
      %11180 = vmatprep.subr.bf16.mxu0 0
      %11181 = vmatpush1.bf16.msra.mxu0 0
      %11182 = vmatprep.subr.bf16.mxu0 0
      %11183 = vmatpush1.bf16.msra.mxu0 0
      %11184 = vmatprep.subr.bf16.mxu0 0
      %11185 = vmatpush1.bf16.msra.mxu0 0
      %11186 = vmatprep.subr.bf16.mxu0 0
      %11187 = vmatpush1.bf16.msra.mxu0 0
      %11188 = vmatprep.subr.bf16.mxu0 0
      %11189 = vmatpush1.bf16.msra.mxu0 0
      %11190 = vmatprep.subr.bf16.mxu0 0
      %11191 = vmatpush1.bf16.msra.mxu0 0
      %11192 = vmatprep.subr.bf16.mxu0 0
      %11193 = vmatpush1.bf16.msra.mxu0 0
      %11194 = vmatprep.mubr.bf16.mxu0 0
      %11195 = vmatmul.mubr.bf16.gmra.mrb[0].mxu0 %v11082
      %v11196 = vpop.f32.mrb[0].mxu0
      %v11197 = vadd.f32 0.0, %v11196
      %v11198 = vpop.f32.mrb[0].mxu0
      %v11199 = vpop.f32.mrb[0].mxu0
      %v11200 = vadd.f32 0.0, %v11199
      %v11201 = vpop.f32.mrb[0].mxu0
      %11202 = vmatprep.mubr.bf16.mxu0 0
      %11203 = vmatmul.mubr.bf16.gmra.mrb[0].mxu0 %v11083
      %v11204 = vpop.f32.mrb[0].mxu0
      %v11205 = vadd.f32 0.0, %v11204
      %v11206 = vpop.f32.mrb[0].mxu0
      %v11207 = vpop.f32.mrb[0].mxu0
      %v11208 = vadd.f32 0.0, %v11207
      %v11209 = vpop.f32.mrb[0].mxu0
      %11210 = vmatprep.mubr.bf16.mxu0 0
      %11211 = vmatmul.mubr.bf16.gmra.mrb[0].mxu0 %v11084
      %v11212 = vpop.f32.mrb[0].mxu0
      %v11213 = vadd.f32 0.0, %v11212
      %v11214 = vpop.f32.mrb[0].mxu0
      %v11215 = vpop.f32.mrb[0].mxu0
      %v11216 = vadd.f32 0.0, %v11215
      %v11217 = vpop.f32.mrb[0].mxu0
      %11218 = vmatprep.mubr.bf16.mxu0 0
      %11219 = vmatmul.mubr.bf16.gmra.mrb[0].mxu0 %v11085
      %v11220 = vpop.f32.mrb[0].mxu0
      %v11221 = vadd.f32 0.0, %v11220
      %v11222 = vpop.f32.mrb[0].mxu0
      %v11223 = vpop.f32.mrb[0].mxu0
      %v11224 = vadd.f32 0.0, %v11223
      %v11225 = vpop.f32.mrb[0].mxu0
      %11226 = vmatprep.mubr.bf16.mxu0 0
      %11227 = vmatmul.mubr.bf16.gmra.mrb[0].mxu0 %v11086
      %v11228 = vpop.f32.mrb[0].mxu0
      %v11229 = vadd.f32 0.0, %v11228
      %v11230 = vpop.f32.mrb[0].mxu0
      %v11231 = vpop.f32.mrb[0].mxu0
      %v11232 = vadd.f32 0.0, %v11231
      %v11233 = vpop.f32.mrb[0].mxu0
      %11234 = vmatprep.mubr.bf16.mxu0 0
      %11235 = vmatmul.mubr.bf16.gmra.mrb[0].mxu0 %v11087
      %v11236 = vpop.f32.mrb[0].mxu0
      %v11237 = vadd.f32 0.0, %v11236
      %v11238 = vpop.f32.mrb[0].mxu0
      %v11239 = vpop.f32.mrb[0].mxu0
      %v11240 = vadd.f32 0.0, %v11239
      %v11241 = vpop.f32.mrb[0].mxu0
      %11242 = vmatprep.mubr.bf16.mxu0 0
      %11243 = vmatmul.mubr.bf16.gmra.mrb[0].mxu0 %v11088
      %v11244 = vpop.f32.mrb[0].mxu0
      %v11245 = vadd.f32 0.0, %v11244
      %v11246 = vpop.f32.mrb[0].mxu0
      %v11247 = vpop.f32.mrb[0].mxu0
      %v11248 = vadd.f32 0.0, %v11247
      %v11249 = vpop.f32.mrb[0].mxu0
      %11250 = vmatprep.mubr.bf16.mxu0 0
      %11251 = vmatmul.mubr.bf16.gmra.mrb[0].mxu0 %v11089
      %v11252 = vpop.f32.mrb[0].mxu0
      %v11253 = vadd.f32 0.0, %v11252
      %v11254 = vpop.f32.mrb[0].mxu0
      %v11255 = vpop.f32.mrb[0].mxu0
      %v11256 = vadd.f32 0.0, %v11255
      %v11257 = vpop.f32.mrb[0].mxu0
      %11258 = vmatprep.mubr.bf16.mxu0 0
      %11259 = vmatmul.mubr.bf16.gmra.mrb[0].mxu0 %v11090
      %v11260 = vpop.f32.mrb[0].mxu0
      %v11261 = vadd.f32 0.0, %v11260
      %v11262 = vpop.f32.mrb[0].mxu0
      %v11263 = vpop.f32.mrb[0].mxu0
      %v11264 = vadd.f32 0.0, %v11263
      %v11265 = vpop.f32.mrb[0].mxu0
      %11266 = vmatprep.mubr.bf16.mxu0 0
      %11267 = vmatmul.mubr.bf16.gmra.mrb[0].mxu0 %v11091
      %v11268 = vpop.f32.mrb[0].mxu0
      %v11269 = vadd.f32 0.0, %v11268
      %v11270 = vpop.f32.mrb[0].mxu0
      %v11271 = vpop.f32.mrb[0].mxu0
      %v11272 = vadd.f32 0.0, %v11271
      %v11273 = vpop.f32.mrb[0].mxu0
      %11274 = vmatprep.mubr.bf16.mxu0 0
      %11275 = vmatmul.mubr.bf16.gmra.mrb[0].mxu0 %v11092
      %v11276 = vpop.f32.mrb[0].mxu0
      %v11277 = vadd.f32 0.0, %v11276
      %v11278 = vpop.f32.mrb[0].mxu0
      %v11279 = vpop.f32.mrb[0].mxu0
      %v11280 = vadd.f32 0.0, %v11279
      %v11281 = vpop.f32.mrb[0].mxu0
      %11282 = vmatprep.mubr.bf16.mxu0 0
      %11283 = vmatmul.mubr.bf16.gmra.mrb[0].mxu0 %v11093
      %v11284 = vpop.f32.mrb[0].mxu0
      %v11285 = vadd.f32 0.0, %v11284
      %v11286 = vpop.f32.mrb[0].mxu0
      %v11287 = vpop.f32.mrb[0].mxu0
      %v11288 = vadd.f32 0.0, %v11287
      %v11289 = vpop.f32.mrb[0].mxu0
      %11290 = vmatprep.mubr.bf16.mxu0 0
      %11291 = vmatmul.mubr.bf16.gmra.mrb[0].mxu0 %v11094
      %v11292 = vpop.f32.mrb[0].mxu0
      %v11293 = vadd.f32 0.0, %v11292
      %v11294 = vpop.f32.mrb[0].mxu0
      %v11295 = vpop.f32.mrb[0].mxu0
      %v11296 = vadd.f32 0.0, %v11295
      %v11297 = vpop.f32.mrb[0].mxu0
      %11298 = vmatprep.mubr.bf16.mxu0 0
      %11299 = vmatmul.mubr.bf16.gmra.mrb[0].mxu0 %v11095
      %v11300 = vpop.f32.mrb[0].mxu0
      %v11301 = vadd.f32 0.0, %v11300
      %v11302 = vpop.f32.mrb[0].mxu0
      %v11303 = vpop.f32.mrb[0].mxu0
      %v11304 = vadd.f32 0.0, %v11303
      %v11305 = vpop.f32.mrb[0].mxu0
      %11306 = vmatprep.mubr.bf16.mxu0 0
      %11307 = vmatmul.mubr.bf16.gmra.mrb[0].mxu0 %v11096
      %v11308 = vpop.f32.mrb[0].mxu0
      %v11309 = vadd.f32 0.0, %v11308
      %v11310 = vpop.f32.mrb[0].mxu0
      %v11311 = vpop.f32.mrb[0].mxu0
      %v11312 = vadd.f32 0.0, %v11311
      %v11313 = vpop.f32.mrb[0].mxu0
      %11314 = vmatprep.mubr.bf16.mxu0 0
      %11315 = vmatmul.mubr.bf16.gmra.mrb[0].mxu0 %v11097
      %v11316 = vpop.f32.mrb[0].mxu0
      %v11317 = vadd.f32 0.0, %v11316
      %v11318 = vpop.f32.mrb[0].mxu0
      %v11319 = vpop.f32.mrb[0].mxu0
      %v11320 = vadd.f32 0.0, %v11319
      %v11321 = vpop.f32.mrb[0].mxu0
      %11322 = vdwg.mxu0
      %v11323 = vadd.f32 %v10825, %v11197
      %v11324 = vadd.f32 %v10826, %v11200
      %v11325 = vadd.f32 %v10827, %v11205
      %v11326 = vadd.f32 %v10828, %v11208
      %v11327 = vadd.f32 %v10829, %v11213
      %v11328 = vadd.f32 %v10830, %v11216
      %v11329 = vadd.f32 %v10831, %v11221
      %v11330 = vadd.f32 %v10832, %v11224
      %v11331 = vadd.f32 %v10833, %v11229
      %v11332 = vadd.f32 %v10834, %v11232
      %v11333 = vadd.f32 %v10835, %v11237
      %v11334 = vadd.f32 %v10836, %v11240
      %v11335 = vadd.f32 %v10837, %v11245
      %v11336 = vadd.f32 %v10838, %v11248
      %v11337 = vadd.f32 %v10839, %v11253
      %v11338 = vadd.f32 %v10840, %v11256
      %v11339 = vadd.f32 %v10841, %v11261
      %v11340 = vadd.f32 %v10842, %v11264
      %v11341 = vadd.f32 %v10843, %v11269
      %v11342 = vadd.f32 %v10844, %v11272
      %v11343 = vadd.f32 %v10845, %v11277
      %v11344 = vadd.f32 %v10846, %v11280
      %v11345 = vadd.f32 %v10847, %v11285
      %v11346 = vadd.f32 %v10848, %v11288
      %v11347 = vadd.f32 %v10849, %v11293
      %v11348 = vadd.f32 %v10850, %v11296
      %v11349 = vadd.f32 %v10851, %v11301
      %v11350 = vadd.f32 %v10852, %v11304
      %v11351 = vadd.f32 %v10853, %v11309
      %v11352 = vadd.f32 %v10854, %v11312
      %v11353 = vadd.f32 %v10855, %v11317
      %v11354 = vadd.f32 %v10856, %v11320
      %v11355 = vmul.f32 %v11323, 0.2
      %v11356 = vmul.f32 %v11324, 0.2
      %v11357 = vmul.f32 %v11325, 0.2
      %v11358 = vmul.f32 %v11326, 0.2
      %v11359 = vmul.f32 %v11327, 0.2
      %v11360 = vmul.f32 %v11328, 0.2
      %v11361 = vmul.f32 %v11329, 0.2
      %v11362 = vmul.f32 %v11330, 0.2
      %v11363 = vmul.f32 %v11331, 0.2
      %v11364 = vmul.f32 %v11332, 0.2
      %v11365 = vmul.f32 %v11333, 0.2
      %v11366 = vmul.f32 %v11334, 0.2
      %v11367 = vmul.f32 %v11335, 0.2
      %v11368 = vmul.f32 %v11336, 0.2
      %v11369 = vmul.f32 %v11337, 0.2
      %v11370 = vmul.f32 %v11338, 0.2
      %v11371 = vmul.f32 %v11339, 0.2
      %v11372 = vmul.f32 %v11340, 0.2
      %v11373 = vmul.f32 %v11341, 0.2
      %v11374 = vmul.f32 %v11342, 0.2
      %v11375 = vmul.f32 %v11343, 0.2
      %v11376 = vmul.f32 %v11344, 0.2
      %v11377 = vmul.f32 %v11345, 0.2
      %v11378 = vmul.f32 %v11346, 0.2
      %v11379 = vmul.f32 %v11347, 0.2
      %v11380 = vmul.f32 %v11348, 0.2
      %v11381 = vmul.f32 %v11349, 0.2
      %v11382 = vmul.f32 %v11350, 0.2
      %v11383 = vmul.f32 %v11351, 0.2
      %v11384 = vmul.f32 %v11352, 0.2
      %v11385 = vmul.f32 %v11353, 0.2
      %v11386 = vmul.f32 %v11354, 0.2
      %v11387 = vmax.f32 %v11323, %v11355
      %v11388 = vmax.f32 %v11324, %v11356
      %v11389 = vmax.f32 %v11325, %v11357
      %v11390 = vmax.f32 %v11326, %v11358
      %v11391 = vmax.f32 %v11327, %v11359
      %v11392 = vmax.f32 %v11328, %v11360
      %v11393 = vmax.f32 %v11329, %v11361
      %v11394 = vmax.f32 %v11330, %v11362
      %v11395 = vmax.f32 %v11331, %v11363
      %v11396 = vmax.f32 %v11332, %v11364
      %v11397 = vmax.f32 %v11333, %v11365
      %v11398 = vmax.f32 %v11334, %v11366
      %v11399 = vmax.f32 %v11335, %v11367
      %v11400 = vmax.f32 %v11336, %v11368
      %v11401 = vmax.f32 %v11337, %v11369
      %v11402 = vmax.f32 %v11338, %v11370
      %v11403 = vmax.f32 %v11339, %v11371
      %v11404 = vmax.f32 %v11340, %v11372
      %v11405 = vmax.f32 %v11341, %v11373
      %v11406 = vmax.f32 %v11342, %v11374
      %v11407 = vmax.f32 %v11343, %v11375
      %v11408 = vmax.f32 %v11344, %v11376
      %v11409 = vmax.f32 %v11345, %v11377
      %v11410 = vmax.f32 %v11346, %v11378
      %v11411 = vmax.f32 %v11347, %v11379
      %v11412 = vmax.f32 %v11348, %v11380
      %v11413 = vmax.f32 %v11349, %v11381
      %v11414 = vmax.f32 %v11350, %v11382
      %v11415 = vmax.f32 %v11351, %v11383
      %v11416 = vmax.f32 %v11352, %v11384
      %v11417 = vmax.f32 %v11353, %v11385
      %v11418 = vmax.f32 %v11354, %v11386
      %11419 = vst [vmem:[%s224] sm:$0xff] %v11387
      %11420 = vst [vmem:[%s224 + $0x8] sm:$0xff] %v11388
      %11421 = vst [vmem:[%s224 + $0x10] sm:$0xff] %v11389
      %11422 = vst [vmem:[%s224 + $0x18] sm:$0xff] %v11390
      %11423 = vst [vmem:[%s224 + $0x20] sm:$0xff] %v11391
      %11424 = vst [vmem:[%s224 + $0x28] sm:$0xff] %v11392
      %11425 = vst [vmem:[%s224 + $0x30] sm:$0xff] %v11393
      %11426 = vst [vmem:[%s224 + $0x38] sm:$0xff] %v11394
      %11427 = vst [vmem:[%s224 + $0x40] sm:$0xff] %v11395
      %11428 = vst [vmem:[%s224 + $0x48] sm:$0xff] %v11396
      %11429 = vst [vmem:[%s224 + $0x50] sm:$0xff] %v11397
      %11430 = vst [vmem:[%s224 + $0x58] sm:$0xff] %v11398
      %11431 = vst [vmem:[%s224 + $0x60] sm:$0xff] %v11399
      %11432 = vst [vmem:[%s224 + $0x68] sm:$0xff] %v11400
      %11433 = vst [vmem:[%s224 + $0x70] sm:$0xff] %v11401
      %11434 = vst [vmem:[%s224 + $0x78] sm:$0xff] %v11402
      %11435 = vst [vmem:[%s224 + $0x80] sm:$0xff] %v11403
      %11436 = vst [vmem:[%s224 + $0x88] sm:$0xff] %v11404
      %11437 = vst [vmem:[%s224 + $0x90] sm:$0xff] %v11405
      %11438 = vst [vmem:[%s224 + $0x98] sm:$0xff] %v11406
      %11439 = vst [vmem:[%s224 + $0xa0] sm:$0xff] %v11407
      %11440 = vst [vmem:[%s224 + $0xa8] sm:$0xff] %v11408
      %11441 = vst [vmem:[%s224 + $0xb0] sm:$0xff] %v11409
      %11442 = vst [vmem:[%s224 + $0xb8] sm:$0xff] %v11410
      %11443 = vst [vmem:[%s224 + $0xc0] sm:$0xff] %v11411
      %11444 = vst [vmem:[%s224 + $0xc8] sm:$0xff] %v11412
      %11445 = vst [vmem:[%s224 + $0xd0] sm:$0xff] %v11413
      %11446 = vst [vmem:[%s224 + $0xd8] sm:$0xff] %v11414
      %11447 = vst [vmem:[%s224 + $0xe0] sm:$0xff] %v11415
      %11448 = vst [vmem:[%s224 + $0xe8] sm:$0xff] %v11416
      %11449 = vst [vmem:[%s224 + $0xf0] sm:$0xff] %v11417
      %11450 = vst [vmem:[%s224 + $0xf8] sm:$0xff] %v11418
      %p11451 = scmp.lt.s32.totalorder %s16, 1
      %s11452 = scalar_select %p11451, %s16, 1
      %s11453 = smul.addr %s11452, 32
      %s11454 = smul.addr %s11453, 8
      %s11455 = scalar_lea.vmem %s5, %s11454
      // Predicated region
      $region41: #{conv_block_forward.1} parent=39 // pred_check
        %p11456 = pneg %p144
      $region42: #{conv_block_forward.1} parent=39 // pred_check_branch
        %11458 = sbr.rel (%p11456) target = $region44
      $region43: #{conv_block_forward.1} parent=39 // pred_region
        _
      $region44: #{conv_block_forward.1} parent=39 // pred_fallthru
        _
    $region40: #{conv_block_forward.1} parent=5 // pred_fallthru
      _
    %p11459 = scmp.le.s32.totalorder 2, %s11
    // Predicated region
    $region45: #{conv_block_forward.1} parent=5 // pred_check
      %p11460 = pneg %p11459
    $region46: #{conv_block_forward.1} parent=5 // pred_check_branch
      %11462 = sbr.rel (%p11460) target = $region48
    $region47: #{conv_block_forward.1} parent=5 // pred_region
      %s11463 = ssub.s32 %s11, 2
      // Predicated region
      $region49: #{conv_block_forward.1} parent=47 // pred_check
        %p11464 = pneg %p150
      $region50: #{conv_block_forward.1} parent=47 // pred_check_branch
        %11466 = sbr.rel (%p11464) target = $region52
      $region51: #{conv_block_forward.1} parent=47 // pred_region
        %p11467 = scmp.lt.s32.totalorder %s17, 1
        %s11468 = scalar_select %p11467, %s17, 1
        %s11469 = smul.addr %s11468, 32
        %s11470 = smul.addr %s11469, 8
        %s11471 = scalar_lea.vmem %s5, %s11470
      $region52: #{conv_block_forward.1} parent=47 // pred_fallthru
        _
    $region48: #{conv_block_forward.1} parent=5 // pred_fallthru
      _
  $region6: #{conv_block_forward.1} parent=0 // loop_footer
    %s15 = sadd.s32 1, %s11
  $region7: #{conv_block_forward.1} parent=0 // loop_footer_branch
    %10 = sbr.rel target = $region3
  $region8: #{conv_block_forward.1} parent=0 // loop_exit
    _

</llo_original>
